<compile_context>
chip_gen: v7x
topology: tpu7x:2x2x1
jax: 0.10.0
libtpu: 0.0.40
codegen_flags: <defaults>
</compile_context>

<pallas_src>
import functools

import jax
import jax.numpy as jnp
from jax.experimental import pallas as pl
from jax.experimental.pallas import tpu as pltpu

# Left/right sublane padding of the dense buffer.  The image lives at columns
# [_LPAD : _LPAD+W], so every bf16 store into the buffer starts at a multiple of
# the (16, 128) bf16 tile in the sublane dim.  The actual conv zero-pad columns
# are _LPAD-1 and _LPAD+W (both inside the zeroed border blocks).
_LPAD = 16


# --------------------------------------------------------------------------
# Fused RDB kernel: one batch element per grid step.
# --------------------------------------------------------------------------
def _rdb5c_kernel(x_ref, w_ref, b_ref, o_ref, buf_ref, *, H, W, nf, gc):
    # x_ref : (1, H, W, nf)            f32   input image (NHWC)
    # w_ref : (5, 3, Ctot, 3*nf)       bf16  dx-major weights; for layer l the 3 dy
    #                                        taps are stacked along the output dim
    #                                        (columns [dy*cout_l:(dy+1)*cout_l]);
    #                                        Cin zero-padded up to Ctot.
    # b_ref : (5, 1, nf)               f32   biases (Cout zero-padded to nf)
    # o_ref : (1, H, W, nf)            f32   output
    # buf_ref: (H+2, W+2*_LPAD, Ctot)  bf16  dense-concat buffer (image at
    #                                        [1:H+1, _LPAD:_LPAD+W, :])
    HW = H * W
    HpW = (H + 2) * W
    Ctot = nf + 4 * gc
    Wb = W + 2 * _LPAD
    bf16 = jnp.bfloat16

    # Border-only zero init (serves as the 3x3 conv zero padding).  Interior
    # channel slots never need zeroing: each conv reads only its true Cin
    # channels, all of which are (re)written earlier in the same grid step.
    buf_ref[0:1, :, :] = jnp.zeros((1, Wb, Ctot), bf16)
    buf_ref[H + 1:H + 2, :, :] = jnp.zeros((1, Wb, Ctot), bf16)
    buf_ref[:, 0:_LPAD, :] = jnp.zeros((H + 2, _LPAD, Ctot), bf16)
    buf_ref[:, _LPAD + W:Wb, :] = jnp.zeros((H + 2, _LPAD, Ctot), bf16)

    x0 = x_ref[0]                                          # (H, W, nf) f32 residual
    buf_ref[1:H + 1, _LPAD:_LPAD + W, 0:nf] = x0.astype(bf16)

    def conv(layer, cin, cout, apply_lrelu):
        # One K=cin, N=3*cout matmul per dx (3 dy taps stacked along N), then
        # three cheap shifted-slice adds.  True-Cin K: no padded-K MXU work and
        # no reads of stale channel slots.
        acc = jnp.zeros((HW, cout), jnp.float32)
        for dx in range(3):
            c0 = _LPAD - 1 + dx
            xs = buf_ref[:, c0:c0 + W, 0:cin]              # (H+2, W, cin) bf16
            xs = xs.reshape(HpW, cin)
            wdx = w_ref[layer, dx, 0:cin, 0:3 * cout]      # (cin, 3*cout) bf16
            y = jnp.dot(xs, wdx, preferred_element_type=jnp.float32)  # (HpW, 3*cout)
            for dy in range(3):
                acc = acc + y[dy * W:dy * W + HW, dy * cout:(dy + 1) * cout]
        acc = acc + b_ref[layer, :, 0:cout]                # (1, cout) f32 broadcast
        if apply_lrelu:
            acc = jnp.where(acc >= 0, acc, jnp.float32(0.2) * acc)
        return acc                                         # (HW, cout) f32

    # conv1..conv4: LeakyReLU(0.2) + append gc channels to the dense buffer.
    for i in range(4):
        cin = nf + i * gc
        yi = conv(i, cin, gc, apply_lrelu=True)
        buf_ref[1:H + 1, _LPAD:_LPAD + W, cin:cin + gc] = (
            yi.reshape(H, W, gc).astype(bf16))

    # conv5 (no activation) + fused residual  x5 * 0.2 + x  (kept in f32).
    y5 = conv(4, Ctot, nf, apply_lrelu=False)
    res = y5 * jnp.float32(0.2) + x0.reshape(HW, nf)
    o_ref[0] = res.reshape(H, W, nf)


# --------------------------------------------------------------------------
# Weight packing: torch OIHW -> dx-major, dy-stacked-along-Cout, bf16.
# --------------------------------------------------------------------------
def _pack_params(params, nf, gc):
    Ctot = nf + 4 * gc
    w_all = jnp.zeros((5, 3, Ctot, 3 * nf), jnp.float32)
    b_all = jnp.zeros((5, 1, nf), jnp.float32)
    for l, (w, b) in enumerate(params):
        cout, cin = w.shape[0], w.shape[1]
        wt = jnp.transpose(w, (3, 2, 1, 0))                # (dx, dy, cin, cout)
        for dy in range(3):
            w_all = w_all.at[l, :, :cin, dy * cout:(dy + 1) * cout].set(wt[:, dy])
        b_all = b_all.at[l, 0, :cout].set(b)
    return w_all.astype(jnp.bfloat16), b_all


def _vmem_limit_bytes(H, W, nf, gc):
    Ctot = nf + 4 * gc
    rup = lambda n, m: ((n + m - 1) // m) * m
    buf = (H + 2) * rup(W + 2 * _LPAD, 16) * rup(Ctot, 128) * 2
    io_blk = H * rup(W, 8) * rup(nf, 128) * 4              # one (1,H,W,nf) f32 block
    w_blk = 5 * 3 * rup(Ctot, 16) * rup(3 * nf, 128) * 2
    b_blk = 5 * rup(1, 8) * rup(nf, 128) * 4
    need = buf + 2 * (2 * io_blk + w_blk + b_blk)          # double-buffered I/O + params
    # Generous headroom for compiler-internal scratch; never below defaults that
    # already worked, capped comfortably below physical VMEM.
    return int(min(max(2 * need, 32 << 20), 96 << 20))


# --------------------------------------------------------------------------
# NHWC core entry point (use this inside an RRDB stack to avoid per-call
# NCHW<->NHWC transposes), plus a thin NCHW (torch-layout) wrapper.
# --------------------------------------------------------------------------
def rdb5c_forward_nhwc(x_nhwc, params, *, nf, gc):
    B, H, W, C = x_nhwc.shape
    assert C == nf
    assert W % 8 == 0, "W should be a multiple of 8 for clean sublane tiling"
    Ctot = nf + 4 * gc

    w_all, b_all = _pack_params(params, nf, gc)
    kernel = functools.partial(_rdb5c_kernel, H=H, W=W, nf=nf, gc=gc)

    return pl.pallas_call(
        kernel,
        out_shape=jax.ShapeDtypeStruct((B, H, W, nf), jnp.float32),
        grid=(B,),
        in_specs=[
            pl.BlockSpec((1, H, W, nf), lambda i: (i, 0, 0, 0)),
            pl.BlockSpec((5, 3, Ctot, 3 * nf), lambda i: (0, 0, 0, 0)),
            pl.BlockSpec((5, 1, nf), lambda i: (0, 0, 0)),
        ],
        out_specs=pl.BlockSpec((1, H, W, nf), lambda i: (i, 0, 0, 0)),
        scratch_shapes=[pltpu.VMEM((H + 2, W + 2 * _LPAD, Ctot), jnp.bfloat16)],
        compiler_params=pltpu.CompilerParams(
            dimension_semantics=("parallel",),
            vmem_limit_bytes=_vmem_limit_bytes(H, W, nf, gc)),
    )(x_nhwc, w_all, b_all)


def rdb5c_forward(x_nchw, params, *, nf, gc):
    """Torch-layout wrapper: NCHW in/out, params = [(OIHW weight, bias), ...]."""
    # NOTE: in an RRDB stack keep activations NHWC and call rdb5c_forward_nhwc
    # directly -- these two transposes are an extra HBM round trip per block.
    x_nhwc = jnp.transpose(x_nchw, (0, 2, 3, 1))
    out = rdb5c_forward_nhwc(x_nhwc, params, nf=nf, gc=gc)
    return jnp.transpose(out, (0, 3, 1, 2))


# --------------------------------------------------------------------------
# Pure-JAX reference (mirrors the PyTorch forward) for a correctness check.
# --------------------------------------------------------------------------
def rdb5c_reference(x, params):
    def conv(t, w, b):
        y = jax.lax.conv_general_dilated(
            t, w, window_strides=(1, 1), padding=((1, 1), (1, 1)),
            dimension_numbers=("NCHW", "OIHW", "NCHW"))
        return y + b[None, :, None, None]

    lrelu = lambda t: jnp.where(t >= 0, t, 0.2 * t)
    x1 = lrelu(conv(x, *params[0]))
    x2 = lrelu(conv(jnp.concatenate([x, x1], 1), *params[1]))
    x3 = lrelu(conv(jnp.concatenate([x, x1, x2], 1), *params[2]))
    x4 = lrelu(conv(jnp.concatenate([x, x1, x2, x3], 1), *params[3]))
    x5 = conv(jnp.concatenate([x, x1, x2, x3, x4], 1), *params[4])
    return x5 * 0.2 + x


def init_params(key, nf, gc):
    in_chs = [nf, nf + gc, nf + 2 * gc, nf + 3 * gc, nf + 4 * gc]
    out_chs = [gc, gc, gc, gc, nf]
    params = []
    for cin, cout in zip(in_chs, out_chs):
        key, kw, kb = jax.random.split(key, 3)
        w = jax.random.normal(kw, (cout, cin, 3, 3), jnp.float32) * 0.05
        b = jax.random.normal(kb, (cout,), jnp.float32) * 0.01
        params.append((w, b))
    return params


if __name__ == "__main__":
    nf, gc = 32, 16
    B, H, W = 2, 16, 16

    key = jax.random.PRNGKey(0)
    k_x, k_p = jax.random.split(key)
    x = jax.random.normal(k_x, (B, nf, H, W), jnp.float32)   # NCHW like torch
    params = init_params(k_p, nf, gc)

    fwd = jax.jit(functools.partial(rdb5c_forward, nf=nf, gc=gc))
    out = fwd(x, params)
    jax.block_until_ready(out)

    assert out.shape == (B, nf, H, W)
    assert out.dtype == jnp.float32

    ref = rdb5c_reference(x, params)
    max_err = float(jnp.max(jnp.abs(out - ref)))
    # bf16 activation storage + bf16 matmuls => small quantization error only.
    assert max_err < 1e-1, f"max abs err vs reference = {max_err}"

    print("KERNEL_OK")
</pallas_src>

<mosaic_0001>
module attributes {stable_mosaic.version = 11 : i64} {
  func.func @_rdb5c_kernel(%arg0: i32, %arg1: memref<1x16x16x32xf32, #tpu.memory_space<vmem>>, %arg2: memref<5x3x96x96xbf16, #tpu.memory_space<vmem>>, %arg3: memref<5x1x32xf32, #tpu.memory_space<vmem>>, %arg4: memref<1x16x16x32xf32, #tpu.memory_space<vmem>>, %arg5: memref<18x48x96xbf16, #tpu.memory_space<vmem>>) attributes {dimension_semantics = [#tpu.dimension_semantics<parallel>], iteration_bounds = array<i64: 2>, scalar_prefetch = 0 : i64, scratch_operands = 1 : i64, tpu.core_type = #tpu.core_type<tc>, window_params = [{transform_indices = @transform_0, window_bounds = array<i64: 1, 16, 16, 32>}, {pipeline_mode = #tpu.pipeline_mode<synchronous>, transform_indices = @transform_1, window_bounds = array<i64: 5, 3, 96, 96>}, {pipeline_mode = #tpu.pipeline_mode<synchronous>, transform_indices = @transform_2, window_bounds = array<i64: 5, 1, 32>}, {transform_indices = @transform_3, window_bounds = array<i64: 1, 16, 16, 32>}]} {
    %cst = arith.constant 0.000000e+00 : bf16
    %0 = vector.broadcast %cst : bf16 to vector<1x48x96xbf16>
    %c0 = arith.constant 0 : index
    %c0_0 = arith.constant 0 : index
    %c0_1 = arith.constant 0 : index
    %1 = vector.load %arg5[%c0, %c0_0, %c0_1] : memref<18x48x96xbf16, #tpu.memory_space<vmem>>, vector<1x48x96xbf16>
    tpu.vector_store %arg5[%c0, %c0_0, %c0_1], %0 {strides = array<i32>} : memref<18x48x96xbf16, #tpu.memory_space<vmem>>, vector<1x48x96xbf16>,
    %cst_2 = arith.constant 0.000000e+00 : bf16
    %2 = vector.broadcast %cst_2 : bf16 to vector<1x48x96xbf16>
    %c17 = arith.constant 17 : index
    %c0_3 = arith.constant 0 : index
    %c0_4 = arith.constant 0 : index
    %3 = vector.load %arg5[%c17, %c0_3, %c0_4] : memref<18x48x96xbf16, #tpu.memory_space<vmem>>, vector<1x48x96xbf16>
    tpu.vector_store %arg5[%c17, %c0_3, %c0_4], %2 {strides = array<i32>} : memref<18x48x96xbf16, #tpu.memory_space<vmem>>, vector<1x48x96xbf16>,
    %cst_5 = arith.constant 0.000000e+00 : bf16
    %4 = vector.broadcast %cst_5 : bf16 to vector<18x16x96xbf16>
    %c0_6 = arith.constant 0 : index
    %c0_7 = arith.constant 0 : index
    %c0_8 = arith.constant 0 : index
    %5 = vector.load %arg5[%c0_6, %c0_7, %c0_8] : memref<18x48x96xbf16, #tpu.memory_space<vmem>>, vector<18x16x96xbf16>
    tpu.vector_store %arg5[%c0_6, %c0_7, %c0_8], %4 {strides = array<i32>} : memref<18x48x96xbf16, #tpu.memory_space<vmem>>, vector<18x16x96xbf16>,
    %cst_9 = arith.constant 0.000000e+00 : bf16
    %6 = vector.broadcast %cst_9 : bf16 to vector<18x16x96xbf16>
    %c0_10 = arith.constant 0 : index
    %c32 = arith.constant 32 : index
    %c0_11 = arith.constant 0 : index
    %7 = vector.load %arg5[%c0_10, %c32, %c0_11] : memref<18x48x96xbf16, #tpu.memory_space<vmem>>, vector<18x16x96xbf16>
    tpu.vector_store %arg5[%c0_10, %c32, %c0_11], %6 {strides = array<i32>} : memref<18x48x96xbf16, #tpu.memory_space<vmem>>, vector<18x16x96xbf16>,
    %c0_12 = arith.constant 0 : index
    %c0_13 = arith.constant 0 : index
    %c0_14 = arith.constant 0 : index
    %c0_15 = arith.constant 0 : index
    %8 = vector.load %arg1[%c0_12, %c0_13, %c0_14, %c0_15] : memref<1x16x16x32xf32, #tpu.memory_space<vmem>>, vector<1x16x16x32xf32>
    %9 = vector.shape_cast %8 : vector<1x16x16x32xf32> to vector<16x16x32xf32>
    %10 = arith.truncf %9 : vector<16x16x32xf32> to vector<16x16x32xbf16>
    %c1 = arith.constant 1 : index
    %c16 = arith.constant 16 : index
    %c0_16 = arith.constant 0 : index
    %11 = vector.load %arg5[%c1, %c16, %c0_16] : memref<18x48x96xbf16, #tpu.memory_space<vmem>>, vector<16x16x32xbf16>
    tpu.vector_store %arg5[%c1, %c16, %c0_16], %10 {strides = array<i32>} : memref<18x48x96xbf16, #tpu.memory_space<vmem>>, vector<16x16x32xbf16>,
    %cst_17 = arith.constant 0.000000e+00 : f32
    %12 = vector.broadcast %cst_17 : f32 to vector<256x16xf32>
    %c0_18 = arith.constant 0 : index
    %c15 = arith.constant 15 : index
    %c0_19 = arith.constant 0 : index
    %13 = vector.load %arg5[%c0_18, %c15, %c0_19] : memref<18x48x96xbf16, #tpu.memory_space<vmem>>, vector<18x16x32xbf16>
    %14 = vector.shape_cast %13 : vector<18x16x32xbf16> to vector<288x32xbf16>
    %c0_20 = arith.constant 0 : index
    %c0_21 = arith.constant 0 : index
    %c0_22 = arith.constant 0 : index
    %c0_23 = arith.constant 0 : index
    %15 = vector.load %arg2[%c0_20, %c0_21, %c0_22, %c0_23] : memref<5x3x96x96xbf16, #tpu.memory_space<vmem>>, vector<1x1x32x48xbf16>
    %16 = vector.shape_cast %15 : vector<1x1x32x48xbf16> to vector<32x48xbf16>
    %cst_24 = arith.constant dense<0.000000e+00> : vector<288x48xf32>
    %17 = tpu.matmul %14, %16, %cst_24 {dimension_numbers = #tpu.dot_dimension_numbers<[1], [0], [0], [1], [0, 0, 1, 1], [], []>} : vector<288x32xbf16>, vector<32x48xbf16>, vector<288x48xf32> -> vector<288x48xf32>
    %18 = vector.extract_strided_slice %17 {offsets = [0, 0], sizes = [256, 16], strides = [1, 1]} : vector<288x48xf32> to vector<256x16xf32>
    %19 = arith.addf %12, %18 : vector<256x16xf32>
    %20 = vector.extract_strided_slice %17 {offsets = [16, 16], sizes = [256, 16], strides = [1, 1]} : vector<288x48xf32> to vector<256x16xf32>
    %21 = arith.addf %19, %20 : vector<256x16xf32>
    %22 = vector.extract_strided_slice %17 {offsets = [32, 32], sizes = [256, 16], strides = [1, 1]} : vector<288x48xf32> to vector<256x16xf32>
    %23 = arith.addf %21, %22 : vector<256x16xf32>
    %c0_25 = arith.constant 0 : index
    %c16_26 = arith.constant 16 : index
    %c0_27 = arith.constant 0 : index
    %24 = vector.load %arg5[%c0_25, %c16_26, %c0_27] : memref<18x48x96xbf16, #tpu.memory_space<vmem>>, vector<18x16x32xbf16>
    %25 = vector.shape_cast %24 : vector<18x16x32xbf16> to vector<288x32xbf16>
    %c0_28 = arith.constant 0 : index
    %c1_29 = arith.constant 1 : index
    %c0_30 = arith.constant 0 : index
    %c0_31 = arith.constant 0 : index
    %26 = vector.load %arg2[%c0_28, %c1_29, %c0_30, %c0_31] : memref<5x3x96x96xbf16, #tpu.memory_space<vmem>>, vector<1x1x32x48xbf16>
    %27 = vector.shape_cast %26 : vector<1x1x32x48xbf16> to vector<32x48xbf16>
    %cst_32 = arith.constant dense<0.000000e+00> : vector<288x48xf32>
    %28 = tpu.matmul %25, %27, %cst_32 {dimension_numbers = #tpu.dot_dimension_numbers<[1], [0], [0], [1], [0, 0, 1, 1], [], []>} : vector<288x32xbf16>, vector<32x48xbf16>, vector<288x48xf32> -> vector<288x48xf32>
    %29 = vector.extract_strided_slice %28 {offsets = [0, 0], sizes = [256, 16], strides = [1, 1]} : vector<288x48xf32> to vector<256x16xf32>
    %30 = arith.addf %23, %29 : vector<256x16xf32>
    %31 = vector.extract_strided_slice %28 {offsets = [16, 16], sizes = [256, 16], strides = [1, 1]} : vector<288x48xf32> to vector<256x16xf32>
    %32 = arith.addf %30, %31 : vector<256x16xf32>
    %33 = vector.extract_strided_slice %28 {offsets = [32, 32], sizes = [256, 16], strides = [1, 1]} : vector<288x48xf32> to vector<256x16xf32>
    %34 = arith.addf %32, %33 : vector<256x16xf32>
    %c0_33 = arith.constant 0 : index
    %c17_34 = arith.constant 17 : index
    %c0_35 = arith.constant 0 : index
    %35 = vector.load %arg5[%c0_33, %c17_34, %c0_35] : memref<18x48x96xbf16, #tpu.memory_space<vmem>>, vector<18x16x32xbf16>
    %36 = vector.shape_cast %35 : vector<18x16x32xbf16> to vector<288x32xbf16>
    %c0_36 = arith.constant 0 : index
    %c2 = arith.constant 2 : index
    %c0_37 = arith.constant 0 : index
    %c0_38 = arith.constant 0 : index
    %37 = vector.load %arg2[%c0_36, %c2, %c0_37, %c0_38] : memref<5x3x96x96xbf16, #tpu.memory_space<vmem>>, vector<1x1x32x48xbf16>
    %38 = vector.shape_cast %37 : vector<1x1x32x48xbf16> to vector<32x48xbf16>
    %cst_39 = arith.constant dense<0.000000e+00> : vector<288x48xf32>
    %39 = tpu.matmul %36, %38, %cst_39 {dimension_numbers = #tpu.dot_dimension_numbers<[1], [0], [0], [1], [0, 0, 1, 1], [], []>} : vector<288x32xbf16>, vector<32x48xbf16>, vector<288x48xf32> -> vector<288x48xf32>
    %40 = vector.extract_strided_slice %39 {offsets = [0, 0], sizes = [256, 16], strides = [1, 1]} : vector<288x48xf32> to vector<256x16xf32>
    %41 = arith.addf %34, %40 : vector<256x16xf32>
    %42 = vector.extract_strided_slice %39 {offsets = [16, 16], sizes = [256, 16], strides = [1, 1]} : vector<288x48xf32> to vector<256x16xf32>
    %43 = arith.addf %41, %42 : vector<256x16xf32>
    %44 = vector.extract_strided_slice %39 {offsets = [32, 32], sizes = [256, 16], strides = [1, 1]} : vector<288x48xf32> to vector<256x16xf32>
    %45 = arith.addf %43, %44 : vector<256x16xf32>
    %c0_40 = arith.constant 0 : index
    %c0_41 = arith.constant 0 : index
    %c0_42 = arith.constant 0 : index
    %46 = vector.load %arg3[%c0_40, %c0_41, %c0_42] : memref<5x1x32xf32, #tpu.memory_space<vmem>>, vector<1x1x16xf32>
    %47 = vector.shape_cast %46 : vector<1x1x16xf32> to vector<1x16xf32>
    %48 = vector.broadcast %47 : vector<1x16xf32> to vector<256x16xf32>
    %49 = arith.addf %45, %48 : vector<256x16xf32>
    %cst_43 = arith.constant 0.000000e+00 : f32
    %50 = vector.broadcast %cst_43 : f32 to vector<256x16xf32>
    %51 = arith.cmpf oge, %49, %50 : vector<256x16xf32>
    %cst_44 = arith.constant 2.000000e-01 : f32
    %52 = vector.broadcast %cst_44 : f32 to vector<256x16xf32>
    %53 = arith.mulf %52, %49 : vector<256x16xf32>
    %54 = arith.select %51, %49, %53 : vector<256x16xi1>, vector<256x16xf32>
    %55 = vector.shape_cast %54 : vector<256x16xf32> to vector<16x16x16xf32>
    %56 = arith.truncf %55 : vector<16x16x16xf32> to vector<16x16x16xbf16>
    %c1_45 = arith.constant 1 : index
    %c16_46 = arith.constant 16 : index
    %c32_47 = arith.constant 32 : index
    %57 = vector.load %arg5[%c1_45, %c16_46, %c32_47] : memref<18x48x96xbf16, #tpu.memory_space<vmem>>, vector<16x16x16xbf16>
    tpu.vector_store %arg5[%c1_45, %c16_46, %c32_47], %56 {strides = array<i32>} : memref<18x48x96xbf16, #tpu.memory_space<vmem>>, vector<16x16x16xbf16>,
    %cst_48 = arith.constant 0.000000e+00 : f32
    %58 = vector.broadcast %cst_48 : f32 to vector<256x16xf32>
    %c0_49 = arith.constant 0 : index
    %c15_50 = arith.constant 15 : index
    %c0_51 = arith.constant 0 : index
    %59 = vector.load %arg5[%c0_49, %c15_50, %c0_51] : memref<18x48x96xbf16, #tpu.memory_space<vmem>>, vector<18x16x48xbf16>
    %60 = vector.shape_cast %59 : vector<18x16x48xbf16> to vector<288x48xbf16>
    %c1_52 = arith.constant 1 : index
    %c0_53 = arith.constant 0 : index
    %c0_54 = arith.constant 0 : index
    %c0_55 = arith.constant 0 : index
    %61 = vector.load %arg2[%c1_52, %c0_53, %c0_54, %c0_55] : memref<5x3x96x96xbf16, #tpu.memory_space<vmem>>, vector<1x1x48x48xbf16>
    %62 = vector.shape_cast %61 : vector<1x1x48x48xbf16> to vector<48x48xbf16>
    %cst_56 = arith.constant dense<0.000000e+00> : vector<288x48xf32>
    %63 = tpu.matmul %60, %62, %cst_56 {dimension_numbers = #tpu.dot_dimension_numbers<[1], [0], [0], [1], [0, 0, 1, 1], [], []>} : vector<288x48xbf16>, vector<48x48xbf16>, vector<288x48xf32> -> vector<288x48xf32>
    %64 = vector.extract_strided_slice %63 {offsets = [0, 0], sizes = [256, 16], strides = [1, 1]} : vector<288x48xf32> to vector<256x16xf32>
    %65 = arith.addf %58, %64 : vector<256x16xf32>
    %66 = vector.extract_strided_slice %63 {offsets = [16, 16], sizes = [256, 16], strides = [1, 1]} : vector<288x48xf32> to vector<256x16xf32>
    %67 = arith.addf %65, %66 : vector<256x16xf32>
    %68 = vector.extract_strided_slice %63 {offsets = [32, 32], sizes = [256, 16], strides = [1, 1]} : vector<288x48xf32> to vector<256x16xf32>
    %69 = arith.addf %67, %68 : vector<256x16xf32>
    %c0_57 = arith.constant 0 : index
    %c16_58 = arith.constant 16 : index
    %c0_59 = arith.constant 0 : index
    %70 = vector.load %arg5[%c0_57, %c16_58, %c0_59] : memref<18x48x96xbf16, #tpu.memory_space<vmem>>, vector<18x16x48xbf16>
    %71 = vector.shape_cast %70 : vector<18x16x48xbf16> to vector<288x48xbf16>
    %c1_60 = arith.constant 1 : index
    %c1_61 = arith.constant 1 : index
    %c0_62 = arith.constant 0 : index
    %c0_63 = arith.constant 0 : index
    %72 = vector.load %arg2[%c1_60, %c1_61, %c0_62, %c0_63] : memref<5x3x96x96xbf16, #tpu.memory_space<vmem>>, vector<1x1x48x48xbf16>
    %73 = vector.shape_cast %72 : vector<1x1x48x48xbf16> to vector<48x48xbf16>
    %cst_64 = arith.constant dense<0.000000e+00> : vector<288x48xf32>
    %74 = tpu.matmul %71, %73, %cst_64 {dimension_numbers = #tpu.dot_dimension_numbers<[1], [0], [0], [1], [0, 0, 1, 1], [], []>} : vector<288x48xbf16>, vector<48x48xbf16>, vector<288x48xf32> -> vector<288x48xf32>
    %75 = vector.extract_strided_slice %74 {offsets = [0, 0], sizes = [256, 16], strides = [1, 1]} : vector<288x48xf32> to vector<256x16xf32>
    %76 = arith.addf %69, %75 : vector<256x16xf32>
    %77 = vector.extract_strided_slice %74 {offsets = [16, 16], sizes = [256, 16], strides = [1, 1]} : vector<288x48xf32> to vector<256x16xf32>
    %78 = arith.addf %76, %77 : vector<256x16xf32>
    %79 = vector.extract_strided_slice %74 {offsets = [32, 32], sizes = [256, 16], strides = [1, 1]} : vector<288x48xf32> to vector<256x16xf32>
    %80 = arith.addf %78, %79 : vector<256x16xf32>
    %c0_65 = arith.constant 0 : index
    %c17_66 = arith.constant 17 : index
    %c0_67 = arith.constant 0 : index
    %81 = vector.load %arg5[%c0_65, %c17_66, %c0_67] : memref<18x48x96xbf16, #tpu.memory_space<vmem>>, vector<18x16x48xbf16>
    %82 = vector.shape_cast %81 : vector<18x16x48xbf16> to vector<288x48xbf16>
    %c1_68 = arith.constant 1 : index
    %c2_69 = arith.constant 2 : index
    %c0_70 = arith.constant 0 : index
    %c0_71 = arith.constant 0 : index
    %83 = vector.load %arg2[%c1_68, %c2_69, %c0_70, %c0_71] : memref<5x3x96x96xbf16, #tpu.memory_space<vmem>>, vector<1x1x48x48xbf16>
    %84 = vector.shape_cast %83 : vector<1x1x48x48xbf16> to vector<48x48xbf16>
    %cst_72 = arith.constant dense<0.000000e+00> : vector<288x48xf32>
    %85 = tpu.matmul %82, %84, %cst_72 {dimension_numbers = #tpu.dot_dimension_numbers<[1], [0], [0], [1], [0, 0, 1, 1], [], []>} : vector<288x48xbf16>, vector<48x48xbf16>, vector<288x48xf32> -> vector<288x48xf32>
    %86 = vector.extract_strided_slice %85 {offsets = [0, 0], sizes = [256, 16], strides = [1, 1]} : vector<288x48xf32> to vector<256x16xf32>
    %87 = arith.addf %80, %86 : vector<256x16xf32>
    %88 = vector.extract_strided_slice %85 {offsets = [16, 16], sizes = [256, 16], strides = [1, 1]} : vector<288x48xf32> to vector<256x16xf32>
    %89 = arith.addf %87, %88 : vector<256x16xf32>
    %90 = vector.extract_strided_slice %85 {offsets = [32, 32], sizes = [256, 16], strides = [1, 1]} : vector<288x48xf32> to vector<256x16xf32>
    %91 = arith.addf %89, %90 : vector<256x16xf32>
    %c1_73 = arith.constant 1 : index
    %c0_74 = arith.constant 0 : index
    %c0_75 = arith.constant 0 : index
    %92 = vector.load %arg3[%c1_73, %c0_74, %c0_75] : memref<5x1x32xf32, #tpu.memory_space<vmem>>, vector<1x1x16xf32>
    %93 = vector.shape_cast %92 : vector<1x1x16xf32> to vector<1x16xf32>
    %94 = vector.broadcast %93 : vector<1x16xf32> to vector<256x16xf32>
    %95 = arith.addf %91, %94 : vector<256x16xf32>
    %cst_76 = arith.constant 0.000000e+00 : f32
    %96 = vector.broadcast %cst_76 : f32 to vector<256x16xf32>
    %97 = arith.cmpf oge, %95, %96 : vector<256x16xf32>
    %cst_77 = arith.constant 2.000000e-01 : f32
    %98 = vector.broadcast %cst_77 : f32 to vector<256x16xf32>
    %99 = arith.mulf %98, %95 : vector<256x16xf32>
    %100 = arith.select %97, %95, %99 : vector<256x16xi1>, vector<256x16xf32>
    %101 = vector.shape_cast %100 : vector<256x16xf32> to vector<16x16x16xf32>
    %102 = arith.truncf %101 : vector<16x16x16xf32> to vector<16x16x16xbf16>
    %c1_78 = arith.constant 1 : index
    %c16_79 = arith.constant 16 : index
    %c48 = arith.constant 48 : index
    %103 = vector.load %arg5[%c1_78, %c16_79, %c48] : memref<18x48x96xbf16, #tpu.memory_space<vmem>>, vector<16x16x16xbf16>
    tpu.vector_store %arg5[%c1_78, %c16_79, %c48], %102 {strides = array<i32>} : memref<18x48x96xbf16, #tpu.memory_space<vmem>>, vector<16x16x16xbf16>,
    %cst_80 = arith.constant 0.000000e+00 : f32
    %104 = vector.broadcast %cst_80 : f32 to vector<256x16xf32>
    %c0_81 = arith.constant 0 : index
    %c15_82 = arith.constant 15 : index
    %c0_83 = arith.constant 0 : index
    %105 = vector.load %arg5[%c0_81, %c15_82, %c0_83] : memref<18x48x96xbf16, #tpu.memory_space<vmem>>, vector<18x16x64xbf16>
    %106 = vector.shape_cast %105 : vector<18x16x64xbf16> to vector<288x64xbf16>
    %c2_84 = arith.constant 2 : index
    %c0_85 = arith.constant 0 : index
    %c0_86 = arith.constant 0 : index
    %c0_87 = arith.constant 0 : index
    %107 = vector.load %arg2[%c2_84, %c0_85, %c0_86, %c0_87] : memref<5x3x96x96xbf16, #tpu.memory_space<vmem>>, vector<1x1x64x48xbf16>
    %108 = vector.shape_cast %107 : vector<1x1x64x48xbf16> to vector<64x48xbf16>
    %cst_88 = arith.constant dense<0.000000e+00> : vector<288x48xf32>
    %109 = tpu.matmul %106, %108, %cst_88 {dimension_numbers = #tpu.dot_dimension_numbers<[1], [0], [0], [1], [0, 0, 1, 1], [], []>} : vector<288x64xbf16>, vector<64x48xbf16>, vector<288x48xf32> -> vector<288x48xf32>
    %110 = vector.extract_strided_slice %109 {offsets = [0, 0], sizes = [256, 16], strides = [1, 1]} : vector<288x48xf32> to vector<256x16xf32>
    %111 = arith.addf %104, %110 : vector<256x16xf32>
    %112 = vector.extract_strided_slice %109 {offsets = [16, 16], sizes = [256, 16], strides = [1, 1]} : vector<288x48xf32> to vector<256x16xf32>
    %113 = arith.addf %111, %112 : vector<256x16xf32>
    %114 = vector.extract_strided_slice %109 {offsets = [32, 32], sizes = [256, 16], strides = [1, 1]} : vector<288x48xf32> to vector<256x16xf32>
    %115 = arith.addf %113, %114 : vector<256x16xf32>
    %c0_89 = arith.constant 0 : index
    %c16_90 = arith.constant 16 : index
    %c0_91 = arith.constant 0 : index
    %116 = vector.load %arg5[%c0_89, %c16_90, %c0_91] : memref<18x48x96xbf16, #tpu.memory_space<vmem>>, vector<18x16x64xbf16>
    %117 = vector.shape_cast %116 : vector<18x16x64xbf16> to vector<288x64xbf16>
    %c2_92 = arith.constant 2 : index
    %c1_93 = arith.constant 1 : index
    %c0_94 = arith.constant 0 : index
    %c0_95 = arith.constant 0 : index
    %118 = vector.load %arg2[%c2_92, %c1_93, %c0_94, %c0_95] : memref<5x3x96x96xbf16, #tpu.memory_space<vmem>>, vector<1x1x64x48xbf16>
    %119 = vector.shape_cast %118 : vector<1x1x64x48xbf16> to vector<64x48xbf16>
    %cst_96 = arith.constant dense<0.000000e+00> : vector<288x48xf32>
    %120 = tpu.matmul %117, %119, %cst_96 {dimension_numbers = #tpu.dot_dimension_numbers<[1], [0], [0], [1], [0, 0, 1, 1], [], []>} : vector<288x64xbf16>, vector<64x48xbf16>, vector<288x48xf32> -> vector<288x48xf32>
    %121 = vector.extract_strided_slice %120 {offsets = [0, 0], sizes = [256, 16], strides = [1, 1]} : vector<288x48xf32> to vector<256x16xf32>
    %122 = arith.addf %115, %121 : vector<256x16xf32>
    %123 = vector.extract_strided_slice %120 {offsets = [16, 16], sizes = [256, 16], strides = [1, 1]} : vector<288x48xf32> to vector<256x16xf32>
    %124 = arith.addf %122, %123 : vector<256x16xf32>
    %125 = vector.extract_strided_slice %120 {offsets = [32, 32], sizes = [256, 16], strides = [1, 1]} : vector<288x48xf32> to vector<256x16xf32>
    %126 = arith.addf %124, %125 : vector<256x16xf32>
    %c0_97 = arith.constant 0 : index
    %c17_98 = arith.constant 17 : index
    %c0_99 = arith.constant 0 : index
    %127 = vector.load %arg5[%c0_97, %c17_98, %c0_99] : memref<18x48x96xbf16, #tpu.memory_space<vmem>>, vector<18x16x64xbf16>
    %128 = vector.shape_cast %127 : vector<18x16x64xbf16> to vector<288x64xbf16>
    %c2_100 = arith.constant 2 : index
    %c2_101 = arith.constant 2 : index
    %c0_102 = arith.constant 0 : index
    %c0_103 = arith.constant 0 : index
    %129 = vector.load %arg2[%c2_100, %c2_101, %c0_102, %c0_103] : memref<5x3x96x96xbf16, #tpu.memory_space<vmem>>, vector<1x1x64x48xbf16>
    %130 = vector.shape_cast %129 : vector<1x1x64x48xbf16> to vector<64x48xbf16>
    %cst_104 = arith.constant dense<0.000000e+00> : vector<288x48xf32>
    %131 = tpu.matmul %128, %130, %cst_104 {dimension_numbers = #tpu.dot_dimension_numbers<[1], [0], [0], [1], [0, 0, 1, 1], [], []>} : vector<288x64xbf16>, vector<64x48xbf16>, vector<288x48xf32> -> vector<288x48xf32>
    %132 = vector.extract_strided_slice %131 {offsets = [0, 0], sizes = [256, 16], strides = [1, 1]} : vector<288x48xf32> to vector<256x16xf32>
    %133 = arith.addf %126, %132 : vector<256x16xf32>
    %134 = vector.extract_strided_slice %131 {offsets = [16, 16], sizes = [256, 16], strides = [1, 1]} : vector<288x48xf32> to vector<256x16xf32>
    %135 = arith.addf %133, %134 : vector<256x16xf32>
    %136 = vector.extract_strided_slice %131 {offsets = [32, 32], sizes = [256, 16], strides = [1, 1]} : vector<288x48xf32> to vector<256x16xf32>
    %137 = arith.addf %135, %136 : vector<256x16xf32>
    %c2_105 = arith.constant 2 : index
    %c0_106 = arith.constant 0 : index
    %c0_107 = arith.constant 0 : index
    %138 = vector.load %arg3[%c2_105, %c0_106, %c0_107] : memref<5x1x32xf32, #tpu.memory_space<vmem>>, vector<1x1x16xf32>
    %139 = vector.shape_cast %138 : vector<1x1x16xf32> to vector<1x16xf32>
    %140 = vector.broadcast %139 : vector<1x16xf32> to vector<256x16xf32>
    %141 = arith.addf %137, %140 : vector<256x16xf32>
    %cst_108 = arith.constant 0.000000e+00 : f32
    %142 = vector.broadcast %cst_108 : f32 to vector<256x16xf32>
    %143 = arith.cmpf oge, %141, %142 : vector<256x16xf32>
    %cst_109 = arith.constant 2.000000e-01 : f32
    %144 = vector.broadcast %cst_109 : f32 to vector<256x16xf32>
    %145 = arith.mulf %144, %141 : vector<256x16xf32>
    %146 = arith.select %143, %141, %145 : vector<256x16xi1>, vector<256x16xf32>
    %147 = vector.shape_cast %146 : vector<256x16xf32> to vector<16x16x16xf32>
    %148 = arith.truncf %147 : vector<16x16x16xf32> to vector<16x16x16xbf16>
    %c1_110 = arith.constant 1 : index
    %c16_111 = arith.constant 16 : index
    %c64 = arith.constant 64 : index
    %149 = vector.load %arg5[%c1_110, %c16_111, %c64] : memref<18x48x96xbf16, #tpu.memory_space<vmem>>, vector<16x16x16xbf16>
    tpu.vector_store %arg5[%c1_110, %c16_111, %c64], %148 {strides = array<i32>} : memref<18x48x96xbf16, #tpu.memory_space<vmem>>, vector<16x16x16xbf16>,
    %cst_112 = arith.constant 0.000000e+00 : f32
    %150 = vector.broadcast %cst_112 : f32 to vector<256x16xf32>
    %c0_113 = arith.constant 0 : index
    %c15_114 = arith.constant 15 : index
    %c0_115 = arith.constant 0 : index
    %151 = vector.load %arg5[%c0_113, %c15_114, %c0_115] : memref<18x48x96xbf16, #tpu.memory_space<vmem>>, vector<18x16x80xbf16>
    %152 = vector.shape_cast %151 : vector<18x16x80xbf16> to vector<288x80xbf16>
    %c3 = arith.constant 3 : index
    %c0_116 = arith.constant 0 : index
    %c0_117 = arith.constant 0 : index
    %c0_118 = arith.constant 0 : index
    %153 = vector.load %arg2[%c3, %c0_116, %c0_117, %c0_118] : memref<5x3x96x96xbf16, #tpu.memory_space<vmem>>, vector<1x1x80x48xbf16>
    %154 = vector.shape_cast %153 : vector<1x1x80x48xbf16> to vector<80x48xbf16>
    %cst_119 = arith.constant dense<0.000000e+00> : vector<288x48xf32>
    %155 = tpu.matmul %152, %154, %cst_119 {dimension_numbers = #tpu.dot_dimension_numbers<[1], [0], [0], [1], [0, 0, 1, 1], [], []>} : vector<288x80xbf16>, vector<80x48xbf16>, vector<288x48xf32> -> vector<288x48xf32>
    %156 = vector.extract_strided_slice %155 {offsets = [0, 0], sizes = [256, 16], strides = [1, 1]} : vector<288x48xf32> to vector<256x16xf32>
    %157 = arith.addf %150, %156 : vector<256x16xf32>
    %158 = vector.extract_strided_slice %155 {offsets = [16, 16], sizes = [256, 16], strides = [1, 1]} : vector<288x48xf32> to vector<256x16xf32>
    %159 = arith.addf %157, %158 : vector<256x16xf32>
    %160 = vector.extract_strided_slice %155 {offsets = [32, 32], sizes = [256, 16], strides = [1, 1]} : vector<288x48xf32> to vector<256x16xf32>
    %161 = arith.addf %159, %160 : vector<256x16xf32>
    %c0_120 = arith.constant 0 : index
    %c16_121 = arith.constant 16 : index
    %c0_122 = arith.constant 0 : index
    %162 = vector.load %arg5[%c0_120, %c16_121, %c0_122] : memref<18x48x96xbf16, #tpu.memory_space<vmem>>, vector<18x16x80xbf16>
    %163 = vector.shape_cast %162 : vector<18x16x80xbf16> to vector<288x80xbf16>
    %c3_123 = arith.constant 3 : index
    %c1_124 = arith.constant 1 : index
    %c0_125 = arith.constant 0 : index
    %c0_126 = arith.constant 0 : index
    %164 = vector.load %arg2[%c3_123, %c1_124, %c0_125, %c0_126] : memref<5x3x96x96xbf16, #tpu.memory_space<vmem>>, vector<1x1x80x48xbf16>
    %165 = vector.shape_cast %164 : vector<1x1x80x48xbf16> to vector<80x48xbf16>
    %cst_127 = arith.constant dense<0.000000e+00> : vector<288x48xf32>
    %166 = tpu.matmul %163, %165, %cst_127 {dimension_numbers = #tpu.dot_dimension_numbers<[1], [0], [0], [1], [0, 0, 1, 1], [], []>} : vector<288x80xbf16>, vector<80x48xbf16>, vector<288x48xf32> -> vector<288x48xf32>
    %167 = vector.extract_strided_slice %166 {offsets = [0, 0], sizes = [256, 16], strides = [1, 1]} : vector<288x48xf32> to vector<256x16xf32>
    %168 = arith.addf %161, %167 : vector<256x16xf32>
    %169 = vector.extract_strided_slice %166 {offsets = [16, 16], sizes = [256, 16], strides = [1, 1]} : vector<288x48xf32> to vector<256x16xf32>
    %170 = arith.addf %168, %169 : vector<256x16xf32>
    %171 = vector.extract_strided_slice %166 {offsets = [32, 32], sizes = [256, 16], strides = [1, 1]} : vector<288x48xf32> to vector<256x16xf32>
    %172 = arith.addf %170, %171 : vector<256x16xf32>
    %c0_128 = arith.constant 0 : index
    %c17_129 = arith.constant 17 : index
    %c0_130 = arith.constant 0 : index
    %173 = vector.load %arg5[%c0_128, %c17_129, %c0_130] : memref<18x48x96xbf16, #tpu.memory_space<vmem>>, vector<18x16x80xbf16>
    %174 = vector.shape_cast %173 : vector<18x16x80xbf16> to vector<288x80xbf16>
    %c3_131 = arith.constant 3 : index
    %c2_132 = arith.constant 2 : index
    %c0_133 = arith.constant 0 : index
    %c0_134 = arith.constant 0 : index
    %175 = vector.load %arg2[%c3_131, %c2_132, %c0_133, %c0_134] : memref<5x3x96x96xbf16, #tpu.memory_space<vmem>>, vector<1x1x80x48xbf16>
    %176 = vector.shape_cast %175 : vector<1x1x80x48xbf16> to vector<80x48xbf16>
    %cst_135 = arith.constant dense<0.000000e+00> : vector<288x48xf32>
    %177 = tpu.matmul %174, %176, %cst_135 {dimension_numbers = #tpu.dot_dimension_numbers<[1], [0], [0], [1], [0, 0, 1, 1], [], []>} : vector<288x80xbf16>, vector<80x48xbf16>, vector<288x48xf32> -> vector<288x48xf32>
    %178 = vector.extract_strided_slice %177 {offsets = [0, 0], sizes = [256, 16], strides = [1, 1]} : vector<288x48xf32> to vector<256x16xf32>
    %179 = arith.addf %172, %178 : vector<256x16xf32>
    %180 = vector.extract_strided_slice %177 {offsets = [16, 16], sizes = [256, 16], strides = [1, 1]} : vector<288x48xf32> to vector<256x16xf32>
    %181 = arith.addf %179, %180 : vector<256x16xf32>
    %182 = vector.extract_strided_slice %177 {offsets = [32, 32], sizes = [256, 16], strides = [1, 1]} : vector<288x48xf32> to vector<256x16xf32>
    %183 = arith.addf %181, %182 : vector<256x16xf32>
    %c3_136 = arith.constant 3 : index
    %c0_137 = arith.constant 0 : index
    %c0_138 = arith.constant 0 : index
    %184 = vector.load %arg3[%c3_136, %c0_137, %c0_138] : memref<5x1x32xf32, #tpu.memory_space<vmem>>, vector<1x1x16xf32>
    %185 = vector.shape_cast %184 : vector<1x1x16xf32> to vector<1x16xf32>
    %186 = vector.broadcast %185 : vector<1x16xf32> to vector<256x16xf32>
    %187 = arith.addf %183, %186 : vector<256x16xf32>
    %cst_139 = arith.constant 0.000000e+00 : f32
    %188 = vector.broadcast %cst_139 : f32 to vector<256x16xf32>
    %189 = arith.cmpf oge, %187, %188 : vector<256x16xf32>
    %cst_140 = arith.constant 2.000000e-01 : f32
    %190 = vector.broadcast %cst_140 : f32 to vector<256x16xf32>
    %191 = arith.mulf %190, %187 : vector<256x16xf32>
    %192 = arith.select %189, %187, %191 : vector<256x16xi1>, vector<256x16xf32>
    %193 = vector.shape_cast %192 : vector<256x16xf32> to vector<16x16x16xf32>
    %194 = arith.truncf %193 : vector<16x16x16xf32> to vector<16x16x16xbf16>
    %c1_141 = arith.constant 1 : index
    %c16_142 = arith.constant 16 : index
    %c80 = arith.constant 80 : index
    %195 = vector.load %arg5[%c1_141, %c16_142, %c80] : memref<18x48x96xbf16, #tpu.memory_space<vmem>>, vector<16x16x16xbf16>
    tpu.vector_store %arg5[%c1_141, %c16_142, %c80], %194 {strides = array<i32>} : memref<18x48x96xbf16, #tpu.memory_space<vmem>>, vector<16x16x16xbf16>,
    %cst_143 = arith.constant 0.000000e+00 : f32
    %196 = vector.broadcast %cst_143 : f32 to vector<256x32xf32>
    %c0_144 = arith.constant 0 : index
    %c15_145 = arith.constant 15 : index
    %c0_146 = arith.constant 0 : index
    %197 = vector.load %arg5[%c0_144, %c15_145, %c0_146] : memref<18x48x96xbf16, #tpu.memory_space<vmem>>, vector<18x16x96xbf16>
    %198 = vector.shape_cast %197 : vector<18x16x96xbf16> to vector<288x96xbf16>
    %c4 = arith.constant 4 : index
    %c0_147 = arith.constant 0 : index
    %c0_148 = arith.constant 0 : index
    %c0_149 = arith.constant 0 : index
    %199 = vector.load %arg2[%c4, %c0_147, %c0_148, %c0_149] : memref<5x3x96x96xbf16, #tpu.memory_space<vmem>>, vector<1x1x96x96xbf16>
    %200 = vector.shape_cast %199 : vector<1x1x96x96xbf16> to vector<96x96xbf16>
    %cst_150 = arith.constant dense<0.000000e+00> : vector<288x96xf32>
    %201 = tpu.matmul %198, %200, %cst_150 {dimension_numbers = #tpu.dot_dimension_numbers<[1], [0], [0], [1], [0, 0, 1, 1], [], []>} : vector<288x96xbf16>, vector<96x96xbf16>, vector<288x96xf32> -> vector<288x96xf32>
    %202 = vector.extract_strided_slice %201 {offsets = [0, 0], sizes = [256, 32], strides = [1, 1]} : vector<288x96xf32> to vector<256x32xf32>
    %203 = arith.addf %196, %202 : vector<256x32xf32>
    %204 = vector.extract_strided_slice %201 {offsets = [16, 32], sizes = [256, 32], strides = [1, 1]} : vector<288x96xf32> to vector<256x32xf32>
    %205 = arith.addf %203, %204 : vector<256x32xf32>
    %206 = vector.extract_strided_slice %201 {offsets = [32, 64], sizes = [256, 32], strides = [1, 1]} : vector<288x96xf32> to vector<256x32xf32>
    %207 = arith.addf %205, %206 : vector<256x32xf32>
    %c0_151 = arith.constant 0 : index
    %c16_152 = arith.constant 16 : index
    %c0_153 = arith.constant 0 : index
    %208 = vector.load %arg5[%c0_151, %c16_152, %c0_153] : memref<18x48x96xbf16, #tpu.memory_space<vmem>>, vector<18x16x96xbf16>
    %209 = vector.shape_cast %208 : vector<18x16x96xbf16> to vector<288x96xbf16>
    %c4_154 = arith.constant 4 : index
    %c1_155 = arith.constant 1 : index
    %c0_156 = arith.constant 0 : index
    %c0_157 = arith.constant 0 : index
    %210 = vector.load %arg2[%c4_154, %c1_155, %c0_156, %c0_157] : memref<5x3x96x96xbf16, #tpu.memory_space<vmem>>, vector<1x1x96x96xbf16>
    %211 = vector.shape_cast %210 : vector<1x1x96x96xbf16> to vector<96x96xbf16>
    %cst_158 = arith.constant dense<0.000000e+00> : vector<288x96xf32>
    %212 = tpu.matmul %209, %211, %cst_158 {dimension_numbers = #tpu.dot_dimension_numbers<[1], [0], [0], [1], [0, 0, 1, 1], [], []>} : vector<288x96xbf16>, vector<96x96xbf16>, vector<288x96xf32> -> vector<288x96xf32>
    %213 = vector.extract_strided_slice %212 {offsets = [0, 0], sizes = [256, 32], strides = [1, 1]} : vector<288x96xf32> to vector<256x32xf32>
    %214 = arith.addf %207, %213 : vector<256x32xf32>
    %215 = vector.extract_strided_slice %212 {offsets = [16, 32], sizes = [256, 32], strides = [1, 1]} : vector<288x96xf32> to vector<256x32xf32>
    %216 = arith.addf %214, %215 : vector<256x32xf32>
    %217 = vector.extract_strided_slice %212 {offsets = [32, 64], sizes = [256, 32], strides = [1, 1]} : vector<288x96xf32> to vector<256x32xf32>
    %218 = arith.addf %216, %217 : vector<256x32xf32>
    %c0_159 = arith.constant 0 : index
    %c17_160 = arith.constant 17 : index
    %c0_161 = arith.constant 0 : index
    %219 = vector.load %arg5[%c0_159, %c17_160, %c0_161] : memref<18x48x96xbf16, #tpu.memory_space<vmem>>, vector<18x16x96xbf16>
    %220 = vector.shape_cast %219 : vector<18x16x96xbf16> to vector<288x96xbf16>
    %c4_162 = arith.constant 4 : index
    %c2_163 = arith.constant 2 : index
    %c0_164 = arith.constant 0 : index
    %c0_165 = arith.constant 0 : index
    %221 = vector.load %arg2[%c4_162, %c2_163, %c0_164, %c0_165] : memref<5x3x96x96xbf16, #tpu.memory_space<vmem>>, vector<1x1x96x96xbf16>
    %222 = vector.shape_cast %221 : vector<1x1x96x96xbf16> to vector<96x96xbf16>
    %cst_166 = arith.constant dense<0.000000e+00> : vector<288x96xf32>
    %223 = tpu.matmul %220, %222, %cst_166 {dimension_numbers = #tpu.dot_dimension_numbers<[1], [0], [0], [1], [0, 0, 1, 1], [], []>} : vector<288x96xbf16>, vector<96x96xbf16>, vector<288x96xf32> -> vector<288x96xf32>
    %224 = vector.extract_strided_slice %223 {offsets = [0, 0], sizes = [256, 32], strides = [1, 1]} : vector<288x96xf32> to vector<256x32xf32>
    %225 = arith.addf %218, %224 : vector<256x32xf32>
    %226 = vector.extract_strided_slice %223 {offsets = [16, 32], sizes = [256, 32], strides = [1, 1]} : vector<288x96xf32> to vector<256x32xf32>
    %227 = arith.addf %225, %226 : vector<256x32xf32>
    %228 = vector.extract_strided_slice %223 {offsets = [32, 64], sizes = [256, 32], strides = [1, 1]} : vector<288x96xf32> to vector<256x32xf32>
    %229 = arith.addf %227, %228 : vector<256x32xf32>
    %c4_167 = arith.constant 4 : index
    %c0_168 = arith.constant 0 : index
    %c0_169 = arith.constant 0 : index
    %230 = vector.load %arg3[%c4_167, %c0_168, %c0_169] : memref<5x1x32xf32, #tpu.memory_space<vmem>>, vector<1x1x32xf32>
    %231 = vector.shape_cast %230 : vector<1x1x32xf32> to vector<1x32xf32>
    %232 = vector.broadcast %231 : vector<1x32xf32> to vector<256x32xf32>
    %233 = arith.addf %229, %232 : vector<256x32xf32>
    %cst_170 = arith.constant 2.000000e-01 : f32
    %234 = vector.broadcast %cst_170 : f32 to vector<256x32xf32>
    %235 = arith.mulf %233, %234 : vector<256x32xf32>
    %236 = vector.shape_cast %9 : vector<16x16x32xf32> to vector<256x32xf32>
    %237 = arith.addf %235, %236 : vector<256x32xf32>
    %238 = vector.shape_cast %237 : vector<256x32xf32> to vector<16x16x32xf32>
    %c0_171 = arith.constant 0 : index
    %c0_172 = arith.constant 0 : index
    %c0_173 = arith.constant 0 : index
    %c0_174 = arith.constant 0 : index
    %239 = vector.load %arg4[%c0_171, %c0_172, %c0_173, %c0_174] : memref<1x16x16x32xf32, #tpu.memory_space<vmem>>, vector<1x16x16x32xf32>
    %240 = vector.shape_cast %239 : vector<1x16x16x32xf32> to vector<16x16x32xf32>
    %241 = vector.shape_cast %238 : vector<16x16x32xf32> to vector<1x16x16x32xf32>
    tpu.vector_store %arg4[%c0_171, %c0_172, %c0_173, %c0_174], %241 {strides = array<i32>} : memref<1x16x16x32xf32, #tpu.memory_space<vmem>>, vector<1x16x16x32xf32>,
    return
  }
  func.func @transform_0(%arg0: i32) -> (i32, i32, i32, i32) {
    %c0_i32 = arith.constant 0 : i32
    %c0_i32_0 = arith.constant 0 : i32
    %c0_i32_1 = arith.constant 0 : i32
    %c0_i32_2 = arith.constant 0 : i32
    return %arg0, %c0_i32, %c0_i32_0, %c0_i32_1 : i32, i32, i32, i32
  }
  func.func @transform_1(%arg0: i32) -> (i32, i32, i32, i32) {
    %c0_i32 = arith.constant 0 : i32
    %c0_i32_0 = arith.constant 0 : i32
    %c0_i32_1 = arith.constant 0 : i32
    %c0_i32_2 = arith.constant 0 : i32
    %c0_i32_3 = arith.constant 0 : i32
    return %c0_i32, %c0_i32_0, %c0_i32_1, %c0_i32_2 : i32, i32, i32, i32
  }
  func.func @transform_2(%arg0: i32) -> (i32, i32, i32) {
    %c0_i32 = arith.constant 0 : i32
    %c0_i32_0 = arith.constant 0 : i32
    %c0_i32_1 = arith.constant 0 : i32
    %c0_i32_2 = arith.constant 0 : i32
    return %c0_i32, %c0_i32_0, %c0_i32_1 : i32, i32, i32
  }
  func.func @transform_3(%arg0: i32) -> (i32, i32, i32, i32) {
    %c0_i32 = arith.constant 0 : i32
    %c0_i32_0 = arith.constant 0 : i32
    %c0_i32_1 = arith.constant 0 : i32
    %c0_i32_2 = arith.constant 0 : i32
    return %arg0, %c0_i32, %c0_i32_0, %c0_i32_1 : i32, i32, i32, i32
  }
}

</mosaic_0001>

<llo_original>
// kernel: rdb5c_forward.1
$region0: #{rdb5c_forward.1}
  #allocation0 [shape = 'u32[]', space=smem, size = 0x4, offset = 0x4, fixed_abs, tag = 'smem constant byte address 0x4 - core index']
  #allocation1 [shape = 'u32[144,128]{1,0:T(1,128)}', space=vmem, size = 0x12000, scoped, tag = 'internal scratch']
  #allocation2 [shape = 'bf16[18,48,96]{2,1,0:T(16,128)(2,1)}', space=vmem, size = 0x36000, scoped, tag = 'scratch operand']
  %s0 = inlined_call_operand.vmem [shape: f32[2,16,16,32], index: 0, kind: input, shape index: {}]
  %s1 = inlined_call_operand.vmem [shape: bf16[5,3,96,96], index: 1, kind: input, shape index: {}]
  %s2 = inlined_call_operand.vmem [shape: f32[5,1,32], index: 2, kind: input, shape index: {}]
  %s3 = inlined_call_operand.hbm [shape: f32[2,16,16,32], index: 3, kind: output, shape index: {}]
  %s4 = sld [smem:[#allocation0]]
  $region45: #{rdb5c_forward.1} parent=0
    _
  %s6 = ssub.s32 1, %s4
  %s7 = scalar_select 0, %s6, %s4
  $region1: #{rdb5c_forward.1} parent=0
    #allocation3 [shape = 'u8[262144]{0}', space=vmem, size = 0x40000, scoped, tag = 'output window, operand 0']
    #allocation4 [shape = 's32[2]{0}', space=sflag, size = 0x8, scoped, tag = 'scoped memory for rdb5c_forward.1']
    %8 = vsyncpa [#allocation4], 0
    %s9 = scalar_lea.sflag [#allocation4], 1
    %10 = vsyncpa %s9, 0
    loop: start=0, step=1, limit=4
    $region2: #{rdb5c_forward.1} parent=1 // loop_pre_header
      _
    $region3: #{rdb5c_forward.1} parent=1 // loop_header
      %s12 = sphi 0, %s16
      %p13 = scmp.ge.s32.totalorder %s12, 4
      %s22 = sphi 0, %s24
      %s25 = sphi 0, %s22
      %s26 = sphi 0, %s25
      %s42 = sphi 0, %s26
      %s46 = sphi 0, %s46
      %s48 = sphi 0, %s46
      %s49 = sphi 0, %s48
      %s63 = sphi 0, %s49
      %s67 = sphi 0, %s67
      %s69 = sphi 0, %s67
      %s70 = sphi 0, %s69
      %s84 = sphi 0, %s70
      %s90 = sphi 0, %s92
      %s93 = sphi 0, %s90
      %s94 = sphi 0, %s93
      %s110 = sphi 0, %s94
    $region4: #{rdb5c_forward.1} parent=1 // loop_header_branch
      %15 = sbr.rel (%p13) target = $region8
    $region5: #{rdb5c_forward.1} parent=1 // loop_body
      %s17 = ssub.s32 %s12, 1
      %s18 = ssub.s32 %s12, 2
      %s19 = sadd.s32 %s12, 1
      %s20 = ssub.s32 %s12, %s19
      %p21 = scmp.eq.s32.totalorder %s20, 0
      %s23 = sadd.s32 %s22, 1
      %s24 = scalar_select %p21, %s22, %s23
      %p27 = pneg %p21
      %p28 = scmp.eq.s32.totalorder %s12, 1
      %p29 = por %p27, %p28
      %p30 = scmp.ne.s32.totalorder %s22, %s25
      %p31 = scmp.eq.s32.totalorder %s12, 0
      %p32 = por %p30, %p31
      %p33 = scmp.ne.s32.totalorder %s22, %s25
      %p34 = scmp.eq.s32.totalorder %s17, 1
      %p35 = por %p33, %p34
      %p36 = scmp.ne.s32.totalorder %s25, %s26
      %p37 = scmp.eq.s32.totalorder %s17, 0
      %p38 = por %p36, %p37
      %p39 = scmp.ne.s32.totalorder %s25, %s26
      %p40 = scmp.eq.s32.totalorder %s18, 1
      %p41 = por %p39, %p40
      %p43 = scmp.ne.s32.totalorder %s26, %s42
      %p44 = scmp.eq.s32.totalorder %s18, 0
      %p45 = por %p43, %p44
      %s47 = sadd.s32 %s46, 1
      %p50 = scmp.eq.s32.totalorder %s12, 1
      %p51 = scmp.ne.s32.totalorder %s46, %s48
      %p52 = scmp.eq.s32.totalorder %s12, 0
      %p53 = por %p51, %p52
      %p54 = scmp.ne.s32.totalorder %s46, %s48
      %p55 = scmp.eq.s32.totalorder %s17, 1
      %p56 = por %p54, %p55
      %p57 = scmp.ne.s32.totalorder %s48, %s49
      %p58 = scmp.eq.s32.totalorder %s17, 0
      %p59 = por %p57, %p58
      %p60 = scmp.ne.s32.totalorder %s48, %s49
      %p61 = scmp.eq.s32.totalorder %s18, 1
      %p62 = por %p60, %p61
      %p64 = scmp.ne.s32.totalorder %s49, %s63
      %p65 = scmp.eq.s32.totalorder %s18, 0
      %p66 = por %p64, %p65
      %s68 = sadd.s32 %s67, 1
      %p71 = scmp.eq.s32.totalorder %s12, 1
      %p72 = scmp.ne.s32.totalorder %s67, %s69
      %p73 = scmp.eq.s32.totalorder %s12, 0
      %p74 = por %p72, %p73
      %p75 = scmp.ne.s32.totalorder %s67, %s69
      %p76 = scmp.eq.s32.totalorder %s17, 1
      %p77 = por %p75, %p76
      %p78 = scmp.ne.s32.totalorder %s69, %s70
      %p79 = scmp.eq.s32.totalorder %s17, 0
      %p80 = por %p78, %p79
      %p81 = scmp.ne.s32.totalorder %s69, %s70
      %p82 = scmp.eq.s32.totalorder %s18, 1
      %p83 = por %p81, %p82
      %p85 = scmp.ne.s32.totalorder %s70, %s84
      %p86 = scmp.eq.s32.totalorder %s18, 0
      %p87 = por %p85, %p86
      %s88 = ssub.s32 %s12, %s19
      %p89 = scmp.eq.s32.totalorder %s88, 0
      %s91 = sadd.s32 %s90, 1
      %s92 = scalar_select %p89, %s90, %s91
      %p95 = pneg %p89
      %p96 = scmp.eq.s32.totalorder %s12, 1
      %p97 = por %p95, %p96
      %p98 = scmp.ne.s32.totalorder %s90, %s93
      %p99 = scmp.eq.s32.totalorder %s12, 0
      %p100 = por %p98, %p99
      %p101 = scmp.ne.s32.totalorder %s90, %s93
      %p102 = scmp.eq.s32.totalorder %s17, 1
      %p103 = por %p101, %p102
      %p104 = scmp.ne.s32.totalorder %s93, %s94
      %p105 = scmp.eq.s32.totalorder %s17, 0
      %p106 = por %p104, %p105
      %p107 = scmp.ne.s32.totalorder %s93, %s94
      %p108 = scmp.eq.s32.totalorder %s18, 1
      %p109 = por %p107, %p108
      %p111 = scmp.ne.s32.totalorder %s94, %s110
      %p112 = scmp.eq.s32.totalorder %s18, 0
      %p113 = por %p111, %p112
      %p114 = scmp.le.s32.totalorder 1, %s12
      %p115 = scmp.lt.s32.totalorder %s12, 3
      %p116 = pnand %p114, %p115
      %p117 = pneg %p116
      // Predicated region
      $region9: #{rdb5c_forward.1} parent=5 // pred_check
        _
      $region10: #{rdb5c_forward.1} parent=5 // pred_check_branch
        %119 = sbr.rel (%p116) target = $region12
      $region11: #{rdb5c_forward.1} parent=5 // pred_region
        %s120 = ssub.s32 %s12, 1
        // Predicated region
        $region13: #{rdb5c_forward.1} parent=11 // pred_check
          %p121 = pneg %p59
        $region14: #{rdb5c_forward.1} parent=11 // pred_check_branch
          %123 = sbr.rel (%p121) target = $region16
        $region15: #{rdb5c_forward.1} parent=11 // pred_region
          _
        $region16: #{rdb5c_forward.1} parent=11 // pred_fallthru
          _
        // Predicated region
        $region17: #{rdb5c_forward.1} parent=11 // pred_check
          %p124 = pneg %p80
        $region18: #{rdb5c_forward.1} parent=11 // pred_check_branch
          %126 = sbr.rel (%p124) target = $region20
        $region19: #{rdb5c_forward.1} parent=11 // pred_region
          _
        $region20: #{rdb5c_forward.1} parent=11 // pred_fallthru
          _
      $region12: #{rdb5c_forward.1} parent=5 // pred_fallthru
        _
      %p127 = scmp.lt.s32.totalorder %s12, 2
      // Predicated region
      $region21: #{rdb5c_forward.1} parent=5 // pred_check
        %p128 = pneg %p127
      $region22: #{rdb5c_forward.1} parent=5 // pred_check_branch
        %130 = sbr.rel (%p128) target = $region24
      $region23: #{rdb5c_forward.1} parent=5 // pred_region
        // Predicated region
        $region25: #{rdb5c_forward.1} parent=23 // pred_check
          %p131 = pneg %p32
        $region26: #{rdb5c_forward.1} parent=23 // pred_check_branch
          %133 = sbr.rel (%p131) target = $region28
        $region27: #{rdb5c_forward.1} parent=23 // pred_region
          %p134 = scmp.lt.s32.totalorder %s12, 1
          %s135 = scalar_select %p134, %s12, 1
          %s136 = smul.addr %s135, 32
          %s137 = smul.addr %s136, 8
          %s138 = scalar_lea.vmem %s0, %s137
        $region28: #{rdb5c_forward.1} parent=23 // pred_fallthru
          _
      $region24: #{rdb5c_forward.1} parent=5 // pred_fallthru
        _
      %p139 = scmp.le.s32.totalorder 1, %s12
      %p140 = scmp.lt.s32.totalorder %s12, 3
      %p141 = pnand %p139, %p140
      %p142 = pneg %p141
      // Predicated region
      $region29: #{rdb5c_forward.1} parent=5 // pred_check
        _
      $region30: #{rdb5c_forward.1} parent=5 // pred_check_branch
        %144 = sbr.rel (%p141) target = $region32
      $region31: #{rdb5c_forward.1} parent=5 // pred_region
        %s145 = ssub.s32 %s12, 1
        %p146 = scmp.lt.s32.totalorder %s17, 1
        %s147 = scalar_select %p146, %s17, 1
        %s148 = smul.addr %s147, 32
        %s149 = smul.addr %s148, 8
        %s150 = scalar_lea.vmem %s0, %s149
        %p151 = pneg %p38
        %p152 = pneg %p35
        %p153 = pneg %p59
        %p154 = pneg %p56
        %p155 = pneg %p80
        %p156 = pneg %p77
        %p157 = pneg %p106
        %p158 = pneg %p103
        %s159 = sand.u32 %s93, 1
        %s160 = scalar_lea.sflag [#allocation4], %s159
        %s161 = sand.u32 %s93, 1
        %s162 = smul.addr %s161, 256
        %s163 = scalar_lea.vmem [#allocation3], %s162
        %p164 = scmp.lt.s32.totalorder %s17, 1
        %s165 = scalar_select %p164, %s17, 1
        %s166 = smul.addr %s165, 32
        %s167 = smul.addr %s166, 8
        %s168 = scalar_lea.vmem %s0, %s167
        %vm170 = vcmask 785408
        %171 = vst.msk [vmem:[#allocation2] sm:$0xff] %vm170, 0
        %172 = vst.msk [vmem:[#allocation2 + $0x8] sm:$0xff] %vm170, 0
        %173 = vst.msk [vmem:[#allocation2 + $0x10] sm:$0xff] %vm170, 0
        %s174 = scalar_lea.vmem [#allocation2], 408
        %175 = vst.msk [vmem:[%s174] sm:$0xff] %vm170, 0
        %176 = vst.msk [vmem:[%s174 + $0x8] sm:$0xff] %vm170, 0
        %177 = vst.msk [vmem:[%s174 + $0x10] sm:$0xff] %vm170, 0
        %178 = vst.msk [vmem:[#allocation2] sm:$0xff] %vm170, 0
        %179 = vst.msk [vmem:[#allocation2 + $0x18] sm:$0xff] %vm170, 0
        %180 = vst.msk [vmem:[#allocation2 + $0x30] sm:$0xff] %vm170, 0
        %181 = vst.msk [vmem:[#allocation2 + $0x48] sm:$0xff] %vm170, 0
        %182 = vst.msk [vmem:[#allocation2 + $0x60] sm:$0xff] %vm170, 0
        %183 = vst.msk [vmem:[#allocation2 + $0x78] sm:$0xff] %vm170, 0
        %184 = vst.msk [vmem:[#allocation2 + $0x90] sm:$0xff] %vm170, 0
        %185 = vst.msk [vmem:[#allocation2 + $0xa8] sm:$0xff] %vm170, 0
        %186 = vst.msk [vmem:[#allocation2 + $0xc0] sm:$0xff] %vm170, 0
        %187 = vst.msk [vmem:[#allocation2 + $0xd8] sm:$0xff] %vm170, 0
        %188 = vst.msk [vmem:[#allocation2 + $0xf0] sm:$0xff] %vm170, 0
        %189 = vst.msk [vmem:[#allocation2 + $0x108] sm:$0xff] %vm170, 0
        %190 = vst.msk [vmem:[#allocation2 + $0x120] sm:$0xff] %vm170, 0
        %191 = vst.msk [vmem:[#allocation2 + $0x138] sm:$0xff] %vm170, 0
        %192 = vst.msk [vmem:[#allocation2 + $0x150] sm:$0xff] %vm170, 0
        %193 = vst.msk [vmem:[#allocation2 + $0x168] sm:$0xff] %vm170, 0
        %194 = vst.msk [vmem:[#allocation2 + $0x180] sm:$0xff] %vm170, 0
        %195 = vst.msk [vmem:[#allocation2 + $0x198] sm:$0xff] %vm170, 0
        %196 = vst.msk [vmem:[#allocation2 + $0x10] sm:$0xff] %vm170, 0
        %197 = vst.msk [vmem:[#allocation2 + $0x28] sm:$0xff] %vm170, 0
        %198 = vst.msk [vmem:[#allocation2 + $0x40] sm:$0xff] %vm170, 0
        %199 = vst.msk [vmem:[#allocation2 + $0x58] sm:$0xff] %vm170, 0
        %200 = vst.msk [vmem:[#allocation2 + $0x70] sm:$0xff] %vm170, 0
        %201 = vst.msk [vmem:[#allocation2 + $0x88] sm:$0xff] %vm170, 0
        %202 = vst.msk [vmem:[#allocation2 + $0xa0] sm:$0xff] %vm170, 0
        %203 = vst.msk [vmem:[#allocation2 + $0xb8] sm:$0xff] %vm170, 0
        %204 = vst.msk [vmem:[#allocation2 + $0xd0] sm:$0xff] %vm170, 0
        %205 = vst.msk [vmem:[#allocation2 + $0xe8] sm:$0xff] %vm170, 0
        %206 = vst.msk [vmem:[#allocation2 + $0x100] sm:$0xff] %vm170, 0
        %207 = vst.msk [vmem:[#allocation2 + $0x118] sm:$0xff] %vm170, 0
        %208 = vst.msk [vmem:[#allocation2 + $0x130] sm:$0xff] %vm170, 0
        %209 = vst.msk [vmem:[#allocation2 + $0x148] sm:$0xff] %vm170, 0
        %210 = vst.msk [vmem:[#allocation2 + $0x160] sm:$0xff] %vm170, 0
        %211 = vst.msk [vmem:[#allocation2 + $0x178] sm:$0xff] %vm170, 0
        %212 = vst.msk [vmem:[#allocation2 + $0x190] sm:$0xff] %vm170, 0
        %213 = vst.msk [vmem:[#allocation2 + $0x1a8] sm:$0xff] %vm170, 0
        %v214 = vld [vmem:[%s168] sm:$0xff]
        %v215 = vld [vmem:[%s168 + $0x8] sm:$0xff]
        %v216 = vld [vmem:[%s168 + $0x10] sm:$0xff]
        %v217 = vld [vmem:[%s168 + $0x18] sm:$0xff]
        %v218 = vld [vmem:[%s168 + $0x20] sm:$0xff]
        %v219 = vld [vmem:[%s168 + $0x28] sm:$0xff]
        %v220 = vld [vmem:[%s168 + $0x30] sm:$0xff]
        %v221 = vld [vmem:[%s168 + $0x38] sm:$0xff]
        %v222 = vld [vmem:[%s168 + $0x40] sm:$0xff]
        %v223 = vld [vmem:[%s168 + $0x48] sm:$0xff]
        %v224 = vld [vmem:[%s168 + $0x50] sm:$0xff]
        %v225 = vld [vmem:[%s168 + $0x58] sm:$0xff]
        %v226 = vld [vmem:[%s168 + $0x60] sm:$0xff]
        %v227 = vld [vmem:[%s168 + $0x68] sm:$0xff]
        %v228 = vld [vmem:[%s168 + $0x70] sm:$0xff]
        %v229 = vld [vmem:[%s168 + $0x78] sm:$0xff]
        %v230 = vld [vmem:[%s168 + $0x80] sm:$0xff]
        %v231 = vld [vmem:[%s168 + $0x88] sm:$0xff]
        %v232 = vld [vmem:[%s168 + $0x90] sm:$0xff]
        %v233 = vld [vmem:[%s168 + $0x98] sm:$0xff]
        %v234 = vld [vmem:[%s168 + $0xa0] sm:$0xff]
        %v235 = vld [vmem:[%s168 + $0xa8] sm:$0xff]
        %v236 = vld [vmem:[%s168 + $0xb0] sm:$0xff]
        %v237 = vld [vmem:[%s168 + $0xb8] sm:$0xff]
        %v238 = vld [vmem:[%s168 + $0xc0] sm:$0xff]
        %v239 = vld [vmem:[%s168 + $0xc8] sm:$0xff]
        %v240 = vld [vmem:[%s168 + $0xd0] sm:$0xff]
        %v241 = vld [vmem:[%s168 + $0xd8] sm:$0xff]
        %v242 = vld [vmem:[%s168 + $0xe0] sm:$0xff]
        %v243 = vld [vmem:[%s168 + $0xe8] sm:$0xff]
        %v244 = vld [vmem:[%s168 + $0xf0] sm:$0xff]
        %v245 = vld [vmem:[%s168 + $0xf8] sm:$0xff]
        %v246 = vpack.c.bf16 %v215, %v214
        %v247 = vpack.c.bf16 %v217, %v216
        %v248 = vpack.c.bf16 %v219, %v218
        %v249 = vpack.c.bf16 %v221, %v220
        %v250 = vpack.c.bf16 %v223, %v222
        %v251 = vpack.c.bf16 %v225, %v224
        %v252 = vpack.c.bf16 %v227, %v226
        %v253 = vpack.c.bf16 %v229, %v228
        %v254 = vpack.c.bf16 %v231, %v230
        %v255 = vpack.c.bf16 %v233, %v232
        %v256 = vpack.c.bf16 %v235, %v234
        %v257 = vpack.c.bf16 %v237, %v236
        %v258 = vpack.c.bf16 %v239, %v238
        %v259 = vpack.c.bf16 %v241, %v240
        %v260 = vpack.c.bf16 %v243, %v242
        %v261 = vpack.c.bf16 %v245, %v244
        %s262 = scalar_lea.vmem [#allocation2], 24
        %vm263 = vcmask 261120
        %264 = vst.msk [vmem:[%s262 + $0x8] sm:$0xff] %vm263, %v246
        %265 = vst.msk [vmem:[%s262 + $0x20] sm:$0xff] %vm263, %v247
        %266 = vst.msk [vmem:[%s262 + $0x38] sm:$0xff] %vm263, %v248
        %267 = vst.msk [vmem:[%s262 + $0x50] sm:$0xff] %vm263, %v249
        %268 = vst.msk [vmem:[%s262 + $0x68] sm:$0xff] %vm263, %v250
        %269 = vst.msk [vmem:[%s262 + $0x80] sm:$0xff] %vm263, %v251
        %270 = vst.msk [vmem:[%s262 + $0x98] sm:$0xff] %vm263, %v252
        %271 = vst.msk [vmem:[%s262 + $0xb0] sm:$0xff] %vm263, %v253
        %272 = vst.msk [vmem:[%s262 + $0xc8] sm:$0xff] %vm263, %v254
        %273 = vst.msk [vmem:[%s262 + $0xe0] sm:$0xff] %vm263, %v255
        %274 = vst.msk [vmem:[%s262 + $0xf8] sm:$0xff] %vm263, %v256
        %275 = vst.msk [vmem:[%s262 + $0x110] sm:$0xff] %vm263, %v257
        %276 = vst.msk [vmem:[%s262 + $0x128] sm:$0xff] %vm263, %v258
        %277 = vst.msk [vmem:[%s262 + $0x140] sm:$0xff] %vm263, %v259
        %278 = vst.msk [vmem:[%s262 + $0x158] sm:$0xff] %vm263, %v260
        %279 = vst.msk [vmem:[%s262 + $0x170] sm:$0xff] %vm263, %v261
        %v280 = vld [vmem:[#allocation2] sm:$0x80]
        %v281 = vld [vmem:[#allocation2 + $0x8] sm:$0xff]
        %v282 = vld [vmem:[#allocation2 + $0x18] sm:$0x80]
        %v283 = vld [vmem:[#allocation2 + $0x20] sm:$0xff]
        %v284 = vld [vmem:[#allocation2 + $0x30] sm:$0x80]
        %v285 = vld [vmem:[#allocation2 + $0x38] sm:$0xff]
        %v286 = vld [vmem:[#allocation2 + $0x48] sm:$0x80]
        %v287 = vld [vmem:[#allocation2 + $0x50] sm:$0xff]
        %v288 = vld [vmem:[#allocation2 + $0x60] sm:$0x80]
        %v289 = vld [vmem:[#allocation2 + $0x68] sm:$0xff]
        %v290 = vld [vmem:[#allocation2 + $0x78] sm:$0x80]
        %v291 = vld [vmem:[#allocation2 + $0x80] sm:$0xff]
        %v292 = vld [vmem:[#allocation2 + $0x90] sm:$0x80]
        %v293 = vld [vmem:[#allocation2 + $0x98] sm:$0xff]
        %v294 = vld [vmem:[#allocation2 + $0xa8] sm:$0x80]
        %v295 = vld [vmem:[#allocation2 + $0xb0] sm:$0xff]
        %v296 = vld [vmem:[#allocation2 + $0xc0] sm:$0x80]
        %v297 = vld [vmem:[#allocation2 + $0xc8] sm:$0xff]
        %v298 = vld [vmem:[#allocation2 + $0xd8] sm:$0x80]
        %v299 = vld [vmem:[#allocation2 + $0xe0] sm:$0xff]
        %v300 = vld [vmem:[#allocation2 + $0xf0] sm:$0x80]
        %v301 = vld [vmem:[#allocation2 + $0xf8] sm:$0xff]
        %v302 = vld [vmem:[#allocation2 + $0x108] sm:$0x80]
        %v303 = vld [vmem:[#allocation2 + $0x110] sm:$0xff]
        %v304 = vld [vmem:[#allocation2 + $0x120] sm:$0x80]
        %v305 = vld [vmem:[#allocation2 + $0x128] sm:$0xff]
        %v306 = vld [vmem:[#allocation2 + $0x138] sm:$0x80]
        %v307 = vld [vmem:[#allocation2 + $0x140] sm:$0xff]
        %v308 = vld [vmem:[#allocation2 + $0x150] sm:$0x80]
        %v309 = vld [vmem:[#allocation2 + $0x158] sm:$0xff]
        %v310 = vld [vmem:[#allocation2 + $0x168] sm:$0x80]
        %v311 = vld [vmem:[#allocation2 + $0x170] sm:$0xff]
        %v312 = vld [vmem:[#allocation2 + $0x180] sm:$0x80]
        %v313 = vld [vmem:[#allocation2 + $0x188] sm:$0xff]
        %v314 = vld [vmem:[#allocation2 + $0x198] sm:$0x80]
        %v315 = vld [vmem:[#allocation2 + $0x1a0] sm:$0xff]
        %vm316 = vsmask.f32 256
        %v318 = vshrl.u32 %v280, 16
        %v320 = vrot.slane %v318, 7
        %v322 = vshrl.u32 %v281, 16
        %v324 = vrot.slane %v322, 7
        %v325 = vshll.u32 %v281, 16
        %v327 = vor.u32 %v324, %v325
        %v328 = vsel %vm316, %v320, %v327
        %v330 = vshrl.u32 %v282, 16
        %v332 = vrot.slane %v330, 7
        %v334 = vshrl.u32 %v283, 16
        %v336 = vrot.slane %v334, 7
        %v337 = vshll.u32 %v283, 16
        %v339 = vor.u32 %v336, %v337
        %v340 = vsel %vm316, %v332, %v339
        %v342 = vshrl.u32 %v284, 16
        %v344 = vrot.slane %v342, 7
        %v346 = vshrl.u32 %v285, 16
        %v348 = vrot.slane %v346, 7
        %v349 = vshll.u32 %v285, 16
        %v351 = vor.u32 %v348, %v349
        %v352 = vsel %vm316, %v344, %v351
        %v354 = vshrl.u32 %v286, 16
        %v356 = vrot.slane %v354, 7
        %v358 = vshrl.u32 %v287, 16
        %v360 = vrot.slane %v358, 7
        %v361 = vshll.u32 %v287, 16
        %v363 = vor.u32 %v360, %v361
        %v364 = vsel %vm316, %v356, %v363
        %v366 = vshrl.u32 %v288, 16
        %v368 = vrot.slane %v366, 7
        %v370 = vshrl.u32 %v289, 16
        %v372 = vrot.slane %v370, 7
        %v373 = vshll.u32 %v289, 16
        %v375 = vor.u32 %v372, %v373
        %v376 = vsel %vm316, %v368, %v375
        %v378 = vshrl.u32 %v290, 16
        %v380 = vrot.slane %v378, 7
        %v382 = vshrl.u32 %v291, 16
        %v384 = vrot.slane %v382, 7
        %v385 = vshll.u32 %v291, 16
        %v387 = vor.u32 %v384, %v385
        %v388 = vsel %vm316, %v380, %v387
        %v390 = vshrl.u32 %v292, 16
        %v392 = vrot.slane %v390, 7
        %v394 = vshrl.u32 %v293, 16
        %v396 = vrot.slane %v394, 7
        %v397 = vshll.u32 %v293, 16
        %v399 = vor.u32 %v396, %v397
        %v400 = vsel %vm316, %v392, %v399
        %v402 = vshrl.u32 %v294, 16
        %v404 = vrot.slane %v402, 7
        %v406 = vshrl.u32 %v295, 16
        %v408 = vrot.slane %v406, 7
        %v409 = vshll.u32 %v295, 16
        %v411 = vor.u32 %v408, %v409
        %v412 = vsel %vm316, %v404, %v411
        %v414 = vshrl.u32 %v296, 16
        %v416 = vrot.slane %v414, 7
        %v418 = vshrl.u32 %v297, 16
        %v420 = vrot.slane %v418, 7
        %v421 = vshll.u32 %v297, 16
        %v423 = vor.u32 %v420, %v421
        %v424 = vsel %vm316, %v416, %v423
        %v426 = vshrl.u32 %v298, 16
        %v428 = vrot.slane %v426, 7
        %v430 = vshrl.u32 %v299, 16
        %v432 = vrot.slane %v430, 7
        %v433 = vshll.u32 %v299, 16
        %v435 = vor.u32 %v432, %v433
        %v436 = vsel %vm316, %v428, %v435
        %v438 = vshrl.u32 %v300, 16
        %v440 = vrot.slane %v438, 7
        %v442 = vshrl.u32 %v301, 16
        %v444 = vrot.slane %v442, 7
        %v445 = vshll.u32 %v301, 16
        %v447 = vor.u32 %v444, %v445
        %v448 = vsel %vm316, %v440, %v447
        %v450 = vshrl.u32 %v302, 16
        %v452 = vrot.slane %v450, 7
        %v454 = vshrl.u32 %v303, 16
        %v456 = vrot.slane %v454, 7
        %v457 = vshll.u32 %v303, 16
        %v459 = vor.u32 %v456, %v457
        %v460 = vsel %vm316, %v452, %v459
        %v462 = vshrl.u32 %v304, 16
        %v464 = vrot.slane %v462, 7
        %v466 = vshrl.u32 %v305, 16
        %v468 = vrot.slane %v466, 7
        %v469 = vshll.u32 %v305, 16
        %v471 = vor.u32 %v468, %v469
        %v472 = vsel %vm316, %v464, %v471
        %v474 = vshrl.u32 %v306, 16
        %v476 = vrot.slane %v474, 7
        %v478 = vshrl.u32 %v307, 16
        %v480 = vrot.slane %v478, 7
        %v481 = vshll.u32 %v307, 16
        %v483 = vor.u32 %v480, %v481
        %v484 = vsel %vm316, %v476, %v483
        %v486 = vshrl.u32 %v308, 16
        %v488 = vrot.slane %v486, 7
        %v490 = vshrl.u32 %v309, 16
        %v492 = vrot.slane %v490, 7
        %v493 = vshll.u32 %v309, 16
        %v495 = vor.u32 %v492, %v493
        %v496 = vsel %vm316, %v488, %v495
        %v498 = vshrl.u32 %v310, 16
        %v500 = vrot.slane %v498, 7
        %v502 = vshrl.u32 %v311, 16
        %v504 = vrot.slane %v502, 7
        %v505 = vshll.u32 %v311, 16
        %v507 = vor.u32 %v504, %v505
        %v508 = vsel %vm316, %v500, %v507
        %v510 = vshrl.u32 %v312, 16
        %v512 = vrot.slane %v510, 7
        %v514 = vshrl.u32 %v313, 16
        %v516 = vrot.slane %v514, 7
        %v517 = vshll.u32 %v313, 16
        %v519 = vor.u32 %v516, %v517
        %v520 = vsel %vm316, %v512, %v519
        %v522 = vshrl.u32 %v314, 16
        %v524 = vrot.slane %v522, 7
        %v526 = vshrl.u32 %v315, 16
        %v528 = vrot.slane %v526, 7
        %v529 = vshll.u32 %v315, 16
        %v531 = vor.u32 %v528, %v529
        %v532 = vsel %vm316, %v524, %v531
        %v533 = vld [vmem:[%s1] sm:$0xf]
        %v534 = vld [vmem:[%s1 + $0x4] sm:$0xf]
        %v535 = vld [vmem:[%s1 + $0x8] sm:$0xf]
        %v536 = vld [vmem:[%s1 + $0xc] sm:$0xf]
        %v541 = vunpack.c.l.b16 %v533
        %v542 = vunpack.c.l.b16 %v534
        %v543 = vunpack.c.l.b16 %v535
        %v544 = vunpack.c.l.b16 %v536
        %v545 = vpack.c.b16 %v542, %v541
        %v546 = vpack.c.b16 %v544, %v543
        %v550 = vsel %vm263, %v328, 0
        %v553 = vsel %vm263, %v340, 0
        %v556 = vsel %vm263, %v352, 0
        %v559 = vsel %vm263, %v364, 0
        %v562 = vsel %vm263, %v376, 0
        %v565 = vsel %vm263, %v388, 0
        %v568 = vsel %vm263, %v400, 0
        %v571 = vsel %vm263, %v412, 0
        %v574 = vsel %vm263, %v424, 0
        %v577 = vsel %vm263, %v436, 0
        %v580 = vsel %vm263, %v448, 0
        %v583 = vsel %vm263, %v460, 0
        %v586 = vsel %vm263, %v472, 0
        %v589 = vsel %vm263, %v484, 0
        %v592 = vsel %vm263, %v496, 0
        %v595 = vsel %vm263, %v508, 0
        %v598 = vsel %vm263, %v520, 0
        %v601 = vsel %vm263, %v532, 0
        %603 = vmatprep.subr.bf16.mxu0 0
        %604 = vmatpush1.bf16.msra.mxu0 %v545
        %605 = vmatprep.subr.bf16.mxu0 0
        %606 = vmatpush1.bf16.msra.mxu0 %v546
        %607 = vmatprep.subr.bf16.mxu0 0
        %608 = vmatpush1.bf16.msra.mxu0 0
        %609 = vmatprep.subr.bf16.mxu0 0
        %610 = vmatpush1.bf16.msra.mxu0 0
        %611 = vmatprep.subr.bf16.mxu0 0
        %612 = vmatpush1.bf16.msra.mxu0 0
        %613 = vmatprep.subr.bf16.mxu0 0
        %614 = vmatpush1.bf16.msra.mxu0 0
        %615 = vmatprep.subr.bf16.mxu0 0
        %616 = vmatpush1.bf16.msra.mxu0 0
        %617 = vmatprep.subr.bf16.mxu0 0
        %618 = vmatpush1.bf16.msra.mxu0 0
        %619 = vmatprep.subr.bf16.mxu0 0
        %620 = vmatpush1.bf16.msra.mxu0 0
        %621 = vmatprep.subr.bf16.mxu0 0
        %622 = vmatpush1.bf16.msra.mxu0 0
        %623 = vmatprep.subr.bf16.mxu0 0
        %624 = vmatpush1.bf16.msra.mxu0 0
        %625 = vmatprep.subr.bf16.mxu0 0
        %626 = vmatpush1.bf16.msra.mxu0 0
        %627 = vmatprep.subr.bf16.mxu0 0
        %628 = vmatpush1.bf16.msra.mxu0 0
        %629 = vmatprep.subr.bf16.mxu0 0
        %630 = vmatpush1.bf16.msra.mxu0 0
        %631 = vmatprep.subr.bf16.mxu0 0
        %632 = vmatpush1.bf16.msra.mxu0 0
        %633 = vmatprep.subr.bf16.mxu0 0
        %634 = vmatpush1.bf16.msra.mxu0 0
        %635 = vmatprep.mubr.bf16.mxu0 0
        %636 = vmatmul.mubr.bf16.gmra.mrb[0].mxu0 %v550
        %v637 = vpop.f32.mrb[0].mxu0
        %v638 = vadd.f32 0.0, %v637
        %v639 = vpop.f32.mrb[0].mxu0
        %v640 = vpop.f32.mrb[0].mxu0
        %v641 = vadd.f32 0.0, %v640
        %v642 = vpop.f32.mrb[0].mxu0
        %643 = vmatprep.mubr.bf16.mxu0 0
        %644 = vmatmul.mubr.bf16.gmra.mrb[0].mxu0 %v553
        %v645 = vpop.f32.mrb[0].mxu0
        %v646 = vadd.f32 0.0, %v645
        %v647 = vpop.f32.mrb[0].mxu0
        %v648 = vpop.f32.mrb[0].mxu0
        %v649 = vadd.f32 0.0, %v648
        %v650 = vpop.f32.mrb[0].mxu0
        %651 = vmatprep.mubr.bf16.mxu0 0
        %652 = vmatmul.mubr.bf16.gmra.mrb[0].mxu0 %v556
        %v653 = vpop.f32.mrb[0].mxu0
        %v654 = vadd.f32 0.0, %v653
        %v655 = vpop.f32.mrb[0].mxu0
        %v656 = vpop.f32.mrb[0].mxu0
        %v657 = vadd.f32 0.0, %v656
        %v658 = vpop.f32.mrb[0].mxu0
        %659 = vmatprep.mubr.bf16.mxu0 0
        %660 = vmatmul.mubr.bf16.gmra.mrb[0].mxu0 %v559
        %v661 = vpop.f32.mrb[0].mxu0
        %v662 = vadd.f32 0.0, %v661
        %v663 = vpop.f32.mrb[0].mxu0
        %v664 = vpop.f32.mrb[0].mxu0
        %v665 = vadd.f32 0.0, %v664
        %v666 = vpop.f32.mrb[0].mxu0
        %667 = vmatprep.mubr.bf16.mxu0 0
        %668 = vmatmul.mubr.bf16.gmra.mrb[0].mxu0 %v562
        %v669 = vpop.f32.mrb[0].mxu0
        %v670 = vadd.f32 0.0, %v669
        %v671 = vpop.f32.mrb[0].mxu0
        %v672 = vpop.f32.mrb[0].mxu0
        %v673 = vadd.f32 0.0, %v672
        %v674 = vpop.f32.mrb[0].mxu0
        %675 = vmatprep.mubr.bf16.mxu0 0
        %676 = vmatmul.mubr.bf16.gmra.mrb[0].mxu0 %v565
        %v677 = vpop.f32.mrb[0].mxu0
        %v678 = vadd.f32 0.0, %v677
        %v679 = vpop.f32.mrb[0].mxu0
        %v680 = vpop.f32.mrb[0].mxu0
        %v681 = vadd.f32 0.0, %v680
        %v682 = vpop.f32.mrb[0].mxu0
        %683 = vmatprep.mubr.bf16.mxu0 0
        %684 = vmatmul.mubr.bf16.gmra.mrb[0].mxu0 %v568
        %v685 = vpop.f32.mrb[0].mxu0
        %v686 = vadd.f32 0.0, %v685
        %v687 = vpop.f32.mrb[0].mxu0
        %v688 = vpop.f32.mrb[0].mxu0
        %v689 = vadd.f32 0.0, %v688
        %v690 = vpop.f32.mrb[0].mxu0
        %691 = vmatprep.mubr.bf16.mxu0 0
        %692 = vmatmul.mubr.bf16.gmra.mrb[0].mxu0 %v571
        %v693 = vpop.f32.mrb[0].mxu0
        %v694 = vadd.f32 0.0, %v693
        %v695 = vpop.f32.mrb[0].mxu0
        %v696 = vpop.f32.mrb[0].mxu0
        %v697 = vadd.f32 0.0, %v696
        %v698 = vpop.f32.mrb[0].mxu0
        %699 = vmatprep.mubr.bf16.mxu0 0
        %700 = vmatmul.mubr.bf16.gmra.mrb[0].mxu0 %v574
        %v701 = vpop.f32.mrb[0].mxu0
        %v702 = vadd.f32 0.0, %v701
        %v703 = vpop.f32.mrb[0].mxu0
        %v704 = vpop.f32.mrb[0].mxu0
        %v705 = vadd.f32 0.0, %v704
        %v706 = vpop.f32.mrb[0].mxu0
        %707 = vmatprep.mubr.bf16.mxu0 0
        %708 = vmatmul.mubr.bf16.gmra.mrb[0].mxu0 %v577
        %v709 = vpop.f32.mrb[0].mxu0
        %v710 = vadd.f32 0.0, %v709
        %v711 = vpop.f32.mrb[0].mxu0
        %v712 = vpop.f32.mrb[0].mxu0
        %v713 = vadd.f32 0.0, %v712
        %v714 = vpop.f32.mrb[0].mxu0
        %715 = vmatprep.mubr.bf16.mxu0 0
        %716 = vmatmul.mubr.bf16.gmra.mrb[0].mxu0 %v580
        %v717 = vpop.f32.mrb[0].mxu0
        %v718 = vadd.f32 0.0, %v717
        %v719 = vpop.f32.mrb[0].mxu0
        %v720 = vpop.f32.mrb[0].mxu0
        %v721 = vadd.f32 0.0, %v720
        %v722 = vpop.f32.mrb[0].mxu0
        %723 = vmatprep.mubr.bf16.mxu0 0
        %724 = vmatmul.mubr.bf16.gmra.mrb[0].mxu0 %v583
        %v725 = vpop.f32.mrb[0].mxu0
        %v726 = vadd.f32 0.0, %v725
        %v727 = vpop.f32.mrb[0].mxu0
        %v728 = vpop.f32.mrb[0].mxu0
        %v729 = vadd.f32 0.0, %v728
        %v730 = vpop.f32.mrb[0].mxu0
        %731 = vmatprep.mubr.bf16.mxu0 0
        %732 = vmatmul.mubr.bf16.gmra.mrb[0].mxu0 %v586
        %v733 = vpop.f32.mrb[0].mxu0
        %v734 = vadd.f32 0.0, %v733
        %v735 = vpop.f32.mrb[0].mxu0
        %v736 = vpop.f32.mrb[0].mxu0
        %v737 = vadd.f32 0.0, %v736
        %v738 = vpop.f32.mrb[0].mxu0
        %739 = vmatprep.mubr.bf16.mxu0 0
        %740 = vmatmul.mubr.bf16.gmra.mrb[0].mxu0 %v589
        %v741 = vpop.f32.mrb[0].mxu0
        %v742 = vadd.f32 0.0, %v741
        %v743 = vpop.f32.mrb[0].mxu0
        %v744 = vpop.f32.mrb[0].mxu0
        %v745 = vadd.f32 0.0, %v744
        %v746 = vpop.f32.mrb[0].mxu0
        %747 = vmatprep.mubr.bf16.mxu0 0
        %748 = vmatmul.mubr.bf16.gmra.mrb[0].mxu0 %v592
        %v749 = vpop.f32.mrb[0].mxu0
        %v750 = vadd.f32 0.0, %v749
        %v751 = vpop.f32.mrb[0].mxu0
        %v752 = vpop.f32.mrb[0].mxu0
        %v753 = vadd.f32 0.0, %v752
        %v754 = vpop.f32.mrb[0].mxu0
        %755 = vmatprep.mubr.bf16.mxu0 0
        %756 = vmatmul.mubr.bf16.gmra.mrb[0].mxu0 %v595
        %v757 = vpop.f32.mrb[0].mxu0
        %v758 = vadd.f32 0.0, %v757
        %v759 = vpop.f32.mrb[0].mxu0
        %v760 = vpop.f32.mrb[0].mxu0
        %v761 = vadd.f32 0.0, %v760
        %v762 = vpop.f32.mrb[0].mxu0
        %763 = vmatprep.mubr.bf16.mxu0 0
        %764 = vmatmul.mubr.bf16.gmra.mrb[0].mxu0 %v598
        %v765 = vpop.f32.mrb[0].mxu0
        %v766 = vadd.f32 0.0, %v765
        %v767 = vpop.f32.mrb[0].mxu0
        %v768 = vpop.f32.mrb[0].mxu0
        %v769 = vadd.f32 0.0, %v768
        %v770 = vpop.f32.mrb[0].mxu0
        %771 = vmatprep.mubr.bf16.mxu0 0
        %772 = vmatmul.mubr.bf16.gmra.mrb[0].mxu0 %v601
        %v773 = vpop.f32.mrb[0].mxu0
        %v774 = vadd.f32 0.0, %v773
        %v775 = vpop.f32.mrb[0].mxu0
        %v776 = vpop.f32.mrb[0].mxu0
        %v777 = vadd.f32 0.0, %v776
        %v778 = vpop.f32.mrb[0].mxu0
        %779 = vdwg.mxu0
        %v780 = vadd.f32 %v638, 0.0
        %v781 = vadd.f32 %v641, 0.0
        %v782 = vadd.f32 %v646, 0.0
        %v783 = vadd.f32 %v649, 0.0
        %v784 = vadd.f32 %v654, 0.0
        %v785 = vadd.f32 %v657, 0.0
        %v786 = vadd.f32 %v662, 0.0
        %v787 = vadd.f32 %v665, 0.0
        %v788 = vadd.f32 %v670, 0.0
        %v789 = vadd.f32 %v673, 0.0
        %v790 = vadd.f32 %v678, 0.0
        %v791 = vadd.f32 %v681, 0.0
        %v792 = vadd.f32 %v686, 0.0
        %v793 = vadd.f32 %v689, 0.0
        %v794 = vadd.f32 %v694, 0.0
        %v795 = vadd.f32 %v697, 0.0
        %v796 = vadd.f32 %v702, 0.0
        %v797 = vadd.f32 %v705, 0.0
        %v798 = vadd.f32 %v710, 0.0
        %v799 = vadd.f32 %v713, 0.0
        %v800 = vadd.f32 %v718, 0.0
        %v801 = vadd.f32 %v721, 0.0
        %v802 = vadd.f32 %v726, 0.0
        %v803 = vadd.f32 %v729, 0.0
        %v804 = vadd.f32 %v734, 0.0
        %v805 = vadd.f32 %v737, 0.0
        %v806 = vadd.f32 %v742, 0.0
        %v807 = vadd.f32 %v745, 0.0
        %v808 = vadd.f32 %v750, 0.0
        %v809 = vadd.f32 %v753, 0.0
        %v810 = vadd.f32 %v758, 0.0
        %v811 = vadd.f32 %v761, 0.0
        %844 = vrot.lane.b32.xlu0 %v646, 112
        %v845 = vpop.permute.xlu0 %844
        %846 = vrot.lane.b32.xlu0 %v649, 112
        %v847 = vpop.permute.xlu0 %846
        %848 = vrot.lane.b32.xlu0 %v654, 112
        %v849 = vpop.permute.xlu0 %848
        %850 = vrot.lane.b32.xlu0 %v657, 112
        %v851 = vpop.permute.xlu0 %850
        %852 = vrot.lane.b32.xlu0 %v662, 112
        %v853 = vpop.permute.xlu0 %852
        %854 = vrot.lane.b32.xlu0 %v665, 112
        %v855 = vpop.permute.xlu0 %854
        %856 = vrot.lane.b32.xlu0 %v670, 112
        %v857 = vpop.permute.xlu0 %856
        %858 = vrot.lane.b32.xlu0 %v673, 112
        %v859 = vpop.permute.xlu0 %858
        %860 = vrot.lane.b32.xlu0 %v678, 112
        %v861 = vpop.permute.xlu0 %860
        %862 = vrot.lane.b32.xlu0 %v681, 112
        %v863 = vpop.permute.xlu0 %862
        %864 = vrot.lane.b32.xlu0 %v686, 112
        %v865 = vpop.permute.xlu0 %864
        %866 = vrot.lane.b32.xlu0 %v689, 112
        %v867 = vpop.permute.xlu0 %866
        %868 = vrot.lane.b32.xlu0 %v694, 112
        %v869 = vpop.permute.xlu0 %868
        %870 = vrot.lane.b32.xlu0 %v697, 112
        %v871 = vpop.permute.xlu0 %870
        %872 = vrot.lane.b32.xlu0 %v702, 112
        %v873 = vpop.permute.xlu0 %872
        %874 = vrot.lane.b32.xlu0 %v705, 112
        %v875 = vpop.permute.xlu0 %874
        %876 = vrot.lane.b32.xlu0 %v710, 112
        %v877 = vpop.permute.xlu0 %876
        %878 = vrot.lane.b32.xlu0 %v713, 112
        %v879 = vpop.permute.xlu0 %878
        %880 = vrot.lane.b32.xlu0 %v718, 112
        %v881 = vpop.permute.xlu0 %880
        %882 = vrot.lane.b32.xlu0 %v721, 112
        %v883 = vpop.permute.xlu0 %882
        %884 = vrot.lane.b32.xlu0 %v726, 112
        %v885 = vpop.permute.xlu0 %884
        %886 = vrot.lane.b32.xlu0 %v729, 112
        %v887 = vpop.permute.xlu0 %886
        %888 = vrot.lane.b32.xlu0 %v734, 112
        %v889 = vpop.permute.xlu0 %888
        %890 = vrot.lane.b32.xlu0 %v737, 112
        %v891 = vpop.permute.xlu0 %890
        %892 = vrot.lane.b32.xlu0 %v742, 112
        %v893 = vpop.permute.xlu0 %892
        %894 = vrot.lane.b32.xlu0 %v745, 112
        %v895 = vpop.permute.xlu0 %894
        %896 = vrot.lane.b32.xlu0 %v750, 112
        %v897 = vpop.permute.xlu0 %896
        %898 = vrot.lane.b32.xlu0 %v753, 112
        %v899 = vpop.permute.xlu0 %898
        %900 = vrot.lane.b32.xlu0 %v758, 112
        %v901 = vpop.permute.xlu0 %900
        %902 = vrot.lane.b32.xlu0 %v761, 112
        %v903 = vpop.permute.xlu0 %902
        %904 = vrot.lane.b32.xlu0 %v766, 112
        %v905 = vpop.permute.xlu0 %904
        %906 = vrot.lane.b32.xlu0 %v769, 112
        %v907 = vpop.permute.xlu0 %906
        %v940 = vadd.f32 %v780, %v845
        %v941 = vadd.f32 %v781, %v847
        %v942 = vadd.f32 %v782, %v849
        %v943 = vadd.f32 %v783, %v851
        %v944 = vadd.f32 %v784, %v853
        %v945 = vadd.f32 %v785, %v855
        %v946 = vadd.f32 %v786, %v857
        %v947 = vadd.f32 %v787, %v859
        %v948 = vadd.f32 %v788, %v861
        %v949 = vadd.f32 %v789, %v863
        %v950 = vadd.f32 %v790, %v865
        %v951 = vadd.f32 %v791, %v867
        %v952 = vadd.f32 %v792, %v869
        %v953 = vadd.f32 %v793, %v871
        %v954 = vadd.f32 %v794, %v873
        %v955 = vadd.f32 %v795, %v875
        %v956 = vadd.f32 %v796, %v877
        %v957 = vadd.f32 %v797, %v879
        %v958 = vadd.f32 %v798, %v881
        %v959 = vadd.f32 %v799, %v883
        %v960 = vadd.f32 %v800, %v885
        %v961 = vadd.f32 %v801, %v887
        %v962 = vadd.f32 %v802, %v889
        %v963 = vadd.f32 %v803, %v891
        %v964 = vadd.f32 %v804, %v893
        %v965 = vadd.f32 %v805, %v895
        %v966 = vadd.f32 %v806, %v897
        %v967 = vadd.f32 %v807, %v899
        %v968 = vadd.f32 %v808, %v901
        %v969 = vadd.f32 %v809, %v903
        %v970 = vadd.f32 %v810, %v905
        %v971 = vadd.f32 %v811, %v907
        %974 = vrot.lane.b32.xlu0 %v654, 96
        %v975 = vpop.permute.xlu0 %974
        %976 = vrot.lane.b32.xlu0 %v657, 96
        %v977 = vpop.permute.xlu0 %976
        %978 = vrot.lane.b32.xlu0 %v662, 96
        %v979 = vpop.permute.xlu0 %978
        %980 = vrot.lane.b32.xlu0 %v665, 96
        %v981 = vpop.permute.xlu0 %980
        %982 = vrot.lane.b32.xlu0 %v670, 96
        %v983 = vpop.permute.xlu0 %982
        %984 = vrot.lane.b32.xlu0 %v673, 96
        %v985 = vpop.permute.xlu0 %984
        %986 = vrot.lane.b32.xlu0 %v678, 96
        %v987 = vpop.permute.xlu0 %986
        %988 = vrot.lane.b32.xlu0 %v681, 96
        %v989 = vpop.permute.xlu0 %988
        %990 = vrot.lane.b32.xlu0 %v686, 96
        %v991 = vpop.permute.xlu0 %990
        %992 = vrot.lane.b32.xlu0 %v689, 96
        %v993 = vpop.permute.xlu0 %992
        %994 = vrot.lane.b32.xlu0 %v694, 96
        %v995 = vpop.permute.xlu0 %994
        %996 = vrot.lane.b32.xlu0 %v697, 96
        %v997 = vpop.permute.xlu0 %996
        %998 = vrot.lane.b32.xlu0 %v702, 96
        %v999 = vpop.permute.xlu0 %998
        %1000 = vrot.lane.b32.xlu0 %v705, 96
        %v1001 = vpop.permute.xlu0 %1000
        %1002 = vrot.lane.b32.xlu0 %v710, 96
        %v1003 = vpop.permute.xlu0 %1002
        %1004 = vrot.lane.b32.xlu0 %v713, 96
        %v1005 = vpop.permute.xlu0 %1004
        %1006 = vrot.lane.b32.xlu0 %v718, 96
        %v1007 = vpop.permute.xlu0 %1006
        %1008 = vrot.lane.b32.xlu0 %v721, 96
        %v1009 = vpop.permute.xlu0 %1008
        %1010 = vrot.lane.b32.xlu0 %v726, 96
        %v1011 = vpop.permute.xlu0 %1010
        %1012 = vrot.lane.b32.xlu0 %v729, 96
        %v1013 = vpop.permute.xlu0 %1012
        %1014 = vrot.lane.b32.xlu0 %v734, 96
        %v1015 = vpop.permute.xlu0 %1014
        %1016 = vrot.lane.b32.xlu0 %v737, 96
        %v1017 = vpop.permute.xlu0 %1016
        %1018 = vrot.lane.b32.xlu0 %v742, 96
        %v1019 = vpop.permute.xlu0 %1018
        %1020 = vrot.lane.b32.xlu0 %v745, 96
        %v1021 = vpop.permute.xlu0 %1020
        %1022 = vrot.lane.b32.xlu0 %v750, 96
        %v1023 = vpop.permute.xlu0 %1022
        %1024 = vrot.lane.b32.xlu0 %v753, 96
        %v1025 = vpop.permute.xlu0 %1024
        %1026 = vrot.lane.b32.xlu0 %v758, 96
        %v1027 = vpop.permute.xlu0 %1026
        %1028 = vrot.lane.b32.xlu0 %v761, 96
        %v1029 = vpop.permute.xlu0 %1028
        %1030 = vrot.lane.b32.xlu0 %v766, 96
        %v1031 = vpop.permute.xlu0 %1030
        %1032 = vrot.lane.b32.xlu0 %v769, 96
        %v1033 = vpop.permute.xlu0 %1032
        %1034 = vrot.lane.b32.xlu0 %v774, 96
        %v1035 = vpop.permute.xlu0 %1034
        %1036 = vrot.lane.b32.xlu0 %v777, 96
        %v1037 = vpop.permute.xlu0 %1036
        %v1070 = vadd.f32 %v940, %v975
        %v1071 = vadd.f32 %v941, %v977
        %v1072 = vadd.f32 %v942, %v979
        %v1073 = vadd.f32 %v943, %v981
        %v1074 = vadd.f32 %v944, %v983
        %v1075 = vadd.f32 %v945, %v985
        %v1076 = vadd.f32 %v946, %v987
        %v1077 = vadd.f32 %v947, %v989
        %v1078 = vadd.f32 %v948, %v991
        %v1079 = vadd.f32 %v949, %v993
        %v1080 = vadd.f32 %v950, %v995
        %v1081 = vadd.f32 %v951, %v997
        %v1082 = vadd.f32 %v952, %v999
        %v1083 = vadd.f32 %v953, %v1001
        %v1084 = vadd.f32 %v954, %v1003
        %v1085 = vadd.f32 %v955, %v1005
        %v1086 = vadd.f32 %v956, %v1007
        %v1087 = vadd.f32 %v957, %v1009
        %v1088 = vadd.f32 %v958, %v1011
        %v1089 = vadd.f32 %v959, %v1013
        %v1090 = vadd.f32 %v960, %v1015
        %v1091 = vadd.f32 %v961, %v1017
        %v1092 = vadd.f32 %v962, %v1019
        %v1093 = vadd.f32 %v963, %v1021
        %v1094 = vadd.f32 %v964, %v1023
        %v1095 = vadd.f32 %v965, %v1025
        %v1096 = vadd.f32 %v966, %v1027
        %v1097 = vadd.f32 %v967, %v1029
        %v1098 = vadd.f32 %v968, %v1031
        %v1099 = vadd.f32 %v969, %v1033
        %v1100 = vadd.f32 %v970, %v1035
        %v1101 = vadd.f32 %v971, %v1037
        %s1102 = scalar_lea.vmem %s1, 48
        %v1103 = vld [vmem:[%s1102] sm:$0xf]
        %v1104 = vld [vmem:[%s1102 + $0x4] sm:$0xf]
        %v1105 = vld [vmem:[%s1102 + $0x8] sm:$0xf]
        %v1106 = vld [vmem:[%s1102 + $0xc] sm:$0xf]
        %v1111 = vunpack.c.l.b16 %v1103
        %v1112 = vunpack.c.l.b16 %v1104
        %v1113 = vunpack.c.l.b16 %v1105
        %v1114 = vunpack.c.l.b16 %v1106
        %v1115 = vpack.c.b16 %v1112, %v1111
        %v1116 = vpack.c.b16 %v1114, %v1113
        %v1119 = vsel %vm263, %v281, 0
        %v1121 = vsel %vm263, %v283, 0
        %v1123 = vsel %vm263, %v285, 0
        %v1125 = vsel %vm263, %v287, 0
        %v1127 = vsel %vm263, %v289, 0
        %v1129 = vsel %vm263, %v291, 0
        %v1131 = vsel %vm263, %v293, 0
        %v1133 = vsel %vm263, %v295, 0
        %v1135 = vsel %vm263, %v297, 0
        %v1137 = vsel %vm263, %v299, 0
        %v1139 = vsel %vm263, %v301, 0
        %v1141 = vsel %vm263, %v303, 0
        %v1143 = vsel %vm263, %v305, 0
        %v1145 = vsel %vm263, %v307, 0
        %v1147 = vsel %vm263, %v309, 0
        %v1149 = vsel %vm263, %v311, 0
        %v1151 = vsel %vm263, %v313, 0
        %v1153 = vsel %vm263, %v315, 0
        %1155 = vmatprep.subr.bf16.mxu0 0
        %1156 = vmatpush1.bf16.msra.mxu0 %v1115
        %1157 = vmatprep.subr.bf16.mxu0 0
        %1158 = vmatpush1.bf16.msra.mxu0 %v1116
        %1159 = vmatprep.subr.bf16.mxu0 0
        %1160 = vmatpush1.bf16.msra.mxu0 0
        %1161 = vmatprep.subr.bf16.mxu0 0
        %1162 = vmatpush1.bf16.msra.mxu0 0
        %1163 = vmatprep.subr.bf16.mxu0 0
        %1164 = vmatpush1.bf16.msra.mxu0 0
        %1165 = vmatprep.subr.bf16.mxu0 0
        %1166 = vmatpush1.bf16.msra.mxu0 0
        %1167 = vmatprep.subr.bf16.mxu0 0
        %1168 = vmatpush1.bf16.msra.mxu0 0
        %1169 = vmatprep.subr.bf16.mxu0 0
        %1170 = vmatpush1.bf16.msra.mxu0 0
        %1171 = vmatprep.subr.bf16.mxu0 0
        %1172 = vmatpush1.bf16.msra.mxu0 0
        %1173 = vmatprep.subr.bf16.mxu0 0
        %1174 = vmatpush1.bf16.msra.mxu0 0
        %1175 = vmatprep.subr.bf16.mxu0 0
        %1176 = vmatpush1.bf16.msra.mxu0 0
        %1177 = vmatprep.subr.bf16.mxu0 0
        %1178 = vmatpush1.bf16.msra.mxu0 0
        %1179 = vmatprep.subr.bf16.mxu0 0
        %1180 = vmatpush1.bf16.msra.mxu0 0
        %1181 = vmatprep.subr.bf16.mxu0 0
        %1182 = vmatpush1.bf16.msra.mxu0 0
        %1183 = vmatprep.subr.bf16.mxu0 0
        %1184 = vmatpush1.bf16.msra.mxu0 0
        %1185 = vmatprep.subr.bf16.mxu0 0
        %1186 = vmatpush1.bf16.msra.mxu0 0
        %1187 = vmatprep.mubr.bf16.mxu0 0
        %1188 = vmatmul.mubr.bf16.gmra.mrb[0].mxu0 %v1119
        %v1189 = vpop.f32.mrb[0].mxu0
        %v1190 = vadd.f32 0.0, %v1189
        %v1191 = vpop.f32.mrb[0].mxu0
        %v1192 = vpop.f32.mrb[0].mxu0
        %v1193 = vadd.f32 0.0, %v1192
        %v1194 = vpop.f32.mrb[0].mxu0
        %1195 = vmatprep.mubr.bf16.mxu0 0
        %1196 = vmatmul.mubr.bf16.gmra.mrb[0].mxu0 %v1121
        %v1197 = vpop.f32.mrb[0].mxu0
        %v1198 = vadd.f32 0.0, %v1197
        %v1199 = vpop.f32.mrb[0].mxu0
        %v1200 = vpop.f32.mrb[0].mxu0
        %v1201 = vadd.f32 0.0, %v1200
        %v1202 = vpop.f32.mrb[0].mxu0
        %1203 = vmatprep.mubr.bf16.mxu0 0
        %1204 = vmatmul.mubr.bf16.gmra.mrb[0].mxu0 %v1123
        %v1205 = vpop.f32.mrb[0].mxu0
        %v1206 = vadd.f32 0.0, %v1205
        %v1207 = vpop.f32.mrb[0].mxu0
        %v1208 = vpop.f32.mrb[0].mxu0
        %v1209 = vadd.f32 0.0, %v1208
        %v1210 = vpop.f32.mrb[0].mxu0
        %1211 = vmatprep.mubr.bf16.mxu0 0
        %1212 = vmatmul.mubr.bf16.gmra.mrb[0].mxu0 %v1125
        %v1213 = vpop.f32.mrb[0].mxu0
        %v1214 = vadd.f32 0.0, %v1213
        %v1215 = vpop.f32.mrb[0].mxu0
        %v1216 = vpop.f32.mrb[0].mxu0
        %v1217 = vadd.f32 0.0, %v1216
        %v1218 = vpop.f32.mrb[0].mxu0
        %1219 = vmatprep.mubr.bf16.mxu0 0
        %1220 = vmatmul.mubr.bf16.gmra.mrb[0].mxu0 %v1127
        %v1221 = vpop.f32.mrb[0].mxu0
        %v1222 = vadd.f32 0.0, %v1221
        %v1223 = vpop.f32.mrb[0].mxu0
        %v1224 = vpop.f32.mrb[0].mxu0
        %v1225 = vadd.f32 0.0, %v1224
        %v1226 = vpop.f32.mrb[0].mxu0
        %1227 = vmatprep.mubr.bf16.mxu0 0
        %1228 = vmatmul.mubr.bf16.gmra.mrb[0].mxu0 %v1129
        %v1229 = vpop.f32.mrb[0].mxu0
        %v1230 = vadd.f32 0.0, %v1229
        %v1231 = vpop.f32.mrb[0].mxu0
        %v1232 = vpop.f32.mrb[0].mxu0
        %v1233 = vadd.f32 0.0, %v1232
        %v1234 = vpop.f32.mrb[0].mxu0
        %1235 = vmatprep.mubr.bf16.mxu0 0
        %1236 = vmatmul.mubr.bf16.gmra.mrb[0].mxu0 %v1131
        %v1237 = vpop.f32.mrb[0].mxu0
        %v1238 = vadd.f32 0.0, %v1237
        %v1239 = vpop.f32.mrb[0].mxu0
        %v1240 = vpop.f32.mrb[0].mxu0
        %v1241 = vadd.f32 0.0, %v1240
        %v1242 = vpop.f32.mrb[0].mxu0
        %1243 = vmatprep.mubr.bf16.mxu0 0
        %1244 = vmatmul.mubr.bf16.gmra.mrb[0].mxu0 %v1133
        %v1245 = vpop.f32.mrb[0].mxu0
        %v1246 = vadd.f32 0.0, %v1245
        %v1247 = vpop.f32.mrb[0].mxu0
        %v1248 = vpop.f32.mrb[0].mxu0
        %v1249 = vadd.f32 0.0, %v1248
        %v1250 = vpop.f32.mrb[0].mxu0
        %1251 = vmatprep.mubr.bf16.mxu0 0
        %1252 = vmatmul.mubr.bf16.gmra.mrb[0].mxu0 %v1135
        %v1253 = vpop.f32.mrb[0].mxu0
        %v1254 = vadd.f32 0.0, %v1253
        %v1255 = vpop.f32.mrb[0].mxu0
        %v1256 = vpop.f32.mrb[0].mxu0
        %v1257 = vadd.f32 0.0, %v1256
        %v1258 = vpop.f32.mrb[0].mxu0
        %1259 = vmatprep.mubr.bf16.mxu0 0
        %1260 = vmatmul.mubr.bf16.gmra.mrb[0].mxu0 %v1137
        %v1261 = vpop.f32.mrb[0].mxu0
        %v1262 = vadd.f32 0.0, %v1261
        %v1263 = vpop.f32.mrb[0].mxu0
        %v1264 = vpop.f32.mrb[0].mxu0
        %v1265 = vadd.f32 0.0, %v1264
        %v1266 = vpop.f32.mrb[0].mxu0
        %1267 = vmatprep.mubr.bf16.mxu0 0
        %1268 = vmatmul.mubr.bf16.gmra.mrb[0].mxu0 %v1139
        %v1269 = vpop.f32.mrb[0].mxu0
        %v1270 = vadd.f32 0.0, %v1269
        %v1271 = vpop.f32.mrb[0].mxu0
        %v1272 = vpop.f32.mrb[0].mxu0
        %v1273 = vadd.f32 0.0, %v1272
        %v1274 = vpop.f32.mrb[0].mxu0
        %1275 = vmatprep.mubr.bf16.mxu0 0
        %1276 = vmatmul.mubr.bf16.gmra.mrb[0].mxu0 %v1141
        %v1277 = vpop.f32.mrb[0].mxu0
        %v1278 = vadd.f32 0.0, %v1277
        %v1279 = vpop.f32.mrb[0].mxu0
        %v1280 = vpop.f32.mrb[0].mxu0
        %v1281 = vadd.f32 0.0, %v1280
        %v1282 = vpop.f32.mrb[0].mxu0
        %1283 = vmatprep.mubr.bf16.mxu0 0
        %1284 = vmatmul.mubr.bf16.gmra.mrb[0].mxu0 %v1143
        %v1285 = vpop.f32.mrb[0].mxu0
        %v1286 = vadd.f32 0.0, %v1285
        %v1287 = vpop.f32.mrb[0].mxu0
        %v1288 = vpop.f32.mrb[0].mxu0
        %v1289 = vadd.f32 0.0, %v1288
        %v1290 = vpop.f32.mrb[0].mxu0
        %1291 = vmatprep.mubr.bf16.mxu0 0
        %1292 = vmatmul.mubr.bf16.gmra.mrb[0].mxu0 %v1145
        %v1293 = vpop.f32.mrb[0].mxu0
        %v1294 = vadd.f32 0.0, %v1293
        %v1295 = vpop.f32.mrb[0].mxu0
        %v1296 = vpop.f32.mrb[0].mxu0
        %v1297 = vadd.f32 0.0, %v1296
        %v1298 = vpop.f32.mrb[0].mxu0
        %1299 = vmatprep.mubr.bf16.mxu0 0
        %1300 = vmatmul.mubr.bf16.gmra.mrb[0].mxu0 %v1147
        %v1301 = vpop.f32.mrb[0].mxu0
        %v1302 = vadd.f32 0.0, %v1301
        %v1303 = vpop.f32.mrb[0].mxu0
        %v1304 = vpop.f32.mrb[0].mxu0
        %v1305 = vadd.f32 0.0, %v1304
        %v1306 = vpop.f32.mrb[0].mxu0
        %1307 = vmatprep.mubr.bf16.mxu0 0
        %1308 = vmatmul.mubr.bf16.gmra.mrb[0].mxu0 %v1149
        %v1309 = vpop.f32.mrb[0].mxu0
        %v1310 = vadd.f32 0.0, %v1309
        %v1311 = vpop.f32.mrb[0].mxu0
        %v1312 = vpop.f32.mrb[0].mxu0
        %v1313 = vadd.f32 0.0, %v1312
        %v1314 = vpop.f32.mrb[0].mxu0
        %1315 = vmatprep.mubr.bf16.mxu0 0
        %1316 = vmatmul.mubr.bf16.gmra.mrb[0].mxu0 %v1151
        %v1317 = vpop.f32.mrb[0].mxu0
        %v1318 = vadd.f32 0.0, %v1317
        %v1319 = vpop.f32.mrb[0].mxu0
        %v1320 = vpop.f32.mrb[0].mxu0
        %v1321 = vadd.f32 0.0, %v1320
        %v1322 = vpop.f32.mrb[0].mxu0
        %1323 = vmatprep.mubr.bf16.mxu0 0
        %1324 = vmatmul.mubr.bf16.gmra.mrb[0].mxu0 %v1153
        %v1325 = vpop.f32.mrb[0].mxu0
        %v1326 = vadd.f32 0.0, %v1325
        %v1327 = vpop.f32.mrb[0].mxu0
        %v1328 = vpop.f32.mrb[0].mxu0
        %v1329 = vadd.f32 0.0, %v1328
        %v1330 = vpop.f32.mrb[0].mxu0
        %1331 = vdwg.mxu0
        %v1332 = vadd.f32 %v1070, %v1190
        %v1333 = vadd.f32 %v1071, %v1193
        %v1334 = vadd.f32 %v1072, %v1198
        %v1335 = vadd.f32 %v1073, %v1201
        %v1336 = vadd.f32 %v1074, %v1206
        %v1337 = vadd.f32 %v1075, %v1209
        %v1338 = vadd.f32 %v1076, %v1214
        %v1339 = vadd.f32 %v1077, %v1217
        %v1340 = vadd.f32 %v1078, %v1222
        %v1341 = vadd.f32 %v1079, %v1225
        %v1342 = vadd.f32 %v1080, %v1230
        %v1343 = vadd.f32 %v1081, %v1233
        %v1344 = vadd.f32 %v1082, %v1238
        %v1345 = vadd.f32 %v1083, %v1241
        %v1346 = vadd.f32 %v1084, %v1246
        %v1347 = vadd.f32 %v1085, %v1249
        %v1348 = vadd.f32 %v1086, %v1254
        %v1349 = vadd.f32 %v1087, %v1257
        %v1350 = vadd.f32 %v1088, %v1262
        %v1351 = vadd.f32 %v1089, %v1265
        %v1352 = vadd.f32 %v1090, %v1270
        %v1353 = vadd.f32 %v1091, %v1273
        %v1354 = vadd.f32 %v1092, %v1278
        %v1355 = vadd.f32 %v1093, %v1281
        %v1356 = vadd.f32 %v1094, %v1286
        %v1357 = vadd.f32 %v1095, %v1289
        %v1358 = vadd.f32 %v1096, %v1294
        %v1359 = vadd.f32 %v1097, %v1297
        %v1360 = vadd.f32 %v1098, %v1302
        %v1361 = vadd.f32 %v1099, %v1305
        %v1362 = vadd.f32 %v1100, %v1310
        %v1363 = vadd.f32 %v1101, %v1313
        %1396 = vrot.lane.b32.xlu0 %v1198, 112
        %v1397 = vpop.permute.xlu0 %1396
        %1398 = vrot.lane.b32.xlu0 %v1201, 112
        %v1399 = vpop.permute.xlu0 %1398
        %1400 = vrot.lane.b32.xlu0 %v1206, 112
        %v1401 = vpop.permute.xlu0 %1400
        %1402 = vrot.lane.b32.xlu0 %v1209, 112
        %v1403 = vpop.permute.xlu0 %1402
        %1404 = vrot.lane.b32.xlu0 %v1214, 112
        %v1405 = vpop.permute.xlu0 %1404
        %1406 = vrot.lane.b32.xlu0 %v1217, 112
        %v1407 = vpop.permute.xlu0 %1406
        %1408 = vrot.lane.b32.xlu0 %v1222, 112
        %v1409 = vpop.permute.xlu0 %1408
        %1410 = vrot.lane.b32.xlu0 %v1225, 112
        %v1411 = vpop.permute.xlu0 %1410
        %1412 = vrot.lane.b32.xlu0 %v1230, 112
        %v1413 = vpop.permute.xlu0 %1412
        %1414 = vrot.lane.b32.xlu0 %v1233, 112
        %v1415 = vpop.permute.xlu0 %1414
        %1416 = vrot.lane.b32.xlu0 %v1238, 112
        %v1417 = vpop.permute.xlu0 %1416
        %1418 = vrot.lane.b32.xlu0 %v1241, 112
        %v1419 = vpop.permute.xlu0 %1418
        %1420 = vrot.lane.b32.xlu0 %v1246, 112
        %v1421 = vpop.permute.xlu0 %1420
        %1422 = vrot.lane.b32.xlu0 %v1249, 112
        %v1423 = vpop.permute.xlu0 %1422
        %1424 = vrot.lane.b32.xlu0 %v1254, 112
        %v1425 = vpop.permute.xlu0 %1424
        %1426 = vrot.lane.b32.xlu0 %v1257, 112
        %v1427 = vpop.permute.xlu0 %1426
        %1428 = vrot.lane.b32.xlu0 %v1262, 112
        %v1429 = vpop.permute.xlu0 %1428
        %1430 = vrot.lane.b32.xlu0 %v1265, 112
        %v1431 = vpop.permute.xlu0 %1430
        %1432 = vrot.lane.b32.xlu0 %v1270, 112
        %v1433 = vpop.permute.xlu0 %1432
        %1434 = vrot.lane.b32.xlu0 %v1273, 112
        %v1435 = vpop.permute.xlu0 %1434
        %1436 = vrot.lane.b32.xlu0 %v1278, 112
        %v1437 = vpop.permute.xlu0 %1436
        %1438 = vrot.lane.b32.xlu0 %v1281, 112
        %v1439 = vpop.permute.xlu0 %1438
        %1440 = vrot.lane.b32.xlu0 %v1286, 112
        %v1441 = vpop.permute.xlu0 %1440
        %1442 = vrot.lane.b32.xlu0 %v1289, 112
        %v1443 = vpop.permute.xlu0 %1442
        %1444 = vrot.lane.b32.xlu0 %v1294, 112
        %v1445 = vpop.permute.xlu0 %1444
        %1446 = vrot.lane.b32.xlu0 %v1297, 112
        %v1447 = vpop.permute.xlu0 %1446
        %1448 = vrot.lane.b32.xlu0 %v1302, 112
        %v1449 = vpop.permute.xlu0 %1448
        %1450 = vrot.lane.b32.xlu0 %v1305, 112
        %v1451 = vpop.permute.xlu0 %1450
        %1452 = vrot.lane.b32.xlu0 %v1310, 112
        %v1453 = vpop.permute.xlu0 %1452
        %1454 = vrot.lane.b32.xlu0 %v1313, 112
        %v1455 = vpop.permute.xlu0 %1454
        %1456 = vrot.lane.b32.xlu0 %v1318, 112
        %v1457 = vpop.permute.xlu0 %1456
        %1458 = vrot.lane.b32.xlu0 %v1321, 112
        %v1459 = vpop.permute.xlu0 %1458
        %v1492 = vadd.f32 %v1332, %v1397
        %v1493 = vadd.f32 %v1333, %v1399
        %v1494 = vadd.f32 %v1334, %v1401
        %v1495 = vadd.f32 %v1335, %v1403
        %v1496 = vadd.f32 %v1336, %v1405
        %v1497 = vadd.f32 %v1337, %v1407
        %v1498 = vadd.f32 %v1338, %v1409
        %v1499 = vadd.f32 %v1339, %v1411
        %v1500 = vadd.f32 %v1340, %v1413
        %v1501 = vadd.f32 %v1341, %v1415
        %v1502 = vadd.f32 %v1342, %v1417
        %v1503 = vadd.f32 %v1343, %v1419
        %v1504 = vadd.f32 %v1344, %v1421
        %v1505 = vadd.f32 %v1345, %v1423
        %v1506 = vadd.f32 %v1346, %v1425
        %v1507 = vadd.f32 %v1347, %v1427
        %v1508 = vadd.f32 %v1348, %v1429
        %v1509 = vadd.f32 %v1349, %v1431
        %v1510 = vadd.f32 %v1350, %v1433
        %v1511 = vadd.f32 %v1351, %v1435
        %v1512 = vadd.f32 %v1352, %v1437
        %v1513 = vadd.f32 %v1353, %v1439
        %v1514 = vadd.f32 %v1354, %v1441
        %v1515 = vadd.f32 %v1355, %v1443
        %v1516 = vadd.f32 %v1356, %v1445
        %v1517 = vadd.f32 %v1357, %v1447
        %v1518 = vadd.f32 %v1358, %v1449
        %v1519 = vadd.f32 %v1359, %v1451
        %v1520 = vadd.f32 %v1360, %v1453
        %v1521 = vadd.f32 %v1361, %v1455
        %v1522 = vadd.f32 %v1362, %v1457
        %v1523 = vadd.f32 %v1363, %v1459
        %1526 = vrot.lane.b32.xlu0 %v1206, 96
        %v1527 = vpop.permute.xlu0 %1526
        %1528 = vrot.lane.b32.xlu0 %v1209, 96
        %v1529 = vpop.permute.xlu0 %1528
        %1530 = vrot.lane.b32.xlu0 %v1214, 96
        %v1531 = vpop.permute.xlu0 %1530
        %1532 = vrot.lane.b32.xlu0 %v1217, 96
        %v1533 = vpop.permute.xlu0 %1532
        %1534 = vrot.lane.b32.xlu0 %v1222, 96
        %v1535 = vpop.permute.xlu0 %1534
        %1536 = vrot.lane.b32.xlu0 %v1225, 96
        %v1537 = vpop.permute.xlu0 %1536
        %1538 = vrot.lane.b32.xlu0 %v1230, 96
        %v1539 = vpop.permute.xlu0 %1538
        %1540 = vrot.lane.b32.xlu0 %v1233, 96
        %v1541 = vpop.permute.xlu0 %1540
        %1542 = vrot.lane.b32.xlu0 %v1238, 96
        %v1543 = vpop.permute.xlu0 %1542
        %1544 = vrot.lane.b32.xlu0 %v1241, 96
        %v1545 = vpop.permute.xlu0 %1544
        %1546 = vrot.lane.b32.xlu0 %v1246, 96
        %v1547 = vpop.permute.xlu0 %1546
        %1548 = vrot.lane.b32.xlu0 %v1249, 96
        %v1549 = vpop.permute.xlu0 %1548
        %1550 = vrot.lane.b32.xlu0 %v1254, 96
        %v1551 = vpop.permute.xlu0 %1550
        %1552 = vrot.lane.b32.xlu0 %v1257, 96
        %v1553 = vpop.permute.xlu0 %1552
        %1554 = vrot.lane.b32.xlu0 %v1262, 96
        %v1555 = vpop.permute.xlu0 %1554
        %1556 = vrot.lane.b32.xlu0 %v1265, 96
        %v1557 = vpop.permute.xlu0 %1556
        %1558 = vrot.lane.b32.xlu0 %v1270, 96
        %v1559 = vpop.permute.xlu0 %1558
        %1560 = vrot.lane.b32.xlu0 %v1273, 96
        %v1561 = vpop.permute.xlu0 %1560
        %1562 = vrot.lane.b32.xlu0 %v1278, 96
        %v1563 = vpop.permute.xlu0 %1562
        %1564 = vrot.lane.b32.xlu0 %v1281, 96
        %v1565 = vpop.permute.xlu0 %1564
        %1566 = vrot.lane.b32.xlu0 %v1286, 96
        %v1567 = vpop.permute.xlu0 %1566
        %1568 = vrot.lane.b32.xlu0 %v1289, 96
        %v1569 = vpop.permute.xlu0 %1568
        %1570 = vrot.lane.b32.xlu0 %v1294, 96
        %v1571 = vpop.permute.xlu0 %1570
        %1572 = vrot.lane.b32.xlu0 %v1297, 96
        %v1573 = vpop.permute.xlu0 %1572
        %1574 = vrot.lane.b32.xlu0 %v1302, 96
        %v1575 = vpop.permute.xlu0 %1574
        %1576 = vrot.lane.b32.xlu0 %v1305, 96
        %v1577 = vpop.permute.xlu0 %1576
        %1578 = vrot.lane.b32.xlu0 %v1310, 96
        %v1579 = vpop.permute.xlu0 %1578
        %1580 = vrot.lane.b32.xlu0 %v1313, 96
        %v1581 = vpop.permute.xlu0 %1580
        %1582 = vrot.lane.b32.xlu0 %v1318, 96
        %v1583 = vpop.permute.xlu0 %1582
        %1584 = vrot.lane.b32.xlu0 %v1321, 96
        %v1585 = vpop.permute.xlu0 %1584
        %1586 = vrot.lane.b32.xlu0 %v1326, 96
        %v1587 = vpop.permute.xlu0 %1586
        %1588 = vrot.lane.b32.xlu0 %v1329, 96
        %v1589 = vpop.permute.xlu0 %1588
        %v1622 = vadd.f32 %v1492, %v1527
        %v1623 = vadd.f32 %v1493, %v1529
        %v1624 = vadd.f32 %v1494, %v1531
        %v1625 = vadd.f32 %v1495, %v1533
        %v1626 = vadd.f32 %v1496, %v1535
        %v1627 = vadd.f32 %v1497, %v1537
        %v1628 = vadd.f32 %v1498, %v1539
        %v1629 = vadd.f32 %v1499, %v1541
        %v1630 = vadd.f32 %v1500, %v1543
        %v1631 = vadd.f32 %v1501, %v1545
        %v1632 = vadd.f32 %v1502, %v1547
        %v1633 = vadd.f32 %v1503, %v1549
        %v1634 = vadd.f32 %v1504, %v1551
        %v1635 = vadd.f32 %v1505, %v1553
        %v1636 = vadd.f32 %v1506, %v1555
        %v1637 = vadd.f32 %v1507, %v1557
        %v1638 = vadd.f32 %v1508, %v1559
        %v1639 = vadd.f32 %v1509, %v1561
        %v1640 = vadd.f32 %v1510, %v1563
        %v1641 = vadd.f32 %v1511, %v1565
        %v1642 = vadd.f32 %v1512, %v1567
        %v1643 = vadd.f32 %v1513, %v1569
        %v1644 = vadd.f32 %v1514, %v1571
        %v1645 = vadd.f32 %v1515, %v1573
        %v1646 = vadd.f32 %v1516, %v1575
        %v1647 = vadd.f32 %v1517, %v1577
        %v1648 = vadd.f32 %v1518, %v1579
        %v1649 = vadd.f32 %v1519, %v1581
        %v1650 = vadd.f32 %v1520, %v1583
        %v1651 = vadd.f32 %v1521, %v1585
        %v1652 = vadd.f32 %v1522, %v1587
        %v1653 = vadd.f32 %v1523, %v1589
        %v1654 = vld [vmem:[#allocation2 + $0x8] sm:$0xff]
        %v1655 = vld [vmem:[#allocation2 + $0x10] sm:$0x1]
        %v1656 = vld [vmem:[#allocation2 + $0x20] sm:$0xff]
        %v1657 = vld [vmem:[#allocation2 + $0x28] sm:$0x1]
        %v1658 = vld [vmem:[#allocation2 + $0x38] sm:$0xff]
        %v1659 = vld [vmem:[#allocation2 + $0x40] sm:$0x1]
        %v1660 = vld [vmem:[#allocation2 + $0x50] sm:$0xff]
        %v1661 = vld [vmem:[#allocation2 + $0x58] sm:$0x1]
        %v1662 = vld [vmem:[#allocation2 + $0x68] sm:$0xff]
        %v1663 = vld [vmem:[#allocation2 + $0x70] sm:$0x1]
        %v1664 = vld [vmem:[#allocation2 + $0x80] sm:$0xff]
        %v1665 = vld [vmem:[#allocation2 + $0x88] sm:$0x1]
        %v1666 = vld [vmem:[#allocation2 + $0x98] sm:$0xff]
        %v1667 = vld [vmem:[#allocation2 + $0xa0] sm:$0x1]
        %v1668 = vld [vmem:[#allocation2 + $0xb0] sm:$0xff]
        %v1669 = vld [vmem:[#allocation2 + $0xb8] sm:$0x1]
        %v1670 = vld [vmem:[#allocation2 + $0xc8] sm:$0xff]
        %v1671 = vld [vmem:[#allocation2 + $0xd0] sm:$0x1]
        %v1672 = vld [vmem:[#allocation2 + $0xe0] sm:$0xff]
        %v1673 = vld [vmem:[#allocation2 + $0xe8] sm:$0x1]
        %v1674 = vld [vmem:[#allocation2 + $0xf8] sm:$0xff]
        %v1675 = vld [vmem:[#allocation2 + $0x100] sm:$0x1]
        %v1676 = vld [vmem:[#allocation2 + $0x110] sm:$0xff]
        %v1677 = vld [vmem:[#allocation2 + $0x118] sm:$0x1]
        %v1678 = vld [vmem:[#allocation2 + $0x128] sm:$0xff]
        %v1679 = vld [vmem:[#allocation2 + $0x130] sm:$0x1]
        %v1680 = vld [vmem:[#allocation2 + $0x140] sm:$0xff]
        %v1681 = vld [vmem:[#allocation2 + $0x148] sm:$0x1]
        %v1682 = vld [vmem:[#allocation2 + $0x158] sm:$0xff]
        %v1683 = vld [vmem:[#allocation2 + $0x160] sm:$0x1]
        %v1684 = vld [vmem:[#allocation2 + $0x170] sm:$0xff]
        %v1685 = vld [vmem:[#allocation2 + $0x178] sm:$0x1]
        %v1686 = vld [vmem:[#allocation2 + $0x188] sm:$0xff]
        %v1687 = vld [vmem:[#allocation2 + $0x190] sm:$0x1]
        %v1688 = vld [vmem:[#allocation2 + $0x1a0] sm:$0xff]
        %v1689 = vld [vmem:[#allocation2 + $0x1a8] sm:$0x1]
        %vm1690 = vsmask.f32 7424
        %v1692 = vshrl.u32 %v1654, 16
        %v1694 = vshll.u32 %v1654, 16
        %v1696 = vrot.slane %v1694, 1
        %v1697 = vor.u32 %v1692, %v1696
        %v1699 = vshll.u32 %v1655, 16
        %v1701 = vrot.slane %v1699, 1
        %v1702 = vsel %vm1690, %v1697, %v1701
        %v1704 = vshrl.u32 %v1656, 16
        %v1706 = vshll.u32 %v1656, 16
        %v1708 = vrot.slane %v1706, 1
        %v1709 = vor.u32 %v1704, %v1708
        %v1711 = vshll.u32 %v1657, 16
        %v1713 = vrot.slane %v1711, 1
        %v1714 = vsel %vm1690, %v1709, %v1713
        %v1716 = vshrl.u32 %v1658, 16
        %v1718 = vshll.u32 %v1658, 16
        %v1720 = vrot.slane %v1718, 1
        %v1721 = vor.u32 %v1716, %v1720
        %v1723 = vshll.u32 %v1659, 16
        %v1725 = vrot.slane %v1723, 1
        %v1726 = vsel %vm1690, %v1721, %v1725
        %v1728 = vshrl.u32 %v1660, 16
        %v1730 = vshll.u32 %v1660, 16
        %v1732 = vrot.slane %v1730, 1
        %v1733 = vor.u32 %v1728, %v1732
        %v1735 = vshll.u32 %v1661, 16
        %v1737 = vrot.slane %v1735, 1
        %v1738 = vsel %vm1690, %v1733, %v1737
        %v1740 = vshrl.u32 %v1662, 16
        %v1742 = vshll.u32 %v1662, 16
        %v1744 = vrot.slane %v1742, 1
        %v1745 = vor.u32 %v1740, %v1744
        %v1747 = vshll.u32 %v1663, 16
        %v1749 = vrot.slane %v1747, 1
        %v1750 = vsel %vm1690, %v1745, %v1749
        %v1752 = vshrl.u32 %v1664, 16
        %v1754 = vshll.u32 %v1664, 16
        %v1756 = vrot.slane %v1754, 1
        %v1757 = vor.u32 %v1752, %v1756
        %v1759 = vshll.u32 %v1665, 16
        %v1761 = vrot.slane %v1759, 1
        %v1762 = vsel %vm1690, %v1757, %v1761
        %v1764 = vshrl.u32 %v1666, 16
        %v1766 = vshll.u32 %v1666, 16
        %v1768 = vrot.slane %v1766, 1
        %v1769 = vor.u32 %v1764, %v1768
        %v1771 = vshll.u32 %v1667, 16
        %v1773 = vrot.slane %v1771, 1
        %v1774 = vsel %vm1690, %v1769, %v1773
        %v1776 = vshrl.u32 %v1668, 16
        %v1778 = vshll.u32 %v1668, 16
        %v1780 = vrot.slane %v1778, 1
        %v1781 = vor.u32 %v1776, %v1780
        %v1783 = vshll.u32 %v1669, 16
        %v1785 = vrot.slane %v1783, 1
        %v1786 = vsel %vm1690, %v1781, %v1785
        %v1788 = vshrl.u32 %v1670, 16
        %v1790 = vshll.u32 %v1670, 16
        %v1792 = vrot.slane %v1790, 1
        %v1793 = vor.u32 %v1788, %v1792
        %v1795 = vshll.u32 %v1671, 16
        %v1797 = vrot.slane %v1795, 1
        %v1798 = vsel %vm1690, %v1793, %v1797
        %v1800 = vshrl.u32 %v1672, 16
        %v1802 = vshll.u32 %v1672, 16
        %v1804 = vrot.slane %v1802, 1
        %v1805 = vor.u32 %v1800, %v1804
        %v1807 = vshll.u32 %v1673, 16
        %v1809 = vrot.slane %v1807, 1
        %v1810 = vsel %vm1690, %v1805, %v1809
        %v1812 = vshrl.u32 %v1674, 16
        %v1814 = vshll.u32 %v1674, 16
        %v1816 = vrot.slane %v1814, 1
        %v1817 = vor.u32 %v1812, %v1816
        %v1819 = vshll.u32 %v1675, 16
        %v1821 = vrot.slane %v1819, 1
        %v1822 = vsel %vm1690, %v1817, %v1821
        %v1824 = vshrl.u32 %v1676, 16
        %v1826 = vshll.u32 %v1676, 16
        %v1828 = vrot.slane %v1826, 1
        %v1829 = vor.u32 %v1824, %v1828
        %v1831 = vshll.u32 %v1677, 16
        %v1833 = vrot.slane %v1831, 1
        %v1834 = vsel %vm1690, %v1829, %v1833
        %v1836 = vshrl.u32 %v1678, 16
        %v1838 = vshll.u32 %v1678, 16
        %v1840 = vrot.slane %v1838, 1
        %v1841 = vor.u32 %v1836, %v1840
        %v1843 = vshll.u32 %v1679, 16
        %v1845 = vrot.slane %v1843, 1
        %v1846 = vsel %vm1690, %v1841, %v1845
        %v1848 = vshrl.u32 %v1680, 16
        %v1850 = vshll.u32 %v1680, 16
        %v1852 = vrot.slane %v1850, 1
        %v1853 = vor.u32 %v1848, %v1852
        %v1855 = vshll.u32 %v1681, 16
        %v1857 = vrot.slane %v1855, 1
        %v1858 = vsel %vm1690, %v1853, %v1857
        %v1860 = vshrl.u32 %v1682, 16
        %v1862 = vshll.u32 %v1682, 16
        %v1864 = vrot.slane %v1862, 1
        %v1865 = vor.u32 %v1860, %v1864
        %v1867 = vshll.u32 %v1683, 16
        %v1869 = vrot.slane %v1867, 1
        %v1870 = vsel %vm1690, %v1865, %v1869
        %v1872 = vshrl.u32 %v1684, 16
        %v1874 = vshll.u32 %v1684, 16
        %v1876 = vrot.slane %v1874, 1
        %v1877 = vor.u32 %v1872, %v1876
        %v1879 = vshll.u32 %v1685, 16
        %v1881 = vrot.slane %v1879, 1
        %v1882 = vsel %vm1690, %v1877, %v1881
        %v1884 = vshrl.u32 %v1686, 16
        %v1886 = vshll.u32 %v1686, 16
        %v1888 = vrot.slane %v1886, 1
        %v1889 = vor.u32 %v1884, %v1888
        %v1891 = vshll.u32 %v1687, 16
        %v1893 = vrot.slane %v1891, 1
        %v1894 = vsel %vm1690, %v1889, %v1893
        %v1896 = vshrl.u32 %v1688, 16
        %v1898 = vshll.u32 %v1688, 16
        %v1900 = vrot.slane %v1898, 1
        %v1901 = vor.u32 %v1896, %v1900
        %v1903 = vshll.u32 %v1689, 16
        %v1905 = vrot.slane %v1903, 1
        %v1906 = vsel %vm1690, %v1901, %v1905
        %s1907 = scalar_lea.vmem %s1, 96
        %v1908 = vld [vmem:[%s1907] sm:$0xf]
        %v1909 = vld [vmem:[%s1907 + $0x4] sm:$0xf]
        %v1910 = vld [vmem:[%s1907 + $0x8] sm:$0xf]
        %v1911 = vld [vmem:[%s1907 + $0xc] sm:$0xf]
        %v1916 = vunpack.c.l.b16 %v1908
        %v1917 = vunpack.c.l.b16 %v1909
        %v1918 = vunpack.c.l.b16 %v1910
        %v1919 = vunpack.c.l.b16 %v1911
        %v1920 = vpack.c.b16 %v1917, %v1916
        %v1921 = vpack.c.b16 %v1919, %v1918
        %v1925 = vsel %vm263, %v1702, 0
        %v1928 = vsel %vm263, %v1714, 0
        %v1931 = vsel %vm263, %v1726, 0
        %v1934 = vsel %vm263, %v1738, 0
        %v1937 = vsel %vm263, %v1750, 0
        %v1940 = vsel %vm263, %v1762, 0
        %v1943 = vsel %vm263, %v1774, 0
        %v1946 = vsel %vm263, %v1786, 0
        %v1949 = vsel %vm263, %v1798, 0
        %v1952 = vsel %vm263, %v1810, 0
        %v1955 = vsel %vm263, %v1822, 0
        %v1958 = vsel %vm263, %v1834, 0
        %v1961 = vsel %vm263, %v1846, 0
        %v1964 = vsel %vm263, %v1858, 0
        %v1967 = vsel %vm263, %v1870, 0
        %v1970 = vsel %vm263, %v1882, 0
        %v1973 = vsel %vm263, %v1894, 0
        %v1976 = vsel %vm263, %v1906, 0
        %1978 = vmatprep.subr.bf16.mxu0 0
        %1979 = vmatpush1.bf16.msra.mxu0 %v1920
        %1980 = vmatprep.subr.bf16.mxu0 0
        %1981 = vmatpush1.bf16.msra.mxu0 %v1921
        %1982 = vmatprep.subr.bf16.mxu0 0
        %1983 = vmatpush1.bf16.msra.mxu0 0
        %1984 = vmatprep.subr.bf16.mxu0 0
        %1985 = vmatpush1.bf16.msra.mxu0 0
        %1986 = vmatprep.subr.bf16.mxu0 0
        %1987 = vmatpush1.bf16.msra.mxu0 0
        %1988 = vmatprep.subr.bf16.mxu0 0
        %1989 = vmatpush1.bf16.msra.mxu0 0
        %1990 = vmatprep.subr.bf16.mxu0 0
        %1991 = vmatpush1.bf16.msra.mxu0 0
        %1992 = vmatprep.subr.bf16.mxu0 0
        %1993 = vmatpush1.bf16.msra.mxu0 0
        %1994 = vmatprep.subr.bf16.mxu0 0
        %1995 = vmatpush1.bf16.msra.mxu0 0
        %1996 = vmatprep.subr.bf16.mxu0 0
        %1997 = vmatpush1.bf16.msra.mxu0 0
        %1998 = vmatprep.subr.bf16.mxu0 0
        %1999 = vmatpush1.bf16.msra.mxu0 0
        %2000 = vmatprep.subr.bf16.mxu0 0
        %2001 = vmatpush1.bf16.msra.mxu0 0
        %2002 = vmatprep.subr.bf16.mxu0 0
        %2003 = vmatpush1.bf16.msra.mxu0 0
        %2004 = vmatprep.subr.bf16.mxu0 0
        %2005 = vmatpush1.bf16.msra.mxu0 0
        %2006 = vmatprep.subr.bf16.mxu0 0
        %2007 = vmatpush1.bf16.msra.mxu0 0
        %2008 = vmatprep.subr.bf16.mxu0 0
        %2009 = vmatpush1.bf16.msra.mxu0 0
        %2010 = vmatprep.mubr.bf16.mxu0 0
        %2011 = vmatmul.mubr.bf16.gmra.mrb[0].mxu0 %v1925
        %v2012 = vpop.f32.mrb[0].mxu0
        %v2013 = vadd.f32 0.0, %v2012
        %v2014 = vpop.f32.mrb[0].mxu0
        %v2015 = vpop.f32.mrb[0].mxu0
        %v2016 = vadd.f32 0.0, %v2015
        %v2017 = vpop.f32.mrb[0].mxu0
        %2018 = vmatprep.mubr.bf16.mxu0 0
        %2019 = vmatmul.mubr.bf16.gmra.mrb[0].mxu0 %v1928
        %v2020 = vpop.f32.mrb[0].mxu0
        %v2021 = vadd.f32 0.0, %v2020
        %v2022 = vpop.f32.mrb[0].mxu0
        %v2023 = vpop.f32.mrb[0].mxu0
        %v2024 = vadd.f32 0.0, %v2023
        %v2025 = vpop.f32.mrb[0].mxu0
        %2026 = vmatprep.mubr.bf16.mxu0 0
        %2027 = vmatmul.mubr.bf16.gmra.mrb[0].mxu0 %v1931
        %v2028 = vpop.f32.mrb[0].mxu0
        %v2029 = vadd.f32 0.0, %v2028
        %v2030 = vpop.f32.mrb[0].mxu0
        %v2031 = vpop.f32.mrb[0].mxu0
        %v2032 = vadd.f32 0.0, %v2031
        %v2033 = vpop.f32.mrb[0].mxu0
        %2034 = vmatprep.mubr.bf16.mxu0 0
        %2035 = vmatmul.mubr.bf16.gmra.mrb[0].mxu0 %v1934
        %v2036 = vpop.f32.mrb[0].mxu0
        %v2037 = vadd.f32 0.0, %v2036
        %v2038 = vpop.f32.mrb[0].mxu0
        %v2039 = vpop.f32.mrb[0].mxu0
        %v2040 = vadd.f32 0.0, %v2039
        %v2041 = vpop.f32.mrb[0].mxu0
        %2042 = vmatprep.mubr.bf16.mxu0 0
        %2043 = vmatmul.mubr.bf16.gmra.mrb[0].mxu0 %v1937
        %v2044 = vpop.f32.mrb[0].mxu0
        %v2045 = vadd.f32 0.0, %v2044
        %v2046 = vpop.f32.mrb[0].mxu0
        %v2047 = vpop.f32.mrb[0].mxu0
        %v2048 = vadd.f32 0.0, %v2047
        %v2049 = vpop.f32.mrb[0].mxu0
        %2050 = vmatprep.mubr.bf16.mxu0 0
        %2051 = vmatmul.mubr.bf16.gmra.mrb[0].mxu0 %v1940
        %v2052 = vpop.f32.mrb[0].mxu0
        %v2053 = vadd.f32 0.0, %v2052
        %v2054 = vpop.f32.mrb[0].mxu0
        %v2055 = vpop.f32.mrb[0].mxu0
        %v2056 = vadd.f32 0.0, %v2055
        %v2057 = vpop.f32.mrb[0].mxu0
        %2058 = vmatprep.mubr.bf16.mxu0 0
        %2059 = vmatmul.mubr.bf16.gmra.mrb[0].mxu0 %v1943
        %v2060 = vpop.f32.mrb[0].mxu0
        %v2061 = vadd.f32 0.0, %v2060
        %v2062 = vpop.f32.mrb[0].mxu0
        %v2063 = vpop.f32.mrb[0].mxu0
        %v2064 = vadd.f32 0.0, %v2063
        %v2065 = vpop.f32.mrb[0].mxu0
        %2066 = vmatprep.mubr.bf16.mxu0 0
        %2067 = vmatmul.mubr.bf16.gmra.mrb[0].mxu0 %v1946
        %v2068 = vpop.f32.mrb[0].mxu0
        %v2069 = vadd.f32 0.0, %v2068
        %v2070 = vpop.f32.mrb[0].mxu0
        %v2071 = vpop.f32.mrb[0].mxu0
        %v2072 = vadd.f32 0.0, %v2071
        %v2073 = vpop.f32.mrb[0].mxu0
        %2074 = vmatprep.mubr.bf16.mxu0 0
        %2075 = vmatmul.mubr.bf16.gmra.mrb[0].mxu0 %v1949
        %v2076 = vpop.f32.mrb[0].mxu0
        %v2077 = vadd.f32 0.0, %v2076
        %v2078 = vpop.f32.mrb[0].mxu0
        %v2079 = vpop.f32.mrb[0].mxu0
        %v2080 = vadd.f32 0.0, %v2079
        %v2081 = vpop.f32.mrb[0].mxu0
        %2082 = vmatprep.mubr.bf16.mxu0 0
        %2083 = vmatmul.mubr.bf16.gmra.mrb[0].mxu0 %v1952
        %v2084 = vpop.f32.mrb[0].mxu0
        %v2085 = vadd.f32 0.0, %v2084
        %v2086 = vpop.f32.mrb[0].mxu0
        %v2087 = vpop.f32.mrb[0].mxu0
        %v2088 = vadd.f32 0.0, %v2087
        %v2089 = vpop.f32.mrb[0].mxu0
        %2090 = vmatprep.mubr.bf16.mxu0 0
        %2091 = vmatmul.mubr.bf16.gmra.mrb[0].mxu0 %v1955
        %v2092 = vpop.f32.mrb[0].mxu0
        %v2093 = vadd.f32 0.0, %v2092
        %v2094 = vpop.f32.mrb[0].mxu0
        %v2095 = vpop.f32.mrb[0].mxu0
        %v2096 = vadd.f32 0.0, %v2095
        %v2097 = vpop.f32.mrb[0].mxu0
        %2098 = vmatprep.mubr.bf16.mxu0 0
        %2099 = vmatmul.mubr.bf16.gmra.mrb[0].mxu0 %v1958
        %v2100 = vpop.f32.mrb[0].mxu0
        %v2101 = vadd.f32 0.0, %v2100
        %v2102 = vpop.f32.mrb[0].mxu0
        %v2103 = vpop.f32.mrb[0].mxu0
        %v2104 = vadd.f32 0.0, %v2103
        %v2105 = vpop.f32.mrb[0].mxu0
        %2106 = vmatprep.mubr.bf16.mxu0 0
        %2107 = vmatmul.mubr.bf16.gmra.mrb[0].mxu0 %v1961
        %v2108 = vpop.f32.mrb[0].mxu0
        %v2109 = vadd.f32 0.0, %v2108
        %v2110 = vpop.f32.mrb[0].mxu0
        %v2111 = vpop.f32.mrb[0].mxu0
        %v2112 = vadd.f32 0.0, %v2111
        %v2113 = vpop.f32.mrb[0].mxu0
        %2114 = vmatprep.mubr.bf16.mxu0 0
        %2115 = vmatmul.mubr.bf16.gmra.mrb[0].mxu0 %v1964
        %v2116 = vpop.f32.mrb[0].mxu0
        %v2117 = vadd.f32 0.0, %v2116
        %v2118 = vpop.f32.mrb[0].mxu0
        %v2119 = vpop.f32.mrb[0].mxu0
        %v2120 = vadd.f32 0.0, %v2119
        %v2121 = vpop.f32.mrb[0].mxu0
        %2122 = vmatprep.mubr.bf16.mxu0 0
        %2123 = vmatmul.mubr.bf16.gmra.mrb[0].mxu0 %v1967
        %v2124 = vpop.f32.mrb[0].mxu0
        %v2125 = vadd.f32 0.0, %v2124
        %v2126 = vpop.f32.mrb[0].mxu0
        %v2127 = vpop.f32.mrb[0].mxu0
        %v2128 = vadd.f32 0.0, %v2127
        %v2129 = vpop.f32.mrb[0].mxu0
        %2130 = vmatprep.mubr.bf16.mxu0 0
        %2131 = vmatmul.mubr.bf16.gmra.mrb[0].mxu0 %v1970
        %v2132 = vpop.f32.mrb[0].mxu0
        %v2133 = vadd.f32 0.0, %v2132
        %v2134 = vpop.f32.mrb[0].mxu0
        %v2135 = vpop.f32.mrb[0].mxu0
        %v2136 = vadd.f32 0.0, %v2135
        %v2137 = vpop.f32.mrb[0].mxu0
        %2138 = vmatprep.mubr.bf16.mxu0 0
        %2139 = vmatmul.mubr.bf16.gmra.mrb[0].mxu0 %v1973
        %v2140 = vpop.f32.mrb[0].mxu0
        %v2141 = vadd.f32 0.0, %v2140
        %v2142 = vpop.f32.mrb[0].mxu0
        %v2143 = vpop.f32.mrb[0].mxu0
        %v2144 = vadd.f32 0.0, %v2143
        %v2145 = vpop.f32.mrb[0].mxu0
        %2146 = vmatprep.mubr.bf16.mxu0 0
        %2147 = vmatmul.mubr.bf16.gmra.mrb[0].mxu0 %v1976
        %v2148 = vpop.f32.mrb[0].mxu0
        %v2149 = vadd.f32 0.0, %v2148
        %v2150 = vpop.f32.mrb[0].mxu0
        %v2151 = vpop.f32.mrb[0].mxu0
        %v2152 = vadd.f32 0.0, %v2151
        %v2153 = vpop.f32.mrb[0].mxu0
        %2154 = vdwg.mxu0
        %v2155 = vadd.f32 %v1622, %v2013
        %v2156 = vadd.f32 %v1623, %v2016
        %v2157 = vadd.f32 %v1624, %v2021
        %v2158 = vadd.f32 %v1625, %v2024
        %v2159 = vadd.f32 %v1626, %v2029
        %v2160 = vadd.f32 %v1627, %v2032
        %v2161 = vadd.f32 %v1628, %v2037
        %v2162 = vadd.f32 %v1629, %v2040
        %v2163 = vadd.f32 %v1630, %v2045
        %v2164 = vadd.f32 %v1631, %v2048
        %v2165 = vadd.f32 %v1632, %v2053
        %v2166 = vadd.f32 %v1633, %v2056
        %v2167 = vadd.f32 %v1634, %v2061
        %v2168 = vadd.f32 %v1635, %v2064
        %v2169 = vadd.f32 %v1636, %v2069
        %v2170 = vadd.f32 %v1637, %v2072
        %v2171 = vadd.f32 %v1638, %v2077
        %v2172 = vadd.f32 %v1639, %v2080
        %v2173 = vadd.f32 %v1640, %v2085
        %v2174 = vadd.f32 %v1641, %v2088
        %v2175 = vadd.f32 %v1642, %v2093
        %v2176 = vadd.f32 %v1643, %v2096
        %v2177 = vadd.f32 %v1644, %v2101
        %v2178 = vadd.f32 %v1645, %v2104
        %v2179 = vadd.f32 %v1646, %v2109
        %v2180 = vadd.f32 %v1647, %v2112
        %v2181 = vadd.f32 %v1648, %v2117
        %v2182 = vadd.f32 %v1649, %v2120
        %v2183 = vadd.f32 %v1650, %v2125
        %v2184 = vadd.f32 %v1651, %v2128
        %v2185 = vadd.f32 %v1652, %v2133
        %v2186 = vadd.f32 %v1653, %v2136
        %2219 = vrot.lane.b32.xlu0 %v2021, 112
        %v2220 = vpop.permute.xlu0 %2219
        %2221 = vrot.lane.b32.xlu0 %v2024, 112
        %v2222 = vpop.permute.xlu0 %2221
        %2223 = vrot.lane.b32.xlu0 %v2029, 112
        %v2224 = vpop.permute.xlu0 %2223
        %2225 = vrot.lane.b32.xlu0 %v2032, 112
        %v2226 = vpop.permute.xlu0 %2225
        %2227 = vrot.lane.b32.xlu0 %v2037, 112
        %v2228 = vpop.permute.xlu0 %2227
        %2229 = vrot.lane.b32.xlu0 %v2040, 112
        %v2230 = vpop.permute.xlu0 %2229
        %2231 = vrot.lane.b32.xlu0 %v2045, 112
        %v2232 = vpop.permute.xlu0 %2231
        %2233 = vrot.lane.b32.xlu0 %v2048, 112
        %v2234 = vpop.permute.xlu0 %2233
        %2235 = vrot.lane.b32.xlu0 %v2053, 112
        %v2236 = vpop.permute.xlu0 %2235
        %2237 = vrot.lane.b32.xlu0 %v2056, 112
        %v2238 = vpop.permute.xlu0 %2237
        %2239 = vrot.lane.b32.xlu0 %v2061, 112
        %v2240 = vpop.permute.xlu0 %2239
        %2241 = vrot.lane.b32.xlu0 %v2064, 112
        %v2242 = vpop.permute.xlu0 %2241
        %2243 = vrot.lane.b32.xlu0 %v2069, 112
        %v2244 = vpop.permute.xlu0 %2243
        %2245 = vrot.lane.b32.xlu0 %v2072, 112
        %v2246 = vpop.permute.xlu0 %2245
        %2247 = vrot.lane.b32.xlu0 %v2077, 112
        %v2248 = vpop.permute.xlu0 %2247
        %2249 = vrot.lane.b32.xlu0 %v2080, 112
        %v2250 = vpop.permute.xlu0 %2249
        %2251 = vrot.lane.b32.xlu0 %v2085, 112
        %v2252 = vpop.permute.xlu0 %2251
        %2253 = vrot.lane.b32.xlu0 %v2088, 112
        %v2254 = vpop.permute.xlu0 %2253
        %2255 = vrot.lane.b32.xlu0 %v2093, 112
        %v2256 = vpop.permute.xlu0 %2255
        %2257 = vrot.lane.b32.xlu0 %v2096, 112
        %v2258 = vpop.permute.xlu0 %2257
        %2259 = vrot.lane.b32.xlu0 %v2101, 112
        %v2260 = vpop.permute.xlu0 %2259
        %2261 = vrot.lane.b32.xlu0 %v2104, 112
        %v2262 = vpop.permute.xlu0 %2261
        %2263 = vrot.lane.b32.xlu0 %v2109, 112
        %v2264 = vpop.permute.xlu0 %2263
        %2265 = vrot.lane.b32.xlu0 %v2112, 112
        %v2266 = vpop.permute.xlu0 %2265
        %2267 = vrot.lane.b32.xlu0 %v2117, 112
        %v2268 = vpop.permute.xlu0 %2267
        %2269 = vrot.lane.b32.xlu0 %v2120, 112
        %v2270 = vpop.permute.xlu0 %2269
        %2271 = vrot.lane.b32.xlu0 %v2125, 112
        %v2272 = vpop.permute.xlu0 %2271
        %2273 = vrot.lane.b32.xlu0 %v2128, 112
        %v2274 = vpop.permute.xlu0 %2273
        %2275 = vrot.lane.b32.xlu0 %v2133, 112
        %v2276 = vpop.permute.xlu0 %2275
        %2277 = vrot.lane.b32.xlu0 %v2136, 112
        %v2278 = vpop.permute.xlu0 %2277
        %2279 = vrot.lane.b32.xlu0 %v2141, 112
        %v2280 = vpop.permute.xlu0 %2279
        %2281 = vrot.lane.b32.xlu0 %v2144, 112
        %v2282 = vpop.permute.xlu0 %2281
        %v2315 = vadd.f32 %v2155, %v2220
        %v2316 = vadd.f32 %v2156, %v2222
        %v2317 = vadd.f32 %v2157, %v2224
        %v2318 = vadd.f32 %v2158, %v2226
        %v2319 = vadd.f32 %v2159, %v2228
        %v2320 = vadd.f32 %v2160, %v2230
        %v2321 = vadd.f32 %v2161, %v2232
        %v2322 = vadd.f32 %v2162, %v2234
        %v2323 = vadd.f32 %v2163, %v2236
        %v2324 = vadd.f32 %v2164, %v2238
        %v2325 = vadd.f32 %v2165, %v2240
        %v2326 = vadd.f32 %v2166, %v2242
        %v2327 = vadd.f32 %v2167, %v2244
        %v2328 = vadd.f32 %v2168, %v2246
        %v2329 = vadd.f32 %v2169, %v2248
        %v2330 = vadd.f32 %v2170, %v2250
        %v2331 = vadd.f32 %v2171, %v2252
        %v2332 = vadd.f32 %v2172, %v2254
        %v2333 = vadd.f32 %v2173, %v2256
        %v2334 = vadd.f32 %v2174, %v2258
        %v2335 = vadd.f32 %v2175, %v2260
        %v2336 = vadd.f32 %v2176, %v2262
        %v2337 = vadd.f32 %v2177, %v2264
        %v2338 = vadd.f32 %v2178, %v2266
        %v2339 = vadd.f32 %v2179, %v2268
        %v2340 = vadd.f32 %v2180, %v2270
        %v2341 = vadd.f32 %v2181, %v2272
        %v2342 = vadd.f32 %v2182, %v2274
        %v2343 = vadd.f32 %v2183, %v2276
        %v2344 = vadd.f32 %v2184, %v2278
        %v2345 = vadd.f32 %v2185, %v2280
        %v2346 = vadd.f32 %v2186, %v2282
        %2349 = vrot.lane.b32.xlu0 %v2029, 96
        %v2350 = vpop.permute.xlu0 %2349
        %2351 = vrot.lane.b32.xlu0 %v2032, 96
        %v2352 = vpop.permute.xlu0 %2351
        %2353 = vrot.lane.b32.xlu0 %v2037, 96
        %v2354 = vpop.permute.xlu0 %2353
        %2355 = vrot.lane.b32.xlu0 %v2040, 96
        %v2356 = vpop.permute.xlu0 %2355
        %2357 = vrot.lane.b32.xlu0 %v2045, 96
        %v2358 = vpop.permute.xlu0 %2357
        %2359 = vrot.lane.b32.xlu0 %v2048, 96
        %v2360 = vpop.permute.xlu0 %2359
        %2361 = vrot.lane.b32.xlu0 %v2053, 96
        %v2362 = vpop.permute.xlu0 %2361
        %2363 = vrot.lane.b32.xlu0 %v2056, 96
        %v2364 = vpop.permute.xlu0 %2363
        %2365 = vrot.lane.b32.xlu0 %v2061, 96
        %v2366 = vpop.permute.xlu0 %2365
        %2367 = vrot.lane.b32.xlu0 %v2064, 96
        %v2368 = vpop.permute.xlu0 %2367
        %2369 = vrot.lane.b32.xlu0 %v2069, 96
        %v2370 = vpop.permute.xlu0 %2369
        %2371 = vrot.lane.b32.xlu0 %v2072, 96
        %v2372 = vpop.permute.xlu0 %2371
        %2373 = vrot.lane.b32.xlu0 %v2077, 96
        %v2374 = vpop.permute.xlu0 %2373
        %2375 = vrot.lane.b32.xlu0 %v2080, 96
        %v2376 = vpop.permute.xlu0 %2375
        %2377 = vrot.lane.b32.xlu0 %v2085, 96
        %v2378 = vpop.permute.xlu0 %2377
        %2379 = vrot.lane.b32.xlu0 %v2088, 96
        %v2380 = vpop.permute.xlu0 %2379
        %2381 = vrot.lane.b32.xlu0 %v2093, 96
        %v2382 = vpop.permute.xlu0 %2381
        %2383 = vrot.lane.b32.xlu0 %v2096, 96
        %v2384 = vpop.permute.xlu0 %2383
        %2385 = vrot.lane.b32.xlu0 %v2101, 96
        %v2386 = vpop.permute.xlu0 %2385
        %2387 = vrot.lane.b32.xlu0 %v2104, 96
        %v2388 = vpop.permute.xlu0 %2387
        %2389 = vrot.lane.b32.xlu0 %v2109, 96
        %v2390 = vpop.permute.xlu0 %2389
        %2391 = vrot.lane.b32.xlu0 %v2112, 96
        %v2392 = vpop.permute.xlu0 %2391
        %2393 = vrot.lane.b32.xlu0 %v2117, 96
        %v2394 = vpop.permute.xlu0 %2393
        %2395 = vrot.lane.b32.xlu0 %v2120, 96
        %v2396 = vpop.permute.xlu0 %2395
        %2397 = vrot.lane.b32.xlu0 %v2125, 96
        %v2398 = vpop.permute.xlu0 %2397
        %2399 = vrot.lane.b32.xlu0 %v2128, 96
        %v2400 = vpop.permute.xlu0 %2399
        %2401 = vrot.lane.b32.xlu0 %v2133, 96
        %v2402 = vpop.permute.xlu0 %2401
        %2403 = vrot.lane.b32.xlu0 %v2136, 96
        %v2404 = vpop.permute.xlu0 %2403
        %2405 = vrot.lane.b32.xlu0 %v2141, 96
        %v2406 = vpop.permute.xlu0 %2405
        %2407 = vrot.lane.b32.xlu0 %v2144, 96
        %v2408 = vpop.permute.xlu0 %2407
        %2409 = vrot.lane.b32.xlu0 %v2149, 96
        %v2410 = vpop.permute.xlu0 %2409
        %2411 = vrot.lane.b32.xlu0 %v2152, 96
        %v2412 = vpop.permute.xlu0 %2411
        %v2445 = vadd.f32 %v2315, %v2350
        %v2446 = vadd.f32 %v2316, %v2352
        %v2447 = vadd.f32 %v2317, %v2354
        %v2448 = vadd.f32 %v2318, %v2356
        %v2449 = vadd.f32 %v2319, %v2358
        %v2450 = vadd.f32 %v2320, %v2360
        %v2451 = vadd.f32 %v2321, %v2362
        %v2452 = vadd.f32 %v2322, %v2364
        %v2453 = vadd.f32 %v2323, %v2366
        %v2454 = vadd.f32 %v2324, %v2368
        %v2455 = vadd.f32 %v2325, %v2370
        %v2456 = vadd.f32 %v2326, %v2372
        %v2457 = vadd.f32 %v2327, %v2374
        %v2458 = vadd.f32 %v2328, %v2376
        %v2459 = vadd.f32 %v2329, %v2378
        %v2460 = vadd.f32 %v2330, %v2380
        %v2461 = vadd.f32 %v2331, %v2382
        %v2462 = vadd.f32 %v2332, %v2384
        %v2463 = vadd.f32 %v2333, %v2386
        %v2464 = vadd.f32 %v2334, %v2388
        %v2465 = vadd.f32 %v2335, %v2390
        %v2466 = vadd.f32 %v2336, %v2392
        %v2467 = vadd.f32 %v2337, %v2394
        %v2468 = vadd.f32 %v2338, %v2396
        %v2469 = vadd.f32 %v2339, %v2398
        %v2470 = vadd.f32 %v2340, %v2400
        %v2471 = vadd.f32 %v2341, %v2402
        %v2472 = vadd.f32 %v2342, %v2404
        %v2473 = vadd.f32 %v2343, %v2406
        %v2474 = vadd.f32 %v2344, %v2408
        %v2475 = vadd.f32 %v2345, %v2410
        %v2476 = vadd.f32 %v2346, %v2412
        %v2477 = vld [vmem:[%s2] sm:$0x1]
        %v2479 = vlaneseq
        %v2480 = vshrl.u32 %v2479, 7
        %v2481 = vsub.s32 0, %v2480
        %v2482 = vrot.slane %v2477, %v2481
        %v2484 = vadd.f32 %v2445, %v2482
        %v2485 = vadd.f32 %v2446, %v2482
        %v2486 = vadd.f32 %v2447, %v2482
        %v2487 = vadd.f32 %v2448, %v2482
        %v2488 = vadd.f32 %v2449, %v2482
        %v2489 = vadd.f32 %v2450, %v2482
        %v2490 = vadd.f32 %v2451, %v2482
        %v2491 = vadd.f32 %v2452, %v2482
        %v2492 = vadd.f32 %v2453, %v2482
        %v2493 = vadd.f32 %v2454, %v2482
        %v2494 = vadd.f32 %v2455, %v2482
        %v2495 = vadd.f32 %v2456, %v2482
        %v2496 = vadd.f32 %v2457, %v2482
        %v2497 = vadd.f32 %v2458, %v2482
        %v2498 = vadd.f32 %v2459, %v2482
        %v2499 = vadd.f32 %v2460, %v2482
        %v2500 = vadd.f32 %v2461, %v2482
        %v2501 = vadd.f32 %v2462, %v2482
        %v2502 = vadd.f32 %v2463, %v2482
        %v2503 = vadd.f32 %v2464, %v2482
        %v2504 = vadd.f32 %v2465, %v2482
        %v2505 = vadd.f32 %v2466, %v2482
        %v2506 = vadd.f32 %v2467, %v2482
        %v2507 = vadd.f32 %v2468, %v2482
        %v2508 = vadd.f32 %v2469, %v2482
        %v2509 = vadd.f32 %v2470, %v2482
        %v2510 = vadd.f32 %v2471, %v2482
        %v2511 = vadd.f32 %v2472, %v2482
        %v2512 = vadd.f32 %v2473, %v2482
        %v2513 = vadd.f32 %v2474, %v2482
        %v2514 = vadd.f32 %v2475, %v2482
        %v2515 = vadd.f32 %v2476, %v2482
        %vm2516 = vcmp.ge.f32.partialorder %v2484, 0.0
        %vm2517 = vcmp.ge.f32.partialorder %v2485, 0.0
        %vm2518 = vcmp.ge.f32.partialorder %v2486, 0.0
        %vm2519 = vcmp.ge.f32.partialorder %v2487, 0.0
        %vm2520 = vcmp.ge.f32.partialorder %v2488, 0.0
        %vm2521 = vcmp.ge.f32.partialorder %v2489, 0.0
        %vm2522 = vcmp.ge.f32.partialorder %v2490, 0.0
        %vm2523 = vcmp.ge.f32.partialorder %v2491, 0.0
        %vm2524 = vcmp.ge.f32.partialorder %v2492, 0.0
        %vm2525 = vcmp.ge.f32.partialorder %v2493, 0.0
        %vm2526 = vcmp.ge.f32.partialorder %v2494, 0.0
        %vm2527 = vcmp.ge.f32.partialorder %v2495, 0.0
        %vm2528 = vcmp.ge.f32.partialorder %v2496, 0.0
        %vm2529 = vcmp.ge.f32.partialorder %v2497, 0.0
        %vm2530 = vcmp.ge.f32.partialorder %v2498, 0.0
        %vm2531 = vcmp.ge.f32.partialorder %v2499, 0.0
        %vm2532 = vcmp.ge.f32.partialorder %v2500, 0.0
        %vm2533 = vcmp.ge.f32.partialorder %v2501, 0.0
        %vm2534 = vcmp.ge.f32.partialorder %v2502, 0.0
        %vm2535 = vcmp.ge.f32.partialorder %v2503, 0.0
        %vm2536 = vcmp.ge.f32.partialorder %v2504, 0.0
        %vm2537 = vcmp.ge.f32.partialorder %v2505, 0.0
        %vm2538 = vcmp.ge.f32.partialorder %v2506, 0.0
        %vm2539 = vcmp.ge.f32.partialorder %v2507, 0.0
        %vm2540 = vcmp.ge.f32.partialorder %v2508, 0.0
        %vm2541 = vcmp.ge.f32.partialorder %v2509, 0.0
        %vm2542 = vcmp.ge.f32.partialorder %v2510, 0.0
        %vm2543 = vcmp.ge.f32.partialorder %v2511, 0.0
        %vm2544 = vcmp.ge.f32.partialorder %v2512, 0.0
        %vm2545 = vcmp.ge.f32.partialorder %v2513, 0.0
        %vm2546 = vcmp.ge.f32.partialorder %v2514, 0.0
        %vm2547 = vcmp.ge.f32.partialorder %v2515, 0.0
        %v2548 = vmul.f32 %v2484, 0.2
        %v2549 = vmul.f32 %v2485, 0.2
        %v2550 = vmul.f32 %v2486, 0.2
        %v2551 = vmul.f32 %v2487, 0.2
        %v2552 = vmul.f32 %v2488, 0.2
        %v2553 = vmul.f32 %v2489, 0.2
        %v2554 = vmul.f32 %v2490, 0.2
        %v2555 = vmul.f32 %v2491, 0.2
        %v2556 = vmul.f32 %v2492, 0.2
        %v2557 = vmul.f32 %v2493, 0.2
        %v2558 = vmul.f32 %v2494, 0.2
        %v2559 = vmul.f32 %v2495, 0.2
        %v2560 = vmul.f32 %v2496, 0.2
        %v2561 = vmul.f32 %v2497, 0.2
        %v2562 = vmul.f32 %v2498, 0.2
        %v2563 = vmul.f32 %v2499, 0.2
        %v2564 = vmul.f32 %v2500, 0.2
        %v2565 = vmul.f32 %v2501, 0.2
        %v2566 = vmul.f32 %v2502, 0.2
        %v2567 = vmul.f32 %v2503, 0.2
        %v2568 = vmul.f32 %v2504, 0.2
        %v2569 = vmul.f32 %v2505, 0.2
        %v2570 = vmul.f32 %v2506, 0.2
        %v2571 = vmul.f32 %v2507, 0.2
        %v2572 = vmul.f32 %v2508, 0.2
        %v2573 = vmul.f32 %v2509, 0.2
        %v2574 = vmul.f32 %v2510, 0.2
        %v2575 = vmul.f32 %v2511, 0.2
        %v2576 = vmul.f32 %v2512, 0.2
        %v2577 = vmul.f32 %v2513, 0.2
        %v2578 = vmul.f32 %v2514, 0.2
        %v2579 = vmul.f32 %v2515, 0.2
        %v2580 = vsel %vm2516, %v2484, %v2548
        %v2581 = vsel %vm2517, %v2485, %v2549
        %v2582 = vsel %vm2518, %v2486, %v2550
        %v2583 = vsel %vm2519, %v2487, %v2551
        %v2584 = vsel %vm2520, %v2488, %v2552
        %v2585 = vsel %vm2521, %v2489, %v2553
        %v2586 = vsel %vm2522, %v2490, %v2554
        %v2587 = vsel %vm2523, %v2491, %v2555
        %v2588 = vsel %vm2524, %v2492, %v2556
        %v2589 = vsel %vm2525, %v2493, %v2557
        %v2590 = vsel %vm2526, %v2494, %v2558
        %v2591 = vsel %vm2527, %v2495, %v2559
        %v2592 = vsel %vm2528, %v2496, %v2560
        %v2593 = vsel %vm2529, %v2497, %v2561
        %v2594 = vsel %vm2530, %v2498, %v2562
        %v2595 = vsel %vm2531, %v2499, %v2563
        %v2596 = vsel %vm2532, %v2500, %v2564
        %v2597 = vsel %vm2533, %v2501, %v2565
        %v2598 = vsel %vm2534, %v2502, %v2566
        %v2599 = vsel %vm2535, %v2503, %v2567
        %v2600 = vsel %vm2536, %v2504, %v2568
        %v2601 = vsel %vm2537, %v2505, %v2569
        %v2602 = vsel %vm2538, %v2506, %v2570
        %v2603 = vsel %vm2539, %v2507, %v2571
        %v2604 = vsel %vm2540, %v2508, %v2572
        %v2605 = vsel %vm2541, %v2509, %v2573
        %v2606 = vsel %vm2542, %v2510, %v2574
        %v2607 = vsel %vm2543, %v2511, %v2575
        %v2608 = vsel %vm2544, %v2512, %v2576
        %v2609 = vsel %vm2545, %v2513, %v2577
        %v2610 = vsel %vm2546, %v2514, %v2578
        %v2611 = vsel %vm2547, %v2515, %v2579
        %v2612 = vpack.c.bf16 %v2581, %v2580
        %v2613 = vpack.c.bf16 %v2583, %v2582
        %v2614 = vpack.c.bf16 %v2585, %v2584
        %v2615 = vpack.c.bf16 %v2587, %v2586
        %v2616 = vpack.c.bf16 %v2589, %v2588
        %v2617 = vpack.c.bf16 %v2591, %v2590
        %v2618 = vpack.c.bf16 %v2593, %v2592
        %v2619 = vpack.c.bf16 %v2595, %v2594
        %v2620 = vpack.c.bf16 %v2597, %v2596
        %v2621 = vpack.c.bf16 %v2599, %v2598
        %v2622 = vpack.c.bf16 %v2601, %v2600
        %v2623 = vpack.c.bf16 %v2603, %v2602
        %v2624 = vpack.c.bf16 %v2605, %v2604
        %v2625 = vpack.c.bf16 %v2607, %v2606
        %v2626 = vpack.c.bf16 %v2609, %v2608
        %v2627 = vpack.c.bf16 %v2611, %v2610
        %2644 = vrot.lane.b32.xlu0 %v2612, 32
        %v2645 = vpop.permute.xlu0 %2644
        %2646 = vrot.lane.b32.xlu0 %v2613, 32
        %v2647 = vpop.permute.xlu0 %2646
        %2648 = vrot.lane.b32.xlu0 %v2614, 32
        %v2649 = vpop.permute.xlu0 %2648
        %2650 = vrot.lane.b32.xlu0 %v2615, 32
        %v2651 = vpop.permute.xlu0 %2650
        %2652 = vrot.lane.b32.xlu0 %v2616, 32
        %v2653 = vpop.permute.xlu0 %2652
        %2654 = vrot.lane.b32.xlu0 %v2617, 32
        %v2655 = vpop.permute.xlu0 %2654
        %2656 = vrot.lane.b32.xlu0 %v2618, 32
        %v2657 = vpop.permute.xlu0 %2656
        %2658 = vrot.lane.b32.xlu0 %v2619, 32
        %v2659 = vpop.permute.xlu0 %2658
        %2660 = vrot.lane.b32.xlu0 %v2620, 32
        %v2661 = vpop.permute.xlu0 %2660
        %2662 = vrot.lane.b32.xlu0 %v2621, 32
        %v2663 = vpop.permute.xlu0 %2662
        %2664 = vrot.lane.b32.xlu0 %v2622, 32
        %v2665 = vpop.permute.xlu0 %2664
        %2666 = vrot.lane.b32.xlu0 %v2623, 32
        %v2667 = vpop.permute.xlu0 %2666
        %2668 = vrot.lane.b32.xlu0 %v2624, 32
        %v2669 = vpop.permute.xlu0 %2668
        %2670 = vrot.lane.b32.xlu0 %v2625, 32
        %v2671 = vpop.permute.xlu0 %2670
        %2672 = vrot.lane.b32.xlu0 %v2626, 32
        %v2673 = vpop.permute.xlu0 %2672
        %2674 = vrot.lane.b32.xlu0 %v2627, 32
        %v2675 = vpop.permute.xlu0 %2674
        %vm2692 = vcmask 392448
        %2693 = vst.msk [vmem:[%s262 + $0x8] sm:$0xff] %vm2692, %v2645
        %2694 = vst.msk [vmem:[%s262 + $0x20] sm:$0xff] %vm2692, %v2647
        %2695 = vst.msk [vmem:[%s262 + $0x38] sm:$0xff] %vm2692, %v2649
        %2696 = vst.msk [vmem:[%s262 + $0x50] sm:$0xff] %vm2692, %v2651
        %2697 = vst.msk [vmem:[%s262 + $0x68] sm:$0xff] %vm2692, %v2653
        %2698 = vst.msk [vmem:[%s262 + $0x80] sm:$0xff] %vm2692, %v2655
        %2699 = vst.msk [vmem:[%s262 + $0x98] sm:$0xff] %vm2692, %v2657
        %2700 = vst.msk [vmem:[%s262 + $0xb0] sm:$0xff] %vm2692, %v2659
        %2701 = vst.msk [vmem:[%s262 + $0xc8] sm:$0xff] %vm2692, %v2661
        %2702 = vst.msk [vmem:[%s262 + $0xe0] sm:$0xff] %vm2692, %v2663
        %2703 = vst.msk [vmem:[%s262 + $0xf8] sm:$0xff] %vm2692, %v2665
        %2704 = vst.msk [vmem:[%s262 + $0x110] sm:$0xff] %vm2692, %v2667
        %2705 = vst.msk [vmem:[%s262 + $0x128] sm:$0xff] %vm2692, %v2669
        %2706 = vst.msk [vmem:[%s262 + $0x140] sm:$0xff] %vm2692, %v2671
        %2707 = vst.msk [vmem:[%s262 + $0x158] sm:$0xff] %vm2692, %v2673
        %2708 = vst.msk [vmem:[%s262 + $0x170] sm:$0xff] %vm2692, %v2675
        %v2709 = vld [vmem:[#allocation2] sm:$0x80]
        %v2710 = vld [vmem:[#allocation2 + $0x8] sm:$0xff]
        %v2711 = vld [vmem:[#allocation2 + $0x18] sm:$0x80]
        %v2712 = vld [vmem:[#allocation2 + $0x20] sm:$0xff]
        %v2713 = vld [vmem:[#allocation2 + $0x30] sm:$0x80]
        %v2714 = vld [vmem:[#allocation2 + $0x38] sm:$0xff]
        %v2715 = vld [vmem:[#allocation2 + $0x48] sm:$0x80]
        %v2716 = vld [vmem:[#allocation2 + $0x50] sm:$0xff]
        %v2717 = vld [vmem:[#allocation2 + $0x60] sm:$0x80]
        %v2718 = vld [vmem:[#allocation2 + $0x68] sm:$0xff]
        %v2719 = vld [vmem:[#allocation2 + $0x78] sm:$0x80]
        %v2720 = vld [vmem:[#allocation2 + $0x80] sm:$0xff]
        %v2721 = vld [vmem:[#allocation2 + $0x90] sm:$0x80]
        %v2722 = vld [vmem:[#allocation2 + $0x98] sm:$0xff]
        %v2723 = vld [vmem:[#allocation2 + $0xa8] sm:$0x80]
        %v2724 = vld [vmem:[#allocation2 + $0xb0] sm:$0xff]
        %v2725 = vld [vmem:[#allocation2 + $0xc0] sm:$0x80]
        %v2726 = vld [vmem:[#allocation2 + $0xc8] sm:$0xff]
        %v2727 = vld [vmem:[#allocation2 + $0xd8] sm:$0x80]
        %v2728 = vld [vmem:[#allocation2 + $0xe0] sm:$0xff]
        %v2729 = vld [vmem:[#allocation2 + $0xf0] sm:$0x80]
        %v2730 = vld [vmem:[#allocation2 + $0xf8] sm:$0xff]
        %v2731 = vld [vmem:[#allocation2 + $0x108] sm:$0x80]
        %v2732 = vld [vmem:[#allocation2 + $0x110] sm:$0xff]
        %v2733 = vld [vmem:[#allocation2 + $0x120] sm:$0x80]
        %v2734 = vld [vmem:[#allocation2 + $0x128] sm:$0xff]
        %v2735 = vld [vmem:[#allocation2 + $0x138] sm:$0x80]
        %v2736 = vld [vmem:[#allocation2 + $0x140] sm:$0xff]
        %v2737 = vld [vmem:[#allocation2 + $0x150] sm:$0x80]
        %v2738 = vld [vmem:[#allocation2 + $0x158] sm:$0xff]
        %v2739 = vld [vmem:[#allocation2 + $0x168] sm:$0x80]
        %v2740 = vld [vmem:[#allocation2 + $0x170] sm:$0xff]
        %v2741 = vld [vmem:[#allocation2 + $0x180] sm:$0x80]
        %v2742 = vld [vmem:[#allocation2 + $0x188] sm:$0xff]
        %v2743 = vld [vmem:[#allocation2 + $0x198] sm:$0x80]
        %v2744 = vld [vmem:[#allocation2 + $0x1a0] sm:$0xff]
        %v2746 = vshrl.u32 %v2709, 16
        %v2748 = vrot.slane %v2746, 7
        %v2750 = vshrl.u32 %v2710, 16
        %v2752 = vrot.slane %v2750, 7
        %v2753 = vshll.u32 %v2710, 16
        %v2755 = vor.u32 %v2752, %v2753
        %v2756 = vsel %vm316, %v2748, %v2755
        %v2758 = vshrl.u32 %v2711, 16
        %v2760 = vrot.slane %v2758, 7
        %v2762 = vshrl.u32 %v2712, 16
        %v2764 = vrot.slane %v2762, 7
        %v2765 = vshll.u32 %v2712, 16
        %v2767 = vor.u32 %v2764, %v2765
        %v2768 = vsel %vm316, %v2760, %v2767
        %v2770 = vshrl.u32 %v2713, 16
        %v2772 = vrot.slane %v2770, 7
        %v2774 = vshrl.u32 %v2714, 16
        %v2776 = vrot.slane %v2774, 7
        %v2777 = vshll.u32 %v2714, 16
        %v2779 = vor.u32 %v2776, %v2777
        %v2780 = vsel %vm316, %v2772, %v2779
        %v2782 = vshrl.u32 %v2715, 16
        %v2784 = vrot.slane %v2782, 7
        %v2786 = vshrl.u32 %v2716, 16
        %v2788 = vrot.slane %v2786, 7
        %v2789 = vshll.u32 %v2716, 16
        %v2791 = vor.u32 %v2788, %v2789
        %v2792 = vsel %vm316, %v2784, %v2791
        %v2794 = vshrl.u32 %v2717, 16
        %v2796 = vrot.slane %v2794, 7
        %v2798 = vshrl.u32 %v2718, 16
        %v2800 = vrot.slane %v2798, 7
        %v2801 = vshll.u32 %v2718, 16
        %v2803 = vor.u32 %v2800, %v2801
        %v2804 = vsel %vm316, %v2796, %v2803
        %v2806 = vshrl.u32 %v2719, 16
        %v2808 = vrot.slane %v2806, 7
        %v2810 = vshrl.u32 %v2720, 16
        %v2812 = vrot.slane %v2810, 7
        %v2813 = vshll.u32 %v2720, 16
        %v2815 = vor.u32 %v2812, %v2813
        %v2816 = vsel %vm316, %v2808, %v2815
        %v2818 = vshrl.u32 %v2721, 16
        %v2820 = vrot.slane %v2818, 7
        %v2822 = vshrl.u32 %v2722, 16
        %v2824 = vrot.slane %v2822, 7
        %v2825 = vshll.u32 %v2722, 16
        %v2827 = vor.u32 %v2824, %v2825
        %v2828 = vsel %vm316, %v2820, %v2827
        %v2830 = vshrl.u32 %v2723, 16
        %v2832 = vrot.slane %v2830, 7
        %v2834 = vshrl.u32 %v2724, 16
        %v2836 = vrot.slane %v2834, 7
        %v2837 = vshll.u32 %v2724, 16
        %v2839 = vor.u32 %v2836, %v2837
        %v2840 = vsel %vm316, %v2832, %v2839
        %v2842 = vshrl.u32 %v2725, 16
        %v2844 = vrot.slane %v2842, 7
        %v2846 = vshrl.u32 %v2726, 16
        %v2848 = vrot.slane %v2846, 7
        %v2849 = vshll.u32 %v2726, 16
        %v2851 = vor.u32 %v2848, %v2849
        %v2852 = vsel %vm316, %v2844, %v2851
        %v2854 = vshrl.u32 %v2727, 16
        %v2856 = vrot.slane %v2854, 7
        %v2858 = vshrl.u32 %v2728, 16
        %v2860 = vrot.slane %v2858, 7
        %v2861 = vshll.u32 %v2728, 16
        %v2863 = vor.u32 %v2860, %v2861
        %v2864 = vsel %vm316, %v2856, %v2863
        %v2866 = vshrl.u32 %v2729, 16
        %v2868 = vrot.slane %v2866, 7
        %v2870 = vshrl.u32 %v2730, 16
        %v2872 = vrot.slane %v2870, 7
        %v2873 = vshll.u32 %v2730, 16
        %v2875 = vor.u32 %v2872, %v2873
        %v2876 = vsel %vm316, %v2868, %v2875
        %v2878 = vshrl.u32 %v2731, 16
        %v2880 = vrot.slane %v2878, 7
        %v2882 = vshrl.u32 %v2732, 16
        %v2884 = vrot.slane %v2882, 7
        %v2885 = vshll.u32 %v2732, 16
        %v2887 = vor.u32 %v2884, %v2885
        %v2888 = vsel %vm316, %v2880, %v2887
        %v2890 = vshrl.u32 %v2733, 16
        %v2892 = vrot.slane %v2890, 7
        %v2894 = vshrl.u32 %v2734, 16
        %v2896 = vrot.slane %v2894, 7
        %v2897 = vshll.u32 %v2734, 16
        %v2899 = vor.u32 %v2896, %v2897
        %v2900 = vsel %vm316, %v2892, %v2899
        %v2902 = vshrl.u32 %v2735, 16
        %v2904 = vrot.slane %v2902, 7
        %v2906 = vshrl.u32 %v2736, 16
        %v2908 = vrot.slane %v2906, 7
        %v2909 = vshll.u32 %v2736, 16
        %v2911 = vor.u32 %v2908, %v2909
        %v2912 = vsel %vm316, %v2904, %v2911
        %v2914 = vshrl.u32 %v2737, 16
        %v2916 = vrot.slane %v2914, 7
        %v2918 = vshrl.u32 %v2738, 16
        %v2920 = vrot.slane %v2918, 7
        %v2921 = vshll.u32 %v2738, 16
        %v2923 = vor.u32 %v2920, %v2921
        %v2924 = vsel %vm316, %v2916, %v2923
        %v2926 = vshrl.u32 %v2739, 16
        %v2928 = vrot.slane %v2926, 7
        %v2930 = vshrl.u32 %v2740, 16
        %v2932 = vrot.slane %v2930, 7
        %v2933 = vshll.u32 %v2740, 16
        %v2935 = vor.u32 %v2932, %v2933
        %v2936 = vsel %vm316, %v2928, %v2935
        %v2938 = vshrl.u32 %v2741, 16
        %v2940 = vrot.slane %v2938, 7
        %v2942 = vshrl.u32 %v2742, 16
        %v2944 = vrot.slane %v2942, 7
        %v2945 = vshll.u32 %v2742, 16
        %v2947 = vor.u32 %v2944, %v2945
        %v2948 = vsel %vm316, %v2940, %v2947
        %v2950 = vshrl.u32 %v2743, 16
        %v2952 = vrot.slane %v2950, 7
        %v2954 = vshrl.u32 %v2744, 16
        %v2956 = vrot.slane %v2954, 7
        %v2957 = vshll.u32 %v2744, 16
        %v2959 = vor.u32 %v2956, %v2957
        %v2960 = vsel %vm316, %v2952, %v2959
        %s2961 = scalar_lea.vmem %s1, 144
        %v2962 = vld [vmem:[%s2961] sm:$0xf]
        %v2963 = vld [vmem:[%s2961 + $0x4] sm:$0xf]
        %v2964 = vld [vmem:[%s2961 + $0x8] sm:$0xf]
        %v2965 = vld [vmem:[%s2961 + $0xc] sm:$0xf]
        %v2966 = vld [vmem:[%s2961 + $0x10] sm:$0xf]
        %v2967 = vld [vmem:[%s2961 + $0x14] sm:$0xf]
        %v2974 = vunpack.c.l.b16 %v2962
        %v2975 = vunpack.c.l.b16 %v2963
        %v2976 = vunpack.c.l.b16 %v2964
        %v2977 = vunpack.c.l.b16 %v2965
        %v2978 = vunpack.c.l.b16 %v2966
        %v2979 = vunpack.c.l.b16 %v2967
        %v2980 = vpack.c.b16 %v2975, %v2974
        %v2981 = vpack.c.b16 %v2977, %v2976
        %v2982 = vpack.c.b16 %v2979, %v2978
        %vm2986 = vcmask 392192
        %v2988 = vsel %vm2986, %v2756, 0
        %v2991 = vsel %vm2986, %v2768, 0
        %v2994 = vsel %vm2986, %v2780, 0
        %v2997 = vsel %vm2986, %v2792, 0
        %v3000 = vsel %vm2986, %v2804, 0
        %v3003 = vsel %vm2986, %v2816, 0
        %v3006 = vsel %vm2986, %v2828, 0
        %v3009 = vsel %vm2986, %v2840, 0
        %v3012 = vsel %vm2986, %v2852, 0
        %v3015 = vsel %vm2986, %v2864, 0
        %v3018 = vsel %vm2986, %v2876, 0
        %v3021 = vsel %vm2986, %v2888, 0
        %v3024 = vsel %vm2986, %v2900, 0
        %v3027 = vsel %vm2986, %v2912, 0
        %v3030 = vsel %vm2986, %v2924, 0
        %v3033 = vsel %vm2986, %v2936, 0
        %v3036 = vsel %vm2986, %v2948, 0
        %v3039 = vsel %vm2986, %v2960, 0
        %3041 = vmatprep.subr.bf16.mxu0 0
        %3042 = vmatpush1.bf16.msra.mxu0 %v2980
        %3043 = vmatprep.subr.bf16.mxu0 0
        %3044 = vmatpush1.bf16.msra.mxu0 %v2981
        %3045 = vmatprep.subr.bf16.mxu0 0
        %3046 = vmatpush1.bf16.msra.mxu0 %v2982
        %3047 = vmatprep.subr.bf16.mxu0 0
        %3048 = vmatpush1.bf16.msra.mxu0 0
        %3049 = vmatprep.subr.bf16.mxu0 0
        %3050 = vmatpush1.bf16.msra.mxu0 0
        %3051 = vmatprep.subr.bf16.mxu0 0
        %3052 = vmatpush1.bf16.msra.mxu0 0
        %3053 = vmatprep.subr.bf16.mxu0 0
        %3054 = vmatpush1.bf16.msra.mxu0 0
        %3055 = vmatprep.subr.bf16.mxu0 0
        %3056 = vmatpush1.bf16.msra.mxu0 0
        %3057 = vmatprep.subr.bf16.mxu0 0
        %3058 = vmatpush1.bf16.msra.mxu0 0
        %3059 = vmatprep.subr.bf16.mxu0 0
        %3060 = vmatpush1.bf16.msra.mxu0 0
        %3061 = vmatprep.subr.bf16.mxu0 0
        %3062 = vmatpush1.bf16.msra.mxu0 0
        %3063 = vmatprep.subr.bf16.mxu0 0
        %3064 = vmatpush1.bf16.msra.mxu0 0
        %3065 = vmatprep.subr.bf16.mxu0 0
        %3066 = vmatpush1.bf16.msra.mxu0 0
        %3067 = vmatprep.subr.bf16.mxu0 0
        %3068 = vmatpush1.bf16.msra.mxu0 0
        %3069 = vmatprep.subr.bf16.mxu0 0
        %3070 = vmatpush1.bf16.msra.mxu0 0
        %3071 = vmatprep.subr.bf16.mxu0 0
        %3072 = vmatpush1.bf16.msra.mxu0 0
        %3073 = vmatprep.mubr.bf16.mxu0 0
        %3074 = vmatmul.mubr.bf16.gmra.mrb[0].mxu0 %v2988
        %v3075 = vpop.f32.mrb[0].mxu0
        %v3076 = vadd.f32 0.0, %v3075
        %v3077 = vpop.f32.mrb[0].mxu0
        %v3078 = vpop.f32.mrb[0].mxu0
        %v3079 = vadd.f32 0.0, %v3078
        %v3080 = vpop.f32.mrb[0].mxu0
        %3081 = vmatprep.mubr.bf16.mxu0 0
        %3082 = vmatmul.mubr.bf16.gmra.mrb[0].mxu0 %v2991
        %v3083 = vpop.f32.mrb[0].mxu0
        %v3084 = vadd.f32 0.0, %v3083
        %v3085 = vpop.f32.mrb[0].mxu0
        %v3086 = vpop.f32.mrb[0].mxu0
        %v3087 = vadd.f32 0.0, %v3086
        %v3088 = vpop.f32.mrb[0].mxu0
        %3089 = vmatprep.mubr.bf16.mxu0 0
        %3090 = vmatmul.mubr.bf16.gmra.mrb[0].mxu0 %v2994
        %v3091 = vpop.f32.mrb[0].mxu0
        %v3092 = vadd.f32 0.0, %v3091
        %v3093 = vpop.f32.mrb[0].mxu0
        %v3094 = vpop.f32.mrb[0].mxu0
        %v3095 = vadd.f32 0.0, %v3094
        %v3096 = vpop.f32.mrb[0].mxu0
        %3097 = vmatprep.mubr.bf16.mxu0 0
        %3098 = vmatmul.mubr.bf16.gmra.mrb[0].mxu0 %v2997
        %v3099 = vpop.f32.mrb[0].mxu0
        %v3100 = vadd.f32 0.0, %v3099
        %v3101 = vpop.f32.mrb[0].mxu0
        %v3102 = vpop.f32.mrb[0].mxu0
        %v3103 = vadd.f32 0.0, %v3102
        %v3104 = vpop.f32.mrb[0].mxu0
        %3105 = vmatprep.mubr.bf16.mxu0 0
        %3106 = vmatmul.mubr.bf16.gmra.mrb[0].mxu0 %v3000
        %v3107 = vpop.f32.mrb[0].mxu0
        %v3108 = vadd.f32 0.0, %v3107
        %v3109 = vpop.f32.mrb[0].mxu0
        %v3110 = vpop.f32.mrb[0].mxu0
        %v3111 = vadd.f32 0.0, %v3110
        %v3112 = vpop.f32.mrb[0].mxu0
        %3113 = vmatprep.mubr.bf16.mxu0 0
        %3114 = vmatmul.mubr.bf16.gmra.mrb[0].mxu0 %v3003
        %v3115 = vpop.f32.mrb[0].mxu0
        %v3116 = vadd.f32 0.0, %v3115
        %v3117 = vpop.f32.mrb[0].mxu0
        %v3118 = vpop.f32.mrb[0].mxu0
        %v3119 = vadd.f32 0.0, %v3118
        %v3120 = vpop.f32.mrb[0].mxu0
        %3121 = vmatprep.mubr.bf16.mxu0 0
        %3122 = vmatmul.mubr.bf16.gmra.mrb[0].mxu0 %v3006
        %v3123 = vpop.f32.mrb[0].mxu0
        %v3124 = vadd.f32 0.0, %v3123
        %v3125 = vpop.f32.mrb[0].mxu0
        %v3126 = vpop.f32.mrb[0].mxu0
        %v3127 = vadd.f32 0.0, %v3126
        %v3128 = vpop.f32.mrb[0].mxu0
        %3129 = vmatprep.mubr.bf16.mxu0 0
        %3130 = vmatmul.mubr.bf16.gmra.mrb[0].mxu0 %v3009
        %v3131 = vpop.f32.mrb[0].mxu0
        %v3132 = vadd.f32 0.0, %v3131
        %v3133 = vpop.f32.mrb[0].mxu0
        %v3134 = vpop.f32.mrb[0].mxu0
        %v3135 = vadd.f32 0.0, %v3134
        %v3136 = vpop.f32.mrb[0].mxu0
        %3137 = vmatprep.mubr.bf16.mxu0 0
        %3138 = vmatmul.mubr.bf16.gmra.mrb[0].mxu0 %v3012
        %v3139 = vpop.f32.mrb[0].mxu0
        %v3140 = vadd.f32 0.0, %v3139
        %v3141 = vpop.f32.mrb[0].mxu0
        %v3142 = vpop.f32.mrb[0].mxu0
        %v3143 = vadd.f32 0.0, %v3142
        %v3144 = vpop.f32.mrb[0].mxu0
        %3145 = vmatprep.mubr.bf16.mxu0 0
        %3146 = vmatmul.mubr.bf16.gmra.mrb[0].mxu0 %v3015
        %v3147 = vpop.f32.mrb[0].mxu0
        %v3148 = vadd.f32 0.0, %v3147
        %v3149 = vpop.f32.mrb[0].mxu0
        %v3150 = vpop.f32.mrb[0].mxu0
        %v3151 = vadd.f32 0.0, %v3150
        %v3152 = vpop.f32.mrb[0].mxu0
        %3153 = vmatprep.mubr.bf16.mxu0 0
        %3154 = vmatmul.mubr.bf16.gmra.mrb[0].mxu0 %v3018
        %v3155 = vpop.f32.mrb[0].mxu0
        %v3156 = vadd.f32 0.0, %v3155
        %v3157 = vpop.f32.mrb[0].mxu0
        %v3158 = vpop.f32.mrb[0].mxu0
        %v3159 = vadd.f32 0.0, %v3158
        %v3160 = vpop.f32.mrb[0].mxu0
        %3161 = vmatprep.mubr.bf16.mxu0 0
        %3162 = vmatmul.mubr.bf16.gmra.mrb[0].mxu0 %v3021
        %v3163 = vpop.f32.mrb[0].mxu0
        %v3164 = vadd.f32 0.0, %v3163
        %v3165 = vpop.f32.mrb[0].mxu0
        %v3166 = vpop.f32.mrb[0].mxu0
        %v3167 = vadd.f32 0.0, %v3166
        %v3168 = vpop.f32.mrb[0].mxu0
        %3169 = vmatprep.mubr.bf16.mxu0 0
        %3170 = vmatmul.mubr.bf16.gmra.mrb[0].mxu0 %v3024
        %v3171 = vpop.f32.mrb[0].mxu0
        %v3172 = vadd.f32 0.0, %v3171
        %v3173 = vpop.f32.mrb[0].mxu0
        %v3174 = vpop.f32.mrb[0].mxu0
        %v3175 = vadd.f32 0.0, %v3174
        %v3176 = vpop.f32.mrb[0].mxu0
        %3177 = vmatprep.mubr.bf16.mxu0 0
        %3178 = vmatmul.mubr.bf16.gmra.mrb[0].mxu0 %v3027
        %v3179 = vpop.f32.mrb[0].mxu0
        %v3180 = vadd.f32 0.0, %v3179
        %v3181 = vpop.f32.mrb[0].mxu0
        %v3182 = vpop.f32.mrb[0].mxu0
        %v3183 = vadd.f32 0.0, %v3182
        %v3184 = vpop.f32.mrb[0].mxu0
        %3185 = vmatprep.mubr.bf16.mxu0 0
        %3186 = vmatmul.mubr.bf16.gmra.mrb[0].mxu0 %v3030
        %v3187 = vpop.f32.mrb[0].mxu0
        %v3188 = vadd.f32 0.0, %v3187
        %v3189 = vpop.f32.mrb[0].mxu0
        %v3190 = vpop.f32.mrb[0].mxu0
        %v3191 = vadd.f32 0.0, %v3190
        %v3192 = vpop.f32.mrb[0].mxu0
        %3193 = vmatprep.mubr.bf16.mxu0 0
        %3194 = vmatmul.mubr.bf16.gmra.mrb[0].mxu0 %v3033
        %v3195 = vpop.f32.mrb[0].mxu0
        %v3196 = vadd.f32 0.0, %v3195
        %v3197 = vpop.f32.mrb[0].mxu0
        %v3198 = vpop.f32.mrb[0].mxu0
        %v3199 = vadd.f32 0.0, %v3198
        %v3200 = vpop.f32.mrb[0].mxu0
        %3201 = vmatprep.mubr.bf16.mxu0 0
        %3202 = vmatmul.mubr.bf16.gmra.mrb[0].mxu0 %v3036
        %v3203 = vpop.f32.mrb[0].mxu0
        %v3204 = vadd.f32 0.0, %v3203
        %v3205 = vpop.f32.mrb[0].mxu0
        %v3206 = vpop.f32.mrb[0].mxu0
        %v3207 = vadd.f32 0.0, %v3206
        %v3208 = vpop.f32.mrb[0].mxu0
        %3209 = vmatprep.mubr.bf16.mxu0 0
        %3210 = vmatmul.mubr.bf16.gmra.mrb[0].mxu0 %v3039
        %v3211 = vpop.f32.mrb[0].mxu0
        %v3212 = vadd.f32 0.0, %v3211
        %v3213 = vpop.f32.mrb[0].mxu0
        %v3214 = vpop.f32.mrb[0].mxu0
        %v3215 = vadd.f32 0.0, %v3214
        %v3216 = vpop.f32.mrb[0].mxu0
        %3217 = vdwg.mxu0
        %v3218 = vadd.f32 %v3076, 0.0
        %v3219 = vadd.f32 %v3079, 0.0
        %v3220 = vadd.f32 %v3084, 0.0
        %v3221 = vadd.f32 %v3087, 0.0
        %v3222 = vadd.f32 %v3092, 0.0
        %v3223 = vadd.f32 %v3095, 0.0
        %v3224 = vadd.f32 %v3100, 0.0
        %v3225 = vadd.f32 %v3103, 0.0
        %v3226 = vadd.f32 %v3108, 0.0
        %v3227 = vadd.f32 %v3111, 0.0
        %v3228 = vadd.f32 %v3116, 0.0
        %v3229 = vadd.f32 %v3119, 0.0
        %v3230 = vadd.f32 %v3124, 0.0
        %v3231 = vadd.f32 %v3127, 0.0
        %v3232 = vadd.f32 %v3132, 0.0
        %v3233 = vadd.f32 %v3135, 0.0
        %v3234 = vadd.f32 %v3140, 0.0
        %v3235 = vadd.f32 %v3143, 0.0
        %v3236 = vadd.f32 %v3148, 0.0
        %v3237 = vadd.f32 %v3151, 0.0
        %v3238 = vadd.f32 %v3156, 0.0
        %v3239 = vadd.f32 %v3159, 0.0
        %v3240 = vadd.f32 %v3164, 0.0
        %v3241 = vadd.f32 %v3167, 0.0
        %v3242 = vadd.f32 %v3172, 0.0
        %v3243 = vadd.f32 %v3175, 0.0
        %v3244 = vadd.f32 %v3180, 0.0
        %v3245 = vadd.f32 %v3183, 0.0
        %v3246 = vadd.f32 %v3188, 0.0
        %v3247 = vadd.f32 %v3191, 0.0
        %v3248 = vadd.f32 %v3196, 0.0
        %v3249 = vadd.f32 %v3199, 0.0
        %3282 = vrot.lane.b32.xlu0 %v3084, 112
        %v3283 = vpop.permute.xlu0 %3282
        %3284 = vrot.lane.b32.xlu0 %v3087, 112
        %v3285 = vpop.permute.xlu0 %3284
        %3286 = vrot.lane.b32.xlu0 %v3092, 112
        %v3287 = vpop.permute.xlu0 %3286
        %3288 = vrot.lane.b32.xlu0 %v3095, 112
        %v3289 = vpop.permute.xlu0 %3288
        %3290 = vrot.lane.b32.xlu0 %v3100, 112
        %v3291 = vpop.permute.xlu0 %3290
        %3292 = vrot.lane.b32.xlu0 %v3103, 112
        %v3293 = vpop.permute.xlu0 %3292
        %3294 = vrot.lane.b32.xlu0 %v3108, 112
        %v3295 = vpop.permute.xlu0 %3294
        %3296 = vrot.lane.b32.xlu0 %v3111, 112
        %v3297 = vpop.permute.xlu0 %3296
        %3298 = vrot.lane.b32.xlu0 %v3116, 112
        %v3299 = vpop.permute.xlu0 %3298
        %3300 = vrot.lane.b32.xlu0 %v3119, 112
        %v3301 = vpop.permute.xlu0 %3300
        %3302 = vrot.lane.b32.xlu0 %v3124, 112
        %v3303 = vpop.permute.xlu0 %3302
        %3304 = vrot.lane.b32.xlu0 %v3127, 112
        %v3305 = vpop.permute.xlu0 %3304
        %3306 = vrot.lane.b32.xlu0 %v3132, 112
        %v3307 = vpop.permute.xlu0 %3306
        %3308 = vrot.lane.b32.xlu0 %v3135, 112
        %v3309 = vpop.permute.xlu0 %3308
        %3310 = vrot.lane.b32.xlu0 %v3140, 112
        %v3311 = vpop.permute.xlu0 %3310
        %3312 = vrot.lane.b32.xlu0 %v3143, 112
        %v3313 = vpop.permute.xlu0 %3312
        %3314 = vrot.lane.b32.xlu0 %v3148, 112
        %v3315 = vpop.permute.xlu0 %3314
        %3316 = vrot.lane.b32.xlu0 %v3151, 112
        %v3317 = vpop.permute.xlu0 %3316
        %3318 = vrot.lane.b32.xlu0 %v3156, 112
        %v3319 = vpop.permute.xlu0 %3318
        %3320 = vrot.lane.b32.xlu0 %v3159, 112
        %v3321 = vpop.permute.xlu0 %3320
        %3322 = vrot.lane.b32.xlu0 %v3164, 112
        %v3323 = vpop.permute.xlu0 %3322
        %3324 = vrot.lane.b32.xlu0 %v3167, 112
        %v3325 = vpop.permute.xlu0 %3324
        %3326 = vrot.lane.b32.xlu0 %v3172, 112
        %v3327 = vpop.permute.xlu0 %3326
        %3328 = vrot.lane.b32.xlu0 %v3175, 112
        %v3329 = vpop.permute.xlu0 %3328
        %3330 = vrot.lane.b32.xlu0 %v3180, 112
        %v3331 = vpop.permute.xlu0 %3330
        %3332 = vrot.lane.b32.xlu0 %v3183, 112
        %v3333 = vpop.permute.xlu0 %3332
        %3334 = vrot.lane.b32.xlu0 %v3188, 112
        %v3335 = vpop.permute.xlu0 %3334
        %3336 = vrot.lane.b32.xlu0 %v3191, 112
        %v3337 = vpop.permute.xlu0 %3336
        %3338 = vrot.lane.b32.xlu0 %v3196, 112
        %v3339 = vpop.permute.xlu0 %3338
        %3340 = vrot.lane.b32.xlu0 %v3199, 112
        %v3341 = vpop.permute.xlu0 %3340
        %3342 = vrot.lane.b32.xlu0 %v3204, 112
        %v3343 = vpop.permute.xlu0 %3342
        %3344 = vrot.lane.b32.xlu0 %v3207, 112
        %v3345 = vpop.permute.xlu0 %3344
        %v3378 = vadd.f32 %v3218, %v3283
        %v3379 = vadd.f32 %v3219, %v3285
        %v3380 = vadd.f32 %v3220, %v3287
        %v3381 = vadd.f32 %v3221, %v3289
        %v3382 = vadd.f32 %v3222, %v3291
        %v3383 = vadd.f32 %v3223, %v3293
        %v3384 = vadd.f32 %v3224, %v3295
        %v3385 = vadd.f32 %v3225, %v3297
        %v3386 = vadd.f32 %v3226, %v3299
        %v3387 = vadd.f32 %v3227, %v3301
        %v3388 = vadd.f32 %v3228, %v3303
        %v3389 = vadd.f32 %v3229, %v3305
        %v3390 = vadd.f32 %v3230, %v3307
        %v3391 = vadd.f32 %v3231, %v3309
        %v3392 = vadd.f32 %v3232, %v3311
        %v3393 = vadd.f32 %v3233, %v3313
        %v3394 = vadd.f32 %v3234, %v3315
        %v3395 = vadd.f32 %v3235, %v3317
        %v3396 = vadd.f32 %v3236, %v3319
        %v3397 = vadd.f32 %v3237, %v3321
        %v3398 = vadd.f32 %v3238, %v3323
        %v3399 = vadd.f32 %v3239, %v3325
        %v3400 = vadd.f32 %v3240, %v3327
        %v3401 = vadd.f32 %v3241, %v3329
        %v3402 = vadd.f32 %v3242, %v3331
        %v3403 = vadd.f32 %v3243, %v3333
        %v3404 = vadd.f32 %v3244, %v3335
        %v3405 = vadd.f32 %v3245, %v3337
        %v3406 = vadd.f32 %v3246, %v3339
        %v3407 = vadd.f32 %v3247, %v3341
        %v3408 = vadd.f32 %v3248, %v3343
        %v3409 = vadd.f32 %v3249, %v3345
        %3412 = vrot.lane.b32.xlu0 %v3092, 96
        %v3413 = vpop.permute.xlu0 %3412
        %3414 = vrot.lane.b32.xlu0 %v3095, 96
        %v3415 = vpop.permute.xlu0 %3414
        %3416 = vrot.lane.b32.xlu0 %v3100, 96
        %v3417 = vpop.permute.xlu0 %3416
        %3418 = vrot.lane.b32.xlu0 %v3103, 96
        %v3419 = vpop.permute.xlu0 %3418
        %3420 = vrot.lane.b32.xlu0 %v3108, 96
        %v3421 = vpop.permute.xlu0 %3420
        %3422 = vrot.lane.b32.xlu0 %v3111, 96
        %v3423 = vpop.permute.xlu0 %3422
        %3424 = vrot.lane.b32.xlu0 %v3116, 96
        %v3425 = vpop.permute.xlu0 %3424
        %3426 = vrot.lane.b32.xlu0 %v3119, 96
        %v3427 = vpop.permute.xlu0 %3426
        %3428 = vrot.lane.b32.xlu0 %v3124, 96
        %v3429 = vpop.permute.xlu0 %3428
        %3430 = vrot.lane.b32.xlu0 %v3127, 96
        %v3431 = vpop.permute.xlu0 %3430
        %3432 = vrot.lane.b32.xlu0 %v3132, 96
        %v3433 = vpop.permute.xlu0 %3432
        %3434 = vrot.lane.b32.xlu0 %v3135, 96
        %v3435 = vpop.permute.xlu0 %3434
        %3436 = vrot.lane.b32.xlu0 %v3140, 96
        %v3437 = vpop.permute.xlu0 %3436
        %3438 = vrot.lane.b32.xlu0 %v3143, 96
        %v3439 = vpop.permute.xlu0 %3438
        %3440 = vrot.lane.b32.xlu0 %v3148, 96
        %v3441 = vpop.permute.xlu0 %3440
        %3442 = vrot.lane.b32.xlu0 %v3151, 96
        %v3443 = vpop.permute.xlu0 %3442
        %3444 = vrot.lane.b32.xlu0 %v3156, 96
        %v3445 = vpop.permute.xlu0 %3444
        %3446 = vrot.lane.b32.xlu0 %v3159, 96
        %v3447 = vpop.permute.xlu0 %3446
        %3448 = vrot.lane.b32.xlu0 %v3164, 96
        %v3449 = vpop.permute.xlu0 %3448
        %3450 = vrot.lane.b32.xlu0 %v3167, 96
        %v3451 = vpop.permute.xlu0 %3450
        %3452 = vrot.lane.b32.xlu0 %v3172, 96
        %v3453 = vpop.permute.xlu0 %3452
        %3454 = vrot.lane.b32.xlu0 %v3175, 96
        %v3455 = vpop.permute.xlu0 %3454
        %3456 = vrot.lane.b32.xlu0 %v3180, 96
        %v3457 = vpop.permute.xlu0 %3456
        %3458 = vrot.lane.b32.xlu0 %v3183, 96
        %v3459 = vpop.permute.xlu0 %3458
        %3460 = vrot.lane.b32.xlu0 %v3188, 96
        %v3461 = vpop.permute.xlu0 %3460
        %3462 = vrot.lane.b32.xlu0 %v3191, 96
        %v3463 = vpop.permute.xlu0 %3462
        %3464 = vrot.lane.b32.xlu0 %v3196, 96
        %v3465 = vpop.permute.xlu0 %3464
        %3466 = vrot.lane.b32.xlu0 %v3199, 96
        %v3467 = vpop.permute.xlu0 %3466
        %3468 = vrot.lane.b32.xlu0 %v3204, 96
        %v3469 = vpop.permute.xlu0 %3468
        %3470 = vrot.lane.b32.xlu0 %v3207, 96
        %v3471 = vpop.permute.xlu0 %3470
        %3472 = vrot.lane.b32.xlu0 %v3212, 96
        %v3473 = vpop.permute.xlu0 %3472
        %3474 = vrot.lane.b32.xlu0 %v3215, 96
        %v3475 = vpop.permute.xlu0 %3474
        %v3508 = vadd.f32 %v3378, %v3413
        %v3509 = vadd.f32 %v3379, %v3415
        %v3510 = vadd.f32 %v3380, %v3417
        %v3511 = vadd.f32 %v3381, %v3419
        %v3512 = vadd.f32 %v3382, %v3421
        %v3513 = vadd.f32 %v3383, %v3423
        %v3514 = vadd.f32 %v3384, %v3425
        %v3515 = vadd.f32 %v3385, %v3427
        %v3516 = vadd.f32 %v3386, %v3429
        %v3517 = vadd.f32 %v3387, %v3431
        %v3518 = vadd.f32 %v3388, %v3433
        %v3519 = vadd.f32 %v3389, %v3435
        %v3520 = vadd.f32 %v3390, %v3437
        %v3521 = vadd.f32 %v3391, %v3439
        %v3522 = vadd.f32 %v3392, %v3441
        %v3523 = vadd.f32 %v3393, %v3443
        %v3524 = vadd.f32 %v3394, %v3445
        %v3525 = vadd.f32 %v3395, %v3447
        %v3526 = vadd.f32 %v3396, %v3449
        %v3527 = vadd.f32 %v3397, %v3451
        %v3528 = vadd.f32 %v3398, %v3453
        %v3529 = vadd.f32 %v3399, %v3455
        %v3530 = vadd.f32 %v3400, %v3457
        %v3531 = vadd.f32 %v3401, %v3459
        %v3532 = vadd.f32 %v3402, %v3461
        %v3533 = vadd.f32 %v3403, %v3463
        %v3534 = vadd.f32 %v3404, %v3465
        %v3535 = vadd.f32 %v3405, %v3467
        %v3536 = vadd.f32 %v3406, %v3469
        %v3537 = vadd.f32 %v3407, %v3471
        %v3538 = vadd.f32 %v3408, %v3473
        %v3539 = vadd.f32 %v3409, %v3475
        %s3540 = scalar_lea.vmem %s1, 192
        %v3541 = vld [vmem:[%s3540] sm:$0xf]
        %v3542 = vld [vmem:[%s3540 + $0x4] sm:$0xf]
        %v3543 = vld [vmem:[%s3540 + $0x8] sm:$0xf]
        %v3544 = vld [vmem:[%s3540 + $0xc] sm:$0xf]
        %v3545 = vld [vmem:[%s3540 + $0x10] sm:$0xf]
        %v3546 = vld [vmem:[%s3540 + $0x14] sm:$0xf]
        %v3553 = vunpack.c.l.b16 %v3541
        %v3554 = vunpack.c.l.b16 %v3542
        %v3555 = vunpack.c.l.b16 %v3543
        %v3556 = vunpack.c.l.b16 %v3544
        %v3557 = vunpack.c.l.b16 %v3545
        %v3558 = vunpack.c.l.b16 %v3546
        %v3559 = vpack.c.b16 %v3554, %v3553
        %v3560 = vpack.c.b16 %v3556, %v3555
        %v3561 = vpack.c.b16 %v3558, %v3557
        %v3565 = vsel %vm2986, %v2710, 0
        %v3567 = vsel %vm2986, %v2712, 0
        %v3569 = vsel %vm2986, %v2714, 0
        %v3571 = vsel %vm2986, %v2716, 0
        %v3573 = vsel %vm2986, %v2718, 0
        %v3575 = vsel %vm2986, %v2720, 0
        %v3577 = vsel %vm2986, %v2722, 0
        %v3579 = vsel %vm2986, %v2724, 0
        %v3581 = vsel %vm2986, %v2726, 0
        %v3583 = vsel %vm2986, %v2728, 0
        %v3585 = vsel %vm2986, %v2730, 0
        %v3587 = vsel %vm2986, %v2732, 0
        %v3589 = vsel %vm2986, %v2734, 0
        %v3591 = vsel %vm2986, %v2736, 0
        %v3593 = vsel %vm2986, %v2738, 0
        %v3595 = vsel %vm2986, %v2740, 0
        %v3597 = vsel %vm2986, %v2742, 0
        %v3599 = vsel %vm2986, %v2744, 0
        %3601 = vmatprep.subr.bf16.mxu0 0
        %3602 = vmatpush1.bf16.msra.mxu0 %v3559
        %3603 = vmatprep.subr.bf16.mxu0 0
        %3604 = vmatpush1.bf16.msra.mxu0 %v3560
        %3605 = vmatprep.subr.bf16.mxu0 0
        %3606 = vmatpush1.bf16.msra.mxu0 %v3561
        %3607 = vmatprep.subr.bf16.mxu0 0
        %3608 = vmatpush1.bf16.msra.mxu0 0
        %3609 = vmatprep.subr.bf16.mxu0 0
        %3610 = vmatpush1.bf16.msra.mxu0 0
        %3611 = vmatprep.subr.bf16.mxu0 0
        %3612 = vmatpush1.bf16.msra.mxu0 0
        %3613 = vmatprep.subr.bf16.mxu0 0
        %3614 = vmatpush1.bf16.msra.mxu0 0
        %3615 = vmatprep.subr.bf16.mxu0 0
        %3616 = vmatpush1.bf16.msra.mxu0 0
        %3617 = vmatprep.subr.bf16.mxu0 0
        %3618 = vmatpush1.bf16.msra.mxu0 0
        %3619 = vmatprep.subr.bf16.mxu0 0
        %3620 = vmatpush1.bf16.msra.mxu0 0
        %3621 = vmatprep.subr.bf16.mxu0 0
        %3622 = vmatpush1.bf16.msra.mxu0 0
        %3623 = vmatprep.subr.bf16.mxu0 0
        %3624 = vmatpush1.bf16.msra.mxu0 0
        %3625 = vmatprep.subr.bf16.mxu0 0
        %3626 = vmatpush1.bf16.msra.mxu0 0
        %3627 = vmatprep.subr.bf16.mxu0 0
        %3628 = vmatpush1.bf16.msra.mxu0 0
        %3629 = vmatprep.subr.bf16.mxu0 0
        %3630 = vmatpush1.bf16.msra.mxu0 0
        %3631 = vmatprep.subr.bf16.mxu0 0
        %3632 = vmatpush1.bf16.msra.mxu0 0
        %3633 = vmatprep.mubr.bf16.mxu0 0
        %3634 = vmatmul.mubr.bf16.gmra.mrb[0].mxu0 %v3565
        %v3635 = vpop.f32.mrb[0].mxu0
        %v3636 = vadd.f32 0.0, %v3635
        %v3637 = vpop.f32.mrb[0].mxu0
        %v3638 = vpop.f32.mrb[0].mxu0
        %v3639 = vadd.f32 0.0, %v3638
        %v3640 = vpop.f32.mrb[0].mxu0
        %3641 = vmatprep.mubr.bf16.mxu0 0
        %3642 = vmatmul.mubr.bf16.gmra.mrb[0].mxu0 %v3567
        %v3643 = vpop.f32.mrb[0].mxu0
        %v3644 = vadd.f32 0.0, %v3643
        %v3645 = vpop.f32.mrb[0].mxu0
        %v3646 = vpop.f32.mrb[0].mxu0
        %v3647 = vadd.f32 0.0, %v3646
        %v3648 = vpop.f32.mrb[0].mxu0
        %3649 = vmatprep.mubr.bf16.mxu0 0
        %3650 = vmatmul.mubr.bf16.gmra.mrb[0].mxu0 %v3569
        %v3651 = vpop.f32.mrb[0].mxu0
        %v3652 = vadd.f32 0.0, %v3651
        %v3653 = vpop.f32.mrb[0].mxu0
        %v3654 = vpop.f32.mrb[0].mxu0
        %v3655 = vadd.f32 0.0, %v3654
        %v3656 = vpop.f32.mrb[0].mxu0
        %3657 = vmatprep.mubr.bf16.mxu0 0
        %3658 = vmatmul.mubr.bf16.gmra.mrb[0].mxu0 %v3571
        %v3659 = vpop.f32.mrb[0].mxu0
        %v3660 = vadd.f32 0.0, %v3659
        %v3661 = vpop.f32.mrb[0].mxu0
        %v3662 = vpop.f32.mrb[0].mxu0
        %v3663 = vadd.f32 0.0, %v3662
        %v3664 = vpop.f32.mrb[0].mxu0
        %3665 = vmatprep.mubr.bf16.mxu0 0
        %3666 = vmatmul.mubr.bf16.gmra.mrb[0].mxu0 %v3573
        %v3667 = vpop.f32.mrb[0].mxu0
        %v3668 = vadd.f32 0.0, %v3667
        %v3669 = vpop.f32.mrb[0].mxu0
        %v3670 = vpop.f32.mrb[0].mxu0
        %v3671 = vadd.f32 0.0, %v3670
        %v3672 = vpop.f32.mrb[0].mxu0
        %3673 = vmatprep.mubr.bf16.mxu0 0
        %3674 = vmatmul.mubr.bf16.gmra.mrb[0].mxu0 %v3575
        %v3675 = vpop.f32.mrb[0].mxu0
        %v3676 = vadd.f32 0.0, %v3675
        %v3677 = vpop.f32.mrb[0].mxu0
        %v3678 = vpop.f32.mrb[0].mxu0
        %v3679 = vadd.f32 0.0, %v3678
        %v3680 = vpop.f32.mrb[0].mxu0
        %3681 = vmatprep.mubr.bf16.mxu0 0
        %3682 = vmatmul.mubr.bf16.gmra.mrb[0].mxu0 %v3577
        %v3683 = vpop.f32.mrb[0].mxu0
        %v3684 = vadd.f32 0.0, %v3683
        %v3685 = vpop.f32.mrb[0].mxu0
        %v3686 = vpop.f32.mrb[0].mxu0
        %v3687 = vadd.f32 0.0, %v3686
        %v3688 = vpop.f32.mrb[0].mxu0
        %3689 = vmatprep.mubr.bf16.mxu0 0
        %3690 = vmatmul.mubr.bf16.gmra.mrb[0].mxu0 %v3579
        %v3691 = vpop.f32.mrb[0].mxu0
        %v3692 = vadd.f32 0.0, %v3691
        %v3693 = vpop.f32.mrb[0].mxu0
        %v3694 = vpop.f32.mrb[0].mxu0
        %v3695 = vadd.f32 0.0, %v3694
        %v3696 = vpop.f32.mrb[0].mxu0
        %3697 = vmatprep.mubr.bf16.mxu0 0
        %3698 = vmatmul.mubr.bf16.gmra.mrb[0].mxu0 %v3581
        %v3699 = vpop.f32.mrb[0].mxu0
        %v3700 = vadd.f32 0.0, %v3699
        %v3701 = vpop.f32.mrb[0].mxu0
        %v3702 = vpop.f32.mrb[0].mxu0
        %v3703 = vadd.f32 0.0, %v3702
        %v3704 = vpop.f32.mrb[0].mxu0
        %3705 = vmatprep.mubr.bf16.mxu0 0
        %3706 = vmatmul.mubr.bf16.gmra.mrb[0].mxu0 %v3583
        %v3707 = vpop.f32.mrb[0].mxu0
        %v3708 = vadd.f32 0.0, %v3707
        %v3709 = vpop.f32.mrb[0].mxu0
        %v3710 = vpop.f32.mrb[0].mxu0
        %v3711 = vadd.f32 0.0, %v3710
        %v3712 = vpop.f32.mrb[0].mxu0
        %3713 = vmatprep.mubr.bf16.mxu0 0
        %3714 = vmatmul.mubr.bf16.gmra.mrb[0].mxu0 %v3585
        %v3715 = vpop.f32.mrb[0].mxu0
        %v3716 = vadd.f32 0.0, %v3715
        %v3717 = vpop.f32.mrb[0].mxu0
        %v3718 = vpop.f32.mrb[0].mxu0
        %v3719 = vadd.f32 0.0, %v3718
        %v3720 = vpop.f32.mrb[0].mxu0
        %3721 = vmatprep.mubr.bf16.mxu0 0
        %3722 = vmatmul.mubr.bf16.gmra.mrb[0].mxu0 %v3587
        %v3723 = vpop.f32.mrb[0].mxu0
        %v3724 = vadd.f32 0.0, %v3723
        %v3725 = vpop.f32.mrb[0].mxu0
        %v3726 = vpop.f32.mrb[0].mxu0
        %v3727 = vadd.f32 0.0, %v3726
        %v3728 = vpop.f32.mrb[0].mxu0
        %3729 = vmatprep.mubr.bf16.mxu0 0
        %3730 = vmatmul.mubr.bf16.gmra.mrb[0].mxu0 %v3589
        %v3731 = vpop.f32.mrb[0].mxu0
        %v3732 = vadd.f32 0.0, %v3731
        %v3733 = vpop.f32.mrb[0].mxu0
        %v3734 = vpop.f32.mrb[0].mxu0
        %v3735 = vadd.f32 0.0, %v3734
        %v3736 = vpop.f32.mrb[0].mxu0
        %3737 = vmatprep.mubr.bf16.mxu0 0
        %3738 = vmatmul.mubr.bf16.gmra.mrb[0].mxu0 %v3591
        %v3739 = vpop.f32.mrb[0].mxu0
        %v3740 = vadd.f32 0.0, %v3739
        %v3741 = vpop.f32.mrb[0].mxu0
        %v3742 = vpop.f32.mrb[0].mxu0
        %v3743 = vadd.f32 0.0, %v3742
        %v3744 = vpop.f32.mrb[0].mxu0
        %3745 = vmatprep.mubr.bf16.mxu0 0
        %3746 = vmatmul.mubr.bf16.gmra.mrb[0].mxu0 %v3593
        %v3747 = vpop.f32.mrb[0].mxu0
        %v3748 = vadd.f32 0.0, %v3747
        %v3749 = vpop.f32.mrb[0].mxu0
        %v3750 = vpop.f32.mrb[0].mxu0
        %v3751 = vadd.f32 0.0, %v3750
        %v3752 = vpop.f32.mrb[0].mxu0
        %3753 = vmatprep.mubr.bf16.mxu0 0
        %3754 = vmatmul.mubr.bf16.gmra.mrb[0].mxu0 %v3595
        %v3755 = vpop.f32.mrb[0].mxu0
        %v3756 = vadd.f32 0.0, %v3755
        %v3757 = vpop.f32.mrb[0].mxu0
        %v3758 = vpop.f32.mrb[0].mxu0
        %v3759 = vadd.f32 0.0, %v3758
        %v3760 = vpop.f32.mrb[0].mxu0
        %3761 = vmatprep.mubr.bf16.mxu0 0
        %3762 = vmatmul.mubr.bf16.gmra.mrb[0].mxu0 %v3597
        %v3763 = vpop.f32.mrb[0].mxu0
        %v3764 = vadd.f32 0.0, %v3763
        %v3765 = vpop.f32.mrb[0].mxu0
        %v3766 = vpop.f32.mrb[0].mxu0
        %v3767 = vadd.f32 0.0, %v3766
        %v3768 = vpop.f32.mrb[0].mxu0
        %3769 = vmatprep.mubr.bf16.mxu0 0
        %3770 = vmatmul.mubr.bf16.gmra.mrb[0].mxu0 %v3599
        %v3771 = vpop.f32.mrb[0].mxu0
        %v3772 = vadd.f32 0.0, %v3771
        %v3773 = vpop.f32.mrb[0].mxu0
        %v3774 = vpop.f32.mrb[0].mxu0
        %v3775 = vadd.f32 0.0, %v3774
        %v3776 = vpop.f32.mrb[0].mxu0
        %3777 = vdwg.mxu0
        %v3778 = vadd.f32 %v3508, %v3636
        %v3779 = vadd.f32 %v3509, %v3639
        %v3780 = vadd.f32 %v3510, %v3644
        %v3781 = vadd.f32 %v3511, %v3647
        %v3782 = vadd.f32 %v3512, %v3652
        %v3783 = vadd.f32 %v3513, %v3655
        %v3784 = vadd.f32 %v3514, %v3660
        %v3785 = vadd.f32 %v3515, %v3663
        %v3786 = vadd.f32 %v3516, %v3668
        %v3787 = vadd.f32 %v3517, %v3671
        %v3788 = vadd.f32 %v3518, %v3676
        %v3789 = vadd.f32 %v3519, %v3679
        %v3790 = vadd.f32 %v3520, %v3684
        %v3791 = vadd.f32 %v3521, %v3687
        %v3792 = vadd.f32 %v3522, %v3692
        %v3793 = vadd.f32 %v3523, %v3695
        %v3794 = vadd.f32 %v3524, %v3700
        %v3795 = vadd.f32 %v3525, %v3703
        %v3796 = vadd.f32 %v3526, %v3708
        %v3797 = vadd.f32 %v3527, %v3711
        %v3798 = vadd.f32 %v3528, %v3716
        %v3799 = vadd.f32 %v3529, %v3719
        %v3800 = vadd.f32 %v3530, %v3724
        %v3801 = vadd.f32 %v3531, %v3727
        %v3802 = vadd.f32 %v3532, %v3732
        %v3803 = vadd.f32 %v3533, %v3735
        %v3804 = vadd.f32 %v3534, %v3740
        %v3805 = vadd.f32 %v3535, %v3743
        %v3806 = vadd.f32 %v3536, %v3748
        %v3807 = vadd.f32 %v3537, %v3751
        %v3808 = vadd.f32 %v3538, %v3756
        %v3809 = vadd.f32 %v3539, %v3759
        %3842 = vrot.lane.b32.xlu0 %v3644, 112
        %v3843 = vpop.permute.xlu0 %3842
        %3844 = vrot.lane.b32.xlu0 %v3647, 112
        %v3845 = vpop.permute.xlu0 %3844
        %3846 = vrot.lane.b32.xlu0 %v3652, 112
        %v3847 = vpop.permute.xlu0 %3846
        %3848 = vrot.lane.b32.xlu0 %v3655, 112
        %v3849 = vpop.permute.xlu0 %3848
        %3850 = vrot.lane.b32.xlu0 %v3660, 112
        %v3851 = vpop.permute.xlu0 %3850
        %3852 = vrot.lane.b32.xlu0 %v3663, 112
        %v3853 = vpop.permute.xlu0 %3852
        %3854 = vrot.lane.b32.xlu0 %v3668, 112
        %v3855 = vpop.permute.xlu0 %3854
        %3856 = vrot.lane.b32.xlu0 %v3671, 112
        %v3857 = vpop.permute.xlu0 %3856
        %3858 = vrot.lane.b32.xlu0 %v3676, 112
        %v3859 = vpop.permute.xlu0 %3858
        %3860 = vrot.lane.b32.xlu0 %v3679, 112
        %v3861 = vpop.permute.xlu0 %3860
        %3862 = vrot.lane.b32.xlu0 %v3684, 112
        %v3863 = vpop.permute.xlu0 %3862
        %3864 = vrot.lane.b32.xlu0 %v3687, 112
        %v3865 = vpop.permute.xlu0 %3864
        %3866 = vrot.lane.b32.xlu0 %v3692, 112
        %v3867 = vpop.permute.xlu0 %3866
        %3868 = vrot.lane.b32.xlu0 %v3695, 112
        %v3869 = vpop.permute.xlu0 %3868
        %3870 = vrot.lane.b32.xlu0 %v3700, 112
        %v3871 = vpop.permute.xlu0 %3870
        %3872 = vrot.lane.b32.xlu0 %v3703, 112
        %v3873 = vpop.permute.xlu0 %3872
        %3874 = vrot.lane.b32.xlu0 %v3708, 112
        %v3875 = vpop.permute.xlu0 %3874
        %3876 = vrot.lane.b32.xlu0 %v3711, 112
        %v3877 = vpop.permute.xlu0 %3876
        %3878 = vrot.lane.b32.xlu0 %v3716, 112
        %v3879 = vpop.permute.xlu0 %3878
        %3880 = vrot.lane.b32.xlu0 %v3719, 112
        %v3881 = vpop.permute.xlu0 %3880
        %3882 = vrot.lane.b32.xlu0 %v3724, 112
        %v3883 = vpop.permute.xlu0 %3882
        %3884 = vrot.lane.b32.xlu0 %v3727, 112
        %v3885 = vpop.permute.xlu0 %3884
        %3886 = vrot.lane.b32.xlu0 %v3732, 112
        %v3887 = vpop.permute.xlu0 %3886
        %3888 = vrot.lane.b32.xlu0 %v3735, 112
        %v3889 = vpop.permute.xlu0 %3888
        %3890 = vrot.lane.b32.xlu0 %v3740, 112
        %v3891 = vpop.permute.xlu0 %3890
        %3892 = vrot.lane.b32.xlu0 %v3743, 112
        %v3893 = vpop.permute.xlu0 %3892
        %3894 = vrot.lane.b32.xlu0 %v3748, 112
        %v3895 = vpop.permute.xlu0 %3894
        %3896 = vrot.lane.b32.xlu0 %v3751, 112
        %v3897 = vpop.permute.xlu0 %3896
        %3898 = vrot.lane.b32.xlu0 %v3756, 112
        %v3899 = vpop.permute.xlu0 %3898
        %3900 = vrot.lane.b32.xlu0 %v3759, 112
        %v3901 = vpop.permute.xlu0 %3900
        %3902 = vrot.lane.b32.xlu0 %v3764, 112
        %v3903 = vpop.permute.xlu0 %3902
        %3904 = vrot.lane.b32.xlu0 %v3767, 112
        %v3905 = vpop.permute.xlu0 %3904
        %v3938 = vadd.f32 %v3778, %v3843
        %v3939 = vadd.f32 %v3779, %v3845
        %v3940 = vadd.f32 %v3780, %v3847
        %v3941 = vadd.f32 %v3781, %v3849
        %v3942 = vadd.f32 %v3782, %v3851
        %v3943 = vadd.f32 %v3783, %v3853
        %v3944 = vadd.f32 %v3784, %v3855
        %v3945 = vadd.f32 %v3785, %v3857
        %v3946 = vadd.f32 %v3786, %v3859
        %v3947 = vadd.f32 %v3787, %v3861
        %v3948 = vadd.f32 %v3788, %v3863
        %v3949 = vadd.f32 %v3789, %v3865
        %v3950 = vadd.f32 %v3790, %v3867
        %v3951 = vadd.f32 %v3791, %v3869
        %v3952 = vadd.f32 %v3792, %v3871
        %v3953 = vadd.f32 %v3793, %v3873
        %v3954 = vadd.f32 %v3794, %v3875
        %v3955 = vadd.f32 %v3795, %v3877
        %v3956 = vadd.f32 %v3796, %v3879
        %v3957 = vadd.f32 %v3797, %v3881
        %v3958 = vadd.f32 %v3798, %v3883
        %v3959 = vadd.f32 %v3799, %v3885
        %v3960 = vadd.f32 %v3800, %v3887
        %v3961 = vadd.f32 %v3801, %v3889
        %v3962 = vadd.f32 %v3802, %v3891
        %v3963 = vadd.f32 %v3803, %v3893
        %v3964 = vadd.f32 %v3804, %v3895
        %v3965 = vadd.f32 %v3805, %v3897
        %v3966 = vadd.f32 %v3806, %v3899
        %v3967 = vadd.f32 %v3807, %v3901
        %v3968 = vadd.f32 %v3808, %v3903
        %v3969 = vadd.f32 %v3809, %v3905
        %3972 = vrot.lane.b32.xlu0 %v3652, 96
        %v3973 = vpop.permute.xlu0 %3972
        %3974 = vrot.lane.b32.xlu0 %v3655, 96
        %v3975 = vpop.permute.xlu0 %3974
        %3976 = vrot.lane.b32.xlu0 %v3660, 96
        %v3977 = vpop.permute.xlu0 %3976
        %3978 = vrot.lane.b32.xlu0 %v3663, 96
        %v3979 = vpop.permute.xlu0 %3978
        %3980 = vrot.lane.b32.xlu0 %v3668, 96
        %v3981 = vpop.permute.xlu0 %3980
        %3982 = vrot.lane.b32.xlu0 %v3671, 96
        %v3983 = vpop.permute.xlu0 %3982
        %3984 = vrot.lane.b32.xlu0 %v3676, 96
        %v3985 = vpop.permute.xlu0 %3984
        %3986 = vrot.lane.b32.xlu0 %v3679, 96
        %v3987 = vpop.permute.xlu0 %3986
        %3988 = vrot.lane.b32.xlu0 %v3684, 96
        %v3989 = vpop.permute.xlu0 %3988
        %3990 = vrot.lane.b32.xlu0 %v3687, 96
        %v3991 = vpop.permute.xlu0 %3990
        %3992 = vrot.lane.b32.xlu0 %v3692, 96
        %v3993 = vpop.permute.xlu0 %3992
        %3994 = vrot.lane.b32.xlu0 %v3695, 96
        %v3995 = vpop.permute.xlu0 %3994
        %3996 = vrot.lane.b32.xlu0 %v3700, 96
        %v3997 = vpop.permute.xlu0 %3996
        %3998 = vrot.lane.b32.xlu0 %v3703, 96
        %v3999 = vpop.permute.xlu0 %3998
        %4000 = vrot.lane.b32.xlu0 %v3708, 96
        %v4001 = vpop.permute.xlu0 %4000
        %4002 = vrot.lane.b32.xlu0 %v3711, 96
        %v4003 = vpop.permute.xlu0 %4002
        %4004 = vrot.lane.b32.xlu0 %v3716, 96
        %v4005 = vpop.permute.xlu0 %4004
        %4006 = vrot.lane.b32.xlu0 %v3719, 96
        %v4007 = vpop.permute.xlu0 %4006
        %4008 = vrot.lane.b32.xlu0 %v3724, 96
        %v4009 = vpop.permute.xlu0 %4008
        %4010 = vrot.lane.b32.xlu0 %v3727, 96
        %v4011 = vpop.permute.xlu0 %4010
        %4012 = vrot.lane.b32.xlu0 %v3732, 96
        %v4013 = vpop.permute.xlu0 %4012
        %4014 = vrot.lane.b32.xlu0 %v3735, 96
        %v4015 = vpop.permute.xlu0 %4014
        %4016 = vrot.lane.b32.xlu0 %v3740, 96
        %v4017 = vpop.permute.xlu0 %4016
        %4018 = vrot.lane.b32.xlu0 %v3743, 96
        %v4019 = vpop.permute.xlu0 %4018
        %4020 = vrot.lane.b32.xlu0 %v3748, 96
        %v4021 = vpop.permute.xlu0 %4020
        %4022 = vrot.lane.b32.xlu0 %v3751, 96
        %v4023 = vpop.permute.xlu0 %4022
        %4024 = vrot.lane.b32.xlu0 %v3756, 96
        %v4025 = vpop.permute.xlu0 %4024
        %4026 = vrot.lane.b32.xlu0 %v3759, 96
        %v4027 = vpop.permute.xlu0 %4026
        %4028 = vrot.lane.b32.xlu0 %v3764, 96
        %v4029 = vpop.permute.xlu0 %4028
        %4030 = vrot.lane.b32.xlu0 %v3767, 96
        %v4031 = vpop.permute.xlu0 %4030
        %4032 = vrot.lane.b32.xlu0 %v3772, 96
        %v4033 = vpop.permute.xlu0 %4032
        %4034 = vrot.lane.b32.xlu0 %v3775, 96
        %v4035 = vpop.permute.xlu0 %4034
        %v4068 = vadd.f32 %v3938, %v3973
        %v4069 = vadd.f32 %v3939, %v3975
        %v4070 = vadd.f32 %v3940, %v3977
        %v4071 = vadd.f32 %v3941, %v3979
        %v4072 = vadd.f32 %v3942, %v3981
        %v4073 = vadd.f32 %v3943, %v3983
        %v4074 = vadd.f32 %v3944, %v3985
        %v4075 = vadd.f32 %v3945, %v3987
        %v4076 = vadd.f32 %v3946, %v3989
        %v4077 = vadd.f32 %v3947, %v3991
        %v4078 = vadd.f32 %v3948, %v3993
        %v4079 = vadd.f32 %v3949, %v3995
        %v4080 = vadd.f32 %v3950, %v3997
        %v4081 = vadd.f32 %v3951, %v3999
        %v4082 = vadd.f32 %v3952, %v4001
        %v4083 = vadd.f32 %v3953, %v4003
        %v4084 = vadd.f32 %v3954, %v4005
        %v4085 = vadd.f32 %v3955, %v4007
        %v4086 = vadd.f32 %v3956, %v4009
        %v4087 = vadd.f32 %v3957, %v4011
        %v4088 = vadd.f32 %v3958, %v4013
        %v4089 = vadd.f32 %v3959, %v4015
        %v4090 = vadd.f32 %v3960, %v4017
        %v4091 = vadd.f32 %v3961, %v4019
        %v4092 = vadd.f32 %v3962, %v4021
        %v4093 = vadd.f32 %v3963, %v4023
        %v4094 = vadd.f32 %v3964, %v4025
        %v4095 = vadd.f32 %v3965, %v4027
        %v4096 = vadd.f32 %v3966, %v4029
        %v4097 = vadd.f32 %v3967, %v4031
        %v4098 = vadd.f32 %v3968, %v4033
        %v4099 = vadd.f32 %v3969, %v4035
        %v4100 = vld [vmem:[#allocation2 + $0x8] sm:$0xff]
        %v4101 = vld [vmem:[#allocation2 + $0x10] sm:$0x1]
        %v4102 = vld [vmem:[#allocation2 + $0x20] sm:$0xff]
        %v4103 = vld [vmem:[#allocation2 + $0x28] sm:$0x1]
        %v4104 = vld [vmem:[#allocation2 + $0x38] sm:$0xff]
        %v4105 = vld [vmem:[#allocation2 + $0x40] sm:$0x1]
        %v4106 = vld [vmem:[#allocation2 + $0x50] sm:$0xff]
        %v4107 = vld [vmem:[#allocation2 + $0x58] sm:$0x1]
        %v4108 = vld [vmem:[#allocation2 + $0x68] sm:$0xff]
        %v4109 = vld [vmem:[#allocation2 + $0x70] sm:$0x1]
        %v4110 = vld [vmem:[#allocation2 + $0x80] sm:$0xff]
        %v4111 = vld [vmem:[#allocation2 + $0x88] sm:$0x1]
        %v4112 = vld [vmem:[#allocation2 + $0x98] sm:$0xff]
        %v4113 = vld [vmem:[#allocation2 + $0xa0] sm:$0x1]
        %v4114 = vld [vmem:[#allocation2 + $0xb0] sm:$0xff]
        %v4115 = vld [vmem:[#allocation2 + $0xb8] sm:$0x1]
        %v4116 = vld [vmem:[#allocation2 + $0xc8] sm:$0xff]
        %v4117 = vld [vmem:[#allocation2 + $0xd0] sm:$0x1]
        %v4118 = vld [vmem:[#allocation2 + $0xe0] sm:$0xff]
        %v4119 = vld [vmem:[#allocation2 + $0xe8] sm:$0x1]
        %v4120 = vld [vmem:[#allocation2 + $0xf8] sm:$0xff]
        %v4121 = vld [vmem:[#allocation2 + $0x100] sm:$0x1]
        %v4122 = vld [vmem:[#allocation2 + $0x110] sm:$0xff]
        %v4123 = vld [vmem:[#allocation2 + $0x118] sm:$0x1]
        %v4124 = vld [vmem:[#allocation2 + $0x128] sm:$0xff]
        %v4125 = vld [vmem:[#allocation2 + $0x130] sm:$0x1]
        %v4126 = vld [vmem:[#allocation2 + $0x140] sm:$0xff]
        %v4127 = vld [vmem:[#allocation2 + $0x148] sm:$0x1]
        %v4128 = vld [vmem:[#allocation2 + $0x158] sm:$0xff]
        %v4129 = vld [vmem:[#allocation2 + $0x160] sm:$0x1]
        %v4130 = vld [vmem:[#allocation2 + $0x170] sm:$0xff]
        %v4131 = vld [vmem:[#allocation2 + $0x178] sm:$0x1]
        %v4132 = vld [vmem:[#allocation2 + $0x188] sm:$0xff]
        %v4133 = vld [vmem:[#allocation2 + $0x190] sm:$0x1]
        %v4134 = vld [vmem:[#allocation2 + $0x1a0] sm:$0xff]
        %v4135 = vld [vmem:[#allocation2 + $0x1a8] sm:$0x1]
        %v4137 = vshrl.u32 %v4100, 16
        %v4139 = vshll.u32 %v4100, 16
        %v4141 = vrot.slane %v4139, 1
        %v4142 = vor.u32 %v4137, %v4141
        %v4144 = vshll.u32 %v4101, 16
        %v4146 = vrot.slane %v4144, 1
        %v4147 = vsel %vm1690, %v4142, %v4146
        %v4149 = vshrl.u32 %v4102, 16
        %v4151 = vshll.u32 %v4102, 16
        %v4153 = vrot.slane %v4151, 1
        %v4154 = vor.u32 %v4149, %v4153
        %v4156 = vshll.u32 %v4103, 16
        %v4158 = vrot.slane %v4156, 1
        %v4159 = vsel %vm1690, %v4154, %v4158
        %v4161 = vshrl.u32 %v4104, 16
        %v4163 = vshll.u32 %v4104, 16
        %v4165 = vrot.slane %v4163, 1
        %v4166 = vor.u32 %v4161, %v4165
        %v4168 = vshll.u32 %v4105, 16
        %v4170 = vrot.slane %v4168, 1
        %v4171 = vsel %vm1690, %v4166, %v4170
        %v4173 = vshrl.u32 %v4106, 16
        %v4175 = vshll.u32 %v4106, 16
        %v4177 = vrot.slane %v4175, 1
        %v4178 = vor.u32 %v4173, %v4177
        %v4180 = vshll.u32 %v4107, 16
        %v4182 = vrot.slane %v4180, 1
        %v4183 = vsel %vm1690, %v4178, %v4182
        %v4185 = vshrl.u32 %v4108, 16
        %v4187 = vshll.u32 %v4108, 16
        %v4189 = vrot.slane %v4187, 1
        %v4190 = vor.u32 %v4185, %v4189
        %v4192 = vshll.u32 %v4109, 16
        %v4194 = vrot.slane %v4192, 1
        %v4195 = vsel %vm1690, %v4190, %v4194
        %v4197 = vshrl.u32 %v4110, 16
        %v4199 = vshll.u32 %v4110, 16
        %v4201 = vrot.slane %v4199, 1
        %v4202 = vor.u32 %v4197, %v4201
        %v4204 = vshll.u32 %v4111, 16
        %v4206 = vrot.slane %v4204, 1
        %v4207 = vsel %vm1690, %v4202, %v4206
        %v4209 = vshrl.u32 %v4112, 16
        %v4211 = vshll.u32 %v4112, 16
        %v4213 = vrot.slane %v4211, 1
        %v4214 = vor.u32 %v4209, %v4213
        %v4216 = vshll.u32 %v4113, 16
        %v4218 = vrot.slane %v4216, 1
        %v4219 = vsel %vm1690, %v4214, %v4218
        %v4221 = vshrl.u32 %v4114, 16
        %v4223 = vshll.u32 %v4114, 16
        %v4225 = vrot.slane %v4223, 1
        %v4226 = vor.u32 %v4221, %v4225
        %v4228 = vshll.u32 %v4115, 16
        %v4230 = vrot.slane %v4228, 1
        %v4231 = vsel %vm1690, %v4226, %v4230
        %v4233 = vshrl.u32 %v4116, 16
        %v4235 = vshll.u32 %v4116, 16
        %v4237 = vrot.slane %v4235, 1
        %v4238 = vor.u32 %v4233, %v4237
        %v4240 = vshll.u32 %v4117, 16
        %v4242 = vrot.slane %v4240, 1
        %v4243 = vsel %vm1690, %v4238, %v4242
        %v4245 = vshrl.u32 %v4118, 16
        %v4247 = vshll.u32 %v4118, 16
        %v4249 = vrot.slane %v4247, 1
        %v4250 = vor.u32 %v4245, %v4249
        %v4252 = vshll.u32 %v4119, 16
        %v4254 = vrot.slane %v4252, 1
        %v4255 = vsel %vm1690, %v4250, %v4254
        %v4257 = vshrl.u32 %v4120, 16
        %v4259 = vshll.u32 %v4120, 16
        %v4261 = vrot.slane %v4259, 1
        %v4262 = vor.u32 %v4257, %v4261
        %v4264 = vshll.u32 %v4121, 16
        %v4266 = vrot.slane %v4264, 1
        %v4267 = vsel %vm1690, %v4262, %v4266
        %v4269 = vshrl.u32 %v4122, 16
        %v4271 = vshll.u32 %v4122, 16
        %v4273 = vrot.slane %v4271, 1
        %v4274 = vor.u32 %v4269, %v4273
        %v4276 = vshll.u32 %v4123, 16
        %v4278 = vrot.slane %v4276, 1
        %v4279 = vsel %vm1690, %v4274, %v4278
        %v4281 = vshrl.u32 %v4124, 16
        %v4283 = vshll.u32 %v4124, 16
        %v4285 = vrot.slane %v4283, 1
        %v4286 = vor.u32 %v4281, %v4285
        %v4288 = vshll.u32 %v4125, 16
        %v4290 = vrot.slane %v4288, 1
        %v4291 = vsel %vm1690, %v4286, %v4290
        %v4293 = vshrl.u32 %v4126, 16
        %v4295 = vshll.u32 %v4126, 16
        %v4297 = vrot.slane %v4295, 1
        %v4298 = vor.u32 %v4293, %v4297
        %v4300 = vshll.u32 %v4127, 16
        %v4302 = vrot.slane %v4300, 1
        %v4303 = vsel %vm1690, %v4298, %v4302
        %v4305 = vshrl.u32 %v4128, 16
        %v4307 = vshll.u32 %v4128, 16
        %v4309 = vrot.slane %v4307, 1
        %v4310 = vor.u32 %v4305, %v4309
        %v4312 = vshll.u32 %v4129, 16
        %v4314 = vrot.slane %v4312, 1
        %v4315 = vsel %vm1690, %v4310, %v4314
        %v4317 = vshrl.u32 %v4130, 16
        %v4319 = vshll.u32 %v4130, 16
        %v4321 = vrot.slane %v4319, 1
        %v4322 = vor.u32 %v4317, %v4321
        %v4324 = vshll.u32 %v4131, 16
        %v4326 = vrot.slane %v4324, 1
        %v4327 = vsel %vm1690, %v4322, %v4326
        %v4329 = vshrl.u32 %v4132, 16
        %v4331 = vshll.u32 %v4132, 16
        %v4333 = vrot.slane %v4331, 1
        %v4334 = vor.u32 %v4329, %v4333
        %v4336 = vshll.u32 %v4133, 16
        %v4338 = vrot.slane %v4336, 1
        %v4339 = vsel %vm1690, %v4334, %v4338
        %v4341 = vshrl.u32 %v4134, 16
        %v4343 = vshll.u32 %v4134, 16
        %v4345 = vrot.slane %v4343, 1
        %v4346 = vor.u32 %v4341, %v4345
        %v4348 = vshll.u32 %v4135, 16
        %v4350 = vrot.slane %v4348, 1
        %v4351 = vsel %vm1690, %v4346, %v4350
        %s4352 = scalar_lea.vmem %s1, 240
        %v4353 = vld [vmem:[%s4352] sm:$0xf]
        %v4354 = vld [vmem:[%s4352 + $0x4] sm:$0xf]
        %v4355 = vld [vmem:[%s4352 + $0x8] sm:$0xf]
        %v4356 = vld [vmem:[%s4352 + $0xc] sm:$0xf]
        %v4357 = vld [vmem:[%s4352 + $0x10] sm:$0xf]
        %v4358 = vld [vmem:[%s4352 + $0x14] sm:$0xf]
        %v4365 = vunpack.c.l.b16 %v4353
        %v4366 = vunpack.c.l.b16 %v4354
        %v4367 = vunpack.c.l.b16 %v4355
        %v4368 = vunpack.c.l.b16 %v4356
        %v4369 = vunpack.c.l.b16 %v4357
        %v4370 = vunpack.c.l.b16 %v4358
        %v4371 = vpack.c.b16 %v4366, %v4365
        %v4372 = vpack.c.b16 %v4368, %v4367
        %v4373 = vpack.c.b16 %v4370, %v4369
        %v4378 = vsel %vm2986, %v4147, 0
        %v4381 = vsel %vm2986, %v4159, 0
        %v4384 = vsel %vm2986, %v4171, 0
        %v4387 = vsel %vm2986, %v4183, 0
        %v4390 = vsel %vm2986, %v4195, 0
        %v4393 = vsel %vm2986, %v4207, 0
        %v4396 = vsel %vm2986, %v4219, 0
        %v4399 = vsel %vm2986, %v4231, 0
        %v4402 = vsel %vm2986, %v4243, 0
        %v4405 = vsel %vm2986, %v4255, 0
        %v4408 = vsel %vm2986, %v4267, 0
        %v4411 = vsel %vm2986, %v4279, 0
        %v4414 = vsel %vm2986, %v4291, 0
        %v4417 = vsel %vm2986, %v4303, 0
        %v4420 = vsel %vm2986, %v4315, 0
        %v4423 = vsel %vm2986, %v4327, 0
        %v4426 = vsel %vm2986, %v4339, 0
        %v4429 = vsel %vm2986, %v4351, 0
        %4431 = vmatprep.subr.bf16.mxu0 0
        %4432 = vmatpush1.bf16.msra.mxu0 %v4371
        %4433 = vmatprep.subr.bf16.mxu0 0
        %4434 = vmatpush1.bf16.msra.mxu0 %v4372
        %4435 = vmatprep.subr.bf16.mxu0 0
        %4436 = vmatpush1.bf16.msra.mxu0 %v4373
        %4437 = vmatprep.subr.bf16.mxu0 0
        %4438 = vmatpush1.bf16.msra.mxu0 0
        %4439 = vmatprep.subr.bf16.mxu0 0
        %4440 = vmatpush1.bf16.msra.mxu0 0
        %4441 = vmatprep.subr.bf16.mxu0 0
        %4442 = vmatpush1.bf16.msra.mxu0 0
        %4443 = vmatprep.subr.bf16.mxu0 0
        %4444 = vmatpush1.bf16.msra.mxu0 0
        %4445 = vmatprep.subr.bf16.mxu0 0
        %4446 = vmatpush1.bf16.msra.mxu0 0
        %4447 = vmatprep.subr.bf16.mxu0 0
        %4448 = vmatpush1.bf16.msra.mxu0 0
        %4449 = vmatprep.subr.bf16.mxu0 0
        %4450 = vmatpush1.bf16.msra.mxu0 0
        %4451 = vmatprep.subr.bf16.mxu0 0
        %4452 = vmatpush1.bf16.msra.mxu0 0
        %4453 = vmatprep.subr.bf16.mxu0 0
        %4454 = vmatpush1.bf16.msra.mxu0 0
        %4455 = vmatprep.subr.bf16.mxu0 0
        %4456 = vmatpush1.bf16.msra.mxu0 0
        %4457 = vmatprep.subr.bf16.mxu0 0
        %4458 = vmatpush1.bf16.msra.mxu0 0
        %4459 = vmatprep.subr.bf16.mxu0 0
        %4460 = vmatpush1.bf16.msra.mxu0 0
        %4461 = vmatprep.subr.bf16.mxu0 0
        %4462 = vmatpush1.bf16.msra.mxu0 0
        %4463 = vmatprep.mubr.bf16.mxu0 0
        %4464 = vmatmul.mubr.bf16.gmra.mrb[0].mxu0 %v4378
        %v4465 = vpop.f32.mrb[0].mxu0
        %v4466 = vadd.f32 0.0, %v4465
        %v4467 = vpop.f32.mrb[0].mxu0
        %v4468 = vpop.f32.mrb[0].mxu0
        %v4469 = vadd.f32 0.0, %v4468
        %v4470 = vpop.f32.mrb[0].mxu0
        %4471 = vmatprep.mubr.bf16.mxu0 0
        %4472 = vmatmul.mubr.bf16.gmra.mrb[0].mxu0 %v4381
        %v4473 = vpop.f32.mrb[0].mxu0
        %v4474 = vadd.f32 0.0, %v4473
        %v4475 = vpop.f32.mrb[0].mxu0
        %v4476 = vpop.f32.mrb[0].mxu0
        %v4477 = vadd.f32 0.0, %v4476
        %v4478 = vpop.f32.mrb[0].mxu0
        %4479 = vmatprep.mubr.bf16.mxu0 0
        %4480 = vmatmul.mubr.bf16.gmra.mrb[0].mxu0 %v4384
        %v4481 = vpop.f32.mrb[0].mxu0
        %v4482 = vadd.f32 0.0, %v4481
        %v4483 = vpop.f32.mrb[0].mxu0
        %v4484 = vpop.f32.mrb[0].mxu0
        %v4485 = vadd.f32 0.0, %v4484
        %v4486 = vpop.f32.mrb[0].mxu0
        %4487 = vmatprep.mubr.bf16.mxu0 0
        %4488 = vmatmul.mubr.bf16.gmra.mrb[0].mxu0 %v4387
        %v4489 = vpop.f32.mrb[0].mxu0
        %v4490 = vadd.f32 0.0, %v4489
        %v4491 = vpop.f32.mrb[0].mxu0
        %v4492 = vpop.f32.mrb[0].mxu0
        %v4493 = vadd.f32 0.0, %v4492
        %v4494 = vpop.f32.mrb[0].mxu0
        %4495 = vmatprep.mubr.bf16.mxu0 0
        %4496 = vmatmul.mubr.bf16.gmra.mrb[0].mxu0 %v4390
        %v4497 = vpop.f32.mrb[0].mxu0
        %v4498 = vadd.f32 0.0, %v4497
        %v4499 = vpop.f32.mrb[0].mxu0
        %v4500 = vpop.f32.mrb[0].mxu0
        %v4501 = vadd.f32 0.0, %v4500
        %v4502 = vpop.f32.mrb[0].mxu0
        %4503 = vmatprep.mubr.bf16.mxu0 0
        %4504 = vmatmul.mubr.bf16.gmra.mrb[0].mxu0 %v4393
        %v4505 = vpop.f32.mrb[0].mxu0
        %v4506 = vadd.f32 0.0, %v4505
        %v4507 = vpop.f32.mrb[0].mxu0
        %v4508 = vpop.f32.mrb[0].mxu0
        %v4509 = vadd.f32 0.0, %v4508
        %v4510 = vpop.f32.mrb[0].mxu0
        %4511 = vmatprep.mubr.bf16.mxu0 0
        %4512 = vmatmul.mubr.bf16.gmra.mrb[0].mxu0 %v4396
        %v4513 = vpop.f32.mrb[0].mxu0
        %v4514 = vadd.f32 0.0, %v4513
        %v4515 = vpop.f32.mrb[0].mxu0
        %v4516 = vpop.f32.mrb[0].mxu0
        %v4517 = vadd.f32 0.0, %v4516
        %v4518 = vpop.f32.mrb[0].mxu0
        %4519 = vmatprep.mubr.bf16.mxu0 0
        %4520 = vmatmul.mubr.bf16.gmra.mrb[0].mxu0 %v4399
        %v4521 = vpop.f32.mrb[0].mxu0
        %v4522 = vadd.f32 0.0, %v4521
        %v4523 = vpop.f32.mrb[0].mxu0
        %v4524 = vpop.f32.mrb[0].mxu0
        %v4525 = vadd.f32 0.0, %v4524
        %v4526 = vpop.f32.mrb[0].mxu0
        %4527 = vmatprep.mubr.bf16.mxu0 0
        %4528 = vmatmul.mubr.bf16.gmra.mrb[0].mxu0 %v4402
        %v4529 = vpop.f32.mrb[0].mxu0
        %v4530 = vadd.f32 0.0, %v4529
        %v4531 = vpop.f32.mrb[0].mxu0
        %v4532 = vpop.f32.mrb[0].mxu0
        %v4533 = vadd.f32 0.0, %v4532
        %v4534 = vpop.f32.mrb[0].mxu0
        %4535 = vmatprep.mubr.bf16.mxu0 0
        %4536 = vmatmul.mubr.bf16.gmra.mrb[0].mxu0 %v4405
        %v4537 = vpop.f32.mrb[0].mxu0
        %v4538 = vadd.f32 0.0, %v4537
        %v4539 = vpop.f32.mrb[0].mxu0
        %v4540 = vpop.f32.mrb[0].mxu0
        %v4541 = vadd.f32 0.0, %v4540
        %v4542 = vpop.f32.mrb[0].mxu0
        %4543 = vmatprep.mubr.bf16.mxu0 0
        %4544 = vmatmul.mubr.bf16.gmra.mrb[0].mxu0 %v4408
        %v4545 = vpop.f32.mrb[0].mxu0
        %v4546 = vadd.f32 0.0, %v4545
        %v4547 = vpop.f32.mrb[0].mxu0
        %v4548 = vpop.f32.mrb[0].mxu0
        %v4549 = vadd.f32 0.0, %v4548
        %v4550 = vpop.f32.mrb[0].mxu0
        %4551 = vmatprep.mubr.bf16.mxu0 0
        %4552 = vmatmul.mubr.bf16.gmra.mrb[0].mxu0 %v4411
        %v4553 = vpop.f32.mrb[0].mxu0
        %v4554 = vadd.f32 0.0, %v4553
        %v4555 = vpop.f32.mrb[0].mxu0
        %v4556 = vpop.f32.mrb[0].mxu0
        %v4557 = vadd.f32 0.0, %v4556
        %v4558 = vpop.f32.mrb[0].mxu0
        %4559 = vmatprep.mubr.bf16.mxu0 0
        %4560 = vmatmul.mubr.bf16.gmra.mrb[0].mxu0 %v4414
        %v4561 = vpop.f32.mrb[0].mxu0
        %v4562 = vadd.f32 0.0, %v4561
        %v4563 = vpop.f32.mrb[0].mxu0
        %v4564 = vpop.f32.mrb[0].mxu0
        %v4565 = vadd.f32 0.0, %v4564
        %v4566 = vpop.f32.mrb[0].mxu0
        %4567 = vmatprep.mubr.bf16.mxu0 0
        %4568 = vmatmul.mubr.bf16.gmra.mrb[0].mxu0 %v4417
        %v4569 = vpop.f32.mrb[0].mxu0
        %v4570 = vadd.f32 0.0, %v4569
        %v4571 = vpop.f32.mrb[0].mxu0
        %v4572 = vpop.f32.mrb[0].mxu0
        %v4573 = vadd.f32 0.0, %v4572
        %v4574 = vpop.f32.mrb[0].mxu0
        %4575 = vmatprep.mubr.bf16.mxu0 0
        %4576 = vmatmul.mubr.bf16.gmra.mrb[0].mxu0 %v4420
        %v4577 = vpop.f32.mrb[0].mxu0
        %v4578 = vadd.f32 0.0, %v4577
        %v4579 = vpop.f32.mrb[0].mxu0
        %v4580 = vpop.f32.mrb[0].mxu0
        %v4581 = vadd.f32 0.0, %v4580
        %v4582 = vpop.f32.mrb[0].mxu0
        %4583 = vmatprep.mubr.bf16.mxu0 0
        %4584 = vmatmul.mubr.bf16.gmra.mrb[0].mxu0 %v4423
        %v4585 = vpop.f32.mrb[0].mxu0
        %v4586 = vadd.f32 0.0, %v4585
        %v4587 = vpop.f32.mrb[0].mxu0
        %v4588 = vpop.f32.mrb[0].mxu0
        %v4589 = vadd.f32 0.0, %v4588
        %v4590 = vpop.f32.mrb[0].mxu0
        %4591 = vmatprep.mubr.bf16.mxu0 0
        %4592 = vmatmul.mubr.bf16.gmra.mrb[0].mxu0 %v4426
        %v4593 = vpop.f32.mrb[0].mxu0
        %v4594 = vadd.f32 0.0, %v4593
        %v4595 = vpop.f32.mrb[0].mxu0
        %v4596 = vpop.f32.mrb[0].mxu0
        %v4597 = vadd.f32 0.0, %v4596
        %v4598 = vpop.f32.mrb[0].mxu0
        %4599 = vmatprep.mubr.bf16.mxu0 0
        %4600 = vmatmul.mubr.bf16.gmra.mrb[0].mxu0 %v4429
        %v4601 = vpop.f32.mrb[0].mxu0
        %v4602 = vadd.f32 0.0, %v4601
        %v4603 = vpop.f32.mrb[0].mxu0
        %v4604 = vpop.f32.mrb[0].mxu0
        %v4605 = vadd.f32 0.0, %v4604
        %v4606 = vpop.f32.mrb[0].mxu0
        %4607 = vdwg.mxu0
        %v4608 = vadd.f32 %v4068, %v4466
        %v4609 = vadd.f32 %v4069, %v4469
        %v4610 = vadd.f32 %v4070, %v4474
        %v4611 = vadd.f32 %v4071, %v4477
        %v4612 = vadd.f32 %v4072, %v4482
        %v4613 = vadd.f32 %v4073, %v4485
        %v4614 = vadd.f32 %v4074, %v4490
        %v4615 = vadd.f32 %v4075, %v4493
        %v4616 = vadd.f32 %v4076, %v4498
        %v4617 = vadd.f32 %v4077, %v4501
        %v4618 = vadd.f32 %v4078, %v4506
        %v4619 = vadd.f32 %v4079, %v4509
        %v4620 = vadd.f32 %v4080, %v4514
        %v4621 = vadd.f32 %v4081, %v4517
        %v4622 = vadd.f32 %v4082, %v4522
        %v4623 = vadd.f32 %v4083, %v4525
        %v4624 = vadd.f32 %v4084, %v4530
        %v4625 = vadd.f32 %v4085, %v4533
        %v4626 = vadd.f32 %v4086, %v4538
        %v4627 = vadd.f32 %v4087, %v4541
        %v4628 = vadd.f32 %v4088, %v4546
        %v4629 = vadd.f32 %v4089, %v4549
        %v4630 = vadd.f32 %v4090, %v4554
        %v4631 = vadd.f32 %v4091, %v4557
        %v4632 = vadd.f32 %v4092, %v4562
        %v4633 = vadd.f32 %v4093, %v4565
        %v4634 = vadd.f32 %v4094, %v4570
        %v4635 = vadd.f32 %v4095, %v4573
        %v4636 = vadd.f32 %v4096, %v4578
        %v4637 = vadd.f32 %v4097, %v4581
        %v4638 = vadd.f32 %v4098, %v4586
        %v4639 = vadd.f32 %v4099, %v4589
        %4672 = vrot.lane.b32.xlu0 %v4474, 112
        %v4673 = vpop.permute.xlu0 %4672
        %4674 = vrot.lane.b32.xlu0 %v4477, 112
        %v4675 = vpop.permute.xlu0 %4674
        %4676 = vrot.lane.b32.xlu0 %v4482, 112
        %v4677 = vpop.permute.xlu0 %4676
        %4678 = vrot.lane.b32.xlu0 %v4485, 112
        %v4679 = vpop.permute.xlu0 %4678
        %4680 = vrot.lane.b32.xlu0 %v4490, 112
        %v4681 = vpop.permute.xlu0 %4680
        %4682 = vrot.lane.b32.xlu0 %v4493, 112
        %v4683 = vpop.permute.xlu0 %4682
        %4684 = vrot.lane.b32.xlu0 %v4498, 112
        %v4685 = vpop.permute.xlu0 %4684
        %4686 = vrot.lane.b32.xlu0 %v4501, 112
        %v4687 = vpop.permute.xlu0 %4686
        %4688 = vrot.lane.b32.xlu0 %v4506, 112
        %v4689 = vpop.permute.xlu0 %4688
        %4690 = vrot.lane.b32.xlu0 %v4509, 112
        %v4691 = vpop.permute.xlu0 %4690
        %4692 = vrot.lane.b32.xlu0 %v4514, 112
        %v4693 = vpop.permute.xlu0 %4692
        %4694 = vrot.lane.b32.xlu0 %v4517, 112
        %v4695 = vpop.permute.xlu0 %4694
        %4696 = vrot.lane.b32.xlu0 %v4522, 112
        %v4697 = vpop.permute.xlu0 %4696
        %4698 = vrot.lane.b32.xlu0 %v4525, 112
        %v4699 = vpop.permute.xlu0 %4698
        %4700 = vrot.lane.b32.xlu0 %v4530, 112
        %v4701 = vpop.permute.xlu0 %4700
        %4702 = vrot.lane.b32.xlu0 %v4533, 112
        %v4703 = vpop.permute.xlu0 %4702
        %4704 = vrot.lane.b32.xlu0 %v4538, 112
        %v4705 = vpop.permute.xlu0 %4704
        %4706 = vrot.lane.b32.xlu0 %v4541, 112
        %v4707 = vpop.permute.xlu0 %4706
        %4708 = vrot.lane.b32.xlu0 %v4546, 112
        %v4709 = vpop.permute.xlu0 %4708
        %4710 = vrot.lane.b32.xlu0 %v4549, 112
        %v4711 = vpop.permute.xlu0 %4710
        %4712 = vrot.lane.b32.xlu0 %v4554, 112
        %v4713 = vpop.permute.xlu0 %4712
        %4714 = vrot.lane.b32.xlu0 %v4557, 112
        %v4715 = vpop.permute.xlu0 %4714
        %4716 = vrot.lane.b32.xlu0 %v4562, 112
        %v4717 = vpop.permute.xlu0 %4716
        %4718 = vrot.lane.b32.xlu0 %v4565, 112
        %v4719 = vpop.permute.xlu0 %4718
        %4720 = vrot.lane.b32.xlu0 %v4570, 112
        %v4721 = vpop.permute.xlu0 %4720
        %4722 = vrot.lane.b32.xlu0 %v4573, 112
        %v4723 = vpop.permute.xlu0 %4722
        %4724 = vrot.lane.b32.xlu0 %v4578, 112
        %v4725 = vpop.permute.xlu0 %4724
        %4726 = vrot.lane.b32.xlu0 %v4581, 112
        %v4727 = vpop.permute.xlu0 %4726
        %4728 = vrot.lane.b32.xlu0 %v4586, 112
        %v4729 = vpop.permute.xlu0 %4728
        %4730 = vrot.lane.b32.xlu0 %v4589, 112
        %v4731 = vpop.permute.xlu0 %4730
        %4732 = vrot.lane.b32.xlu0 %v4594, 112
        %v4733 = vpop.permute.xlu0 %4732
        %4734 = vrot.lane.b32.xlu0 %v4597, 112
        %v4735 = vpop.permute.xlu0 %4734
        %v4768 = vadd.f32 %v4608, %v4673
        %v4769 = vadd.f32 %v4609, %v4675
        %v4770 = vadd.f32 %v4610, %v4677
        %v4771 = vadd.f32 %v4611, %v4679
        %v4772 = vadd.f32 %v4612, %v4681
        %v4773 = vadd.f32 %v4613, %v4683
        %v4774 = vadd.f32 %v4614, %v4685
        %v4775 = vadd.f32 %v4615, %v4687
        %v4776 = vadd.f32 %v4616, %v4689
        %v4777 = vadd.f32 %v4617, %v4691
        %v4778 = vadd.f32 %v4618, %v4693
        %v4779 = vadd.f32 %v4619, %v4695
        %v4780 = vadd.f32 %v4620, %v4697
        %v4781 = vadd.f32 %v4621, %v4699
        %v4782 = vadd.f32 %v4622, %v4701
        %v4783 = vadd.f32 %v4623, %v4703
        %v4784 = vadd.f32 %v4624, %v4705
        %v4785 = vadd.f32 %v4625, %v4707
        %v4786 = vadd.f32 %v4626, %v4709
        %v4787 = vadd.f32 %v4627, %v4711
        %v4788 = vadd.f32 %v4628, %v4713
        %v4789 = vadd.f32 %v4629, %v4715
        %v4790 = vadd.f32 %v4630, %v4717
        %v4791 = vadd.f32 %v4631, %v4719
        %v4792 = vadd.f32 %v4632, %v4721
        %v4793 = vadd.f32 %v4633, %v4723
        %v4794 = vadd.f32 %v4634, %v4725
        %v4795 = vadd.f32 %v4635, %v4727
        %v4796 = vadd.f32 %v4636, %v4729
        %v4797 = vadd.f32 %v4637, %v4731
        %v4798 = vadd.f32 %v4638, %v4733
        %v4799 = vadd.f32 %v4639, %v4735
        %4802 = vrot.lane.b32.xlu0 %v4482, 96
        %v4803 = vpop.permute.xlu0 %4802
        %4804 = vrot.lane.b32.xlu0 %v4485, 96
        %v4805 = vpop.permute.xlu0 %4804
        %4806 = vrot.lane.b32.xlu0 %v4490, 96
        %v4807 = vpop.permute.xlu0 %4806
        %4808 = vrot.lane.b32.xlu0 %v4493, 96
        %v4809 = vpop.permute.xlu0 %4808
        %4810 = vrot.lane.b32.xlu0 %v4498, 96
        %v4811 = vpop.permute.xlu0 %4810
        %4812 = vrot.lane.b32.xlu0 %v4501, 96
        %v4813 = vpop.permute.xlu0 %4812
        %4814 = vrot.lane.b32.xlu0 %v4506, 96
        %v4815 = vpop.permute.xlu0 %4814
        %4816 = vrot.lane.b32.xlu0 %v4509, 96
        %v4817 = vpop.permute.xlu0 %4816
        %4818 = vrot.lane.b32.xlu0 %v4514, 96
        %v4819 = vpop.permute.xlu0 %4818
        %4820 = vrot.lane.b32.xlu0 %v4517, 96
        %v4821 = vpop.permute.xlu0 %4820
        %4822 = vrot.lane.b32.xlu0 %v4522, 96
        %v4823 = vpop.permute.xlu0 %4822
        %4824 = vrot.lane.b32.xlu0 %v4525, 96
        %v4825 = vpop.permute.xlu0 %4824
        %4826 = vrot.lane.b32.xlu0 %v4530, 96
        %v4827 = vpop.permute.xlu0 %4826
        %4828 = vrot.lane.b32.xlu0 %v4533, 96
        %v4829 = vpop.permute.xlu0 %4828
        %4830 = vrot.lane.b32.xlu0 %v4538, 96
        %v4831 = vpop.permute.xlu0 %4830
        %4832 = vrot.lane.b32.xlu0 %v4541, 96
        %v4833 = vpop.permute.xlu0 %4832
        %4834 = vrot.lane.b32.xlu0 %v4546, 96
        %v4835 = vpop.permute.xlu0 %4834
        %4836 = vrot.lane.b32.xlu0 %v4549, 96
        %v4837 = vpop.permute.xlu0 %4836
        %4838 = vrot.lane.b32.xlu0 %v4554, 96
        %v4839 = vpop.permute.xlu0 %4838
        %4840 = vrot.lane.b32.xlu0 %v4557, 96
        %v4841 = vpop.permute.xlu0 %4840
        %4842 = vrot.lane.b32.xlu0 %v4562, 96
        %v4843 = vpop.permute.xlu0 %4842
        %4844 = vrot.lane.b32.xlu0 %v4565, 96
        %v4845 = vpop.permute.xlu0 %4844
        %4846 = vrot.lane.b32.xlu0 %v4570, 96
        %v4847 = vpop.permute.xlu0 %4846
        %4848 = vrot.lane.b32.xlu0 %v4573, 96
        %v4849 = vpop.permute.xlu0 %4848
        %4850 = vrot.lane.b32.xlu0 %v4578, 96
        %v4851 = vpop.permute.xlu0 %4850
        %4852 = vrot.lane.b32.xlu0 %v4581, 96
        %v4853 = vpop.permute.xlu0 %4852
        %4854 = vrot.lane.b32.xlu0 %v4586, 96
        %v4855 = vpop.permute.xlu0 %4854
        %4856 = vrot.lane.b32.xlu0 %v4589, 96
        %v4857 = vpop.permute.xlu0 %4856
        %4858 = vrot.lane.b32.xlu0 %v4594, 96
        %v4859 = vpop.permute.xlu0 %4858
        %4860 = vrot.lane.b32.xlu0 %v4597, 96
        %v4861 = vpop.permute.xlu0 %4860
        %4862 = vrot.lane.b32.xlu0 %v4602, 96
        %v4863 = vpop.permute.xlu0 %4862
        %4864 = vrot.lane.b32.xlu0 %v4605, 96
        %v4865 = vpop.permute.xlu0 %4864
        %v4898 = vadd.f32 %v4768, %v4803
        %v4899 = vadd.f32 %v4769, %v4805
        %v4900 = vadd.f32 %v4770, %v4807
        %v4901 = vadd.f32 %v4771, %v4809
        %v4902 = vadd.f32 %v4772, %v4811
        %v4903 = vadd.f32 %v4773, %v4813
        %v4904 = vadd.f32 %v4774, %v4815
        %v4905 = vadd.f32 %v4775, %v4817
        %v4906 = vadd.f32 %v4776, %v4819
        %v4907 = vadd.f32 %v4777, %v4821
        %v4908 = vadd.f32 %v4778, %v4823
        %v4909 = vadd.f32 %v4779, %v4825
        %v4910 = vadd.f32 %v4780, %v4827
        %v4911 = vadd.f32 %v4781, %v4829
        %v4912 = vadd.f32 %v4782, %v4831
        %v4913 = vadd.f32 %v4783, %v4833
        %v4914 = vadd.f32 %v4784, %v4835
        %v4915 = vadd.f32 %v4785, %v4837
        %v4916 = vadd.f32 %v4786, %v4839
        %v4917 = vadd.f32 %v4787, %v4841
        %v4918 = vadd.f32 %v4788, %v4843
        %v4919 = vadd.f32 %v4789, %v4845
        %v4920 = vadd.f32 %v4790, %v4847
        %v4921 = vadd.f32 %v4791, %v4849
        %v4922 = vadd.f32 %v4792, %v4851
        %v4923 = vadd.f32 %v4793, %v4853
        %v4924 = vadd.f32 %v4794, %v4855
        %v4925 = vadd.f32 %v4795, %v4857
        %v4926 = vadd.f32 %v4796, %v4859
        %v4927 = vadd.f32 %v4797, %v4861
        %v4928 = vadd.f32 %v4798, %v4863
        %v4929 = vadd.f32 %v4799, %v4865
        %s4930 = scalar_lea.vmem %s2, 1
        %v4931 = vld [vmem:[%s4930] sm:$0x1]
        %v4933 = vlaneseq
        %v4934 = vshrl.u32 %v4933, 7
        %v4935 = vsub.s32 0, %v4934
        %v4936 = vrot.slane %v4931, %v4935
        %v4938 = vadd.f32 %v4898, %v4936
        %v4939 = vadd.f32 %v4899, %v4936
        %v4940 = vadd.f32 %v4900, %v4936
        %v4941 = vadd.f32 %v4901, %v4936
        %v4942 = vadd.f32 %v4902, %v4936
        %v4943 = vadd.f32 %v4903, %v4936
        %v4944 = vadd.f32 %v4904, %v4936
        %v4945 = vadd.f32 %v4905, %v4936
        %v4946 = vadd.f32 %v4906, %v4936
        %v4947 = vadd.f32 %v4907, %v4936
        %v4948 = vadd.f32 %v4908, %v4936
        %v4949 = vadd.f32 %v4909, %v4936
        %v4950 = vadd.f32 %v4910, %v4936
        %v4951 = vadd.f32 %v4911, %v4936
        %v4952 = vadd.f32 %v4912, %v4936
        %v4953 = vadd.f32 %v4913, %v4936
        %v4954 = vadd.f32 %v4914, %v4936
        %v4955 = vadd.f32 %v4915, %v4936
        %v4956 = vadd.f32 %v4916, %v4936
        %v4957 = vadd.f32 %v4917, %v4936
        %v4958 = vadd.f32 %v4918, %v4936
        %v4959 = vadd.f32 %v4919, %v4936
        %v4960 = vadd.f32 %v4920, %v4936
        %v4961 = vadd.f32 %v4921, %v4936
        %v4962 = vadd.f32 %v4922, %v4936
        %v4963 = vadd.f32 %v4923, %v4936
        %v4964 = vadd.f32 %v4924, %v4936
        %v4965 = vadd.f32 %v4925, %v4936
        %v4966 = vadd.f32 %v4926, %v4936
        %v4967 = vadd.f32 %v4927, %v4936
        %v4968 = vadd.f32 %v4928, %v4936
        %v4969 = vadd.f32 %v4929, %v4936
        %vm4970 = vcmp.ge.f32.partialorder %v4938, 0.0
        %vm4971 = vcmp.ge.f32.partialorder %v4939, 0.0
        %vm4972 = vcmp.ge.f32.partialorder %v4940, 0.0
        %vm4973 = vcmp.ge.f32.partialorder %v4941, 0.0
        %vm4974 = vcmp.ge.f32.partialorder %v4942, 0.0
        %vm4975 = vcmp.ge.f32.partialorder %v4943, 0.0
        %vm4976 = vcmp.ge.f32.partialorder %v4944, 0.0
        %vm4977 = vcmp.ge.f32.partialorder %v4945, 0.0
        %vm4978 = vcmp.ge.f32.partialorder %v4946, 0.0
        %vm4979 = vcmp.ge.f32.partialorder %v4947, 0.0
        %vm4980 = vcmp.ge.f32.partialorder %v4948, 0.0
        %vm4981 = vcmp.ge.f32.partialorder %v4949, 0.0
        %vm4982 = vcmp.ge.f32.partialorder %v4950, 0.0
        %vm4983 = vcmp.ge.f32.partialorder %v4951, 0.0
        %vm4984 = vcmp.ge.f32.partialorder %v4952, 0.0
        %vm4985 = vcmp.ge.f32.partialorder %v4953, 0.0
        %vm4986 = vcmp.ge.f32.partialorder %v4954, 0.0
        %vm4987 = vcmp.ge.f32.partialorder %v4955, 0.0
        %vm4988 = vcmp.ge.f32.partialorder %v4956, 0.0
        %vm4989 = vcmp.ge.f32.partialorder %v4957, 0.0
        %vm4990 = vcmp.ge.f32.partialorder %v4958, 0.0
        %vm4991 = vcmp.ge.f32.partialorder %v4959, 0.0
        %vm4992 = vcmp.ge.f32.partialorder %v4960, 0.0
        %vm4993 = vcmp.ge.f32.partialorder %v4961, 0.0
        %vm4994 = vcmp.ge.f32.partialorder %v4962, 0.0
        %vm4995 = vcmp.ge.f32.partialorder %v4963, 0.0
        %vm4996 = vcmp.ge.f32.partialorder %v4964, 0.0
        %vm4997 = vcmp.ge.f32.partialorder %v4965, 0.0
        %vm4998 = vcmp.ge.f32.partialorder %v4966, 0.0
        %vm4999 = vcmp.ge.f32.partialorder %v4967, 0.0
        %vm5000 = vcmp.ge.f32.partialorder %v4968, 0.0
        %vm5001 = vcmp.ge.f32.partialorder %v4969, 0.0
        %v5002 = vmul.f32 %v4938, 0.2
        %v5003 = vmul.f32 %v4939, 0.2
        %v5004 = vmul.f32 %v4940, 0.2
        %v5005 = vmul.f32 %v4941, 0.2
        %v5006 = vmul.f32 %v4942, 0.2
        %v5007 = vmul.f32 %v4943, 0.2
        %v5008 = vmul.f32 %v4944, 0.2
        %v5009 = vmul.f32 %v4945, 0.2
        %v5010 = vmul.f32 %v4946, 0.2
        %v5011 = vmul.f32 %v4947, 0.2
        %v5012 = vmul.f32 %v4948, 0.2
        %v5013 = vmul.f32 %v4949, 0.2
        %v5014 = vmul.f32 %v4950, 0.2
        %v5015 = vmul.f32 %v4951, 0.2
        %v5016 = vmul.f32 %v4952, 0.2
        %v5017 = vmul.f32 %v4953, 0.2
        %v5018 = vmul.f32 %v4954, 0.2
        %v5019 = vmul.f32 %v4955, 0.2
        %v5020 = vmul.f32 %v4956, 0.2
        %v5021 = vmul.f32 %v4957, 0.2
        %v5022 = vmul.f32 %v4958, 0.2
        %v5023 = vmul.f32 %v4959, 0.2
        %v5024 = vmul.f32 %v4960, 0.2
        %v5025 = vmul.f32 %v4961, 0.2
        %v5026 = vmul.f32 %v4962, 0.2
        %v5027 = vmul.f32 %v4963, 0.2
        %v5028 = vmul.f32 %v4964, 0.2
        %v5029 = vmul.f32 %v4965, 0.2
        %v5030 = vmul.f32 %v4966, 0.2
        %v5031 = vmul.f32 %v4967, 0.2
        %v5032 = vmul.f32 %v4968, 0.2
        %v5033 = vmul.f32 %v4969, 0.2
        %v5034 = vsel %vm4970, %v4938, %v5002
        %v5035 = vsel %vm4971, %v4939, %v5003
        %v5036 = vsel %vm4972, %v4940, %v5004
        %v5037 = vsel %vm4973, %v4941, %v5005
        %v5038 = vsel %vm4974, %v4942, %v5006
        %v5039 = vsel %vm4975, %v4943, %v5007
        %v5040 = vsel %vm4976, %v4944, %v5008
        %v5041 = vsel %vm4977, %v4945, %v5009
        %v5042 = vsel %vm4978, %v4946, %v5010
        %v5043 = vsel %vm4979, %v4947, %v5011
        %v5044 = vsel %vm4980, %v4948, %v5012
        %v5045 = vsel %vm4981, %v4949, %v5013
        %v5046 = vsel %vm4982, %v4950, %v5014
        %v5047 = vsel %vm4983, %v4951, %v5015
        %v5048 = vsel %vm4984, %v4952, %v5016
        %v5049 = vsel %vm4985, %v4953, %v5017
        %v5050 = vsel %vm4986, %v4954, %v5018
        %v5051 = vsel %vm4987, %v4955, %v5019
        %v5052 = vsel %vm4988, %v4956, %v5020
        %v5053 = vsel %vm4989, %v4957, %v5021
        %v5054 = vsel %vm4990, %v4958, %v5022
        %v5055 = vsel %vm4991, %v4959, %v5023
        %v5056 = vsel %vm4992, %v4960, %v5024
        %v5057 = vsel %vm4993, %v4961, %v5025
        %v5058 = vsel %vm4994, %v4962, %v5026
        %v5059 = vsel %vm4995, %v4963, %v5027
        %v5060 = vsel %vm4996, %v4964, %v5028
        %v5061 = vsel %vm4997, %v4965, %v5029
        %v5062 = vsel %vm4998, %v4966, %v5030
        %v5063 = vsel %vm4999, %v4967, %v5031
        %v5064 = vsel %vm5000, %v4968, %v5032
        %v5065 = vsel %vm5001, %v4969, %v5033
        %v5066 = vpack.c.bf16 %v5035, %v5034
        %v5067 = vpack.c.bf16 %v5037, %v5036
        %v5068 = vpack.c.bf16 %v5039, %v5038
        %v5069 = vpack.c.bf16 %v5041, %v5040
        %v5070 = vpack.c.bf16 %v5043, %v5042
        %v5071 = vpack.c.bf16 %v5045, %v5044
        %v5072 = vpack.c.bf16 %v5047, %v5046
        %v5073 = vpack.c.bf16 %v5049, %v5048
        %v5074 = vpack.c.bf16 %v5051, %v5050
        %v5075 = vpack.c.bf16 %v5053, %v5052
        %v5076 = vpack.c.bf16 %v5055, %v5054
        %v5077 = vpack.c.bf16 %v5057, %v5056
        %v5078 = vpack.c.bf16 %v5059, %v5058
        %v5079 = vpack.c.bf16 %v5061, %v5060
        %v5080 = vpack.c.bf16 %v5063, %v5062
        %v5081 = vpack.c.bf16 %v5065, %v5064
        %5098 = vrot.lane.b32.xlu0 %v5066, 48
        %v5099 = vpop.permute.xlu0 %5098
        %5100 = vrot.lane.b32.xlu0 %v5067, 48
        %v5101 = vpop.permute.xlu0 %5100
        %5102 = vrot.lane.b32.xlu0 %v5068, 48
        %v5103 = vpop.permute.xlu0 %5102
        %5104 = vrot.lane.b32.xlu0 %v5069, 48
        %v5105 = vpop.permute.xlu0 %5104
        %5106 = vrot.lane.b32.xlu0 %v5070, 48
        %v5107 = vpop.permute.xlu0 %5106
        %5108 = vrot.lane.b32.xlu0 %v5071, 48
        %v5109 = vpop.permute.xlu0 %5108
        %5110 = vrot.lane.b32.xlu0 %v5072, 48
        %v5111 = vpop.permute.xlu0 %5110
        %5112 = vrot.lane.b32.xlu0 %v5073, 48
        %v5113 = vpop.permute.xlu0 %5112
        %5114 = vrot.lane.b32.xlu0 %v5074, 48
        %v5115 = vpop.permute.xlu0 %5114
        %5116 = vrot.lane.b32.xlu0 %v5075, 48
        %v5117 = vpop.permute.xlu0 %5116
        %5118 = vrot.lane.b32.xlu0 %v5076, 48
        %v5119 = vpop.permute.xlu0 %5118
        %5120 = vrot.lane.b32.xlu0 %v5077, 48
        %v5121 = vpop.permute.xlu0 %5120
        %5122 = vrot.lane.b32.xlu0 %v5078, 48
        %v5123 = vpop.permute.xlu0 %5122
        %5124 = vrot.lane.b32.xlu0 %v5079, 48
        %v5125 = vpop.permute.xlu0 %5124
        %5126 = vrot.lane.b32.xlu0 %v5080, 48
        %v5127 = vpop.permute.xlu0 %5126
        %5128 = vrot.lane.b32.xlu0 %v5081, 48
        %v5129 = vpop.permute.xlu0 %5128
        %vm5146 = vcmask 523648
        %5147 = vst.msk [vmem:[%s262 + $0x8] sm:$0xff] %vm5146, %v5099
        %5148 = vst.msk [vmem:[%s262 + $0x20] sm:$0xff] %vm5146, %v5101
        %5149 = vst.msk [vmem:[%s262 + $0x38] sm:$0xff] %vm5146, %v5103
        %5150 = vst.msk [vmem:[%s262 + $0x50] sm:$0xff] %vm5146, %v5105
        %5151 = vst.msk [vmem:[%s262 + $0x68] sm:$0xff] %vm5146, %v5107
        %5152 = vst.msk [vmem:[%s262 + $0x80] sm:$0xff] %vm5146, %v5109
        %5153 = vst.msk [vmem:[%s262 + $0x98] sm:$0xff] %vm5146, %v5111
        %5154 = vst.msk [vmem:[%s262 + $0xb0] sm:$0xff] %vm5146, %v5113
        %5155 = vst.msk [vmem:[%s262 + $0xc8] sm:$0xff] %vm5146, %v5115
        %5156 = vst.msk [vmem:[%s262 + $0xe0] sm:$0xff] %vm5146, %v5117
        %5157 = vst.msk [vmem:[%s262 + $0xf8] sm:$0xff] %vm5146, %v5119
        %5158 = vst.msk [vmem:[%s262 + $0x110] sm:$0xff] %vm5146, %v5121
        %5159 = vst.msk [vmem:[%s262 + $0x128] sm:$0xff] %vm5146, %v5123
        %5160 = vst.msk [vmem:[%s262 + $0x140] sm:$0xff] %vm5146, %v5125
        %5161 = vst.msk [vmem:[%s262 + $0x158] sm:$0xff] %vm5146, %v5127
        %5162 = vst.msk [vmem:[%s262 + $0x170] sm:$0xff] %vm5146, %v5129
        %v5163 = vld [vmem:[#allocation2] sm:$0x80]
        %v5164 = vld [vmem:[#allocation2 + $0x8] sm:$0xff]
        %v5165 = vld [vmem:[#allocation2 + $0x18] sm:$0x80]
        %v5166 = vld [vmem:[#allocation2 + $0x20] sm:$0xff]
        %v5167 = vld [vmem:[#allocation2 + $0x30] sm:$0x80]
        %v5168 = vld [vmem:[#allocation2 + $0x38] sm:$0xff]
        %v5169 = vld [vmem:[#allocation2 + $0x48] sm:$0x80]
        %v5170 = vld [vmem:[#allocation2 + $0x50] sm:$0xff]
        %v5171 = vld [vmem:[#allocation2 + $0x60] sm:$0x80]
        %v5172 = vld [vmem:[#allocation2 + $0x68] sm:$0xff]
        %v5173 = vld [vmem:[#allocation2 + $0x78] sm:$0x80]
        %v5174 = vld [vmem:[#allocation2 + $0x80] sm:$0xff]
        %v5175 = vld [vmem:[#allocation2 + $0x90] sm:$0x80]
        %v5176 = vld [vmem:[#allocation2 + $0x98] sm:$0xff]
        %v5177 = vld [vmem:[#allocation2 + $0xa8] sm:$0x80]
        %v5178 = vld [vmem:[#allocation2 + $0xb0] sm:$0xff]
        %v5179 = vld [vmem:[#allocation2 + $0xc0] sm:$0x80]
        %v5180 = vld [vmem:[#allocation2 + $0xc8] sm:$0xff]
        %v5181 = vld [vmem:[#allocation2 + $0xd8] sm:$0x80]
        %v5182 = vld [vmem:[#allocation2 + $0xe0] sm:$0xff]
        %v5183 = vld [vmem:[#allocation2 + $0xf0] sm:$0x80]
        %v5184 = vld [vmem:[#allocation2 + $0xf8] sm:$0xff]
        %v5185 = vld [vmem:[#allocation2 + $0x108] sm:$0x80]
        %v5186 = vld [vmem:[#allocation2 + $0x110] sm:$0xff]
        %v5187 = vld [vmem:[#allocation2 + $0x120] sm:$0x80]
        %v5188 = vld [vmem:[#allocation2 + $0x128] sm:$0xff]
        %v5189 = vld [vmem:[#allocation2 + $0x138] sm:$0x80]
        %v5190 = vld [vmem:[#allocation2 + $0x140] sm:$0xff]
        %v5191 = vld [vmem:[#allocation2 + $0x150] sm:$0x80]
        %v5192 = vld [vmem:[#allocation2 + $0x158] sm:$0xff]
        %v5193 = vld [vmem:[#allocation2 + $0x168] sm:$0x80]
        %v5194 = vld [vmem:[#allocation2 + $0x170] sm:$0xff]
        %v5195 = vld [vmem:[#allocation2 + $0x180] sm:$0x80]
        %v5196 = vld [vmem:[#allocation2 + $0x188] sm:$0xff]
        %v5197 = vld [vmem:[#allocation2 + $0x198] sm:$0x80]
        %v5198 = vld [vmem:[#allocation2 + $0x1a0] sm:$0xff]
        %v5200 = vshrl.u32 %v5163, 16
        %v5202 = vrot.slane %v5200, 7
        %v5204 = vshrl.u32 %v5164, 16
        %v5206 = vrot.slane %v5204, 7
        %v5207 = vshll.u32 %v5164, 16
        %v5209 = vor.u32 %v5206, %v5207
        %v5210 = vsel %vm316, %v5202, %v5209
        %v5212 = vshrl.u32 %v5165, 16
        %v5214 = vrot.slane %v5212, 7
        %v5216 = vshrl.u32 %v5166, 16
        %v5218 = vrot.slane %v5216, 7
        %v5219 = vshll.u32 %v5166, 16
        %v5221 = vor.u32 %v5218, %v5219
        %v5222 = vsel %vm316, %v5214, %v5221
        %v5224 = vshrl.u32 %v5167, 16
        %v5226 = vrot.slane %v5224, 7
        %v5228 = vshrl.u32 %v5168, 16
        %v5230 = vrot.slane %v5228, 7
        %v5231 = vshll.u32 %v5168, 16
        %v5233 = vor.u32 %v5230, %v5231
        %v5234 = vsel %vm316, %v5226, %v5233
        %v5236 = vshrl.u32 %v5169, 16
        %v5238 = vrot.slane %v5236, 7
        %v5240 = vshrl.u32 %v5170, 16
        %v5242 = vrot.slane %v5240, 7
        %v5243 = vshll.u32 %v5170, 16
        %v5245 = vor.u32 %v5242, %v5243
        %v5246 = vsel %vm316, %v5238, %v5245
        %v5248 = vshrl.u32 %v5171, 16
        %v5250 = vrot.slane %v5248, 7
        %v5252 = vshrl.u32 %v5172, 16
        %v5254 = vrot.slane %v5252, 7
        %v5255 = vshll.u32 %v5172, 16
        %v5257 = vor.u32 %v5254, %v5255
        %v5258 = vsel %vm316, %v5250, %v5257
        %v5260 = vshrl.u32 %v5173, 16
        %v5262 = vrot.slane %v5260, 7
        %v5264 = vshrl.u32 %v5174, 16
        %v5266 = vrot.slane %v5264, 7
        %v5267 = vshll.u32 %v5174, 16
        %v5269 = vor.u32 %v5266, %v5267
        %v5270 = vsel %vm316, %v5262, %v5269
        %v5272 = vshrl.u32 %v5175, 16
        %v5274 = vrot.slane %v5272, 7
        %v5276 = vshrl.u32 %v5176, 16
        %v5278 = vrot.slane %v5276, 7
        %v5279 = vshll.u32 %v5176, 16
        %v5281 = vor.u32 %v5278, %v5279
        %v5282 = vsel %vm316, %v5274, %v5281
        %v5284 = vshrl.u32 %v5177, 16
        %v5286 = vrot.slane %v5284, 7
        %v5288 = vshrl.u32 %v5178, 16
        %v5290 = vrot.slane %v5288, 7
        %v5291 = vshll.u32 %v5178, 16
        %v5293 = vor.u32 %v5290, %v5291
        %v5294 = vsel %vm316, %v5286, %v5293
        %v5296 = vshrl.u32 %v5179, 16
        %v5298 = vrot.slane %v5296, 7
        %v5300 = vshrl.u32 %v5180, 16
        %v5302 = vrot.slane %v5300, 7
        %v5303 = vshll.u32 %v5180, 16
        %v5305 = vor.u32 %v5302, %v5303
        %v5306 = vsel %vm316, %v5298, %v5305
        %v5308 = vshrl.u32 %v5181, 16
        %v5310 = vrot.slane %v5308, 7
        %v5312 = vshrl.u32 %v5182, 16
        %v5314 = vrot.slane %v5312, 7
        %v5315 = vshll.u32 %v5182, 16
        %v5317 = vor.u32 %v5314, %v5315
        %v5318 = vsel %vm316, %v5310, %v5317
        %v5320 = vshrl.u32 %v5183, 16
        %v5322 = vrot.slane %v5320, 7
        %v5324 = vshrl.u32 %v5184, 16
        %v5326 = vrot.slane %v5324, 7
        %v5327 = vshll.u32 %v5184, 16
        %v5329 = vor.u32 %v5326, %v5327
        %v5330 = vsel %vm316, %v5322, %v5329
        %v5332 = vshrl.u32 %v5185, 16
        %v5334 = vrot.slane %v5332, 7
        %v5336 = vshrl.u32 %v5186, 16
        %v5338 = vrot.slane %v5336, 7
        %v5339 = vshll.u32 %v5186, 16
        %v5341 = vor.u32 %v5338, %v5339
        %v5342 = vsel %vm316, %v5334, %v5341
        %v5344 = vshrl.u32 %v5187, 16
        %v5346 = vrot.slane %v5344, 7
        %v5348 = vshrl.u32 %v5188, 16
        %v5350 = vrot.slane %v5348, 7
        %v5351 = vshll.u32 %v5188, 16
        %v5353 = vor.u32 %v5350, %v5351
        %v5354 = vsel %vm316, %v5346, %v5353
        %v5356 = vshrl.u32 %v5189, 16
        %v5358 = vrot.slane %v5356, 7
        %v5360 = vshrl.u32 %v5190, 16
        %v5362 = vrot.slane %v5360, 7
        %v5363 = vshll.u32 %v5190, 16
        %v5365 = vor.u32 %v5362, %v5363
        %v5366 = vsel %vm316, %v5358, %v5365
        %v5368 = vshrl.u32 %v5191, 16
        %v5370 = vrot.slane %v5368, 7
        %v5372 = vshrl.u32 %v5192, 16
        %v5374 = vrot.slane %v5372, 7
        %v5375 = vshll.u32 %v5192, 16
        %v5377 = vor.u32 %v5374, %v5375
        %v5378 = vsel %vm316, %v5370, %v5377
        %v5380 = vshrl.u32 %v5193, 16
        %v5382 = vrot.slane %v5380, 7
        %v5384 = vshrl.u32 %v5194, 16
        %v5386 = vrot.slane %v5384, 7
        %v5387 = vshll.u32 %v5194, 16
        %v5389 = vor.u32 %v5386, %v5387
        %v5390 = vsel %vm316, %v5382, %v5389
        %v5392 = vshrl.u32 %v5195, 16
        %v5394 = vrot.slane %v5392, 7
        %v5396 = vshrl.u32 %v5196, 16
        %v5398 = vrot.slane %v5396, 7
        %v5399 = vshll.u32 %v5196, 16
        %v5401 = vor.u32 %v5398, %v5399
        %v5402 = vsel %vm316, %v5394, %v5401
        %v5404 = vshrl.u32 %v5197, 16
        %v5406 = vrot.slane %v5404, 7
        %v5408 = vshrl.u32 %v5198, 16
        %v5410 = vrot.slane %v5408, 7
        %v5411 = vshll.u32 %v5198, 16
        %v5413 = vor.u32 %v5410, %v5411
        %v5414 = vsel %vm316, %v5406, %v5413
        %s5415 = scalar_lea.vmem %s1, 288
        %v5416 = vld [vmem:[%s5415] sm:$0xf]
        %v5417 = vld [vmem:[%s5415 + $0x4] sm:$0xf]
        %v5418 = vld [vmem:[%s5415 + $0x8] sm:$0xf]
        %v5419 = vld [vmem:[%s5415 + $0xc] sm:$0xf]
        %v5420 = vld [vmem:[%s5415 + $0x10] sm:$0xf]
        %v5421 = vld [vmem:[%s5415 + $0x14] sm:$0xf]
        %v5422 = vld [vmem:[%s5415 + $0x18] sm:$0xf]
        %v5423 = vld [vmem:[%s5415 + $0x1c] sm:$0xf]
        %v5432 = vunpack.c.l.b16 %v5416
        %v5433 = vunpack.c.l.b16 %v5417
        %v5434 = vunpack.c.l.b16 %v5418
        %v5435 = vunpack.c.l.b16 %v5419
        %v5436 = vunpack.c.l.b16 %v5420
        %v5437 = vunpack.c.l.b16 %v5421
        %v5438 = vunpack.c.l.b16 %v5422
        %v5439 = vunpack.c.l.b16 %v5423
        %v5440 = vpack.c.b16 %v5433, %v5432
        %v5441 = vpack.c.b16 %v5435, %v5434
        %v5442 = vpack.c.b16 %v5437, %v5436
        %v5443 = vpack.c.b16 %v5439, %v5438
        %vm5448 = vcmask 523264
        %v5450 = vsel %vm5448, %v5210, 0
        %v5453 = vsel %vm5448, %v5222, 0
        %v5456 = vsel %vm5448, %v5234, 0
        %v5459 = vsel %vm5448, %v5246, 0
        %v5462 = vsel %vm5448, %v5258, 0
        %v5465 = vsel %vm5448, %v5270, 0
        %v5468 = vsel %vm5448, %v5282, 0
        %v5471 = vsel %vm5448, %v5294, 0
        %v5474 = vsel %vm5448, %v5306, 0
        %v5477 = vsel %vm5448, %v5318, 0
        %v5480 = vsel %vm5448, %v5330, 0
        %v5483 = vsel %vm5448, %v5342, 0
        %v5486 = vsel %vm5448, %v5354, 0
        %v5489 = vsel %vm5448, %v5366, 0
        %v5492 = vsel %vm5448, %v5378, 0
        %v5495 = vsel %vm5448, %v5390, 0
        %v5498 = vsel %vm5448, %v5402, 0
        %v5501 = vsel %vm5448, %v5414, 0
        %5503 = vmatprep.subr.bf16.mxu0 0
        %5504 = vmatpush1.bf16.msra.mxu0 %v5440
        %5505 = vmatprep.subr.bf16.mxu0 0
        %5506 = vmatpush1.bf16.msra.mxu0 %v5441
        %5507 = vmatprep.subr.bf16.mxu0 0
        %5508 = vmatpush1.bf16.msra.mxu0 %v5442
        %5509 = vmatprep.subr.bf16.mxu0 0
        %5510 = vmatpush1.bf16.msra.mxu0 %v5443
        %5511 = vmatprep.subr.bf16.mxu0 0
        %5512 = vmatpush1.bf16.msra.mxu0 0
        %5513 = vmatprep.subr.bf16.mxu0 0
        %5514 = vmatpush1.bf16.msra.mxu0 0
        %5515 = vmatprep.subr.bf16.mxu0 0
        %5516 = vmatpush1.bf16.msra.mxu0 0
        %5517 = vmatprep.subr.bf16.mxu0 0
        %5518 = vmatpush1.bf16.msra.mxu0 0
        %5519 = vmatprep.subr.bf16.mxu0 0
        %5520 = vmatpush1.bf16.msra.mxu0 0
        %5521 = vmatprep.subr.bf16.mxu0 0
        %5522 = vmatpush1.bf16.msra.mxu0 0
        %5523 = vmatprep.subr.bf16.mxu0 0
        %5524 = vmatpush1.bf16.msra.mxu0 0
        %5525 = vmatprep.subr.bf16.mxu0 0
        %5526 = vmatpush1.bf16.msra.mxu0 0
        %5527 = vmatprep.subr.bf16.mxu0 0
        %5528 = vmatpush1.bf16.msra.mxu0 0
        %5529 = vmatprep.subr.bf16.mxu0 0
        %5530 = vmatpush1.bf16.msra.mxu0 0
        %5531 = vmatprep.subr.bf16.mxu0 0
        %5532 = vmatpush1.bf16.msra.mxu0 0
        %5533 = vmatprep.subr.bf16.mxu0 0
        %5534 = vmatpush1.bf16.msra.mxu0 0
        %5535 = vmatprep.mubr.bf16.mxu0 0
        %5536 = vmatmul.mubr.bf16.gmra.mrb[0].mxu0 %v5450
        %v5537 = vpop.f32.mrb[0].mxu0
        %v5538 = vadd.f32 0.0, %v5537
        %v5539 = vpop.f32.mrb[0].mxu0
        %v5540 = vpop.f32.mrb[0].mxu0
        %v5541 = vadd.f32 0.0, %v5540
        %v5542 = vpop.f32.mrb[0].mxu0
        %5543 = vmatprep.mubr.bf16.mxu0 0
        %5544 = vmatmul.mubr.bf16.gmra.mrb[0].mxu0 %v5453
        %v5545 = vpop.f32.mrb[0].mxu0
        %v5546 = vadd.f32 0.0, %v5545
        %v5547 = vpop.f32.mrb[0].mxu0
        %v5548 = vpop.f32.mrb[0].mxu0
        %v5549 = vadd.f32 0.0, %v5548
        %v5550 = vpop.f32.mrb[0].mxu0
        %5551 = vmatprep.mubr.bf16.mxu0 0
        %5552 = vmatmul.mubr.bf16.gmra.mrb[0].mxu0 %v5456
        %v5553 = vpop.f32.mrb[0].mxu0
        %v5554 = vadd.f32 0.0, %v5553
        %v5555 = vpop.f32.mrb[0].mxu0
        %v5556 = vpop.f32.mrb[0].mxu0
        %v5557 = vadd.f32 0.0, %v5556
        %v5558 = vpop.f32.mrb[0].mxu0
        %5559 = vmatprep.mubr.bf16.mxu0 0
        %5560 = vmatmul.mubr.bf16.gmra.mrb[0].mxu0 %v5459
        %v5561 = vpop.f32.mrb[0].mxu0
        %v5562 = vadd.f32 0.0, %v5561
        %v5563 = vpop.f32.mrb[0].mxu0
        %v5564 = vpop.f32.mrb[0].mxu0
        %v5565 = vadd.f32 0.0, %v5564
        %v5566 = vpop.f32.mrb[0].mxu0
        %5567 = vmatprep.mubr.bf16.mxu0 0
        %5568 = vmatmul.mubr.bf16.gmra.mrb[0].mxu0 %v5462
        %v5569 = vpop.f32.mrb[0].mxu0
        %v5570 = vadd.f32 0.0, %v5569
        %v5571 = vpop.f32.mrb[0].mxu0
        %v5572 = vpop.f32.mrb[0].mxu0
        %v5573 = vadd.f32 0.0, %v5572
        %v5574 = vpop.f32.mrb[0].mxu0
        %5575 = vmatprep.mubr.bf16.mxu0 0
        %5576 = vmatmul.mubr.bf16.gmra.mrb[0].mxu0 %v5465
        %v5577 = vpop.f32.mrb[0].mxu0
        %v5578 = vadd.f32 0.0, %v5577
        %v5579 = vpop.f32.mrb[0].mxu0
        %v5580 = vpop.f32.mrb[0].mxu0
        %v5581 = vadd.f32 0.0, %v5580
        %v5582 = vpop.f32.mrb[0].mxu0
        %5583 = vmatprep.mubr.bf16.mxu0 0
        %5584 = vmatmul.mubr.bf16.gmra.mrb[0].mxu0 %v5468
        %v5585 = vpop.f32.mrb[0].mxu0
        %v5586 = vadd.f32 0.0, %v5585
        %v5587 = vpop.f32.mrb[0].mxu0
        %v5588 = vpop.f32.mrb[0].mxu0
        %v5589 = vadd.f32 0.0, %v5588
        %v5590 = vpop.f32.mrb[0].mxu0
        %5591 = vmatprep.mubr.bf16.mxu0 0
        %5592 = vmatmul.mubr.bf16.gmra.mrb[0].mxu0 %v5471
        %v5593 = vpop.f32.mrb[0].mxu0
        %v5594 = vadd.f32 0.0, %v5593
        %v5595 = vpop.f32.mrb[0].mxu0
        %v5596 = vpop.f32.mrb[0].mxu0
        %v5597 = vadd.f32 0.0, %v5596
        %v5598 = vpop.f32.mrb[0].mxu0
        %5599 = vmatprep.mubr.bf16.mxu0 0
        %5600 = vmatmul.mubr.bf16.gmra.mrb[0].mxu0 %v5474
        %v5601 = vpop.f32.mrb[0].mxu0
        %v5602 = vadd.f32 0.0, %v5601
        %v5603 = vpop.f32.mrb[0].mxu0
        %v5604 = vpop.f32.mrb[0].mxu0
        %v5605 = vadd.f32 0.0, %v5604
        %v5606 = vpop.f32.mrb[0].mxu0
        %5607 = vmatprep.mubr.bf16.mxu0 0
        %5608 = vmatmul.mubr.bf16.gmra.mrb[0].mxu0 %v5477
        %v5609 = vpop.f32.mrb[0].mxu0
        %v5610 = vadd.f32 0.0, %v5609
        %v5611 = vpop.f32.mrb[0].mxu0
        %v5612 = vpop.f32.mrb[0].mxu0
        %v5613 = vadd.f32 0.0, %v5612
        %v5614 = vpop.f32.mrb[0].mxu0
        %5615 = vmatprep.mubr.bf16.mxu0 0
        %5616 = vmatmul.mubr.bf16.gmra.mrb[0].mxu0 %v5480
        %v5617 = vpop.f32.mrb[0].mxu0
        %v5618 = vadd.f32 0.0, %v5617
        %v5619 = vpop.f32.mrb[0].mxu0
        %v5620 = vpop.f32.mrb[0].mxu0
        %v5621 = vadd.f32 0.0, %v5620
        %v5622 = vpop.f32.mrb[0].mxu0
        %5623 = vmatprep.mubr.bf16.mxu0 0
        %5624 = vmatmul.mubr.bf16.gmra.mrb[0].mxu0 %v5483
        %v5625 = vpop.f32.mrb[0].mxu0
        %v5626 = vadd.f32 0.0, %v5625
        %v5627 = vpop.f32.mrb[0].mxu0
        %v5628 = vpop.f32.mrb[0].mxu0
        %v5629 = vadd.f32 0.0, %v5628
        %v5630 = vpop.f32.mrb[0].mxu0
        %5631 = vmatprep.mubr.bf16.mxu0 0
        %5632 = vmatmul.mubr.bf16.gmra.mrb[0].mxu0 %v5486
        %v5633 = vpop.f32.mrb[0].mxu0
        %v5634 = vadd.f32 0.0, %v5633
        %v5635 = vpop.f32.mrb[0].mxu0
        %v5636 = vpop.f32.mrb[0].mxu0
        %v5637 = vadd.f32 0.0, %v5636
        %v5638 = vpop.f32.mrb[0].mxu0
        %5639 = vmatprep.mubr.bf16.mxu0 0
        %5640 = vmatmul.mubr.bf16.gmra.mrb[0].mxu0 %v5489
        %v5641 = vpop.f32.mrb[0].mxu0
        %v5642 = vadd.f32 0.0, %v5641
        %v5643 = vpop.f32.mrb[0].mxu0
        %v5644 = vpop.f32.mrb[0].mxu0
        %v5645 = vadd.f32 0.0, %v5644
        %v5646 = vpop.f32.mrb[0].mxu0
        %5647 = vmatprep.mubr.bf16.mxu0 0
        %5648 = vmatmul.mubr.bf16.gmra.mrb[0].mxu0 %v5492
        %v5649 = vpop.f32.mrb[0].mxu0
        %v5650 = vadd.f32 0.0, %v5649
        %v5651 = vpop.f32.mrb[0].mxu0
        %v5652 = vpop.f32.mrb[0].mxu0
        %v5653 = vadd.f32 0.0, %v5652
        %v5654 = vpop.f32.mrb[0].mxu0
        %5655 = vmatprep.mubr.bf16.mxu0 0
        %5656 = vmatmul.mubr.bf16.gmra.mrb[0].mxu0 %v5495
        %v5657 = vpop.f32.mrb[0].mxu0
        %v5658 = vadd.f32 0.0, %v5657
        %v5659 = vpop.f32.mrb[0].mxu0
        %v5660 = vpop.f32.mrb[0].mxu0
        %v5661 = vadd.f32 0.0, %v5660
        %v5662 = vpop.f32.mrb[0].mxu0
        %5663 = vmatprep.mubr.bf16.mxu0 0
        %5664 = vmatmul.mubr.bf16.gmra.mrb[0].mxu0 %v5498
        %v5665 = vpop.f32.mrb[0].mxu0
        %v5666 = vadd.f32 0.0, %v5665
        %v5667 = vpop.f32.mrb[0].mxu0
        %v5668 = vpop.f32.mrb[0].mxu0
        %v5669 = vadd.f32 0.0, %v5668
        %v5670 = vpop.f32.mrb[0].mxu0
        %5671 = vmatprep.mubr.bf16.mxu0 0
        %5672 = vmatmul.mubr.bf16.gmra.mrb[0].mxu0 %v5501
        %v5673 = vpop.f32.mrb[0].mxu0
        %v5674 = vadd.f32 0.0, %v5673
        %v5675 = vpop.f32.mrb[0].mxu0
        %v5676 = vpop.f32.mrb[0].mxu0
        %v5677 = vadd.f32 0.0, %v5676
        %v5678 = vpop.f32.mrb[0].mxu0
        %5679 = vdwg.mxu0
        %v5680 = vadd.f32 %v5538, 0.0
        %v5681 = vadd.f32 %v5541, 0.0
        %v5682 = vadd.f32 %v5546, 0.0
        %v5683 = vadd.f32 %v5549, 0.0
        %v5684 = vadd.f32 %v5554, 0.0
        %v5685 = vadd.f32 %v5557, 0.0
        %v5686 = vadd.f32 %v5562, 0.0
        %v5687 = vadd.f32 %v5565, 0.0
        %v5688 = vadd.f32 %v5570, 0.0
        %v5689 = vadd.f32 %v5573, 0.0
        %v5690 = vadd.f32 %v5578, 0.0
        %v5691 = vadd.f32 %v5581, 0.0
        %v5692 = vadd.f32 %v5586, 0.0
        %v5693 = vadd.f32 %v5589, 0.0
        %v5694 = vadd.f32 %v5594, 0.0
        %v5695 = vadd.f32 %v5597, 0.0
        %v5696 = vadd.f32 %v5602, 0.0
        %v5697 = vadd.f32 %v5605, 0.0
        %v5698 = vadd.f32 %v5610, 0.0
        %v5699 = vadd.f32 %v5613, 0.0
        %v5700 = vadd.f32 %v5618, 0.0
        %v5701 = vadd.f32 %v5621, 0.0
        %v5702 = vadd.f32 %v5626, 0.0
        %v5703 = vadd.f32 %v5629, 0.0
        %v5704 = vadd.f32 %v5634, 0.0
        %v5705 = vadd.f32 %v5637, 0.0
        %v5706 = vadd.f32 %v5642, 0.0
        %v5707 = vadd.f32 %v5645, 0.0
        %v5708 = vadd.f32 %v5650, 0.0
        %v5709 = vadd.f32 %v5653, 0.0
        %v5710 = vadd.f32 %v5658, 0.0
        %v5711 = vadd.f32 %v5661, 0.0
        %5744 = vrot.lane.b32.xlu0 %v5546, 112
        %v5745 = vpop.permute.xlu0 %5744
        %5746 = vrot.lane.b32.xlu0 %v5549, 112
        %v5747 = vpop.permute.xlu0 %5746
        %5748 = vrot.lane.b32.xlu0 %v5554, 112
        %v5749 = vpop.permute.xlu0 %5748
        %5750 = vrot.lane.b32.xlu0 %v5557, 112
        %v5751 = vpop.permute.xlu0 %5750
        %5752 = vrot.lane.b32.xlu0 %v5562, 112
        %v5753 = vpop.permute.xlu0 %5752
        %5754 = vrot.lane.b32.xlu0 %v5565, 112
        %v5755 = vpop.permute.xlu0 %5754
        %5756 = vrot.lane.b32.xlu0 %v5570, 112
        %v5757 = vpop.permute.xlu0 %5756
        %5758 = vrot.lane.b32.xlu0 %v5573, 112
        %v5759 = vpop.permute.xlu0 %5758
        %5760 = vrot.lane.b32.xlu0 %v5578, 112
        %v5761 = vpop.permute.xlu0 %5760
        %5762 = vrot.lane.b32.xlu0 %v5581, 112
        %v5763 = vpop.permute.xlu0 %5762
        %5764 = vrot.lane.b32.xlu0 %v5586, 112
        %v5765 = vpop.permute.xlu0 %5764
        %5766 = vrot.lane.b32.xlu0 %v5589, 112
        %v5767 = vpop.permute.xlu0 %5766
        %5768 = vrot.lane.b32.xlu0 %v5594, 112
        %v5769 = vpop.permute.xlu0 %5768
        %5770 = vrot.lane.b32.xlu0 %v5597, 112
        %v5771 = vpop.permute.xlu0 %5770
        %5772 = vrot.lane.b32.xlu0 %v5602, 112
        %v5773 = vpop.permute.xlu0 %5772
        %5774 = vrot.lane.b32.xlu0 %v5605, 112
        %v5775 = vpop.permute.xlu0 %5774
        %5776 = vrot.lane.b32.xlu0 %v5610, 112
        %v5777 = vpop.permute.xlu0 %5776
        %5778 = vrot.lane.b32.xlu0 %v5613, 112
        %v5779 = vpop.permute.xlu0 %5778
        %5780 = vrot.lane.b32.xlu0 %v5618, 112
        %v5781 = vpop.permute.xlu0 %5780
        %5782 = vrot.lane.b32.xlu0 %v5621, 112
        %v5783 = vpop.permute.xlu0 %5782
        %5784 = vrot.lane.b32.xlu0 %v5626, 112
        %v5785 = vpop.permute.xlu0 %5784
        %5786 = vrot.lane.b32.xlu0 %v5629, 112
        %v5787 = vpop.permute.xlu0 %5786
        %5788 = vrot.lane.b32.xlu0 %v5634, 112
        %v5789 = vpop.permute.xlu0 %5788
        %5790 = vrot.lane.b32.xlu0 %v5637, 112
        %v5791 = vpop.permute.xlu0 %5790
        %5792 = vrot.lane.b32.xlu0 %v5642, 112
        %v5793 = vpop.permute.xlu0 %5792
        %5794 = vrot.lane.b32.xlu0 %v5645, 112
        %v5795 = vpop.permute.xlu0 %5794
        %5796 = vrot.lane.b32.xlu0 %v5650, 112
        %v5797 = vpop.permute.xlu0 %5796
        %5798 = vrot.lane.b32.xlu0 %v5653, 112
        %v5799 = vpop.permute.xlu0 %5798
        %5800 = vrot.lane.b32.xlu0 %v5658, 112
        %v5801 = vpop.permute.xlu0 %5800
        %5802 = vrot.lane.b32.xlu0 %v5661, 112
        %v5803 = vpop.permute.xlu0 %5802
        %5804 = vrot.lane.b32.xlu0 %v5666, 112
        %v5805 = vpop.permute.xlu0 %5804
        %5806 = vrot.lane.b32.xlu0 %v5669, 112
        %v5807 = vpop.permute.xlu0 %5806
        %v5840 = vadd.f32 %v5680, %v5745
        %v5841 = vadd.f32 %v5681, %v5747
        %v5842 = vadd.f32 %v5682, %v5749
        %v5843 = vadd.f32 %v5683, %v5751
        %v5844 = vadd.f32 %v5684, %v5753
        %v5845 = vadd.f32 %v5685, %v5755
        %v5846 = vadd.f32 %v5686, %v5757
        %v5847 = vadd.f32 %v5687, %v5759
        %v5848 = vadd.f32 %v5688, %v5761
        %v5849 = vadd.f32 %v5689, %v5763
        %v5850 = vadd.f32 %v5690, %v5765
        %v5851 = vadd.f32 %v5691, %v5767
        %v5852 = vadd.f32 %v5692, %v5769
        %v5853 = vadd.f32 %v5693, %v5771
        %v5854 = vadd.f32 %v5694, %v5773
        %v5855 = vadd.f32 %v5695, %v5775
        %v5856 = vadd.f32 %v5696, %v5777
        %v5857 = vadd.f32 %v5697, %v5779
        %v5858 = vadd.f32 %v5698, %v5781
        %v5859 = vadd.f32 %v5699, %v5783
        %v5860 = vadd.f32 %v5700, %v5785
        %v5861 = vadd.f32 %v5701, %v5787
        %v5862 = vadd.f32 %v5702, %v5789
        %v5863 = vadd.f32 %v5703, %v5791
        %v5864 = vadd.f32 %v5704, %v5793
        %v5865 = vadd.f32 %v5705, %v5795
        %v5866 = vadd.f32 %v5706, %v5797
        %v5867 = vadd.f32 %v5707, %v5799
        %v5868 = vadd.f32 %v5708, %v5801
        %v5869 = vadd.f32 %v5709, %v5803
        %v5870 = vadd.f32 %v5710, %v5805
        %v5871 = vadd.f32 %v5711, %v5807
        %5874 = vrot.lane.b32.xlu0 %v5554, 96
        %v5875 = vpop.permute.xlu0 %5874
        %5876 = vrot.lane.b32.xlu0 %v5557, 96
        %v5877 = vpop.permute.xlu0 %5876
        %5878 = vrot.lane.b32.xlu0 %v5562, 96
        %v5879 = vpop.permute.xlu0 %5878
        %5880 = vrot.lane.b32.xlu0 %v5565, 96
        %v5881 = vpop.permute.xlu0 %5880
        %5882 = vrot.lane.b32.xlu0 %v5570, 96
        %v5883 = vpop.permute.xlu0 %5882
        %5884 = vrot.lane.b32.xlu0 %v5573, 96
        %v5885 = vpop.permute.xlu0 %5884
        %5886 = vrot.lane.b32.xlu0 %v5578, 96
        %v5887 = vpop.permute.xlu0 %5886
        %5888 = vrot.lane.b32.xlu0 %v5581, 96
        %v5889 = vpop.permute.xlu0 %5888
        %5890 = vrot.lane.b32.xlu0 %v5586, 96
        %v5891 = vpop.permute.xlu0 %5890
        %5892 = vrot.lane.b32.xlu0 %v5589, 96
        %v5893 = vpop.permute.xlu0 %5892
        %5894 = vrot.lane.b32.xlu0 %v5594, 96
        %v5895 = vpop.permute.xlu0 %5894
        %5896 = vrot.lane.b32.xlu0 %v5597, 96
        %v5897 = vpop.permute.xlu0 %5896
        %5898 = vrot.lane.b32.xlu0 %v5602, 96
        %v5899 = vpop.permute.xlu0 %5898
        %5900 = vrot.lane.b32.xlu0 %v5605, 96
        %v5901 = vpop.permute.xlu0 %5900
        %5902 = vrot.lane.b32.xlu0 %v5610, 96
        %v5903 = vpop.permute.xlu0 %5902
        %5904 = vrot.lane.b32.xlu0 %v5613, 96
        %v5905 = vpop.permute.xlu0 %5904
        %5906 = vrot.lane.b32.xlu0 %v5618, 96
        %v5907 = vpop.permute.xlu0 %5906
        %5908 = vrot.lane.b32.xlu0 %v5621, 96
        %v5909 = vpop.permute.xlu0 %5908
        %5910 = vrot.lane.b32.xlu0 %v5626, 96
        %v5911 = vpop.permute.xlu0 %5910
        %5912 = vrot.lane.b32.xlu0 %v5629, 96
        %v5913 = vpop.permute.xlu0 %5912
        %5914 = vrot.lane.b32.xlu0 %v5634, 96
        %v5915 = vpop.permute.xlu0 %5914
        %5916 = vrot.lane.b32.xlu0 %v5637, 96
        %v5917 = vpop.permute.xlu0 %5916
        %5918 = vrot.lane.b32.xlu0 %v5642, 96
        %v5919 = vpop.permute.xlu0 %5918
        %5920 = vrot.lane.b32.xlu0 %v5645, 96
        %v5921 = vpop.permute.xlu0 %5920
        %5922 = vrot.lane.b32.xlu0 %v5650, 96
        %v5923 = vpop.permute.xlu0 %5922
        %5924 = vrot.lane.b32.xlu0 %v5653, 96
        %v5925 = vpop.permute.xlu0 %5924
        %5926 = vrot.lane.b32.xlu0 %v5658, 96
        %v5927 = vpop.permute.xlu0 %5926
        %5928 = vrot.lane.b32.xlu0 %v5661, 96
        %v5929 = vpop.permute.xlu0 %5928
        %5930 = vrot.lane.b32.xlu0 %v5666, 96
        %v5931 = vpop.permute.xlu0 %5930
        %5932 = vrot.lane.b32.xlu0 %v5669, 96
        %v5933 = vpop.permute.xlu0 %5932
        %5934 = vrot.lane.b32.xlu0 %v5674, 96
        %v5935 = vpop.permute.xlu0 %5934
        %5936 = vrot.lane.b32.xlu0 %v5677, 96
        %v5937 = vpop.permute.xlu0 %5936
        %v5970 = vadd.f32 %v5840, %v5875
        %v5971 = vadd.f32 %v5841, %v5877
        %v5972 = vadd.f32 %v5842, %v5879
        %v5973 = vadd.f32 %v5843, %v5881
        %v5974 = vadd.f32 %v5844, %v5883
        %v5975 = vadd.f32 %v5845, %v5885
        %v5976 = vadd.f32 %v5846, %v5887
        %v5977 = vadd.f32 %v5847, %v5889
        %v5978 = vadd.f32 %v5848, %v5891
        %v5979 = vadd.f32 %v5849, %v5893
        %v5980 = vadd.f32 %v5850, %v5895
        %v5981 = vadd.f32 %v5851, %v5897
        %v5982 = vadd.f32 %v5852, %v5899
        %v5983 = vadd.f32 %v5853, %v5901
        %v5984 = vadd.f32 %v5854, %v5903
        %v5985 = vadd.f32 %v5855, %v5905
        %v5986 = vadd.f32 %v5856, %v5907
        %v5987 = vadd.f32 %v5857, %v5909
        %v5988 = vadd.f32 %v5858, %v5911
        %v5989 = vadd.f32 %v5859, %v5913
        %v5990 = vadd.f32 %v5860, %v5915
        %v5991 = vadd.f32 %v5861, %v5917
        %v5992 = vadd.f32 %v5862, %v5919
        %v5993 = vadd.f32 %v5863, %v5921
        %v5994 = vadd.f32 %v5864, %v5923
        %v5995 = vadd.f32 %v5865, %v5925
        %v5996 = vadd.f32 %v5866, %v5927
        %v5997 = vadd.f32 %v5867, %v5929
        %v5998 = vadd.f32 %v5868, %v5931
        %v5999 = vadd.f32 %v5869, %v5933
        %v6000 = vadd.f32 %v5870, %v5935
        %v6001 = vadd.f32 %v5871, %v5937
        %s6002 = scalar_lea.vmem %s1, 336
        %v6003 = vld [vmem:[%s6002] sm:$0xf]
        %v6004 = vld [vmem:[%s6002 + $0x4] sm:$0xf]
        %v6005 = vld [vmem:[%s6002 + $0x8] sm:$0xf]
        %v6006 = vld [vmem:[%s6002 + $0xc] sm:$0xf]
        %v6007 = vld [vmem:[%s6002 + $0x10] sm:$0xf]
        %v6008 = vld [vmem:[%s6002 + $0x14] sm:$0xf]
        %v6009 = vld [vmem:[%s6002 + $0x18] sm:$0xf]
        %v6010 = vld [vmem:[%s6002 + $0x1c] sm:$0xf]
        %v6019 = vunpack.c.l.b16 %v6003
        %v6020 = vunpack.c.l.b16 %v6004
        %v6021 = vunpack.c.l.b16 %v6005
        %v6022 = vunpack.c.l.b16 %v6006
        %v6023 = vunpack.c.l.b16 %v6007
        %v6024 = vunpack.c.l.b16 %v6008
        %v6025 = vunpack.c.l.b16 %v6009
        %v6026 = vunpack.c.l.b16 %v6010
        %v6027 = vpack.c.b16 %v6020, %v6019
        %v6028 = vpack.c.b16 %v6022, %v6021
        %v6029 = vpack.c.b16 %v6024, %v6023
        %v6030 = vpack.c.b16 %v6026, %v6025
        %v6035 = vsel %vm5448, %v5164, 0
        %v6037 = vsel %vm5448, %v5166, 0
        %v6039 = vsel %vm5448, %v5168, 0
        %v6041 = vsel %vm5448, %v5170, 0
        %v6043 = vsel %vm5448, %v5172, 0
        %v6045 = vsel %vm5448, %v5174, 0
        %v6047 = vsel %vm5448, %v5176, 0
        %v6049 = vsel %vm5448, %v5178, 0
        %v6051 = vsel %vm5448, %v5180, 0
        %v6053 = vsel %vm5448, %v5182, 0
        %v6055 = vsel %vm5448, %v5184, 0
        %v6057 = vsel %vm5448, %v5186, 0
        %v6059 = vsel %vm5448, %v5188, 0
        %v6061 = vsel %vm5448, %v5190, 0
        %v6063 = vsel %vm5448, %v5192, 0
        %v6065 = vsel %vm5448, %v5194, 0
        %v6067 = vsel %vm5448, %v5196, 0
        %v6069 = vsel %vm5448, %v5198, 0
        %6071 = vmatprep.subr.bf16.mxu0 0
        %6072 = vmatpush1.bf16.msra.mxu0 %v6027
        %6073 = vmatprep.subr.bf16.mxu0 0
        %6074 = vmatpush1.bf16.msra.mxu0 %v6028
        %6075 = vmatprep.subr.bf16.mxu0 0
        %6076 = vmatpush1.bf16.msra.mxu0 %v6029
        %6077 = vmatprep.subr.bf16.mxu0 0
        %6078 = vmatpush1.bf16.msra.mxu0 %v6030
        %6079 = vmatprep.subr.bf16.mxu0 0
        %6080 = vmatpush1.bf16.msra.mxu0 0
        %6081 = vmatprep.subr.bf16.mxu0 0
        %6082 = vmatpush1.bf16.msra.mxu0 0
        %6083 = vmatprep.subr.bf16.mxu0 0
        %6084 = vmatpush1.bf16.msra.mxu0 0
        %6085 = vmatprep.subr.bf16.mxu0 0
        %6086 = vmatpush1.bf16.msra.mxu0 0
        %6087 = vmatprep.subr.bf16.mxu0 0
        %6088 = vmatpush1.bf16.msra.mxu0 0
        %6089 = vmatprep.subr.bf16.mxu0 0
        %6090 = vmatpush1.bf16.msra.mxu0 0
        %6091 = vmatprep.subr.bf16.mxu0 0
        %6092 = vmatpush1.bf16.msra.mxu0 0
        %6093 = vmatprep.subr.bf16.mxu0 0
        %6094 = vmatpush1.bf16.msra.mxu0 0
        %6095 = vmatprep.subr.bf16.mxu0 0
        %6096 = vmatpush1.bf16.msra.mxu0 0
        %6097 = vmatprep.subr.bf16.mxu0 0
        %6098 = vmatpush1.bf16.msra.mxu0 0
        %6099 = vmatprep.subr.bf16.mxu0 0
        %6100 = vmatpush1.bf16.msra.mxu0 0
        %6101 = vmatprep.subr.bf16.mxu0 0
        %6102 = vmatpush1.bf16.msra.mxu0 0
        %6103 = vmatprep.mubr.bf16.mxu0 0
        %6104 = vmatmul.mubr.bf16.gmra.mrb[0].mxu0 %v6035
        %v6105 = vpop.f32.mrb[0].mxu0
        %v6106 = vadd.f32 0.0, %v6105
        %v6107 = vpop.f32.mrb[0].mxu0
        %v6108 = vpop.f32.mrb[0].mxu0
        %v6109 = vadd.f32 0.0, %v6108
        %v6110 = vpop.f32.mrb[0].mxu0
        %6111 = vmatprep.mubr.bf16.mxu0 0
        %6112 = vmatmul.mubr.bf16.gmra.mrb[0].mxu0 %v6037
        %v6113 = vpop.f32.mrb[0].mxu0
        %v6114 = vadd.f32 0.0, %v6113
        %v6115 = vpop.f32.mrb[0].mxu0
        %v6116 = vpop.f32.mrb[0].mxu0
        %v6117 = vadd.f32 0.0, %v6116
        %v6118 = vpop.f32.mrb[0].mxu0
        %6119 = vmatprep.mubr.bf16.mxu0 0
        %6120 = vmatmul.mubr.bf16.gmra.mrb[0].mxu0 %v6039
        %v6121 = vpop.f32.mrb[0].mxu0
        %v6122 = vadd.f32 0.0, %v6121
        %v6123 = vpop.f32.mrb[0].mxu0
        %v6124 = vpop.f32.mrb[0].mxu0
        %v6125 = vadd.f32 0.0, %v6124
        %v6126 = vpop.f32.mrb[0].mxu0
        %6127 = vmatprep.mubr.bf16.mxu0 0
        %6128 = vmatmul.mubr.bf16.gmra.mrb[0].mxu0 %v6041
        %v6129 = vpop.f32.mrb[0].mxu0
        %v6130 = vadd.f32 0.0, %v6129
        %v6131 = vpop.f32.mrb[0].mxu0
        %v6132 = vpop.f32.mrb[0].mxu0
        %v6133 = vadd.f32 0.0, %v6132
        %v6134 = vpop.f32.mrb[0].mxu0
        %6135 = vmatprep.mubr.bf16.mxu0 0
        %6136 = vmatmul.mubr.bf16.gmra.mrb[0].mxu0 %v6043
        %v6137 = vpop.f32.mrb[0].mxu0
        %v6138 = vadd.f32 0.0, %v6137
        %v6139 = vpop.f32.mrb[0].mxu0
        %v6140 = vpop.f32.mrb[0].mxu0
        %v6141 = vadd.f32 0.0, %v6140
        %v6142 = vpop.f32.mrb[0].mxu0
        %6143 = vmatprep.mubr.bf16.mxu0 0
        %6144 = vmatmul.mubr.bf16.gmra.mrb[0].mxu0 %v6045
        %v6145 = vpop.f32.mrb[0].mxu0
        %v6146 = vadd.f32 0.0, %v6145
        %v6147 = vpop.f32.mrb[0].mxu0
        %v6148 = vpop.f32.mrb[0].mxu0
        %v6149 = vadd.f32 0.0, %v6148
        %v6150 = vpop.f32.mrb[0].mxu0
        %6151 = vmatprep.mubr.bf16.mxu0 0
        %6152 = vmatmul.mubr.bf16.gmra.mrb[0].mxu0 %v6047
        %v6153 = vpop.f32.mrb[0].mxu0
        %v6154 = vadd.f32 0.0, %v6153
        %v6155 = vpop.f32.mrb[0].mxu0
        %v6156 = vpop.f32.mrb[0].mxu0
        %v6157 = vadd.f32 0.0, %v6156
        %v6158 = vpop.f32.mrb[0].mxu0
        %6159 = vmatprep.mubr.bf16.mxu0 0
        %6160 = vmatmul.mubr.bf16.gmra.mrb[0].mxu0 %v6049
        %v6161 = vpop.f32.mrb[0].mxu0
        %v6162 = vadd.f32 0.0, %v6161
        %v6163 = vpop.f32.mrb[0].mxu0
        %v6164 = vpop.f32.mrb[0].mxu0
        %v6165 = vadd.f32 0.0, %v6164
        %v6166 = vpop.f32.mrb[0].mxu0
        %6167 = vmatprep.mubr.bf16.mxu0 0
        %6168 = vmatmul.mubr.bf16.gmra.mrb[0].mxu0 %v6051
        %v6169 = vpop.f32.mrb[0].mxu0
        %v6170 = vadd.f32 0.0, %v6169
        %v6171 = vpop.f32.mrb[0].mxu0
        %v6172 = vpop.f32.mrb[0].mxu0
        %v6173 = vadd.f32 0.0, %v6172
        %v6174 = vpop.f32.mrb[0].mxu0
        %6175 = vmatprep.mubr.bf16.mxu0 0
        %6176 = vmatmul.mubr.bf16.gmra.mrb[0].mxu0 %v6053
        %v6177 = vpop.f32.mrb[0].mxu0
        %v6178 = vadd.f32 0.0, %v6177
        %v6179 = vpop.f32.mrb[0].mxu0
        %v6180 = vpop.f32.mrb[0].mxu0
        %v6181 = vadd.f32 0.0, %v6180
        %v6182 = vpop.f32.mrb[0].mxu0
        %6183 = vmatprep.mubr.bf16.mxu0 0
        %6184 = vmatmul.mubr.bf16.gmra.mrb[0].mxu0 %v6055
        %v6185 = vpop.f32.mrb[0].mxu0
        %v6186 = vadd.f32 0.0, %v6185
        %v6187 = vpop.f32.mrb[0].mxu0
        %v6188 = vpop.f32.mrb[0].mxu0
        %v6189 = vadd.f32 0.0, %v6188
        %v6190 = vpop.f32.mrb[0].mxu0
        %6191 = vmatprep.mubr.bf16.mxu0 0
        %6192 = vmatmul.mubr.bf16.gmra.mrb[0].mxu0 %v6057
        %v6193 = vpop.f32.mrb[0].mxu0
        %v6194 = vadd.f32 0.0, %v6193
        %v6195 = vpop.f32.mrb[0].mxu0
        %v6196 = vpop.f32.mrb[0].mxu0
        %v6197 = vadd.f32 0.0, %v6196
        %v6198 = vpop.f32.mrb[0].mxu0
        %6199 = vmatprep.mubr.bf16.mxu0 0
        %6200 = vmatmul.mubr.bf16.gmra.mrb[0].mxu0 %v6059
        %v6201 = vpop.f32.mrb[0].mxu0
        %v6202 = vadd.f32 0.0, %v6201
        %v6203 = vpop.f32.mrb[0].mxu0
        %v6204 = vpop.f32.mrb[0].mxu0
        %v6205 = vadd.f32 0.0, %v6204
        %v6206 = vpop.f32.mrb[0].mxu0
        %6207 = vmatprep.mubr.bf16.mxu0 0
        %6208 = vmatmul.mubr.bf16.gmra.mrb[0].mxu0 %v6061
        %v6209 = vpop.f32.mrb[0].mxu0
        %v6210 = vadd.f32 0.0, %v6209
        %v6211 = vpop.f32.mrb[0].mxu0
        %v6212 = vpop.f32.mrb[0].mxu0
        %v6213 = vadd.f32 0.0, %v6212
        %v6214 = vpop.f32.mrb[0].mxu0
        %6215 = vmatprep.mubr.bf16.mxu0 0
        %6216 = vmatmul.mubr.bf16.gmra.mrb[0].mxu0 %v6063
        %v6217 = vpop.f32.mrb[0].mxu0
        %v6218 = vadd.f32 0.0, %v6217
        %v6219 = vpop.f32.mrb[0].mxu0
        %v6220 = vpop.f32.mrb[0].mxu0
        %v6221 = vadd.f32 0.0, %v6220
        %v6222 = vpop.f32.mrb[0].mxu0
        %6223 = vmatprep.mubr.bf16.mxu0 0
        %6224 = vmatmul.mubr.bf16.gmra.mrb[0].mxu0 %v6065
        %v6225 = vpop.f32.mrb[0].mxu0
        %v6226 = vadd.f32 0.0, %v6225
        %v6227 = vpop.f32.mrb[0].mxu0
        %v6228 = vpop.f32.mrb[0].mxu0
        %v6229 = vadd.f32 0.0, %v6228
        %v6230 = vpop.f32.mrb[0].mxu0
        %6231 = vmatprep.mubr.bf16.mxu0 0
        %6232 = vmatmul.mubr.bf16.gmra.mrb[0].mxu0 %v6067
        %v6233 = vpop.f32.mrb[0].mxu0
        %v6234 = vadd.f32 0.0, %v6233
        %v6235 = vpop.f32.mrb[0].mxu0
        %v6236 = vpop.f32.mrb[0].mxu0
        %v6237 = vadd.f32 0.0, %v6236
        %v6238 = vpop.f32.mrb[0].mxu0
        %6239 = vmatprep.mubr.bf16.mxu0 0
        %6240 = vmatmul.mubr.bf16.gmra.mrb[0].mxu0 %v6069
        %v6241 = vpop.f32.mrb[0].mxu0
        %v6242 = vadd.f32 0.0, %v6241
        %v6243 = vpop.f32.mrb[0].mxu0
        %v6244 = vpop.f32.mrb[0].mxu0
        %v6245 = vadd.f32 0.0, %v6244
        %v6246 = vpop.f32.mrb[0].mxu0
        %6247 = vdwg.mxu0
        %v6248 = vadd.f32 %v5970, %v6106
        %v6249 = vadd.f32 %v5971, %v6109
        %v6250 = vadd.f32 %v5972, %v6114
        %v6251 = vadd.f32 %v5973, %v6117
        %v6252 = vadd.f32 %v5974, %v6122
        %v6253 = vadd.f32 %v5975, %v6125
        %v6254 = vadd.f32 %v5976, %v6130
        %v6255 = vadd.f32 %v5977, %v6133
        %v6256 = vadd.f32 %v5978, %v6138
        %v6257 = vadd.f32 %v5979, %v6141
        %v6258 = vadd.f32 %v5980, %v6146
        %v6259 = vadd.f32 %v5981, %v6149
        %v6260 = vadd.f32 %v5982, %v6154
        %v6261 = vadd.f32 %v5983, %v6157
        %v6262 = vadd.f32 %v5984, %v6162
        %v6263 = vadd.f32 %v5985, %v6165
        %v6264 = vadd.f32 %v5986, %v6170
        %v6265 = vadd.f32 %v5987, %v6173
        %v6266 = vadd.f32 %v5988, %v6178
        %v6267 = vadd.f32 %v5989, %v6181
        %v6268 = vadd.f32 %v5990, %v6186
        %v6269 = vadd.f32 %v5991, %v6189
        %v6270 = vadd.f32 %v5992, %v6194
        %v6271 = vadd.f32 %v5993, %v6197
        %v6272 = vadd.f32 %v5994, %v6202
        %v6273 = vadd.f32 %v5995, %v6205
        %v6274 = vadd.f32 %v5996, %v6210
        %v6275 = vadd.f32 %v5997, %v6213
        %v6276 = vadd.f32 %v5998, %v6218
        %v6277 = vadd.f32 %v5999, %v6221
        %v6278 = vadd.f32 %v6000, %v6226
        %v6279 = vadd.f32 %v6001, %v6229
        %6312 = vrot.lane.b32.xlu0 %v6114, 112
        %v6313 = vpop.permute.xlu0 %6312
        %6314 = vrot.lane.b32.xlu0 %v6117, 112
        %v6315 = vpop.permute.xlu0 %6314
        %6316 = vrot.lane.b32.xlu0 %v6122, 112
        %v6317 = vpop.permute.xlu0 %6316
        %6318 = vrot.lane.b32.xlu0 %v6125, 112
        %v6319 = vpop.permute.xlu0 %6318
        %6320 = vrot.lane.b32.xlu0 %v6130, 112
        %v6321 = vpop.permute.xlu0 %6320
        %6322 = vrot.lane.b32.xlu0 %v6133, 112
        %v6323 = vpop.permute.xlu0 %6322
        %6324 = vrot.lane.b32.xlu0 %v6138, 112
        %v6325 = vpop.permute.xlu0 %6324
        %6326 = vrot.lane.b32.xlu0 %v6141, 112
        %v6327 = vpop.permute.xlu0 %6326
        %6328 = vrot.lane.b32.xlu0 %v6146, 112
        %v6329 = vpop.permute.xlu0 %6328
        %6330 = vrot.lane.b32.xlu0 %v6149, 112
        %v6331 = vpop.permute.xlu0 %6330
        %6332 = vrot.lane.b32.xlu0 %v6154, 112
        %v6333 = vpop.permute.xlu0 %6332
        %6334 = vrot.lane.b32.xlu0 %v6157, 112
        %v6335 = vpop.permute.xlu0 %6334
        %6336 = vrot.lane.b32.xlu0 %v6162, 112
        %v6337 = vpop.permute.xlu0 %6336
        %6338 = vrot.lane.b32.xlu0 %v6165, 112
        %v6339 = vpop.permute.xlu0 %6338
        %6340 = vrot.lane.b32.xlu0 %v6170, 112
        %v6341 = vpop.permute.xlu0 %6340
        %6342 = vrot.lane.b32.xlu0 %v6173, 112
        %v6343 = vpop.permute.xlu0 %6342
        %6344 = vrot.lane.b32.xlu0 %v6178, 112
        %v6345 = vpop.permute.xlu0 %6344
        %6346 = vrot.lane.b32.xlu0 %v6181, 112
        %v6347 = vpop.permute.xlu0 %6346
        %6348 = vrot.lane.b32.xlu0 %v6186, 112
        %v6349 = vpop.permute.xlu0 %6348
        %6350 = vrot.lane.b32.xlu0 %v6189, 112
        %v6351 = vpop.permute.xlu0 %6350
        %6352 = vrot.lane.b32.xlu0 %v6194, 112
        %v6353 = vpop.permute.xlu0 %6352
        %6354 = vrot.lane.b32.xlu0 %v6197, 112
        %v6355 = vpop.permute.xlu0 %6354
        %6356 = vrot.lane.b32.xlu0 %v6202, 112
        %v6357 = vpop.permute.xlu0 %6356
        %6358 = vrot.lane.b32.xlu0 %v6205, 112
        %v6359 = vpop.permute.xlu0 %6358
        %6360 = vrot.lane.b32.xlu0 %v6210, 112
        %v6361 = vpop.permute.xlu0 %6360
        %6362 = vrot.lane.b32.xlu0 %v6213, 112
        %v6363 = vpop.permute.xlu0 %6362
        %6364 = vrot.lane.b32.xlu0 %v6218, 112
        %v6365 = vpop.permute.xlu0 %6364
        %6366 = vrot.lane.b32.xlu0 %v6221, 112
        %v6367 = vpop.permute.xlu0 %6366
        %6368 = vrot.lane.b32.xlu0 %v6226, 112
        %v6369 = vpop.permute.xlu0 %6368
        %6370 = vrot.lane.b32.xlu0 %v6229, 112
        %v6371 = vpop.permute.xlu0 %6370
        %6372 = vrot.lane.b32.xlu0 %v6234, 112
        %v6373 = vpop.permute.xlu0 %6372
        %6374 = vrot.lane.b32.xlu0 %v6237, 112
        %v6375 = vpop.permute.xlu0 %6374
        %v6408 = vadd.f32 %v6248, %v6313
        %v6409 = vadd.f32 %v6249, %v6315
        %v6410 = vadd.f32 %v6250, %v6317
        %v6411 = vadd.f32 %v6251, %v6319
        %v6412 = vadd.f32 %v6252, %v6321
        %v6413 = vadd.f32 %v6253, %v6323
        %v6414 = vadd.f32 %v6254, %v6325
        %v6415 = vadd.f32 %v6255, %v6327
        %v6416 = vadd.f32 %v6256, %v6329
        %v6417 = vadd.f32 %v6257, %v6331
        %v6418 = vadd.f32 %v6258, %v6333
        %v6419 = vadd.f32 %v6259, %v6335
        %v6420 = vadd.f32 %v6260, %v6337
        %v6421 = vadd.f32 %v6261, %v6339
        %v6422 = vadd.f32 %v6262, %v6341
        %v6423 = vadd.f32 %v6263, %v6343
        %v6424 = vadd.f32 %v6264, %v6345
        %v6425 = vadd.f32 %v6265, %v6347
        %v6426 = vadd.f32 %v6266, %v6349
        %v6427 = vadd.f32 %v6267, %v6351
        %v6428 = vadd.f32 %v6268, %v6353
        %v6429 = vadd.f32 %v6269, %v6355
        %v6430 = vadd.f32 %v6270, %v6357
        %v6431 = vadd.f32 %v6271, %v6359
        %v6432 = vadd.f32 %v6272, %v6361
        %v6433 = vadd.f32 %v6273, %v6363
        %v6434 = vadd.f32 %v6274, %v6365
        %v6435 = vadd.f32 %v6275, %v6367
        %v6436 = vadd.f32 %v6276, %v6369
        %v6437 = vadd.f32 %v6277, %v6371
        %v6438 = vadd.f32 %v6278, %v6373
        %v6439 = vadd.f32 %v6279, %v6375
        %6442 = vrot.lane.b32.xlu0 %v6122, 96
        %v6443 = vpop.permute.xlu0 %6442
        %6444 = vrot.lane.b32.xlu0 %v6125, 96
        %v6445 = vpop.permute.xlu0 %6444
        %6446 = vrot.lane.b32.xlu0 %v6130, 96
        %v6447 = vpop.permute.xlu0 %6446
        %6448 = vrot.lane.b32.xlu0 %v6133, 96
        %v6449 = vpop.permute.xlu0 %6448
        %6450 = vrot.lane.b32.xlu0 %v6138, 96
        %v6451 = vpop.permute.xlu0 %6450
        %6452 = vrot.lane.b32.xlu0 %v6141, 96
        %v6453 = vpop.permute.xlu0 %6452
        %6454 = vrot.lane.b32.xlu0 %v6146, 96
        %v6455 = vpop.permute.xlu0 %6454
        %6456 = vrot.lane.b32.xlu0 %v6149, 96
        %v6457 = vpop.permute.xlu0 %6456
        %6458 = vrot.lane.b32.xlu0 %v6154, 96
        %v6459 = vpop.permute.xlu0 %6458
        %6460 = vrot.lane.b32.xlu0 %v6157, 96
        %v6461 = vpop.permute.xlu0 %6460
        %6462 = vrot.lane.b32.xlu0 %v6162, 96
        %v6463 = vpop.permute.xlu0 %6462
        %6464 = vrot.lane.b32.xlu0 %v6165, 96
        %v6465 = vpop.permute.xlu0 %6464
        %6466 = vrot.lane.b32.xlu0 %v6170, 96
        %v6467 = vpop.permute.xlu0 %6466
        %6468 = vrot.lane.b32.xlu0 %v6173, 96
        %v6469 = vpop.permute.xlu0 %6468
        %6470 = vrot.lane.b32.xlu0 %v6178, 96
        %v6471 = vpop.permute.xlu0 %6470
        %6472 = vrot.lane.b32.xlu0 %v6181, 96
        %v6473 = vpop.permute.xlu0 %6472
        %6474 = vrot.lane.b32.xlu0 %v6186, 96
        %v6475 = vpop.permute.xlu0 %6474
        %6476 = vrot.lane.b32.xlu0 %v6189, 96
        %v6477 = vpop.permute.xlu0 %6476
        %6478 = vrot.lane.b32.xlu0 %v6194, 96
        %v6479 = vpop.permute.xlu0 %6478
        %6480 = vrot.lane.b32.xlu0 %v6197, 96
        %v6481 = vpop.permute.xlu0 %6480
        %6482 = vrot.lane.b32.xlu0 %v6202, 96
        %v6483 = vpop.permute.xlu0 %6482
        %6484 = vrot.lane.b32.xlu0 %v6205, 96
        %v6485 = vpop.permute.xlu0 %6484
        %6486 = vrot.lane.b32.xlu0 %v6210, 96
        %v6487 = vpop.permute.xlu0 %6486
        %6488 = vrot.lane.b32.xlu0 %v6213, 96
        %v6489 = vpop.permute.xlu0 %6488
        %6490 = vrot.lane.b32.xlu0 %v6218, 96
        %v6491 = vpop.permute.xlu0 %6490
        %6492 = vrot.lane.b32.xlu0 %v6221, 96
        %v6493 = vpop.permute.xlu0 %6492
        %6494 = vrot.lane.b32.xlu0 %v6226, 96
        %v6495 = vpop.permute.xlu0 %6494
        %6496 = vrot.lane.b32.xlu0 %v6229, 96
        %v6497 = vpop.permute.xlu0 %6496
        %6498 = vrot.lane.b32.xlu0 %v6234, 96
        %v6499 = vpop.permute.xlu0 %6498
        %6500 = vrot.lane.b32.xlu0 %v6237, 96
        %v6501 = vpop.permute.xlu0 %6500
        %6502 = vrot.lane.b32.xlu0 %v6242, 96
        %v6503 = vpop.permute.xlu0 %6502
        %6504 = vrot.lane.b32.xlu0 %v6245, 96
        %v6505 = vpop.permute.xlu0 %6504
        %v6538 = vadd.f32 %v6408, %v6443
        %v6539 = vadd.f32 %v6409, %v6445
        %v6540 = vadd.f32 %v6410, %v6447
        %v6541 = vadd.f32 %v6411, %v6449
        %v6542 = vadd.f32 %v6412, %v6451
        %v6543 = vadd.f32 %v6413, %v6453
        %v6544 = vadd.f32 %v6414, %v6455
        %v6545 = vadd.f32 %v6415, %v6457
        %v6546 = vadd.f32 %v6416, %v6459
        %v6547 = vadd.f32 %v6417, %v6461
        %v6548 = vadd.f32 %v6418, %v6463
        %v6549 = vadd.f32 %v6419, %v6465
        %v6550 = vadd.f32 %v6420, %v6467
        %v6551 = vadd.f32 %v6421, %v6469
        %v6552 = vadd.f32 %v6422, %v6471
        %v6553 = vadd.f32 %v6423, %v6473
        %v6554 = vadd.f32 %v6424, %v6475
        %v6555 = vadd.f32 %v6425, %v6477
        %v6556 = vadd.f32 %v6426, %v6479
        %v6557 = vadd.f32 %v6427, %v6481
        %v6558 = vadd.f32 %v6428, %v6483
        %v6559 = vadd.f32 %v6429, %v6485
        %v6560 = vadd.f32 %v6430, %v6487
        %v6561 = vadd.f32 %v6431, %v6489
        %v6562 = vadd.f32 %v6432, %v6491
        %v6563 = vadd.f32 %v6433, %v6493
        %v6564 = vadd.f32 %v6434, %v6495
        %v6565 = vadd.f32 %v6435, %v6497
        %v6566 = vadd.f32 %v6436, %v6499
        %v6567 = vadd.f32 %v6437, %v6501
        %v6568 = vadd.f32 %v6438, %v6503
        %v6569 = vadd.f32 %v6439, %v6505
        %v6570 = vld [vmem:[#allocation2 + $0x8] sm:$0xff]
        %v6571 = vld [vmem:[#allocation2 + $0x10] sm:$0x1]
        %v6572 = vld [vmem:[#allocation2 + $0x20] sm:$0xff]
        %v6573 = vld [vmem:[#allocation2 + $0x28] sm:$0x1]
        %v6574 = vld [vmem:[#allocation2 + $0x38] sm:$0xff]
        %v6575 = vld [vmem:[#allocation2 + $0x40] sm:$0x1]
        %v6576 = vld [vmem:[#allocation2 + $0x50] sm:$0xff]
        %v6577 = vld [vmem:[#allocation2 + $0x58] sm:$0x1]
        %v6578 = vld [vmem:[#allocation2 + $0x68] sm:$0xff]
        %v6579 = vld [vmem:[#allocation2 + $0x70] sm:$0x1]
        %v6580 = vld [vmem:[#allocation2 + $0x80] sm:$0xff]
        %v6581 = vld [vmem:[#allocation2 + $0x88] sm:$0x1]
        %v6582 = vld [vmem:[#allocation2 + $0x98] sm:$0xff]
        %v6583 = vld [vmem:[#allocation2 + $0xa0] sm:$0x1]
        %v6584 = vld [vmem:[#allocation2 + $0xb0] sm:$0xff]
        %v6585 = vld [vmem:[#allocation2 + $0xb8] sm:$0x1]
        %v6586 = vld [vmem:[#allocation2 + $0xc8] sm:$0xff]
        %v6587 = vld [vmem:[#allocation2 + $0xd0] sm:$0x1]
        %v6588 = vld [vmem:[#allocation2 + $0xe0] sm:$0xff]
        %v6589 = vld [vmem:[#allocation2 + $0xe8] sm:$0x1]
        %v6590 = vld [vmem:[#allocation2 + $0xf8] sm:$0xff]
        %v6591 = vld [vmem:[#allocation2 + $0x100] sm:$0x1]
        %v6592 = vld [vmem:[#allocation2 + $0x110] sm:$0xff]
        %v6593 = vld [vmem:[#allocation2 + $0x118] sm:$0x1]
        %v6594 = vld [vmem:[#allocation2 + $0x128] sm:$0xff]
        %v6595 = vld [vmem:[#allocation2 + $0x130] sm:$0x1]
        %v6596 = vld [vmem:[#allocation2 + $0x140] sm:$0xff]
        %v6597 = vld [vmem:[#allocation2 + $0x148] sm:$0x1]
        %v6598 = vld [vmem:[#allocation2 + $0x158] sm:$0xff]
        %v6599 = vld [vmem:[#allocation2 + $0x160] sm:$0x1]
        %v6600 = vld [vmem:[#allocation2 + $0x170] sm:$0xff]
        %v6601 = vld [vmem:[#allocation2 + $0x178] sm:$0x1]
        %v6602 = vld [vmem:[#allocation2 + $0x188] sm:$0xff]
        %v6603 = vld [vmem:[#allocation2 + $0x190] sm:$0x1]
        %v6604 = vld [vmem:[#allocation2 + $0x1a0] sm:$0xff]
        %v6605 = vld [vmem:[#allocation2 + $0x1a8] sm:$0x1]
        %v6607 = vshrl.u32 %v6570, 16
        %v6609 = vshll.u32 %v6570, 16
        %v6611 = vrot.slane %v6609, 1
        %v6612 = vor.u32 %v6607, %v6611
        %v6614 = vshll.u32 %v6571, 16
        %v6616 = vrot.slane %v6614, 1
        %v6617 = vsel %vm1690, %v6612, %v6616
        %v6619 = vshrl.u32 %v6572, 16
        %v6621 = vshll.u32 %v6572, 16
        %v6623 = vrot.slane %v6621, 1
        %v6624 = vor.u32 %v6619, %v6623
        %v6626 = vshll.u32 %v6573, 16
        %v6628 = vrot.slane %v6626, 1
        %v6629 = vsel %vm1690, %v6624, %v6628
        %v6631 = vshrl.u32 %v6574, 16
        %v6633 = vshll.u32 %v6574, 16
        %v6635 = vrot.slane %v6633, 1
        %v6636 = vor.u32 %v6631, %v6635
        %v6638 = vshll.u32 %v6575, 16
        %v6640 = vrot.slane %v6638, 1
        %v6641 = vsel %vm1690, %v6636, %v6640
        %v6643 = vshrl.u32 %v6576, 16
        %v6645 = vshll.u32 %v6576, 16
        %v6647 = vrot.slane %v6645, 1
        %v6648 = vor.u32 %v6643, %v6647
        %v6650 = vshll.u32 %v6577, 16
        %v6652 = vrot.slane %v6650, 1
        %v6653 = vsel %vm1690, %v6648, %v6652
        %v6655 = vshrl.u32 %v6578, 16
        %v6657 = vshll.u32 %v6578, 16
        %v6659 = vrot.slane %v6657, 1
        %v6660 = vor.u32 %v6655, %v6659
        %v6662 = vshll.u32 %v6579, 16
        %v6664 = vrot.slane %v6662, 1
        %v6665 = vsel %vm1690, %v6660, %v6664
        %v6667 = vshrl.u32 %v6580, 16
        %v6669 = vshll.u32 %v6580, 16
        %v6671 = vrot.slane %v6669, 1
        %v6672 = vor.u32 %v6667, %v6671
        %v6674 = vshll.u32 %v6581, 16
        %v6676 = vrot.slane %v6674, 1
        %v6677 = vsel %vm1690, %v6672, %v6676
        %v6679 = vshrl.u32 %v6582, 16
        %v6681 = vshll.u32 %v6582, 16
        %v6683 = vrot.slane %v6681, 1
        %v6684 = vor.u32 %v6679, %v6683
        %v6686 = vshll.u32 %v6583, 16
        %v6688 = vrot.slane %v6686, 1
        %v6689 = vsel %vm1690, %v6684, %v6688
        %v6691 = vshrl.u32 %v6584, 16
        %v6693 = vshll.u32 %v6584, 16
        %v6695 = vrot.slane %v6693, 1
        %v6696 = vor.u32 %v6691, %v6695
        %v6698 = vshll.u32 %v6585, 16
        %v6700 = vrot.slane %v6698, 1
        %v6701 = vsel %vm1690, %v6696, %v6700
        %v6703 = vshrl.u32 %v6586, 16
        %v6705 = vshll.u32 %v6586, 16
        %v6707 = vrot.slane %v6705, 1
        %v6708 = vor.u32 %v6703, %v6707
        %v6710 = vshll.u32 %v6587, 16
        %v6712 = vrot.slane %v6710, 1
        %v6713 = vsel %vm1690, %v6708, %v6712
        %v6715 = vshrl.u32 %v6588, 16
        %v6717 = vshll.u32 %v6588, 16
        %v6719 = vrot.slane %v6717, 1
        %v6720 = vor.u32 %v6715, %v6719
        %v6722 = vshll.u32 %v6589, 16
        %v6724 = vrot.slane %v6722, 1
        %v6725 = vsel %vm1690, %v6720, %v6724
        %v6727 = vshrl.u32 %v6590, 16
        %v6729 = vshll.u32 %v6590, 16
        %v6731 = vrot.slane %v6729, 1
        %v6732 = vor.u32 %v6727, %v6731
        %v6734 = vshll.u32 %v6591, 16
        %v6736 = vrot.slane %v6734, 1
        %v6737 = vsel %vm1690, %v6732, %v6736
        %v6739 = vshrl.u32 %v6592, 16
        %v6741 = vshll.u32 %v6592, 16
        %v6743 = vrot.slane %v6741, 1
        %v6744 = vor.u32 %v6739, %v6743
        %v6746 = vshll.u32 %v6593, 16
        %v6748 = vrot.slane %v6746, 1
        %v6749 = vsel %vm1690, %v6744, %v6748
        %v6751 = vshrl.u32 %v6594, 16
        %v6753 = vshll.u32 %v6594, 16
        %v6755 = vrot.slane %v6753, 1
        %v6756 = vor.u32 %v6751, %v6755
        %v6758 = vshll.u32 %v6595, 16
        %v6760 = vrot.slane %v6758, 1
        %v6761 = vsel %vm1690, %v6756, %v6760
        %v6763 = vshrl.u32 %v6596, 16
        %v6765 = vshll.u32 %v6596, 16
        %v6767 = vrot.slane %v6765, 1
        %v6768 = vor.u32 %v6763, %v6767
        %v6770 = vshll.u32 %v6597, 16
        %v6772 = vrot.slane %v6770, 1
        %v6773 = vsel %vm1690, %v6768, %v6772
        %v6775 = vshrl.u32 %v6598, 16
        %v6777 = vshll.u32 %v6598, 16
        %v6779 = vrot.slane %v6777, 1
        %v6780 = vor.u32 %v6775, %v6779
        %v6782 = vshll.u32 %v6599, 16
        %v6784 = vrot.slane %v6782, 1
        %v6785 = vsel %vm1690, %v6780, %v6784
        %v6787 = vshrl.u32 %v6600, 16
        %v6789 = vshll.u32 %v6600, 16
        %v6791 = vrot.slane %v6789, 1
        %v6792 = vor.u32 %v6787, %v6791
        %v6794 = vshll.u32 %v6601, 16
        %v6796 = vrot.slane %v6794, 1
        %v6797 = vsel %vm1690, %v6792, %v6796
        %v6799 = vshrl.u32 %v6602, 16
        %v6801 = vshll.u32 %v6602, 16
        %v6803 = vrot.slane %v6801, 1
        %v6804 = vor.u32 %v6799, %v6803
        %v6806 = vshll.u32 %v6603, 16
        %v6808 = vrot.slane %v6806, 1
        %v6809 = vsel %vm1690, %v6804, %v6808
        %v6811 = vshrl.u32 %v6604, 16
        %v6813 = vshll.u32 %v6604, 16
        %v6815 = vrot.slane %v6813, 1
        %v6816 = vor.u32 %v6811, %v6815
        %v6818 = vshll.u32 %v6605, 16
        %v6820 = vrot.slane %v6818, 1
        %v6821 = vsel %vm1690, %v6816, %v6820
        %s6822 = scalar_lea.vmem %s1, 384
        %v6823 = vld [vmem:[%s6822] sm:$0xf]
        %v6824 = vld [vmem:[%s6822 + $0x4] sm:$0xf]
        %v6825 = vld [vmem:[%s6822 + $0x8] sm:$0xf]
        %v6826 = vld [vmem:[%s6822 + $0xc] sm:$0xf]
        %v6827 = vld [vmem:[%s6822 + $0x10] sm:$0xf]
        %v6828 = vld [vmem:[%s6822 + $0x14] sm:$0xf]
        %v6829 = vld [vmem:[%s6822 + $0x18] sm:$0xf]
        %v6830 = vld [vmem:[%s6822 + $0x1c] sm:$0xf]
        %v6839 = vunpack.c.l.b16 %v6823
        %v6840 = vunpack.c.l.b16 %v6824
        %v6841 = vunpack.c.l.b16 %v6825
        %v6842 = vunpack.c.l.b16 %v6826
        %v6843 = vunpack.c.l.b16 %v6827
        %v6844 = vunpack.c.l.b16 %v6828
        %v6845 = vunpack.c.l.b16 %v6829
        %v6846 = vunpack.c.l.b16 %v6830
        %v6847 = vpack.c.b16 %v6840, %v6839
        %v6848 = vpack.c.b16 %v6842, %v6841
        %v6849 = vpack.c.b16 %v6844, %v6843
        %v6850 = vpack.c.b16 %v6846, %v6845
        %v6856 = vsel %vm5448, %v6617, 0
        %v6859 = vsel %vm5448, %v6629, 0
        %v6862 = vsel %vm5448, %v6641, 0
        %v6865 = vsel %vm5448, %v6653, 0
        %v6868 = vsel %vm5448, %v6665, 0
        %v6871 = vsel %vm5448, %v6677, 0
        %v6874 = vsel %vm5448, %v6689, 0
        %v6877 = vsel %vm5448, %v6701, 0
        %v6880 = vsel %vm5448, %v6713, 0
        %v6883 = vsel %vm5448, %v6725, 0
        %v6886 = vsel %vm5448, %v6737, 0
        %v6889 = vsel %vm5448, %v6749, 0
        %v6892 = vsel %vm5448, %v6761, 0
        %v6895 = vsel %vm5448, %v6773, 0
        %v6898 = vsel %vm5448, %v6785, 0
        %v6901 = vsel %vm5448, %v6797, 0
        %v6904 = vsel %vm5448, %v6809, 0
        %v6907 = vsel %vm5448, %v6821, 0
        %6909 = vmatprep.subr.bf16.mxu0 0
        %6910 = vmatpush1.bf16.msra.mxu0 %v6847
        %6911 = vmatprep.subr.bf16.mxu0 0
        %6912 = vmatpush1.bf16.msra.mxu0 %v6848
        %6913 = vmatprep.subr.bf16.mxu0 0
        %6914 = vmatpush1.bf16.msra.mxu0 %v6849
        %6915 = vmatprep.subr.bf16.mxu0 0
        %6916 = vmatpush1.bf16.msra.mxu0 %v6850
        %6917 = vmatprep.subr.bf16.mxu0 0
        %6918 = vmatpush1.bf16.msra.mxu0 0
        %6919 = vmatprep.subr.bf16.mxu0 0
        %6920 = vmatpush1.bf16.msra.mxu0 0
        %6921 = vmatprep.subr.bf16.mxu0 0
        %6922 = vmatpush1.bf16.msra.mxu0 0
        %6923 = vmatprep.subr.bf16.mxu0 0
        %6924 = vmatpush1.bf16.msra.mxu0 0
        %6925 = vmatprep.subr.bf16.mxu0 0
        %6926 = vmatpush1.bf16.msra.mxu0 0
        %6927 = vmatprep.subr.bf16.mxu0 0
        %6928 = vmatpush1.bf16.msra.mxu0 0
        %6929 = vmatprep.subr.bf16.mxu0 0
        %6930 = vmatpush1.bf16.msra.mxu0 0
        %6931 = vmatprep.subr.bf16.mxu0 0
        %6932 = vmatpush1.bf16.msra.mxu0 0
        %6933 = vmatprep.subr.bf16.mxu0 0
        %6934 = vmatpush1.bf16.msra.mxu0 0
        %6935 = vmatprep.subr.bf16.mxu0 0
        %6936 = vmatpush1.bf16.msra.mxu0 0
        %6937 = vmatprep.subr.bf16.mxu0 0
        %6938 = vmatpush1.bf16.msra.mxu0 0
        %6939 = vmatprep.subr.bf16.mxu0 0
        %6940 = vmatpush1.bf16.msra.mxu0 0
        %6941 = vmatprep.mubr.bf16.mxu0 0
        %6942 = vmatmul.mubr.bf16.gmra.mrb[0].mxu0 %v6856
        %v6943 = vpop.f32.mrb[0].mxu0
        %v6944 = vadd.f32 0.0, %v6943
        %v6945 = vpop.f32.mrb[0].mxu0
        %v6946 = vpop.f32.mrb[0].mxu0
        %v6947 = vadd.f32 0.0, %v6946
        %v6948 = vpop.f32.mrb[0].mxu0
        %6949 = vmatprep.mubr.bf16.mxu0 0
        %6950 = vmatmul.mubr.bf16.gmra.mrb[0].mxu0 %v6859
        %v6951 = vpop.f32.mrb[0].mxu0
        %v6952 = vadd.f32 0.0, %v6951
        %v6953 = vpop.f32.mrb[0].mxu0
        %v6954 = vpop.f32.mrb[0].mxu0
        %v6955 = vadd.f32 0.0, %v6954
        %v6956 = vpop.f32.mrb[0].mxu0
        %6957 = vmatprep.mubr.bf16.mxu0 0
        %6958 = vmatmul.mubr.bf16.gmra.mrb[0].mxu0 %v6862
        %v6959 = vpop.f32.mrb[0].mxu0
        %v6960 = vadd.f32 0.0, %v6959
        %v6961 = vpop.f32.mrb[0].mxu0
        %v6962 = vpop.f32.mrb[0].mxu0
        %v6963 = vadd.f32 0.0, %v6962
        %v6964 = vpop.f32.mrb[0].mxu0
        %6965 = vmatprep.mubr.bf16.mxu0 0
        %6966 = vmatmul.mubr.bf16.gmra.mrb[0].mxu0 %v6865
        %v6967 = vpop.f32.mrb[0].mxu0
        %v6968 = vadd.f32 0.0, %v6967
        %v6969 = vpop.f32.mrb[0].mxu0
        %v6970 = vpop.f32.mrb[0].mxu0
        %v6971 = vadd.f32 0.0, %v6970
        %v6972 = vpop.f32.mrb[0].mxu0
        %6973 = vmatprep.mubr.bf16.mxu0 0
        %6974 = vmatmul.mubr.bf16.gmra.mrb[0].mxu0 %v6868
        %v6975 = vpop.f32.mrb[0].mxu0
        %v6976 = vadd.f32 0.0, %v6975
        %v6977 = vpop.f32.mrb[0].mxu0
        %v6978 = vpop.f32.mrb[0].mxu0
        %v6979 = vadd.f32 0.0, %v6978
        %v6980 = vpop.f32.mrb[0].mxu0
        %6981 = vmatprep.mubr.bf16.mxu0 0
        %6982 = vmatmul.mubr.bf16.gmra.mrb[0].mxu0 %v6871
        %v6983 = vpop.f32.mrb[0].mxu0
        %v6984 = vadd.f32 0.0, %v6983
        %v6985 = vpop.f32.mrb[0].mxu0
        %v6986 = vpop.f32.mrb[0].mxu0
        %v6987 = vadd.f32 0.0, %v6986
        %v6988 = vpop.f32.mrb[0].mxu0
        %6989 = vmatprep.mubr.bf16.mxu0 0
        %6990 = vmatmul.mubr.bf16.gmra.mrb[0].mxu0 %v6874
        %v6991 = vpop.f32.mrb[0].mxu0
        %v6992 = vadd.f32 0.0, %v6991
        %v6993 = vpop.f32.mrb[0].mxu0
        %v6994 = vpop.f32.mrb[0].mxu0
        %v6995 = vadd.f32 0.0, %v6994
        %v6996 = vpop.f32.mrb[0].mxu0
        %6997 = vmatprep.mubr.bf16.mxu0 0
        %6998 = vmatmul.mubr.bf16.gmra.mrb[0].mxu0 %v6877
        %v6999 = vpop.f32.mrb[0].mxu0
        %v7000 = vadd.f32 0.0, %v6999
        %v7001 = vpop.f32.mrb[0].mxu0
        %v7002 = vpop.f32.mrb[0].mxu0
        %v7003 = vadd.f32 0.0, %v7002
        %v7004 = vpop.f32.mrb[0].mxu0
        %7005 = vmatprep.mubr.bf16.mxu0 0
        %7006 = vmatmul.mubr.bf16.gmra.mrb[0].mxu0 %v6880
        %v7007 = vpop.f32.mrb[0].mxu0
        %v7008 = vadd.f32 0.0, %v7007
        %v7009 = vpop.f32.mrb[0].mxu0
        %v7010 = vpop.f32.mrb[0].mxu0
        %v7011 = vadd.f32 0.0, %v7010
        %v7012 = vpop.f32.mrb[0].mxu0
        %7013 = vmatprep.mubr.bf16.mxu0 0
        %7014 = vmatmul.mubr.bf16.gmra.mrb[0].mxu0 %v6883
        %v7015 = vpop.f32.mrb[0].mxu0
        %v7016 = vadd.f32 0.0, %v7015
        %v7017 = vpop.f32.mrb[0].mxu0
        %v7018 = vpop.f32.mrb[0].mxu0
        %v7019 = vadd.f32 0.0, %v7018
        %v7020 = vpop.f32.mrb[0].mxu0
        %7021 = vmatprep.mubr.bf16.mxu0 0
        %7022 = vmatmul.mubr.bf16.gmra.mrb[0].mxu0 %v6886
        %v7023 = vpop.f32.mrb[0].mxu0
        %v7024 = vadd.f32 0.0, %v7023
        %v7025 = vpop.f32.mrb[0].mxu0
        %v7026 = vpop.f32.mrb[0].mxu0
        %v7027 = vadd.f32 0.0, %v7026
        %v7028 = vpop.f32.mrb[0].mxu0
        %7029 = vmatprep.mubr.bf16.mxu0 0
        %7030 = vmatmul.mubr.bf16.gmra.mrb[0].mxu0 %v6889
        %v7031 = vpop.f32.mrb[0].mxu0
        %v7032 = vadd.f32 0.0, %v7031
        %v7033 = vpop.f32.mrb[0].mxu0
        %v7034 = vpop.f32.mrb[0].mxu0
        %v7035 = vadd.f32 0.0, %v7034
        %v7036 = vpop.f32.mrb[0].mxu0
        %7037 = vmatprep.mubr.bf16.mxu0 0
        %7038 = vmatmul.mubr.bf16.gmra.mrb[0].mxu0 %v6892
        %v7039 = vpop.f32.mrb[0].mxu0
        %v7040 = vadd.f32 0.0, %v7039
        %v7041 = vpop.f32.mrb[0].mxu0
        %v7042 = vpop.f32.mrb[0].mxu0
        %v7043 = vadd.f32 0.0, %v7042
        %v7044 = vpop.f32.mrb[0].mxu0
        %7045 = vmatprep.mubr.bf16.mxu0 0
        %7046 = vmatmul.mubr.bf16.gmra.mrb[0].mxu0 %v6895
        %v7047 = vpop.f32.mrb[0].mxu0
        %v7048 = vadd.f32 0.0, %v7047
        %v7049 = vpop.f32.mrb[0].mxu0
        %v7050 = vpop.f32.mrb[0].mxu0
        %v7051 = vadd.f32 0.0, %v7050
        %v7052 = vpop.f32.mrb[0].mxu0
        %7053 = vmatprep.mubr.bf16.mxu0 0
        %7054 = vmatmul.mubr.bf16.gmra.mrb[0].mxu0 %v6898
        %v7055 = vpop.f32.mrb[0].mxu0
        %v7056 = vadd.f32 0.0, %v7055
        %v7057 = vpop.f32.mrb[0].mxu0
        %v7058 = vpop.f32.mrb[0].mxu0
        %v7059 = vadd.f32 0.0, %v7058
        %v7060 = vpop.f32.mrb[0].mxu0
        %7061 = vmatprep.mubr.bf16.mxu0 0
        %7062 = vmatmul.mubr.bf16.gmra.mrb[0].mxu0 %v6901
        %v7063 = vpop.f32.mrb[0].mxu0
        %v7064 = vadd.f32 0.0, %v7063
        %v7065 = vpop.f32.mrb[0].mxu0
        %v7066 = vpop.f32.mrb[0].mxu0
        %v7067 = vadd.f32 0.0, %v7066
        %v7068 = vpop.f32.mrb[0].mxu0
        %7069 = vmatprep.mubr.bf16.mxu0 0
        %7070 = vmatmul.mubr.bf16.gmra.mrb[0].mxu0 %v6904
        %v7071 = vpop.f32.mrb[0].mxu0
        %v7072 = vadd.f32 0.0, %v7071
        %v7073 = vpop.f32.mrb[0].mxu0
        %v7074 = vpop.f32.mrb[0].mxu0
        %v7075 = vadd.f32 0.0, %v7074
        %v7076 = vpop.f32.mrb[0].mxu0
        %7077 = vmatprep.mubr.bf16.mxu0 0
        %7078 = vmatmul.mubr.bf16.gmra.mrb[0].mxu0 %v6907
        %v7079 = vpop.f32.mrb[0].mxu0
        %v7080 = vadd.f32 0.0, %v7079
        %v7081 = vpop.f32.mrb[0].mxu0
        %v7082 = vpop.f32.mrb[0].mxu0
        %v7083 = vadd.f32 0.0, %v7082
        %v7084 = vpop.f32.mrb[0].mxu0
        %7085 = vdwg.mxu0
        %v7086 = vadd.f32 %v6538, %v6944
        %v7087 = vadd.f32 %v6539, %v6947
        %v7088 = vadd.f32 %v6540, %v6952
        %v7089 = vadd.f32 %v6541, %v6955
        %v7090 = vadd.f32 %v6542, %v6960
        %v7091 = vadd.f32 %v6543, %v6963
        %v7092 = vadd.f32 %v6544, %v6968
        %v7093 = vadd.f32 %v6545, %v6971
        %v7094 = vadd.f32 %v6546, %v6976
        %v7095 = vadd.f32 %v6547, %v6979
        %v7096 = vadd.f32 %v6548, %v6984
        %v7097 = vadd.f32 %v6549, %v6987
        %v7098 = vadd.f32 %v6550, %v6992
        %v7099 = vadd.f32 %v6551, %v6995
        %v7100 = vadd.f32 %v6552, %v7000
        %v7101 = vadd.f32 %v6553, %v7003
        %v7102 = vadd.f32 %v6554, %v7008
        %v7103 = vadd.f32 %v6555, %v7011
        %v7104 = vadd.f32 %v6556, %v7016
        %v7105 = vadd.f32 %v6557, %v7019
        %v7106 = vadd.f32 %v6558, %v7024
        %v7107 = vadd.f32 %v6559, %v7027
        %v7108 = vadd.f32 %v6560, %v7032
        %v7109 = vadd.f32 %v6561, %v7035
        %v7110 = vadd.f32 %v6562, %v7040
        %v7111 = vadd.f32 %v6563, %v7043
        %v7112 = vadd.f32 %v6564, %v7048
        %v7113 = vadd.f32 %v6565, %v7051
        %v7114 = vadd.f32 %v6566, %v7056
        %v7115 = vadd.f32 %v6567, %v7059
        %v7116 = vadd.f32 %v6568, %v7064
        %v7117 = vadd.f32 %v6569, %v7067
        %7150 = vrot.lane.b32.xlu0 %v6952, 112
        %v7151 = vpop.permute.xlu0 %7150
        %7152 = vrot.lane.b32.xlu0 %v6955, 112
        %v7153 = vpop.permute.xlu0 %7152
        %7154 = vrot.lane.b32.xlu0 %v6960, 112
        %v7155 = vpop.permute.xlu0 %7154
        %7156 = vrot.lane.b32.xlu0 %v6963, 112
        %v7157 = vpop.permute.xlu0 %7156
        %7158 = vrot.lane.b32.xlu0 %v6968, 112
        %v7159 = vpop.permute.xlu0 %7158
        %7160 = vrot.lane.b32.xlu0 %v6971, 112
        %v7161 = vpop.permute.xlu0 %7160
        %7162 = vrot.lane.b32.xlu0 %v6976, 112
        %v7163 = vpop.permute.xlu0 %7162
        %7164 = vrot.lane.b32.xlu0 %v6979, 112
        %v7165 = vpop.permute.xlu0 %7164
        %7166 = vrot.lane.b32.xlu0 %v6984, 112
        %v7167 = vpop.permute.xlu0 %7166
        %7168 = vrot.lane.b32.xlu0 %v6987, 112
        %v7169 = vpop.permute.xlu0 %7168
        %7170 = vrot.lane.b32.xlu0 %v6992, 112
        %v7171 = vpop.permute.xlu0 %7170
        %7172 = vrot.lane.b32.xlu0 %v6995, 112
        %v7173 = vpop.permute.xlu0 %7172
        %7174 = vrot.lane.b32.xlu0 %v7000, 112
        %v7175 = vpop.permute.xlu0 %7174
        %7176 = vrot.lane.b32.xlu0 %v7003, 112
        %v7177 = vpop.permute.xlu0 %7176
        %7178 = vrot.lane.b32.xlu0 %v7008, 112
        %v7179 = vpop.permute.xlu0 %7178
        %7180 = vrot.lane.b32.xlu0 %v7011, 112
        %v7181 = vpop.permute.xlu0 %7180
        %7182 = vrot.lane.b32.xlu0 %v7016, 112
        %v7183 = vpop.permute.xlu0 %7182
        %7184 = vrot.lane.b32.xlu0 %v7019, 112
        %v7185 = vpop.permute.xlu0 %7184
        %7186 = vrot.lane.b32.xlu0 %v7024, 112
        %v7187 = vpop.permute.xlu0 %7186
        %7188 = vrot.lane.b32.xlu0 %v7027, 112
        %v7189 = vpop.permute.xlu0 %7188
        %7190 = vrot.lane.b32.xlu0 %v7032, 112
        %v7191 = vpop.permute.xlu0 %7190
        %7192 = vrot.lane.b32.xlu0 %v7035, 112
        %v7193 = vpop.permute.xlu0 %7192
        %7194 = vrot.lane.b32.xlu0 %v7040, 112
        %v7195 = vpop.permute.xlu0 %7194
        %7196 = vrot.lane.b32.xlu0 %v7043, 112
        %v7197 = vpop.permute.xlu0 %7196
        %7198 = vrot.lane.b32.xlu0 %v7048, 112
        %v7199 = vpop.permute.xlu0 %7198
        %7200 = vrot.lane.b32.xlu0 %v7051, 112
        %v7201 = vpop.permute.xlu0 %7200
        %7202 = vrot.lane.b32.xlu0 %v7056, 112
        %v7203 = vpop.permute.xlu0 %7202
        %7204 = vrot.lane.b32.xlu0 %v7059, 112
        %v7205 = vpop.permute.xlu0 %7204
        %7206 = vrot.lane.b32.xlu0 %v7064, 112
        %v7207 = vpop.permute.xlu0 %7206
        %7208 = vrot.lane.b32.xlu0 %v7067, 112
        %v7209 = vpop.permute.xlu0 %7208
        %7210 = vrot.lane.b32.xlu0 %v7072, 112
        %v7211 = vpop.permute.xlu0 %7210
        %7212 = vrot.lane.b32.xlu0 %v7075, 112
        %v7213 = vpop.permute.xlu0 %7212
        %v7246 = vadd.f32 %v7086, %v7151
        %v7247 = vadd.f32 %v7087, %v7153
        %v7248 = vadd.f32 %v7088, %v7155
        %v7249 = vadd.f32 %v7089, %v7157
        %v7250 = vadd.f32 %v7090, %v7159
        %v7251 = vadd.f32 %v7091, %v7161
        %v7252 = vadd.f32 %v7092, %v7163
        %v7253 = vadd.f32 %v7093, %v7165
        %v7254 = vadd.f32 %v7094, %v7167
        %v7255 = vadd.f32 %v7095, %v7169
        %v7256 = vadd.f32 %v7096, %v7171
        %v7257 = vadd.f32 %v7097, %v7173
        %v7258 = vadd.f32 %v7098, %v7175
        %v7259 = vadd.f32 %v7099, %v7177
        %v7260 = vadd.f32 %v7100, %v7179
        %v7261 = vadd.f32 %v7101, %v7181
        %v7262 = vadd.f32 %v7102, %v7183
        %v7263 = vadd.f32 %v7103, %v7185
        %v7264 = vadd.f32 %v7104, %v7187
        %v7265 = vadd.f32 %v7105, %v7189
        %v7266 = vadd.f32 %v7106, %v7191
        %v7267 = vadd.f32 %v7107, %v7193
        %v7268 = vadd.f32 %v7108, %v7195
        %v7269 = vadd.f32 %v7109, %v7197
        %v7270 = vadd.f32 %v7110, %v7199
        %v7271 = vadd.f32 %v7111, %v7201
        %v7272 = vadd.f32 %v7112, %v7203
        %v7273 = vadd.f32 %v7113, %v7205
        %v7274 = vadd.f32 %v7114, %v7207
        %v7275 = vadd.f32 %v7115, %v7209
        %v7276 = vadd.f32 %v7116, %v7211
        %v7277 = vadd.f32 %v7117, %v7213
        %7280 = vrot.lane.b32.xlu0 %v6960, 96
        %v7281 = vpop.permute.xlu0 %7280
        %7282 = vrot.lane.b32.xlu0 %v6963, 96
        %v7283 = vpop.permute.xlu0 %7282
        %7284 = vrot.lane.b32.xlu0 %v6968, 96
        %v7285 = vpop.permute.xlu0 %7284
        %7286 = vrot.lane.b32.xlu0 %v6971, 96
        %v7287 = vpop.permute.xlu0 %7286
        %7288 = vrot.lane.b32.xlu0 %v6976, 96
        %v7289 = vpop.permute.xlu0 %7288
        %7290 = vrot.lane.b32.xlu0 %v6979, 96
        %v7291 = vpop.permute.xlu0 %7290
        %7292 = vrot.lane.b32.xlu0 %v6984, 96
        %v7293 = vpop.permute.xlu0 %7292
        %7294 = vrot.lane.b32.xlu0 %v6987, 96
        %v7295 = vpop.permute.xlu0 %7294
        %7296 = vrot.lane.b32.xlu0 %v6992, 96
        %v7297 = vpop.permute.xlu0 %7296
        %7298 = vrot.lane.b32.xlu0 %v6995, 96
        %v7299 = vpop.permute.xlu0 %7298
        %7300 = vrot.lane.b32.xlu0 %v7000, 96
        %v7301 = vpop.permute.xlu0 %7300
        %7302 = vrot.lane.b32.xlu0 %v7003, 96
        %v7303 = vpop.permute.xlu0 %7302
        %7304 = vrot.lane.b32.xlu0 %v7008, 96
        %v7305 = vpop.permute.xlu0 %7304
        %7306 = vrot.lane.b32.xlu0 %v7011, 96
        %v7307 = vpop.permute.xlu0 %7306
        %7308 = vrot.lane.b32.xlu0 %v7016, 96
        %v7309 = vpop.permute.xlu0 %7308
        %7310 = vrot.lane.b32.xlu0 %v7019, 96
        %v7311 = vpop.permute.xlu0 %7310
        %7312 = vrot.lane.b32.xlu0 %v7024, 96
        %v7313 = vpop.permute.xlu0 %7312
        %7314 = vrot.lane.b32.xlu0 %v7027, 96
        %v7315 = vpop.permute.xlu0 %7314
        %7316 = vrot.lane.b32.xlu0 %v7032, 96
        %v7317 = vpop.permute.xlu0 %7316
        %7318 = vrot.lane.b32.xlu0 %v7035, 96
        %v7319 = vpop.permute.xlu0 %7318
        %7320 = vrot.lane.b32.xlu0 %v7040, 96
        %v7321 = vpop.permute.xlu0 %7320
        %7322 = vrot.lane.b32.xlu0 %v7043, 96
        %v7323 = vpop.permute.xlu0 %7322
        %7324 = vrot.lane.b32.xlu0 %v7048, 96
        %v7325 = vpop.permute.xlu0 %7324
        %7326 = vrot.lane.b32.xlu0 %v7051, 96
        %v7327 = vpop.permute.xlu0 %7326
        %7328 = vrot.lane.b32.xlu0 %v7056, 96
        %v7329 = vpop.permute.xlu0 %7328
        %7330 = vrot.lane.b32.xlu0 %v7059, 96
        %v7331 = vpop.permute.xlu0 %7330
        %7332 = vrot.lane.b32.xlu0 %v7064, 96
        %v7333 = vpop.permute.xlu0 %7332
        %7334 = vrot.lane.b32.xlu0 %v7067, 96
        %v7335 = vpop.permute.xlu0 %7334
        %7336 = vrot.lane.b32.xlu0 %v7072, 96
        %v7337 = vpop.permute.xlu0 %7336
        %7338 = vrot.lane.b32.xlu0 %v7075, 96
        %v7339 = vpop.permute.xlu0 %7338
        %7340 = vrot.lane.b32.xlu0 %v7080, 96
        %v7341 = vpop.permute.xlu0 %7340
        %7342 = vrot.lane.b32.xlu0 %v7083, 96
        %v7343 = vpop.permute.xlu0 %7342
        %v7376 = vadd.f32 %v7246, %v7281
        %v7377 = vadd.f32 %v7247, %v7283
        %v7378 = vadd.f32 %v7248, %v7285
        %v7379 = vadd.f32 %v7249, %v7287
        %v7380 = vadd.f32 %v7250, %v7289
        %v7381 = vadd.f32 %v7251, %v7291
        %v7382 = vadd.f32 %v7252, %v7293
        %v7383 = vadd.f32 %v7253, %v7295
        %v7384 = vadd.f32 %v7254, %v7297
        %v7385 = vadd.f32 %v7255, %v7299
        %v7386 = vadd.f32 %v7256, %v7301
        %v7387 = vadd.f32 %v7257, %v7303
        %v7388 = vadd.f32 %v7258, %v7305
        %v7389 = vadd.f32 %v7259, %v7307
        %v7390 = vadd.f32 %v7260, %v7309
        %v7391 = vadd.f32 %v7261, %v7311
        %v7392 = vadd.f32 %v7262, %v7313
        %v7393 = vadd.f32 %v7263, %v7315
        %v7394 = vadd.f32 %v7264, %v7317
        %v7395 = vadd.f32 %v7265, %v7319
        %v7396 = vadd.f32 %v7266, %v7321
        %v7397 = vadd.f32 %v7267, %v7323
        %v7398 = vadd.f32 %v7268, %v7325
        %v7399 = vadd.f32 %v7269, %v7327
        %v7400 = vadd.f32 %v7270, %v7329
        %v7401 = vadd.f32 %v7271, %v7331
        %v7402 = vadd.f32 %v7272, %v7333
        %v7403 = vadd.f32 %v7273, %v7335
        %v7404 = vadd.f32 %v7274, %v7337
        %v7405 = vadd.f32 %v7275, %v7339
        %v7406 = vadd.f32 %v7276, %v7341
        %v7407 = vadd.f32 %v7277, %v7343
        %s7408 = scalar_lea.vmem %s2, 2
        %v7409 = vld [vmem:[%s7408] sm:$0x1]
        %v7411 = vlaneseq
        %v7412 = vshrl.u32 %v7411, 7
        %v7413 = vsub.s32 0, %v7412
        %v7414 = vrot.slane %v7409, %v7413
        %v7416 = vadd.f32 %v7376, %v7414
        %v7417 = vadd.f32 %v7377, %v7414
        %v7418 = vadd.f32 %v7378, %v7414
        %v7419 = vadd.f32 %v7379, %v7414
        %v7420 = vadd.f32 %v7380, %v7414
        %v7421 = vadd.f32 %v7381, %v7414
        %v7422 = vadd.f32 %v7382, %v7414
        %v7423 = vadd.f32 %v7383, %v7414
        %v7424 = vadd.f32 %v7384, %v7414
        %v7425 = vadd.f32 %v7385, %v7414
        %v7426 = vadd.f32 %v7386, %v7414
        %v7427 = vadd.f32 %v7387, %v7414
        %v7428 = vadd.f32 %v7388, %v7414
        %v7429 = vadd.f32 %v7389, %v7414
        %v7430 = vadd.f32 %v7390, %v7414
        %v7431 = vadd.f32 %v7391, %v7414
        %v7432 = vadd.f32 %v7392, %v7414
        %v7433 = vadd.f32 %v7393, %v7414
        %v7434 = vadd.f32 %v7394, %v7414
        %v7435 = vadd.f32 %v7395, %v7414
        %v7436 = vadd.f32 %v7396, %v7414
        %v7437 = vadd.f32 %v7397, %v7414
        %v7438 = vadd.f32 %v7398, %v7414
        %v7439 = vadd.f32 %v7399, %v7414
        %v7440 = vadd.f32 %v7400, %v7414
        %v7441 = vadd.f32 %v7401, %v7414
        %v7442 = vadd.f32 %v7402, %v7414
        %v7443 = vadd.f32 %v7403, %v7414
        %v7444 = vadd.f32 %v7404, %v7414
        %v7445 = vadd.f32 %v7405, %v7414
        %v7446 = vadd.f32 %v7406, %v7414
        %v7447 = vadd.f32 %v7407, %v7414
        %vm7448 = vcmp.ge.f32.partialorder %v7416, 0.0
        %vm7449 = vcmp.ge.f32.partialorder %v7417, 0.0
        %vm7450 = vcmp.ge.f32.partialorder %v7418, 0.0
        %vm7451 = vcmp.ge.f32.partialorder %v7419, 0.0
        %vm7452 = vcmp.ge.f32.partialorder %v7420, 0.0
        %vm7453 = vcmp.ge.f32.partialorder %v7421, 0.0
        %vm7454 = vcmp.ge.f32.partialorder %v7422, 0.0
        %vm7455 = vcmp.ge.f32.partialorder %v7423, 0.0
        %vm7456 = vcmp.ge.f32.partialorder %v7424, 0.0
        %vm7457 = vcmp.ge.f32.partialorder %v7425, 0.0
        %vm7458 = vcmp.ge.f32.partialorder %v7426, 0.0
        %vm7459 = vcmp.ge.f32.partialorder %v7427, 0.0
        %vm7460 = vcmp.ge.f32.partialorder %v7428, 0.0
        %vm7461 = vcmp.ge.f32.partialorder %v7429, 0.0
        %vm7462 = vcmp.ge.f32.partialorder %v7430, 0.0
        %vm7463 = vcmp.ge.f32.partialorder %v7431, 0.0
        %vm7464 = vcmp.ge.f32.partialorder %v7432, 0.0
        %vm7465 = vcmp.ge.f32.partialorder %v7433, 0.0
        %vm7466 = vcmp.ge.f32.partialorder %v7434, 0.0
        %vm7467 = vcmp.ge.f32.partialorder %v7435, 0.0
        %vm7468 = vcmp.ge.f32.partialorder %v7436, 0.0
        %vm7469 = vcmp.ge.f32.partialorder %v7437, 0.0
        %vm7470 = vcmp.ge.f32.partialorder %v7438, 0.0
        %vm7471 = vcmp.ge.f32.partialorder %v7439, 0.0
        %vm7472 = vcmp.ge.f32.partialorder %v7440, 0.0
        %vm7473 = vcmp.ge.f32.partialorder %v7441, 0.0
        %vm7474 = vcmp.ge.f32.partialorder %v7442, 0.0
        %vm7475 = vcmp.ge.f32.partialorder %v7443, 0.0
        %vm7476 = vcmp.ge.f32.partialorder %v7444, 0.0
        %vm7477 = vcmp.ge.f32.partialorder %v7445, 0.0
        %vm7478 = vcmp.ge.f32.partialorder %v7446, 0.0
        %vm7479 = vcmp.ge.f32.partialorder %v7447, 0.0
        %v7480 = vmul.f32 %v7416, 0.2
        %v7481 = vmul.f32 %v7417, 0.2
        %v7482 = vmul.f32 %v7418, 0.2
        %v7483 = vmul.f32 %v7419, 0.2
        %v7484 = vmul.f32 %v7420, 0.2
        %v7485 = vmul.f32 %v7421, 0.2
        %v7486 = vmul.f32 %v7422, 0.2
        %v7487 = vmul.f32 %v7423, 0.2
        %v7488 = vmul.f32 %v7424, 0.2
        %v7489 = vmul.f32 %v7425, 0.2
        %v7490 = vmul.f32 %v7426, 0.2
        %v7491 = vmul.f32 %v7427, 0.2
        %v7492 = vmul.f32 %v7428, 0.2
        %v7493 = vmul.f32 %v7429, 0.2
        %v7494 = vmul.f32 %v7430, 0.2
        %v7495 = vmul.f32 %v7431, 0.2
        %v7496 = vmul.f32 %v7432, 0.2
        %v7497 = vmul.f32 %v7433, 0.2
        %v7498 = vmul.f32 %v7434, 0.2
        %v7499 = vmul.f32 %v7435, 0.2
        %v7500 = vmul.f32 %v7436, 0.2
        %v7501 = vmul.f32 %v7437, 0.2
        %v7502 = vmul.f32 %v7438, 0.2
        %v7503 = vmul.f32 %v7439, 0.2
        %v7504 = vmul.f32 %v7440, 0.2
        %v7505 = vmul.f32 %v7441, 0.2
        %v7506 = vmul.f32 %v7442, 0.2
        %v7507 = vmul.f32 %v7443, 0.2
        %v7508 = vmul.f32 %v7444, 0.2
        %v7509 = vmul.f32 %v7445, 0.2
        %v7510 = vmul.f32 %v7446, 0.2
        %v7511 = vmul.f32 %v7447, 0.2
        %v7512 = vsel %vm7448, %v7416, %v7480
        %v7513 = vsel %vm7449, %v7417, %v7481
        %v7514 = vsel %vm7450, %v7418, %v7482
        %v7515 = vsel %vm7451, %v7419, %v7483
        %v7516 = vsel %vm7452, %v7420, %v7484
        %v7517 = vsel %vm7453, %v7421, %v7485
        %v7518 = vsel %vm7454, %v7422, %v7486
        %v7519 = vsel %vm7455, %v7423, %v7487
        %v7520 = vsel %vm7456, %v7424, %v7488
        %v7521 = vsel %vm7457, %v7425, %v7489
        %v7522 = vsel %vm7458, %v7426, %v7490
        %v7523 = vsel %vm7459, %v7427, %v7491
        %v7524 = vsel %vm7460, %v7428, %v7492
        %v7525 = vsel %vm7461, %v7429, %v7493
        %v7526 = vsel %vm7462, %v7430, %v7494
        %v7527 = vsel %vm7463, %v7431, %v7495
        %v7528 = vsel %vm7464, %v7432, %v7496
        %v7529 = vsel %vm7465, %v7433, %v7497
        %v7530 = vsel %vm7466, %v7434, %v7498
        %v7531 = vsel %vm7467, %v7435, %v7499
        %v7532 = vsel %vm7468, %v7436, %v7500
        %v7533 = vsel %vm7469, %v7437, %v7501
        %v7534 = vsel %vm7470, %v7438, %v7502
        %v7535 = vsel %vm7471, %v7439, %v7503
        %v7536 = vsel %vm7472, %v7440, %v7504
        %v7537 = vsel %vm7473, %v7441, %v7505
        %v7538 = vsel %vm7474, %v7442, %v7506
        %v7539 = vsel %vm7475, %v7443, %v7507
        %v7540 = vsel %vm7476, %v7444, %v7508
        %v7541 = vsel %vm7477, %v7445, %v7509
        %v7542 = vsel %vm7478, %v7446, %v7510
        %v7543 = vsel %vm7479, %v7447, %v7511
        %v7544 = vpack.c.bf16 %v7513, %v7512
        %v7545 = vpack.c.bf16 %v7515, %v7514
        %v7546 = vpack.c.bf16 %v7517, %v7516
        %v7547 = vpack.c.bf16 %v7519, %v7518
        %v7548 = vpack.c.bf16 %v7521, %v7520
        %v7549 = vpack.c.bf16 %v7523, %v7522
        %v7550 = vpack.c.bf16 %v7525, %v7524
        %v7551 = vpack.c.bf16 %v7527, %v7526
        %v7552 = vpack.c.bf16 %v7529, %v7528
        %v7553 = vpack.c.bf16 %v7531, %v7530
        %v7554 = vpack.c.bf16 %v7533, %v7532
        %v7555 = vpack.c.bf16 %v7535, %v7534
        %v7556 = vpack.c.bf16 %v7537, %v7536
        %v7557 = vpack.c.bf16 %v7539, %v7538
        %v7558 = vpack.c.bf16 %v7541, %v7540
        %v7559 = vpack.c.bf16 %v7543, %v7542
        %7576 = vrot.lane.b32.xlu0 %v7544, 64
        %v7577 = vpop.permute.xlu0 %7576
        %7578 = vrot.lane.b32.xlu0 %v7545, 64
        %v7579 = vpop.permute.xlu0 %7578
        %7580 = vrot.lane.b32.xlu0 %v7546, 64
        %v7581 = vpop.permute.xlu0 %7580
        %7582 = vrot.lane.b32.xlu0 %v7547, 64
        %v7583 = vpop.permute.xlu0 %7582
        %7584 = vrot.lane.b32.xlu0 %v7548, 64
        %v7585 = vpop.permute.xlu0 %7584
        %7586 = vrot.lane.b32.xlu0 %v7549, 64
        %v7587 = vpop.permute.xlu0 %7586
        %7588 = vrot.lane.b32.xlu0 %v7550, 64
        %v7589 = vpop.permute.xlu0 %7588
        %7590 = vrot.lane.b32.xlu0 %v7551, 64
        %v7591 = vpop.permute.xlu0 %7590
        %7592 = vrot.lane.b32.xlu0 %v7552, 64
        %v7593 = vpop.permute.xlu0 %7592
        %7594 = vrot.lane.b32.xlu0 %v7553, 64
        %v7595 = vpop.permute.xlu0 %7594
        %7596 = vrot.lane.b32.xlu0 %v7554, 64
        %v7597 = vpop.permute.xlu0 %7596
        %7598 = vrot.lane.b32.xlu0 %v7555, 64
        %v7599 = vpop.permute.xlu0 %7598
        %7600 = vrot.lane.b32.xlu0 %v7556, 64
        %v7601 = vpop.permute.xlu0 %7600
        %7602 = vrot.lane.b32.xlu0 %v7557, 64
        %v7603 = vpop.permute.xlu0 %7602
        %7604 = vrot.lane.b32.xlu0 %v7558, 64
        %v7605 = vpop.permute.xlu0 %7604
        %7606 = vrot.lane.b32.xlu0 %v7559, 64
        %v7607 = vpop.permute.xlu0 %7606
        %vm7624 = vcmask 654848
        %7625 = vst.msk [vmem:[%s262 + $0x8] sm:$0xff] %vm7624, %v7577
        %7626 = vst.msk [vmem:[%s262 + $0x20] sm:$0xff] %vm7624, %v7579
        %7627 = vst.msk [vmem:[%s262 + $0x38] sm:$0xff] %vm7624, %v7581
        %7628 = vst.msk [vmem:[%s262 + $0x50] sm:$0xff] %vm7624, %v7583
        %7629 = vst.msk [vmem:[%s262 + $0x68] sm:$0xff] %vm7624, %v7585
        %7630 = vst.msk [vmem:[%s262 + $0x80] sm:$0xff] %vm7624, %v7587
        %7631 = vst.msk [vmem:[%s262 + $0x98] sm:$0xff] %vm7624, %v7589
        %7632 = vst.msk [vmem:[%s262 + $0xb0] sm:$0xff] %vm7624, %v7591
        %7633 = vst.msk [vmem:[%s262 + $0xc8] sm:$0xff] %vm7624, %v7593
        %7634 = vst.msk [vmem:[%s262 + $0xe0] sm:$0xff] %vm7624, %v7595
        %7635 = vst.msk [vmem:[%s262 + $0xf8] sm:$0xff] %vm7624, %v7597
        %7636 = vst.msk [vmem:[%s262 + $0x110] sm:$0xff] %vm7624, %v7599
        %7637 = vst.msk [vmem:[%s262 + $0x128] sm:$0xff] %vm7624, %v7601
        %7638 = vst.msk [vmem:[%s262 + $0x140] sm:$0xff] %vm7624, %v7603
        %7639 = vst.msk [vmem:[%s262 + $0x158] sm:$0xff] %vm7624, %v7605
        %7640 = vst.msk [vmem:[%s262 + $0x170] sm:$0xff] %vm7624, %v7607
        %v7641 = vld [vmem:[#allocation2] sm:$0x80]
        %v7642 = vld [vmem:[#allocation2 + $0x8] sm:$0xff]
        %v7643 = vld [vmem:[#allocation2 + $0x18] sm:$0x80]
        %v7644 = vld [vmem:[#allocation2 + $0x20] sm:$0xff]
        %v7645 = vld [vmem:[#allocation2 + $0x30] sm:$0x80]
        %v7646 = vld [vmem:[#allocation2 + $0x38] sm:$0xff]
        %v7647 = vld [vmem:[#allocation2 + $0x48] sm:$0x80]
        %v7648 = vld [vmem:[#allocation2 + $0x50] sm:$0xff]
        %v7649 = vld [vmem:[#allocation2 + $0x60] sm:$0x80]
        %v7650 = vld [vmem:[#allocation2 + $0x68] sm:$0xff]
        %v7651 = vld [vmem:[#allocation2 + $0x78] sm:$0x80]
        %v7652 = vld [vmem:[#allocation2 + $0x80] sm:$0xff]
        %v7653 = vld [vmem:[#allocation2 + $0x90] sm:$0x80]
        %v7654 = vld [vmem:[#allocation2 + $0x98] sm:$0xff]
        %v7655 = vld [vmem:[#allocation2 + $0xa8] sm:$0x80]
        %v7656 = vld [vmem:[#allocation2 + $0xb0] sm:$0xff]
        %v7657 = vld [vmem:[#allocation2 + $0xc0] sm:$0x80]
        %v7658 = vld [vmem:[#allocation2 + $0xc8] sm:$0xff]
        %v7659 = vld [vmem:[#allocation2 + $0xd8] sm:$0x80]
        %v7660 = vld [vmem:[#allocation2 + $0xe0] sm:$0xff]
        %v7661 = vld [vmem:[#allocation2 + $0xf0] sm:$0x80]
        %v7662 = vld [vmem:[#allocation2 + $0xf8] sm:$0xff]
        %v7663 = vld [vmem:[#allocation2 + $0x108] sm:$0x80]
        %v7664 = vld [vmem:[#allocation2 + $0x110] sm:$0xff]
        %v7665 = vld [vmem:[#allocation2 + $0x120] sm:$0x80]
        %v7666 = vld [vmem:[#allocation2 + $0x128] sm:$0xff]
        %v7667 = vld [vmem:[#allocation2 + $0x138] sm:$0x80]
        %v7668 = vld [vmem:[#allocation2 + $0x140] sm:$0xff]
        %v7669 = vld [vmem:[#allocation2 + $0x150] sm:$0x80]
        %v7670 = vld [vmem:[#allocation2 + $0x158] sm:$0xff]
        %v7671 = vld [vmem:[#allocation2 + $0x168] sm:$0x80]
        %v7672 = vld [vmem:[#allocation2 + $0x170] sm:$0xff]
        %v7673 = vld [vmem:[#allocation2 + $0x180] sm:$0x80]
        %v7674 = vld [vmem:[#allocation2 + $0x188] sm:$0xff]
        %v7675 = vld [vmem:[#allocation2 + $0x198] sm:$0x80]
        %v7676 = vld [vmem:[#allocation2 + $0x1a0] sm:$0xff]
        %v7678 = vshrl.u32 %v7641, 16
        %v7680 = vrot.slane %v7678, 7
        %v7682 = vshrl.u32 %v7642, 16
        %v7684 = vrot.slane %v7682, 7
        %v7685 = vshll.u32 %v7642, 16
        %v7687 = vor.u32 %v7684, %v7685
        %v7688 = vsel %vm316, %v7680, %v7687
        %v7690 = vshrl.u32 %v7643, 16
        %v7692 = vrot.slane %v7690, 7
        %v7694 = vshrl.u32 %v7644, 16
        %v7696 = vrot.slane %v7694, 7
        %v7697 = vshll.u32 %v7644, 16
        %v7699 = vor.u32 %v7696, %v7697
        %v7700 = vsel %vm316, %v7692, %v7699
        %v7702 = vshrl.u32 %v7645, 16
        %v7704 = vrot.slane %v7702, 7
        %v7706 = vshrl.u32 %v7646, 16
        %v7708 = vrot.slane %v7706, 7
        %v7709 = vshll.u32 %v7646, 16
        %v7711 = vor.u32 %v7708, %v7709
        %v7712 = vsel %vm316, %v7704, %v7711
        %v7714 = vshrl.u32 %v7647, 16
        %v7716 = vrot.slane %v7714, 7
        %v7718 = vshrl.u32 %v7648, 16
        %v7720 = vrot.slane %v7718, 7
        %v7721 = vshll.u32 %v7648, 16
        %v7723 = vor.u32 %v7720, %v7721
        %v7724 = vsel %vm316, %v7716, %v7723
        %v7726 = vshrl.u32 %v7649, 16
        %v7728 = vrot.slane %v7726, 7
        %v7730 = vshrl.u32 %v7650, 16
        %v7732 = vrot.slane %v7730, 7
        %v7733 = vshll.u32 %v7650, 16
        %v7735 = vor.u32 %v7732, %v7733
        %v7736 = vsel %vm316, %v7728, %v7735
        %v7738 = vshrl.u32 %v7651, 16
        %v7740 = vrot.slane %v7738, 7
        %v7742 = vshrl.u32 %v7652, 16
        %v7744 = vrot.slane %v7742, 7
        %v7745 = vshll.u32 %v7652, 16
        %v7747 = vor.u32 %v7744, %v7745
        %v7748 = vsel %vm316, %v7740, %v7747
        %v7750 = vshrl.u32 %v7653, 16
        %v7752 = vrot.slane %v7750, 7
        %v7754 = vshrl.u32 %v7654, 16
        %v7756 = vrot.slane %v7754, 7
        %v7757 = vshll.u32 %v7654, 16
        %v7759 = vor.u32 %v7756, %v7757
        %v7760 = vsel %vm316, %v7752, %v7759
        %v7762 = vshrl.u32 %v7655, 16
        %v7764 = vrot.slane %v7762, 7
        %v7766 = vshrl.u32 %v7656, 16
        %v7768 = vrot.slane %v7766, 7
        %v7769 = vshll.u32 %v7656, 16
        %v7771 = vor.u32 %v7768, %v7769
        %v7772 = vsel %vm316, %v7764, %v7771
        %v7774 = vshrl.u32 %v7657, 16
        %v7776 = vrot.slane %v7774, 7
        %v7778 = vshrl.u32 %v7658, 16
        %v7780 = vrot.slane %v7778, 7
        %v7781 = vshll.u32 %v7658, 16
        %v7783 = vor.u32 %v7780, %v7781
        %v7784 = vsel %vm316, %v7776, %v7783
        %v7786 = vshrl.u32 %v7659, 16
        %v7788 = vrot.slane %v7786, 7
        %v7790 = vshrl.u32 %v7660, 16
        %v7792 = vrot.slane %v7790, 7
        %v7793 = vshll.u32 %v7660, 16
        %v7795 = vor.u32 %v7792, %v7793
        %v7796 = vsel %vm316, %v7788, %v7795
        %v7798 = vshrl.u32 %v7661, 16
        %v7800 = vrot.slane %v7798, 7
        %v7802 = vshrl.u32 %v7662, 16
        %v7804 = vrot.slane %v7802, 7
        %v7805 = vshll.u32 %v7662, 16
        %v7807 = vor.u32 %v7804, %v7805
        %v7808 = vsel %vm316, %v7800, %v7807
        %v7810 = vshrl.u32 %v7663, 16
        %v7812 = vrot.slane %v7810, 7
        %v7814 = vshrl.u32 %v7664, 16
        %v7816 = vrot.slane %v7814, 7
        %v7817 = vshll.u32 %v7664, 16
        %v7819 = vor.u32 %v7816, %v7817
        %v7820 = vsel %vm316, %v7812, %v7819
        %v7822 = vshrl.u32 %v7665, 16
        %v7824 = vrot.slane %v7822, 7
        %v7826 = vshrl.u32 %v7666, 16
        %v7828 = vrot.slane %v7826, 7
        %v7829 = vshll.u32 %v7666, 16
        %v7831 = vor.u32 %v7828, %v7829
        %v7832 = vsel %vm316, %v7824, %v7831
        %v7834 = vshrl.u32 %v7667, 16
        %v7836 = vrot.slane %v7834, 7
        %v7838 = vshrl.u32 %v7668, 16
        %v7840 = vrot.slane %v7838, 7
        %v7841 = vshll.u32 %v7668, 16
        %v7843 = vor.u32 %v7840, %v7841
        %v7844 = vsel %vm316, %v7836, %v7843
        %v7846 = vshrl.u32 %v7669, 16
        %v7848 = vrot.slane %v7846, 7
        %v7850 = vshrl.u32 %v7670, 16
        %v7852 = vrot.slane %v7850, 7
        %v7853 = vshll.u32 %v7670, 16
        %v7855 = vor.u32 %v7852, %v7853
        %v7856 = vsel %vm316, %v7848, %v7855
        %v7858 = vshrl.u32 %v7671, 16
        %v7860 = vrot.slane %v7858, 7
        %v7862 = vshrl.u32 %v7672, 16
        %v7864 = vrot.slane %v7862, 7
        %v7865 = vshll.u32 %v7672, 16
        %v7867 = vor.u32 %v7864, %v7865
        %v7868 = vsel %vm316, %v7860, %v7867
        %v7870 = vshrl.u32 %v7673, 16
        %v7872 = vrot.slane %v7870, 7
        %v7874 = vshrl.u32 %v7674, 16
        %v7876 = vrot.slane %v7874, 7
        %v7877 = vshll.u32 %v7674, 16
        %v7879 = vor.u32 %v7876, %v7877
        %v7880 = vsel %vm316, %v7872, %v7879
        %v7882 = vshrl.u32 %v7675, 16
        %v7884 = vrot.slane %v7882, 7
        %v7886 = vshrl.u32 %v7676, 16
        %v7888 = vrot.slane %v7886, 7
        %v7889 = vshll.u32 %v7676, 16
        %v7891 = vor.u32 %v7888, %v7889
        %v7892 = vsel %vm316, %v7884, %v7891
        %s7893 = scalar_lea.vmem %s1, 432
        %v7894 = vld [vmem:[%s7893] sm:$0xf]
        %v7895 = vld [vmem:[%s7893 + $0x4] sm:$0xf]
        %v7896 = vld [vmem:[%s7893 + $0x8] sm:$0xf]
        %v7897 = vld [vmem:[%s7893 + $0xc] sm:$0xf]
        %v7898 = vld [vmem:[%s7893 + $0x10] sm:$0xf]
        %v7899 = vld [vmem:[%s7893 + $0x14] sm:$0xf]
        %v7900 = vld [vmem:[%s7893 + $0x18] sm:$0xf]
        %v7901 = vld [vmem:[%s7893 + $0x1c] sm:$0xf]
        %v7902 = vld [vmem:[%s7893 + $0x20] sm:$0xf]
        %v7903 = vld [vmem:[%s7893 + $0x24] sm:$0xf]
        %v7914 = vunpack.c.l.b16 %v7894
        %v7915 = vunpack.c.l.b16 %v7895
        %v7916 = vunpack.c.l.b16 %v7896
        %v7917 = vunpack.c.l.b16 %v7897
        %v7918 = vunpack.c.l.b16 %v7898
        %v7919 = vunpack.c.l.b16 %v7899
        %v7920 = vunpack.c.l.b16 %v7900
        %v7921 = vunpack.c.l.b16 %v7901
        %v7922 = vunpack.c.l.b16 %v7902
        %v7923 = vunpack.c.l.b16 %v7903
        %v7924 = vpack.c.b16 %v7915, %v7914
        %v7925 = vpack.c.b16 %v7917, %v7916
        %v7926 = vpack.c.b16 %v7919, %v7918
        %v7927 = vpack.c.b16 %v7921, %v7920
        %v7928 = vpack.c.b16 %v7923, %v7922
        %vm7934 = vcmask 654336
        %v7936 = vsel %vm7934, %v7688, 0
        %v7939 = vsel %vm7934, %v7700, 0
        %v7942 = vsel %vm7934, %v7712, 0
        %v7945 = vsel %vm7934, %v7724, 0
        %v7948 = vsel %vm7934, %v7736, 0
        %v7951 = vsel %vm7934, %v7748, 0
        %v7954 = vsel %vm7934, %v7760, 0
        %v7957 = vsel %vm7934, %v7772, 0
        %v7960 = vsel %vm7934, %v7784, 0
        %v7963 = vsel %vm7934, %v7796, 0
        %v7966 = vsel %vm7934, %v7808, 0
        %v7969 = vsel %vm7934, %v7820, 0
        %v7972 = vsel %vm7934, %v7832, 0
        %v7975 = vsel %vm7934, %v7844, 0
        %v7978 = vsel %vm7934, %v7856, 0
        %v7981 = vsel %vm7934, %v7868, 0
        %v7984 = vsel %vm7934, %v7880, 0
        %v7987 = vsel %vm7934, %v7892, 0
        %7989 = vmatprep.subr.bf16.mxu0 0
        %7990 = vmatpush1.bf16.msra.mxu0 %v7924
        %7991 = vmatprep.subr.bf16.mxu0 0
        %7992 = vmatpush1.bf16.msra.mxu0 %v7925
        %7993 = vmatprep.subr.bf16.mxu0 0
        %7994 = vmatpush1.bf16.msra.mxu0 %v7926
        %7995 = vmatprep.subr.bf16.mxu0 0
        %7996 = vmatpush1.bf16.msra.mxu0 %v7927
        %7997 = vmatprep.subr.bf16.mxu0 0
        %7998 = vmatpush1.bf16.msra.mxu0 %v7928
        %7999 = vmatprep.subr.bf16.mxu0 0
        %8000 = vmatpush1.bf16.msra.mxu0 0
        %8001 = vmatprep.subr.bf16.mxu0 0
        %8002 = vmatpush1.bf16.msra.mxu0 0
        %8003 = vmatprep.subr.bf16.mxu0 0
        %8004 = vmatpush1.bf16.msra.mxu0 0
        %8005 = vmatprep.subr.bf16.mxu0 0
        %8006 = vmatpush1.bf16.msra.mxu0 0
        %8007 = vmatprep.subr.bf16.mxu0 0
        %8008 = vmatpush1.bf16.msra.mxu0 0
        %8009 = vmatprep.subr.bf16.mxu0 0
        %8010 = vmatpush1.bf16.msra.mxu0 0
        %8011 = vmatprep.subr.bf16.mxu0 0
        %8012 = vmatpush1.bf16.msra.mxu0 0
        %8013 = vmatprep.subr.bf16.mxu0 0
        %8014 = vmatpush1.bf16.msra.mxu0 0
        %8015 = vmatprep.subr.bf16.mxu0 0
        %8016 = vmatpush1.bf16.msra.mxu0 0
        %8017 = vmatprep.subr.bf16.mxu0 0
        %8018 = vmatpush1.bf16.msra.mxu0 0
        %8019 = vmatprep.subr.bf16.mxu0 0
        %8020 = vmatpush1.bf16.msra.mxu0 0
        %8021 = vmatprep.mubr.bf16.mxu0 0
        %8022 = vmatmul.mubr.bf16.gmra.mrb[0].mxu0 %v7936
        %v8023 = vpop.f32.mrb[0].mxu0
        %v8024 = vadd.f32 0.0, %v8023
        %v8025 = vpop.f32.mrb[0].mxu0
        %v8026 = vpop.f32.mrb[0].mxu0
        %v8027 = vadd.f32 0.0, %v8026
        %v8028 = vpop.f32.mrb[0].mxu0
        %8029 = vmatprep.mubr.bf16.mxu0 0
        %8030 = vmatmul.mubr.bf16.gmra.mrb[0].mxu0 %v7939
        %v8031 = vpop.f32.mrb[0].mxu0
        %v8032 = vadd.f32 0.0, %v8031
        %v8033 = vpop.f32.mrb[0].mxu0
        %v8034 = vpop.f32.mrb[0].mxu0
        %v8035 = vadd.f32 0.0, %v8034
        %v8036 = vpop.f32.mrb[0].mxu0
        %8037 = vmatprep.mubr.bf16.mxu0 0
        %8038 = vmatmul.mubr.bf16.gmra.mrb[0].mxu0 %v7942
        %v8039 = vpop.f32.mrb[0].mxu0
        %v8040 = vadd.f32 0.0, %v8039
        %v8041 = vpop.f32.mrb[0].mxu0
        %v8042 = vpop.f32.mrb[0].mxu0
        %v8043 = vadd.f32 0.0, %v8042
        %v8044 = vpop.f32.mrb[0].mxu0
        %8045 = vmatprep.mubr.bf16.mxu0 0
        %8046 = vmatmul.mubr.bf16.gmra.mrb[0].mxu0 %v7945
        %v8047 = vpop.f32.mrb[0].mxu0
        %v8048 = vadd.f32 0.0, %v8047
        %v8049 = vpop.f32.mrb[0].mxu0
        %v8050 = vpop.f32.mrb[0].mxu0
        %v8051 = vadd.f32 0.0, %v8050
        %v8052 = vpop.f32.mrb[0].mxu0
        %8053 = vmatprep.mubr.bf16.mxu0 0
        %8054 = vmatmul.mubr.bf16.gmra.mrb[0].mxu0 %v7948
        %v8055 = vpop.f32.mrb[0].mxu0
        %v8056 = vadd.f32 0.0, %v8055
        %v8057 = vpop.f32.mrb[0].mxu0
        %v8058 = vpop.f32.mrb[0].mxu0
        %v8059 = vadd.f32 0.0, %v8058
        %v8060 = vpop.f32.mrb[0].mxu0
        %8061 = vmatprep.mubr.bf16.mxu0 0
        %8062 = vmatmul.mubr.bf16.gmra.mrb[0].mxu0 %v7951
        %v8063 = vpop.f32.mrb[0].mxu0
        %v8064 = vadd.f32 0.0, %v8063
        %v8065 = vpop.f32.mrb[0].mxu0
        %v8066 = vpop.f32.mrb[0].mxu0
        %v8067 = vadd.f32 0.0, %v8066
        %v8068 = vpop.f32.mrb[0].mxu0
        %8069 = vmatprep.mubr.bf16.mxu0 0
        %8070 = vmatmul.mubr.bf16.gmra.mrb[0].mxu0 %v7954
        %v8071 = vpop.f32.mrb[0].mxu0
        %v8072 = vadd.f32 0.0, %v8071
        %v8073 = vpop.f32.mrb[0].mxu0
        %v8074 = vpop.f32.mrb[0].mxu0
        %v8075 = vadd.f32 0.0, %v8074
        %v8076 = vpop.f32.mrb[0].mxu0
        %8077 = vmatprep.mubr.bf16.mxu0 0
        %8078 = vmatmul.mubr.bf16.gmra.mrb[0].mxu0 %v7957
        %v8079 = vpop.f32.mrb[0].mxu0
        %v8080 = vadd.f32 0.0, %v8079
        %v8081 = vpop.f32.mrb[0].mxu0
        %v8082 = vpop.f32.mrb[0].mxu0
        %v8083 = vadd.f32 0.0, %v8082
        %v8084 = vpop.f32.mrb[0].mxu0
        %8085 = vmatprep.mubr.bf16.mxu0 0
        %8086 = vmatmul.mubr.bf16.gmra.mrb[0].mxu0 %v7960
        %v8087 = vpop.f32.mrb[0].mxu0
        %v8088 = vadd.f32 0.0, %v8087
        %v8089 = vpop.f32.mrb[0].mxu0
        %v8090 = vpop.f32.mrb[0].mxu0
        %v8091 = vadd.f32 0.0, %v8090
        %v8092 = vpop.f32.mrb[0].mxu0
        %8093 = vmatprep.mubr.bf16.mxu0 0
        %8094 = vmatmul.mubr.bf16.gmra.mrb[0].mxu0 %v7963
        %v8095 = vpop.f32.mrb[0].mxu0
        %v8096 = vadd.f32 0.0, %v8095
        %v8097 = vpop.f32.mrb[0].mxu0
        %v8098 = vpop.f32.mrb[0].mxu0
        %v8099 = vadd.f32 0.0, %v8098
        %v8100 = vpop.f32.mrb[0].mxu0
        %8101 = vmatprep.mubr.bf16.mxu0 0
        %8102 = vmatmul.mubr.bf16.gmra.mrb[0].mxu0 %v7966
        %v8103 = vpop.f32.mrb[0].mxu0
        %v8104 = vadd.f32 0.0, %v8103
        %v8105 = vpop.f32.mrb[0].mxu0
        %v8106 = vpop.f32.mrb[0].mxu0
        %v8107 = vadd.f32 0.0, %v8106
        %v8108 = vpop.f32.mrb[0].mxu0
        %8109 = vmatprep.mubr.bf16.mxu0 0
        %8110 = vmatmul.mubr.bf16.gmra.mrb[0].mxu0 %v7969
        %v8111 = vpop.f32.mrb[0].mxu0
        %v8112 = vadd.f32 0.0, %v8111
        %v8113 = vpop.f32.mrb[0].mxu0
        %v8114 = vpop.f32.mrb[0].mxu0
        %v8115 = vadd.f32 0.0, %v8114
        %v8116 = vpop.f32.mrb[0].mxu0
        %8117 = vmatprep.mubr.bf16.mxu0 0
        %8118 = vmatmul.mubr.bf16.gmra.mrb[0].mxu0 %v7972
        %v8119 = vpop.f32.mrb[0].mxu0
        %v8120 = vadd.f32 0.0, %v8119
        %v8121 = vpop.f32.mrb[0].mxu0
        %v8122 = vpop.f32.mrb[0].mxu0
        %v8123 = vadd.f32 0.0, %v8122
        %v8124 = vpop.f32.mrb[0].mxu0
        %8125 = vmatprep.mubr.bf16.mxu0 0
        %8126 = vmatmul.mubr.bf16.gmra.mrb[0].mxu0 %v7975
        %v8127 = vpop.f32.mrb[0].mxu0
        %v8128 = vadd.f32 0.0, %v8127
        %v8129 = vpop.f32.mrb[0].mxu0
        %v8130 = vpop.f32.mrb[0].mxu0
        %v8131 = vadd.f32 0.0, %v8130
        %v8132 = vpop.f32.mrb[0].mxu0
        %8133 = vmatprep.mubr.bf16.mxu0 0
        %8134 = vmatmul.mubr.bf16.gmra.mrb[0].mxu0 %v7978
        %v8135 = vpop.f32.mrb[0].mxu0
        %v8136 = vadd.f32 0.0, %v8135
        %v8137 = vpop.f32.mrb[0].mxu0
        %v8138 = vpop.f32.mrb[0].mxu0
        %v8139 = vadd.f32 0.0, %v8138
        %v8140 = vpop.f32.mrb[0].mxu0
        %8141 = vmatprep.mubr.bf16.mxu0 0
        %8142 = vmatmul.mubr.bf16.gmra.mrb[0].mxu0 %v7981
        %v8143 = vpop.f32.mrb[0].mxu0
        %v8144 = vadd.f32 0.0, %v8143
        %v8145 = vpop.f32.mrb[0].mxu0
        %v8146 = vpop.f32.mrb[0].mxu0
        %v8147 = vadd.f32 0.0, %v8146
        %v8148 = vpop.f32.mrb[0].mxu0
        %8149 = vmatprep.mubr.bf16.mxu0 0
        %8150 = vmatmul.mubr.bf16.gmra.mrb[0].mxu0 %v7984
        %v8151 = vpop.f32.mrb[0].mxu0
        %v8152 = vadd.f32 0.0, %v8151
        %v8153 = vpop.f32.mrb[0].mxu0
        %v8154 = vpop.f32.mrb[0].mxu0
        %v8155 = vadd.f32 0.0, %v8154
        %v8156 = vpop.f32.mrb[0].mxu0
        %8157 = vmatprep.mubr.bf16.mxu0 0
        %8158 = vmatmul.mubr.bf16.gmra.mrb[0].mxu0 %v7987
        %v8159 = vpop.f32.mrb[0].mxu0
        %v8160 = vadd.f32 0.0, %v8159
        %v8161 = vpop.f32.mrb[0].mxu0
        %v8162 = vpop.f32.mrb[0].mxu0
        %v8163 = vadd.f32 0.0, %v8162
        %v8164 = vpop.f32.mrb[0].mxu0
        %8165 = vdwg.mxu0
        %v8166 = vadd.f32 %v8024, 0.0
        %v8167 = vadd.f32 %v8027, 0.0
        %v8168 = vadd.f32 %v8032, 0.0
        %v8169 = vadd.f32 %v8035, 0.0
        %v8170 = vadd.f32 %v8040, 0.0
        %v8171 = vadd.f32 %v8043, 0.0
        %v8172 = vadd.f32 %v8048, 0.0
        %v8173 = vadd.f32 %v8051, 0.0
        %v8174 = vadd.f32 %v8056, 0.0
        %v8175 = vadd.f32 %v8059, 0.0
        %v8176 = vadd.f32 %v8064, 0.0
        %v8177 = vadd.f32 %v8067, 0.0
        %v8178 = vadd.f32 %v8072, 0.0
        %v8179 = vadd.f32 %v8075, 0.0
        %v8180 = vadd.f32 %v8080, 0.0
        %v8181 = vadd.f32 %v8083, 0.0
        %v8182 = vadd.f32 %v8088, 0.0
        %v8183 = vadd.f32 %v8091, 0.0
        %v8184 = vadd.f32 %v8096, 0.0
        %v8185 = vadd.f32 %v8099, 0.0
        %v8186 = vadd.f32 %v8104, 0.0
        %v8187 = vadd.f32 %v8107, 0.0
        %v8188 = vadd.f32 %v8112, 0.0
        %v8189 = vadd.f32 %v8115, 0.0
        %v8190 = vadd.f32 %v8120, 0.0
        %v8191 = vadd.f32 %v8123, 0.0
        %v8192 = vadd.f32 %v8128, 0.0
        %v8193 = vadd.f32 %v8131, 0.0
        %v8194 = vadd.f32 %v8136, 0.0
        %v8195 = vadd.f32 %v8139, 0.0
        %v8196 = vadd.f32 %v8144, 0.0
        %v8197 = vadd.f32 %v8147, 0.0
        %8230 = vrot.lane.b32.xlu0 %v8032, 112
        %v8231 = vpop.permute.xlu0 %8230
        %8232 = vrot.lane.b32.xlu0 %v8035, 112
        %v8233 = vpop.permute.xlu0 %8232
        %8234 = vrot.lane.b32.xlu0 %v8040, 112
        %v8235 = vpop.permute.xlu0 %8234
        %8236 = vrot.lane.b32.xlu0 %v8043, 112
        %v8237 = vpop.permute.xlu0 %8236
        %8238 = vrot.lane.b32.xlu0 %v8048, 112
        %v8239 = vpop.permute.xlu0 %8238
        %8240 = vrot.lane.b32.xlu0 %v8051, 112
        %v8241 = vpop.permute.xlu0 %8240
        %8242 = vrot.lane.b32.xlu0 %v8056, 112
        %v8243 = vpop.permute.xlu0 %8242
        %8244 = vrot.lane.b32.xlu0 %v8059, 112
        %v8245 = vpop.permute.xlu0 %8244
        %8246 = vrot.lane.b32.xlu0 %v8064, 112
        %v8247 = vpop.permute.xlu0 %8246
        %8248 = vrot.lane.b32.xlu0 %v8067, 112
        %v8249 = vpop.permute.xlu0 %8248
        %8250 = vrot.lane.b32.xlu0 %v8072, 112
        %v8251 = vpop.permute.xlu0 %8250
        %8252 = vrot.lane.b32.xlu0 %v8075, 112
        %v8253 = vpop.permute.xlu0 %8252
        %8254 = vrot.lane.b32.xlu0 %v8080, 112
        %v8255 = vpop.permute.xlu0 %8254
        %8256 = vrot.lane.b32.xlu0 %v8083, 112
        %v8257 = vpop.permute.xlu0 %8256
        %8258 = vrot.lane.b32.xlu0 %v8088, 112
        %v8259 = vpop.permute.xlu0 %8258
        %8260 = vrot.lane.b32.xlu0 %v8091, 112
        %v8261 = vpop.permute.xlu0 %8260
        %8262 = vrot.lane.b32.xlu0 %v8096, 112
        %v8263 = vpop.permute.xlu0 %8262
        %8264 = vrot.lane.b32.xlu0 %v8099, 112
        %v8265 = vpop.permute.xlu0 %8264
        %8266 = vrot.lane.b32.xlu0 %v8104, 112
        %v8267 = vpop.permute.xlu0 %8266
        %8268 = vrot.lane.b32.xlu0 %v8107, 112
        %v8269 = vpop.permute.xlu0 %8268
        %8270 = vrot.lane.b32.xlu0 %v8112, 112
        %v8271 = vpop.permute.xlu0 %8270
        %8272 = vrot.lane.b32.xlu0 %v8115, 112
        %v8273 = vpop.permute.xlu0 %8272
        %8274 = vrot.lane.b32.xlu0 %v8120, 112
        %v8275 = vpop.permute.xlu0 %8274
        %8276 = vrot.lane.b32.xlu0 %v8123, 112
        %v8277 = vpop.permute.xlu0 %8276
        %8278 = vrot.lane.b32.xlu0 %v8128, 112
        %v8279 = vpop.permute.xlu0 %8278
        %8280 = vrot.lane.b32.xlu0 %v8131, 112
        %v8281 = vpop.permute.xlu0 %8280
        %8282 = vrot.lane.b32.xlu0 %v8136, 112
        %v8283 = vpop.permute.xlu0 %8282
        %8284 = vrot.lane.b32.xlu0 %v8139, 112
        %v8285 = vpop.permute.xlu0 %8284
        %8286 = vrot.lane.b32.xlu0 %v8144, 112
        %v8287 = vpop.permute.xlu0 %8286
        %8288 = vrot.lane.b32.xlu0 %v8147, 112
        %v8289 = vpop.permute.xlu0 %8288
        %8290 = vrot.lane.b32.xlu0 %v8152, 112
        %v8291 = vpop.permute.xlu0 %8290
        %8292 = vrot.lane.b32.xlu0 %v8155, 112
        %v8293 = vpop.permute.xlu0 %8292
        %v8326 = vadd.f32 %v8166, %v8231
        %v8327 = vadd.f32 %v8167, %v8233
        %v8328 = vadd.f32 %v8168, %v8235
        %v8329 = vadd.f32 %v8169, %v8237
        %v8330 = vadd.f32 %v8170, %v8239
        %v8331 = vadd.f32 %v8171, %v8241
        %v8332 = vadd.f32 %v8172, %v8243
        %v8333 = vadd.f32 %v8173, %v8245
        %v8334 = vadd.f32 %v8174, %v8247
        %v8335 = vadd.f32 %v8175, %v8249
        %v8336 = vadd.f32 %v8176, %v8251
        %v8337 = vadd.f32 %v8177, %v8253
        %v8338 = vadd.f32 %v8178, %v8255
        %v8339 = vadd.f32 %v8179, %v8257
        %v8340 = vadd.f32 %v8180, %v8259
        %v8341 = vadd.f32 %v8181, %v8261
        %v8342 = vadd.f32 %v8182, %v8263
        %v8343 = vadd.f32 %v8183, %v8265
        %v8344 = vadd.f32 %v8184, %v8267
        %v8345 = vadd.f32 %v8185, %v8269
        %v8346 = vadd.f32 %v8186, %v8271
        %v8347 = vadd.f32 %v8187, %v8273
        %v8348 = vadd.f32 %v8188, %v8275
        %v8349 = vadd.f32 %v8189, %v8277
        %v8350 = vadd.f32 %v8190, %v8279
        %v8351 = vadd.f32 %v8191, %v8281
        %v8352 = vadd.f32 %v8192, %v8283
        %v8353 = vadd.f32 %v8193, %v8285
        %v8354 = vadd.f32 %v8194, %v8287
        %v8355 = vadd.f32 %v8195, %v8289
        %v8356 = vadd.f32 %v8196, %v8291
        %v8357 = vadd.f32 %v8197, %v8293
        %8360 = vrot.lane.b32.xlu0 %v8040, 96
        %v8361 = vpop.permute.xlu0 %8360
        %8362 = vrot.lane.b32.xlu0 %v8043, 96
        %v8363 = vpop.permute.xlu0 %8362
        %8364 = vrot.lane.b32.xlu0 %v8048, 96
        %v8365 = vpop.permute.xlu0 %8364
        %8366 = vrot.lane.b32.xlu0 %v8051, 96
        %v8367 = vpop.permute.xlu0 %8366
        %8368 = vrot.lane.b32.xlu0 %v8056, 96
        %v8369 = vpop.permute.xlu0 %8368
        %8370 = vrot.lane.b32.xlu0 %v8059, 96
        %v8371 = vpop.permute.xlu0 %8370
        %8372 = vrot.lane.b32.xlu0 %v8064, 96
        %v8373 = vpop.permute.xlu0 %8372
        %8374 = vrot.lane.b32.xlu0 %v8067, 96
        %v8375 = vpop.permute.xlu0 %8374
        %8376 = vrot.lane.b32.xlu0 %v8072, 96
        %v8377 = vpop.permute.xlu0 %8376
        %8378 = vrot.lane.b32.xlu0 %v8075, 96
        %v8379 = vpop.permute.xlu0 %8378
        %8380 = vrot.lane.b32.xlu0 %v8080, 96
        %v8381 = vpop.permute.xlu0 %8380
        %8382 = vrot.lane.b32.xlu0 %v8083, 96
        %v8383 = vpop.permute.xlu0 %8382
        %8384 = vrot.lane.b32.xlu0 %v8088, 96
        %v8385 = vpop.permute.xlu0 %8384
        %8386 = vrot.lane.b32.xlu0 %v8091, 96
        %v8387 = vpop.permute.xlu0 %8386
        %8388 = vrot.lane.b32.xlu0 %v8096, 96
        %v8389 = vpop.permute.xlu0 %8388
        %8390 = vrot.lane.b32.xlu0 %v8099, 96
        %v8391 = vpop.permute.xlu0 %8390
        %8392 = vrot.lane.b32.xlu0 %v8104, 96
        %v8393 = vpop.permute.xlu0 %8392
        %8394 = vrot.lane.b32.xlu0 %v8107, 96
        %v8395 = vpop.permute.xlu0 %8394
        %8396 = vrot.lane.b32.xlu0 %v8112, 96
        %v8397 = vpop.permute.xlu0 %8396
        %8398 = vrot.lane.b32.xlu0 %v8115, 96
        %v8399 = vpop.permute.xlu0 %8398
        %8400 = vrot.lane.b32.xlu0 %v8120, 96
        %v8401 = vpop.permute.xlu0 %8400
        %8402 = vrot.lane.b32.xlu0 %v8123, 96
        %v8403 = vpop.permute.xlu0 %8402
        %8404 = vrot.lane.b32.xlu0 %v8128, 96
        %v8405 = vpop.permute.xlu0 %8404
        %8406 = vrot.lane.b32.xlu0 %v8131, 96
        %v8407 = vpop.permute.xlu0 %8406
        %8408 = vrot.lane.b32.xlu0 %v8136, 96
        %v8409 = vpop.permute.xlu0 %8408
        %8410 = vrot.lane.b32.xlu0 %v8139, 96
        %v8411 = vpop.permute.xlu0 %8410
        %8412 = vrot.lane.b32.xlu0 %v8144, 96
        %v8413 = vpop.permute.xlu0 %8412
        %8414 = vrot.lane.b32.xlu0 %v8147, 96
        %v8415 = vpop.permute.xlu0 %8414
        %8416 = vrot.lane.b32.xlu0 %v8152, 96
        %v8417 = vpop.permute.xlu0 %8416
        %8418 = vrot.lane.b32.xlu0 %v8155, 96
        %v8419 = vpop.permute.xlu0 %8418
        %8420 = vrot.lane.b32.xlu0 %v8160, 96
        %v8421 = vpop.permute.xlu0 %8420
        %8422 = vrot.lane.b32.xlu0 %v8163, 96
        %v8423 = vpop.permute.xlu0 %8422
        %v8456 = vadd.f32 %v8326, %v8361
        %v8457 = vadd.f32 %v8327, %v8363
        %v8458 = vadd.f32 %v8328, %v8365
        %v8459 = vadd.f32 %v8329, %v8367
        %v8460 = vadd.f32 %v8330, %v8369
        %v8461 = vadd.f32 %v8331, %v8371
        %v8462 = vadd.f32 %v8332, %v8373
        %v8463 = vadd.f32 %v8333, %v8375
        %v8464 = vadd.f32 %v8334, %v8377
        %v8465 = vadd.f32 %v8335, %v8379
        %v8466 = vadd.f32 %v8336, %v8381
        %v8467 = vadd.f32 %v8337, %v8383
        %v8468 = vadd.f32 %v8338, %v8385
        %v8469 = vadd.f32 %v8339, %v8387
        %v8470 = vadd.f32 %v8340, %v8389
        %v8471 = vadd.f32 %v8341, %v8391
        %v8472 = vadd.f32 %v8342, %v8393
        %v8473 = vadd.f32 %v8343, %v8395
        %v8474 = vadd.f32 %v8344, %v8397
        %v8475 = vadd.f32 %v8345, %v8399
        %v8476 = vadd.f32 %v8346, %v8401
        %v8477 = vadd.f32 %v8347, %v8403
        %v8478 = vadd.f32 %v8348, %v8405
        %v8479 = vadd.f32 %v8349, %v8407
        %v8480 = vadd.f32 %v8350, %v8409
        %v8481 = vadd.f32 %v8351, %v8411
        %v8482 = vadd.f32 %v8352, %v8413
        %v8483 = vadd.f32 %v8353, %v8415
        %v8484 = vadd.f32 %v8354, %v8417
        %v8485 = vadd.f32 %v8355, %v8419
        %v8486 = vadd.f32 %v8356, %v8421
        %v8487 = vadd.f32 %v8357, %v8423
        %s8488 = scalar_lea.vmem %s1, 480
        %v8489 = vld [vmem:[%s8488] sm:$0xf]
        %v8490 = vld [vmem:[%s8488 + $0x4] sm:$0xf]
        %v8491 = vld [vmem:[%s8488 + $0x8] sm:$0xf]
        %v8492 = vld [vmem:[%s8488 + $0xc] sm:$0xf]
        %v8493 = vld [vmem:[%s8488 + $0x10] sm:$0xf]
        %v8494 = vld [vmem:[%s8488 + $0x14] sm:$0xf]
        %v8495 = vld [vmem:[%s8488 + $0x18] sm:$0xf]
        %v8496 = vld [vmem:[%s8488 + $0x1c] sm:$0xf]
        %v8497 = vld [vmem:[%s8488 + $0x20] sm:$0xf]
        %v8498 = vld [vmem:[%s8488 + $0x24] sm:$0xf]
        %v8509 = vunpack.c.l.b16 %v8489
        %v8510 = vunpack.c.l.b16 %v8490
        %v8511 = vunpack.c.l.b16 %v8491
        %v8512 = vunpack.c.l.b16 %v8492
        %v8513 = vunpack.c.l.b16 %v8493
        %v8514 = vunpack.c.l.b16 %v8494
        %v8515 = vunpack.c.l.b16 %v8495
        %v8516 = vunpack.c.l.b16 %v8496
        %v8517 = vunpack.c.l.b16 %v8497
        %v8518 = vunpack.c.l.b16 %v8498
        %v8519 = vpack.c.b16 %v8510, %v8509
        %v8520 = vpack.c.b16 %v8512, %v8511
        %v8521 = vpack.c.b16 %v8514, %v8513
        %v8522 = vpack.c.b16 %v8516, %v8515
        %v8523 = vpack.c.b16 %v8518, %v8517
        %v8529 = vsel %vm7934, %v7642, 0
        %v8531 = vsel %vm7934, %v7644, 0
        %v8533 = vsel %vm7934, %v7646, 0
        %v8535 = vsel %vm7934, %v7648, 0
        %v8537 = vsel %vm7934, %v7650, 0
        %v8539 = vsel %vm7934, %v7652, 0
        %v8541 = vsel %vm7934, %v7654, 0
        %v8543 = vsel %vm7934, %v7656, 0
        %v8545 = vsel %vm7934, %v7658, 0
        %v8547 = vsel %vm7934, %v7660, 0
        %v8549 = vsel %vm7934, %v7662, 0
        %v8551 = vsel %vm7934, %v7664, 0
        %v8553 = vsel %vm7934, %v7666, 0
        %v8555 = vsel %vm7934, %v7668, 0
        %v8557 = vsel %vm7934, %v7670, 0
        %v8559 = vsel %vm7934, %v7672, 0
        %v8561 = vsel %vm7934, %v7674, 0
        %v8563 = vsel %vm7934, %v7676, 0
        %8565 = vmatprep.subr.bf16.mxu0 0
        %8566 = vmatpush1.bf16.msra.mxu0 %v8519
        %8567 = vmatprep.subr.bf16.mxu0 0
        %8568 = vmatpush1.bf16.msra.mxu0 %v8520
        %8569 = vmatprep.subr.bf16.mxu0 0
        %8570 = vmatpush1.bf16.msra.mxu0 %v8521
        %8571 = vmatprep.subr.bf16.mxu0 0
        %8572 = vmatpush1.bf16.msra.mxu0 %v8522
        %8573 = vmatprep.subr.bf16.mxu0 0
        %8574 = vmatpush1.bf16.msra.mxu0 %v8523
        %8575 = vmatprep.subr.bf16.mxu0 0
        %8576 = vmatpush1.bf16.msra.mxu0 0
        %8577 = vmatprep.subr.bf16.mxu0 0
        %8578 = vmatpush1.bf16.msra.mxu0 0
        %8579 = vmatprep.subr.bf16.mxu0 0
        %8580 = vmatpush1.bf16.msra.mxu0 0
        %8581 = vmatprep.subr.bf16.mxu0 0
        %8582 = vmatpush1.bf16.msra.mxu0 0
        %8583 = vmatprep.subr.bf16.mxu0 0
        %8584 = vmatpush1.bf16.msra.mxu0 0
        %8585 = vmatprep.subr.bf16.mxu0 0
        %8586 = vmatpush1.bf16.msra.mxu0 0
        %8587 = vmatprep.subr.bf16.mxu0 0
        %8588 = vmatpush1.bf16.msra.mxu0 0
        %8589 = vmatprep.subr.bf16.mxu0 0
        %8590 = vmatpush1.bf16.msra.mxu0 0
        %8591 = vmatprep.subr.bf16.mxu0 0
        %8592 = vmatpush1.bf16.msra.mxu0 0
        %8593 = vmatprep.subr.bf16.mxu0 0
        %8594 = vmatpush1.bf16.msra.mxu0 0
        %8595 = vmatprep.subr.bf16.mxu0 0
        %8596 = vmatpush1.bf16.msra.mxu0 0
        %8597 = vmatprep.mubr.bf16.mxu0 0
        %8598 = vmatmul.mubr.bf16.gmra.mrb[0].mxu0 %v8529
        %v8599 = vpop.f32.mrb[0].mxu0
        %v8600 = vadd.f32 0.0, %v8599
        %v8601 = vpop.f32.mrb[0].mxu0
        %v8602 = vpop.f32.mrb[0].mxu0
        %v8603 = vadd.f32 0.0, %v8602
        %v8604 = vpop.f32.mrb[0].mxu0
        %8605 = vmatprep.mubr.bf16.mxu0 0
        %8606 = vmatmul.mubr.bf16.gmra.mrb[0].mxu0 %v8531
        %v8607 = vpop.f32.mrb[0].mxu0
        %v8608 = vadd.f32 0.0, %v8607
        %v8609 = vpop.f32.mrb[0].mxu0
        %v8610 = vpop.f32.mrb[0].mxu0
        %v8611 = vadd.f32 0.0, %v8610
        %v8612 = vpop.f32.mrb[0].mxu0
        %8613 = vmatprep.mubr.bf16.mxu0 0
        %8614 = vmatmul.mubr.bf16.gmra.mrb[0].mxu0 %v8533
        %v8615 = vpop.f32.mrb[0].mxu0
        %v8616 = vadd.f32 0.0, %v8615
        %v8617 = vpop.f32.mrb[0].mxu0
        %v8618 = vpop.f32.mrb[0].mxu0
        %v8619 = vadd.f32 0.0, %v8618
        %v8620 = vpop.f32.mrb[0].mxu0
        %8621 = vmatprep.mubr.bf16.mxu0 0
        %8622 = vmatmul.mubr.bf16.gmra.mrb[0].mxu0 %v8535
        %v8623 = vpop.f32.mrb[0].mxu0
        %v8624 = vadd.f32 0.0, %v8623
        %v8625 = vpop.f32.mrb[0].mxu0
        %v8626 = vpop.f32.mrb[0].mxu0
        %v8627 = vadd.f32 0.0, %v8626
        %v8628 = vpop.f32.mrb[0].mxu0
        %8629 = vmatprep.mubr.bf16.mxu0 0
        %8630 = vmatmul.mubr.bf16.gmra.mrb[0].mxu0 %v8537
        %v8631 = vpop.f32.mrb[0].mxu0
        %v8632 = vadd.f32 0.0, %v8631
        %v8633 = vpop.f32.mrb[0].mxu0
        %v8634 = vpop.f32.mrb[0].mxu0
        %v8635 = vadd.f32 0.0, %v8634
        %v8636 = vpop.f32.mrb[0].mxu0
        %8637 = vmatprep.mubr.bf16.mxu0 0
        %8638 = vmatmul.mubr.bf16.gmra.mrb[0].mxu0 %v8539
        %v8639 = vpop.f32.mrb[0].mxu0
        %v8640 = vadd.f32 0.0, %v8639
        %v8641 = vpop.f32.mrb[0].mxu0
        %v8642 = vpop.f32.mrb[0].mxu0
        %v8643 = vadd.f32 0.0, %v8642
        %v8644 = vpop.f32.mrb[0].mxu0
        %8645 = vmatprep.mubr.bf16.mxu0 0
        %8646 = vmatmul.mubr.bf16.gmra.mrb[0].mxu0 %v8541
        %v8647 = vpop.f32.mrb[0].mxu0
        %v8648 = vadd.f32 0.0, %v8647
        %v8649 = vpop.f32.mrb[0].mxu0
        %v8650 = vpop.f32.mrb[0].mxu0
        %v8651 = vadd.f32 0.0, %v8650
        %v8652 = vpop.f32.mrb[0].mxu0
        %8653 = vmatprep.mubr.bf16.mxu0 0
        %8654 = vmatmul.mubr.bf16.gmra.mrb[0].mxu0 %v8543
        %v8655 = vpop.f32.mrb[0].mxu0
        %v8656 = vadd.f32 0.0, %v8655
        %v8657 = vpop.f32.mrb[0].mxu0
        %v8658 = vpop.f32.mrb[0].mxu0
        %v8659 = vadd.f32 0.0, %v8658
        %v8660 = vpop.f32.mrb[0].mxu0
        %8661 = vmatprep.mubr.bf16.mxu0 0
        %8662 = vmatmul.mubr.bf16.gmra.mrb[0].mxu0 %v8545
        %v8663 = vpop.f32.mrb[0].mxu0
        %v8664 = vadd.f32 0.0, %v8663
        %v8665 = vpop.f32.mrb[0].mxu0
        %v8666 = vpop.f32.mrb[0].mxu0
        %v8667 = vadd.f32 0.0, %v8666
        %v8668 = vpop.f32.mrb[0].mxu0
        %8669 = vmatprep.mubr.bf16.mxu0 0
        %8670 = vmatmul.mubr.bf16.gmra.mrb[0].mxu0 %v8547
        %v8671 = vpop.f32.mrb[0].mxu0
        %v8672 = vadd.f32 0.0, %v8671
        %v8673 = vpop.f32.mrb[0].mxu0
        %v8674 = vpop.f32.mrb[0].mxu0
        %v8675 = vadd.f32 0.0, %v8674
        %v8676 = vpop.f32.mrb[0].mxu0
        %8677 = vmatprep.mubr.bf16.mxu0 0
        %8678 = vmatmul.mubr.bf16.gmra.mrb[0].mxu0 %v8549
        %v8679 = vpop.f32.mrb[0].mxu0
        %v8680 = vadd.f32 0.0, %v8679
        %v8681 = vpop.f32.mrb[0].mxu0
        %v8682 = vpop.f32.mrb[0].mxu0
        %v8683 = vadd.f32 0.0, %v8682
        %v8684 = vpop.f32.mrb[0].mxu0
        %8685 = vmatprep.mubr.bf16.mxu0 0
        %8686 = vmatmul.mubr.bf16.gmra.mrb[0].mxu0 %v8551
        %v8687 = vpop.f32.mrb[0].mxu0
        %v8688 = vadd.f32 0.0, %v8687
        %v8689 = vpop.f32.mrb[0].mxu0
        %v8690 = vpop.f32.mrb[0].mxu0
        %v8691 = vadd.f32 0.0, %v8690
        %v8692 = vpop.f32.mrb[0].mxu0
        %8693 = vmatprep.mubr.bf16.mxu0 0
        %8694 = vmatmul.mubr.bf16.gmra.mrb[0].mxu0 %v8553
        %v8695 = vpop.f32.mrb[0].mxu0
        %v8696 = vadd.f32 0.0, %v8695
        %v8697 = vpop.f32.mrb[0].mxu0
        %v8698 = vpop.f32.mrb[0].mxu0
        %v8699 = vadd.f32 0.0, %v8698
        %v8700 = vpop.f32.mrb[0].mxu0
        %8701 = vmatprep.mubr.bf16.mxu0 0
        %8702 = vmatmul.mubr.bf16.gmra.mrb[0].mxu0 %v8555
        %v8703 = vpop.f32.mrb[0].mxu0
        %v8704 = vadd.f32 0.0, %v8703
        %v8705 = vpop.f32.mrb[0].mxu0
        %v8706 = vpop.f32.mrb[0].mxu0
        %v8707 = vadd.f32 0.0, %v8706
        %v8708 = vpop.f32.mrb[0].mxu0
        %8709 = vmatprep.mubr.bf16.mxu0 0
        %8710 = vmatmul.mubr.bf16.gmra.mrb[0].mxu0 %v8557
        %v8711 = vpop.f32.mrb[0].mxu0
        %v8712 = vadd.f32 0.0, %v8711
        %v8713 = vpop.f32.mrb[0].mxu0
        %v8714 = vpop.f32.mrb[0].mxu0
        %v8715 = vadd.f32 0.0, %v8714
        %v8716 = vpop.f32.mrb[0].mxu0
        %8717 = vmatprep.mubr.bf16.mxu0 0
        %8718 = vmatmul.mubr.bf16.gmra.mrb[0].mxu0 %v8559
        %v8719 = vpop.f32.mrb[0].mxu0
        %v8720 = vadd.f32 0.0, %v8719
        %v8721 = vpop.f32.mrb[0].mxu0
        %v8722 = vpop.f32.mrb[0].mxu0
        %v8723 = vadd.f32 0.0, %v8722
        %v8724 = vpop.f32.mrb[0].mxu0
        %8725 = vmatprep.mubr.bf16.mxu0 0
        %8726 = vmatmul.mubr.bf16.gmra.mrb[0].mxu0 %v8561
        %v8727 = vpop.f32.mrb[0].mxu0
        %v8728 = vadd.f32 0.0, %v8727
        %v8729 = vpop.f32.mrb[0].mxu0
        %v8730 = vpop.f32.mrb[0].mxu0
        %v8731 = vadd.f32 0.0, %v8730
        %v8732 = vpop.f32.mrb[0].mxu0
        %8733 = vmatprep.mubr.bf16.mxu0 0
        %8734 = vmatmul.mubr.bf16.gmra.mrb[0].mxu0 %v8563
        %v8735 = vpop.f32.mrb[0].mxu0
        %v8736 = vadd.f32 0.0, %v8735
        %v8737 = vpop.f32.mrb[0].mxu0
        %v8738 = vpop.f32.mrb[0].mxu0
        %v8739 = vadd.f32 0.0, %v8738
        %v8740 = vpop.f32.mrb[0].mxu0
        %8741 = vdwg.mxu0
        %v8742 = vadd.f32 %v8456, %v8600
        %v8743 = vadd.f32 %v8457, %v8603
        %v8744 = vadd.f32 %v8458, %v8608
        %v8745 = vadd.f32 %v8459, %v8611
        %v8746 = vadd.f32 %v8460, %v8616
        %v8747 = vadd.f32 %v8461, %v8619
        %v8748 = vadd.f32 %v8462, %v8624
        %v8749 = vadd.f32 %v8463, %v8627
        %v8750 = vadd.f32 %v8464, %v8632
        %v8751 = vadd.f32 %v8465, %v8635
        %v8752 = vadd.f32 %v8466, %v8640
        %v8753 = vadd.f32 %v8467, %v8643
        %v8754 = vadd.f32 %v8468, %v8648
        %v8755 = vadd.f32 %v8469, %v8651
        %v8756 = vadd.f32 %v8470, %v8656
        %v8757 = vadd.f32 %v8471, %v8659
        %v8758 = vadd.f32 %v8472, %v8664
        %v8759 = vadd.f32 %v8473, %v8667
        %v8760 = vadd.f32 %v8474, %v8672
        %v8761 = vadd.f32 %v8475, %v8675
        %v8762 = vadd.f32 %v8476, %v8680
        %v8763 = vadd.f32 %v8477, %v8683
        %v8764 = vadd.f32 %v8478, %v8688
        %v8765 = vadd.f32 %v8479, %v8691
        %v8766 = vadd.f32 %v8480, %v8696
        %v8767 = vadd.f32 %v8481, %v8699
        %v8768 = vadd.f32 %v8482, %v8704
        %v8769 = vadd.f32 %v8483, %v8707
        %v8770 = vadd.f32 %v8484, %v8712
        %v8771 = vadd.f32 %v8485, %v8715
        %v8772 = vadd.f32 %v8486, %v8720
        %v8773 = vadd.f32 %v8487, %v8723
        %8806 = vrot.lane.b32.xlu0 %v8608, 112
        %v8807 = vpop.permute.xlu0 %8806
        %8808 = vrot.lane.b32.xlu0 %v8611, 112
        %v8809 = vpop.permute.xlu0 %8808
        %8810 = vrot.lane.b32.xlu0 %v8616, 112
        %v8811 = vpop.permute.xlu0 %8810
        %8812 = vrot.lane.b32.xlu0 %v8619, 112
        %v8813 = vpop.permute.xlu0 %8812
        %8814 = vrot.lane.b32.xlu0 %v8624, 112
        %v8815 = vpop.permute.xlu0 %8814
        %8816 = vrot.lane.b32.xlu0 %v8627, 112
        %v8817 = vpop.permute.xlu0 %8816
        %8818 = vrot.lane.b32.xlu0 %v8632, 112
        %v8819 = vpop.permute.xlu0 %8818
        %8820 = vrot.lane.b32.xlu0 %v8635, 112
        %v8821 = vpop.permute.xlu0 %8820
        %8822 = vrot.lane.b32.xlu0 %v8640, 112
        %v8823 = vpop.permute.xlu0 %8822
        %8824 = vrot.lane.b32.xlu0 %v8643, 112
        %v8825 = vpop.permute.xlu0 %8824
        %8826 = vrot.lane.b32.xlu0 %v8648, 112
        %v8827 = vpop.permute.xlu0 %8826
        %8828 = vrot.lane.b32.xlu0 %v8651, 112
        %v8829 = vpop.permute.xlu0 %8828
        %8830 = vrot.lane.b32.xlu0 %v8656, 112
        %v8831 = vpop.permute.xlu0 %8830
        %8832 = vrot.lane.b32.xlu0 %v8659, 112
        %v8833 = vpop.permute.xlu0 %8832
        %8834 = vrot.lane.b32.xlu0 %v8664, 112
        %v8835 = vpop.permute.xlu0 %8834
        %8836 = vrot.lane.b32.xlu0 %v8667, 112
        %v8837 = vpop.permute.xlu0 %8836
        %8838 = vrot.lane.b32.xlu0 %v8672, 112
        %v8839 = vpop.permute.xlu0 %8838
        %8840 = vrot.lane.b32.xlu0 %v8675, 112
        %v8841 = vpop.permute.xlu0 %8840
        %8842 = vrot.lane.b32.xlu0 %v8680, 112
        %v8843 = vpop.permute.xlu0 %8842
        %8844 = vrot.lane.b32.xlu0 %v8683, 112
        %v8845 = vpop.permute.xlu0 %8844
        %8846 = vrot.lane.b32.xlu0 %v8688, 112
        %v8847 = vpop.permute.xlu0 %8846
        %8848 = vrot.lane.b32.xlu0 %v8691, 112
        %v8849 = vpop.permute.xlu0 %8848
        %8850 = vrot.lane.b32.xlu0 %v8696, 112
        %v8851 = vpop.permute.xlu0 %8850
        %8852 = vrot.lane.b32.xlu0 %v8699, 112
        %v8853 = vpop.permute.xlu0 %8852
        %8854 = vrot.lane.b32.xlu0 %v8704, 112
        %v8855 = vpop.permute.xlu0 %8854
        %8856 = vrot.lane.b32.xlu0 %v8707, 112
        %v8857 = vpop.permute.xlu0 %8856
        %8858 = vrot.lane.b32.xlu0 %v8712, 112
        %v8859 = vpop.permute.xlu0 %8858
        %8860 = vrot.lane.b32.xlu0 %v8715, 112
        %v8861 = vpop.permute.xlu0 %8860
        %8862 = vrot.lane.b32.xlu0 %v8720, 112
        %v8863 = vpop.permute.xlu0 %8862
        %8864 = vrot.lane.b32.xlu0 %v8723, 112
        %v8865 = vpop.permute.xlu0 %8864
        %8866 = vrot.lane.b32.xlu0 %v8728, 112
        %v8867 = vpop.permute.xlu0 %8866
        %8868 = vrot.lane.b32.xlu0 %v8731, 112
        %v8869 = vpop.permute.xlu0 %8868
        %v8902 = vadd.f32 %v8742, %v8807
        %v8903 = vadd.f32 %v8743, %v8809
        %v8904 = vadd.f32 %v8744, %v8811
        %v8905 = vadd.f32 %v8745, %v8813
        %v8906 = vadd.f32 %v8746, %v8815
        %v8907 = vadd.f32 %v8747, %v8817
        %v8908 = vadd.f32 %v8748, %v8819
        %v8909 = vadd.f32 %v8749, %v8821
        %v8910 = vadd.f32 %v8750, %v8823
        %v8911 = vadd.f32 %v8751, %v8825
        %v8912 = vadd.f32 %v8752, %v8827
        %v8913 = vadd.f32 %v8753, %v8829
        %v8914 = vadd.f32 %v8754, %v8831
        %v8915 = vadd.f32 %v8755, %v8833
        %v8916 = vadd.f32 %v8756, %v8835
        %v8917 = vadd.f32 %v8757, %v8837
        %v8918 = vadd.f32 %v8758, %v8839
        %v8919 = vadd.f32 %v8759, %v8841
        %v8920 = vadd.f32 %v8760, %v8843
        %v8921 = vadd.f32 %v8761, %v8845
        %v8922 = vadd.f32 %v8762, %v8847
        %v8923 = vadd.f32 %v8763, %v8849
        %v8924 = vadd.f32 %v8764, %v8851
        %v8925 = vadd.f32 %v8765, %v8853
        %v8926 = vadd.f32 %v8766, %v8855
        %v8927 = vadd.f32 %v8767, %v8857
        %v8928 = vadd.f32 %v8768, %v8859
        %v8929 = vadd.f32 %v8769, %v8861
        %v8930 = vadd.f32 %v8770, %v8863
        %v8931 = vadd.f32 %v8771, %v8865
        %v8932 = vadd.f32 %v8772, %v8867
        %v8933 = vadd.f32 %v8773, %v8869
        %8936 = vrot.lane.b32.xlu0 %v8616, 96
        %v8937 = vpop.permute.xlu0 %8936
        %8938 = vrot.lane.b32.xlu0 %v8619, 96
        %v8939 = vpop.permute.xlu0 %8938
        %8940 = vrot.lane.b32.xlu0 %v8624, 96
        %v8941 = vpop.permute.xlu0 %8940
        %8942 = vrot.lane.b32.xlu0 %v8627, 96
        %v8943 = vpop.permute.xlu0 %8942
        %8944 = vrot.lane.b32.xlu0 %v8632, 96
        %v8945 = vpop.permute.xlu0 %8944
        %8946 = vrot.lane.b32.xlu0 %v8635, 96
        %v8947 = vpop.permute.xlu0 %8946
        %8948 = vrot.lane.b32.xlu0 %v8640, 96
        %v8949 = vpop.permute.xlu0 %8948
        %8950 = vrot.lane.b32.xlu0 %v8643, 96
        %v8951 = vpop.permute.xlu0 %8950
        %8952 = vrot.lane.b32.xlu0 %v8648, 96
        %v8953 = vpop.permute.xlu0 %8952
        %8954 = vrot.lane.b32.xlu0 %v8651, 96
        %v8955 = vpop.permute.xlu0 %8954
        %8956 = vrot.lane.b32.xlu0 %v8656, 96
        %v8957 = vpop.permute.xlu0 %8956
        %8958 = vrot.lane.b32.xlu0 %v8659, 96
        %v8959 = vpop.permute.xlu0 %8958
        %8960 = vrot.lane.b32.xlu0 %v8664, 96
        %v8961 = vpop.permute.xlu0 %8960
        %8962 = vrot.lane.b32.xlu0 %v8667, 96
        %v8963 = vpop.permute.xlu0 %8962
        %8964 = vrot.lane.b32.xlu0 %v8672, 96
        %v8965 = vpop.permute.xlu0 %8964
        %8966 = vrot.lane.b32.xlu0 %v8675, 96
        %v8967 = vpop.permute.xlu0 %8966
        %8968 = vrot.lane.b32.xlu0 %v8680, 96
        %v8969 = vpop.permute.xlu0 %8968
        %8970 = vrot.lane.b32.xlu0 %v8683, 96
        %v8971 = vpop.permute.xlu0 %8970
        %8972 = vrot.lane.b32.xlu0 %v8688, 96
        %v8973 = vpop.permute.xlu0 %8972
        %8974 = vrot.lane.b32.xlu0 %v8691, 96
        %v8975 = vpop.permute.xlu0 %8974
        %8976 = vrot.lane.b32.xlu0 %v8696, 96
        %v8977 = vpop.permute.xlu0 %8976
        %8978 = vrot.lane.b32.xlu0 %v8699, 96
        %v8979 = vpop.permute.xlu0 %8978
        %8980 = vrot.lane.b32.xlu0 %v8704, 96
        %v8981 = vpop.permute.xlu0 %8980
        %8982 = vrot.lane.b32.xlu0 %v8707, 96
        %v8983 = vpop.permute.xlu0 %8982
        %8984 = vrot.lane.b32.xlu0 %v8712, 96
        %v8985 = vpop.permute.xlu0 %8984
        %8986 = vrot.lane.b32.xlu0 %v8715, 96
        %v8987 = vpop.permute.xlu0 %8986
        %8988 = vrot.lane.b32.xlu0 %v8720, 96
        %v8989 = vpop.permute.xlu0 %8988
        %8990 = vrot.lane.b32.xlu0 %v8723, 96
        %v8991 = vpop.permute.xlu0 %8990
        %8992 = vrot.lane.b32.xlu0 %v8728, 96
        %v8993 = vpop.permute.xlu0 %8992
        %8994 = vrot.lane.b32.xlu0 %v8731, 96
        %v8995 = vpop.permute.xlu0 %8994
        %8996 = vrot.lane.b32.xlu0 %v8736, 96
        %v8997 = vpop.permute.xlu0 %8996
        %8998 = vrot.lane.b32.xlu0 %v8739, 96
        %v8999 = vpop.permute.xlu0 %8998
        %v9032 = vadd.f32 %v8902, %v8937
        %v9033 = vadd.f32 %v8903, %v8939
        %v9034 = vadd.f32 %v8904, %v8941
        %v9035 = vadd.f32 %v8905, %v8943
        %v9036 = vadd.f32 %v8906, %v8945
        %v9037 = vadd.f32 %v8907, %v8947
        %v9038 = vadd.f32 %v8908, %v8949
        %v9039 = vadd.f32 %v8909, %v8951
        %v9040 = vadd.f32 %v8910, %v8953
        %v9041 = vadd.f32 %v8911, %v8955
        %v9042 = vadd.f32 %v8912, %v8957
        %v9043 = vadd.f32 %v8913, %v8959
        %v9044 = vadd.f32 %v8914, %v8961
        %v9045 = vadd.f32 %v8915, %v8963
        %v9046 = vadd.f32 %v8916, %v8965
        %v9047 = vadd.f32 %v8917, %v8967
        %v9048 = vadd.f32 %v8918, %v8969
        %v9049 = vadd.f32 %v8919, %v8971
        %v9050 = vadd.f32 %v8920, %v8973
        %v9051 = vadd.f32 %v8921, %v8975
        %v9052 = vadd.f32 %v8922, %v8977
        %v9053 = vadd.f32 %v8923, %v8979
        %v9054 = vadd.f32 %v8924, %v8981
        %v9055 = vadd.f32 %v8925, %v8983
        %v9056 = vadd.f32 %v8926, %v8985
        %v9057 = vadd.f32 %v8927, %v8987
        %v9058 = vadd.f32 %v8928, %v8989
        %v9059 = vadd.f32 %v8929, %v8991
        %v9060 = vadd.f32 %v8930, %v8993
        %v9061 = vadd.f32 %v8931, %v8995
        %v9062 = vadd.f32 %v8932, %v8997
        %v9063 = vadd.f32 %v8933, %v8999
        %v9064 = vld [vmem:[#allocation2 + $0x8] sm:$0xff]
        %v9065 = vld [vmem:[#allocation2 + $0x10] sm:$0x1]
        %v9066 = vld [vmem:[#allocation2 + $0x20] sm:$0xff]
        %v9067 = vld [vmem:[#allocation2 + $0x28] sm:$0x1]
        %v9068 = vld [vmem:[#allocation2 + $0x38] sm:$0xff]
        %v9069 = vld [vmem:[#allocation2 + $0x40] sm:$0x1]
        %v9070 = vld [vmem:[#allocation2 + $0x50] sm:$0xff]
        %v9071 = vld [vmem:[#allocation2 + $0x58] sm:$0x1]
        %v9072 = vld [vmem:[#allocation2 + $0x68] sm:$0xff]
        %v9073 = vld [vmem:[#allocation2 + $0x70] sm:$0x1]
        %v9074 = vld [vmem:[#allocation2 + $0x80] sm:$0xff]
        %v9075 = vld [vmem:[#allocation2 + $0x88] sm:$0x1]
        %v9076 = vld [vmem:[#allocation2 + $0x98] sm:$0xff]
        %v9077 = vld [vmem:[#allocation2 + $0xa0] sm:$0x1]
        %v9078 = vld [vmem:[#allocation2 + $0xb0] sm:$0xff]
        %v9079 = vld [vmem:[#allocation2 + $0xb8] sm:$0x1]
        %v9080 = vld [vmem:[#allocation2 + $0xc8] sm:$0xff]
        %v9081 = vld [vmem:[#allocation2 + $0xd0] sm:$0x1]
        %v9082 = vld [vmem:[#allocation2 + $0xe0] sm:$0xff]
        %v9083 = vld [vmem:[#allocation2 + $0xe8] sm:$0x1]
        %v9084 = vld [vmem:[#allocation2 + $0xf8] sm:$0xff]
        %v9085 = vld [vmem:[#allocation2 + $0x100] sm:$0x1]
        %v9086 = vld [vmem:[#allocation2 + $0x110] sm:$0xff]
        %v9087 = vld [vmem:[#allocation2 + $0x118] sm:$0x1]
        %v9088 = vld [vmem:[#allocation2 + $0x128] sm:$0xff]
        %v9089 = vld [vmem:[#allocation2 + $0x130] sm:$0x1]
        %v9090 = vld [vmem:[#allocation2 + $0x140] sm:$0xff]
        %v9091 = vld [vmem:[#allocation2 + $0x148] sm:$0x1]
        %v9092 = vld [vmem:[#allocation2 + $0x158] sm:$0xff]
        %v9093 = vld [vmem:[#allocation2 + $0x160] sm:$0x1]
        %v9094 = vld [vmem:[#allocation2 + $0x170] sm:$0xff]
        %v9095 = vld [vmem:[#allocation2 + $0x178] sm:$0x1]
        %v9096 = vld [vmem:[#allocation2 + $0x188] sm:$0xff]
        %v9097 = vld [vmem:[#allocation2 + $0x190] sm:$0x1]
        %v9098 = vld [vmem:[#allocation2 + $0x1a0] sm:$0xff]
        %v9099 = vld [vmem:[#allocation2 + $0x1a8] sm:$0x1]
        %v9101 = vshrl.u32 %v9064, 16
        %v9103 = vshll.u32 %v9064, 16
        %v9105 = vrot.slane %v9103, 1
        %v9106 = vor.u32 %v9101, %v9105
        %v9108 = vshll.u32 %v9065, 16
        %v9110 = vrot.slane %v9108, 1
        %v9111 = vsel %vm1690, %v9106, %v9110
        %v9113 = vshrl.u32 %v9066, 16
        %v9115 = vshll.u32 %v9066, 16
        %v9117 = vrot.slane %v9115, 1
        %v9118 = vor.u32 %v9113, %v9117
        %v9120 = vshll.u32 %v9067, 16
        %v9122 = vrot.slane %v9120, 1
        %v9123 = vsel %vm1690, %v9118, %v9122
        %v9125 = vshrl.u32 %v9068, 16
        %v9127 = vshll.u32 %v9068, 16
        %v9129 = vrot.slane %v9127, 1
        %v9130 = vor.u32 %v9125, %v9129
        %v9132 = vshll.u32 %v9069, 16
        %v9134 = vrot.slane %v9132, 1
        %v9135 = vsel %vm1690, %v9130, %v9134
        %v9137 = vshrl.u32 %v9070, 16
        %v9139 = vshll.u32 %v9070, 16
        %v9141 = vrot.slane %v9139, 1
        %v9142 = vor.u32 %v9137, %v9141
        %v9144 = vshll.u32 %v9071, 16
        %v9146 = vrot.slane %v9144, 1
        %v9147 = vsel %vm1690, %v9142, %v9146
        %v9149 = vshrl.u32 %v9072, 16
        %v9151 = vshll.u32 %v9072, 16
        %v9153 = vrot.slane %v9151, 1
        %v9154 = vor.u32 %v9149, %v9153
        %v9156 = vshll.u32 %v9073, 16
        %v9158 = vrot.slane %v9156, 1
        %v9159 = vsel %vm1690, %v9154, %v9158
        %v9161 = vshrl.u32 %v9074, 16
        %v9163 = vshll.u32 %v9074, 16
        %v9165 = vrot.slane %v9163, 1
        %v9166 = vor.u32 %v9161, %v9165
        %v9168 = vshll.u32 %v9075, 16
        %v9170 = vrot.slane %v9168, 1
        %v9171 = vsel %vm1690, %v9166, %v9170
        %v9173 = vshrl.u32 %v9076, 16
        %v9175 = vshll.u32 %v9076, 16
        %v9177 = vrot.slane %v9175, 1
        %v9178 = vor.u32 %v9173, %v9177
        %v9180 = vshll.u32 %v9077, 16
        %v9182 = vrot.slane %v9180, 1
        %v9183 = vsel %vm1690, %v9178, %v9182
        %v9185 = vshrl.u32 %v9078, 16
        %v9187 = vshll.u32 %v9078, 16
        %v9189 = vrot.slane %v9187, 1
        %v9190 = vor.u32 %v9185, %v9189
        %v9192 = vshll.u32 %v9079, 16
        %v9194 = vrot.slane %v9192, 1
        %v9195 = vsel %vm1690, %v9190, %v9194
        %v9197 = vshrl.u32 %v9080, 16
        %v9199 = vshll.u32 %v9080, 16
        %v9201 = vrot.slane %v9199, 1
        %v9202 = vor.u32 %v9197, %v9201
        %v9204 = vshll.u32 %v9081, 16
        %v9206 = vrot.slane %v9204, 1
        %v9207 = vsel %vm1690, %v9202, %v9206
        %v9209 = vshrl.u32 %v9082, 16
        %v9211 = vshll.u32 %v9082, 16
        %v9213 = vrot.slane %v9211, 1
        %v9214 = vor.u32 %v9209, %v9213
        %v9216 = vshll.u32 %v9083, 16
        %v9218 = vrot.slane %v9216, 1
        %v9219 = vsel %vm1690, %v9214, %v9218
        %v9221 = vshrl.u32 %v9084, 16
        %v9223 = vshll.u32 %v9084, 16
        %v9225 = vrot.slane %v9223, 1
        %v9226 = vor.u32 %v9221, %v9225
        %v9228 = vshll.u32 %v9085, 16
        %v9230 = vrot.slane %v9228, 1
        %v9231 = vsel %vm1690, %v9226, %v9230
        %v9233 = vshrl.u32 %v9086, 16
        %v9235 = vshll.u32 %v9086, 16
        %v9237 = vrot.slane %v9235, 1
        %v9238 = vor.u32 %v9233, %v9237
        %v9240 = vshll.u32 %v9087, 16
        %v9242 = vrot.slane %v9240, 1
        %v9243 = vsel %vm1690, %v9238, %v9242
        %v9245 = vshrl.u32 %v9088, 16
        %v9247 = vshll.u32 %v9088, 16
        %v9249 = vrot.slane %v9247, 1
        %v9250 = vor.u32 %v9245, %v9249
        %v9252 = vshll.u32 %v9089, 16
        %v9254 = vrot.slane %v9252, 1
        %v9255 = vsel %vm1690, %v9250, %v9254
        %v9257 = vshrl.u32 %v9090, 16
        %v9259 = vshll.u32 %v9090, 16
        %v9261 = vrot.slane %v9259, 1
        %v9262 = vor.u32 %v9257, %v9261
        %v9264 = vshll.u32 %v9091, 16
        %v9266 = vrot.slane %v9264, 1
        %v9267 = vsel %vm1690, %v9262, %v9266
        %v9269 = vshrl.u32 %v9092, 16
        %v9271 = vshll.u32 %v9092, 16
        %v9273 = vrot.slane %v9271, 1
        %v9274 = vor.u32 %v9269, %v9273
        %v9276 = vshll.u32 %v9093, 16
        %v9278 = vrot.slane %v9276, 1
        %v9279 = vsel %vm1690, %v9274, %v9278
        %v9281 = vshrl.u32 %v9094, 16
        %v9283 = vshll.u32 %v9094, 16
        %v9285 = vrot.slane %v9283, 1
        %v9286 = vor.u32 %v9281, %v9285
        %v9288 = vshll.u32 %v9095, 16
        %v9290 = vrot.slane %v9288, 1
        %v9291 = vsel %vm1690, %v9286, %v9290
        %v9293 = vshrl.u32 %v9096, 16
        %v9295 = vshll.u32 %v9096, 16
        %v9297 = vrot.slane %v9295, 1
        %v9298 = vor.u32 %v9293, %v9297
        %v9300 = vshll.u32 %v9097, 16
        %v9302 = vrot.slane %v9300, 1
        %v9303 = vsel %vm1690, %v9298, %v9302
        %v9305 = vshrl.u32 %v9098, 16
        %v9307 = vshll.u32 %v9098, 16
        %v9309 = vrot.slane %v9307, 1
        %v9310 = vor.u32 %v9305, %v9309
        %v9312 = vshll.u32 %v9099, 16
        %v9314 = vrot.slane %v9312, 1
        %v9315 = vsel %vm1690, %v9310, %v9314
        %s9316 = scalar_lea.vmem %s1, 528
        %v9317 = vld [vmem:[%s9316] sm:$0xf]
        %v9318 = vld [vmem:[%s9316 + $0x4] sm:$0xf]
        %v9319 = vld [vmem:[%s9316 + $0x8] sm:$0xf]
        %v9320 = vld [vmem:[%s9316 + $0xc] sm:$0xf]
        %v9321 = vld [vmem:[%s9316 + $0x10] sm:$0xf]
        %v9322 = vld [vmem:[%s9316 + $0x14] sm:$0xf]
        %v9323 = vld [vmem:[%s9316 + $0x18] sm:$0xf]
        %v9324 = vld [vmem:[%s9316 + $0x1c] sm:$0xf]
        %v9325 = vld [vmem:[%s9316 + $0x20] sm:$0xf]
        %v9326 = vld [vmem:[%s9316 + $0x24] sm:$0xf]
        %v9337 = vunpack.c.l.b16 %v9317
        %v9338 = vunpack.c.l.b16 %v9318
        %v9339 = vunpack.c.l.b16 %v9319
        %v9340 = vunpack.c.l.b16 %v9320
        %v9341 = vunpack.c.l.b16 %v9321
        %v9342 = vunpack.c.l.b16 %v9322
        %v9343 = vunpack.c.l.b16 %v9323
        %v9344 = vunpack.c.l.b16 %v9324
        %v9345 = vunpack.c.l.b16 %v9325
        %v9346 = vunpack.c.l.b16 %v9326
        %v9347 = vpack.c.b16 %v9338, %v9337
        %v9348 = vpack.c.b16 %v9340, %v9339
        %v9349 = vpack.c.b16 %v9342, %v9341
        %v9350 = vpack.c.b16 %v9344, %v9343
        %v9351 = vpack.c.b16 %v9346, %v9345
        %v9358 = vsel %vm7934, %v9111, 0
        %v9361 = vsel %vm7934, %v9123, 0
        %v9364 = vsel %vm7934, %v9135, 0
        %v9367 = vsel %vm7934, %v9147, 0
        %v9370 = vsel %vm7934, %v9159, 0
        %v9373 = vsel %vm7934, %v9171, 0
        %v9376 = vsel %vm7934, %v9183, 0
        %v9379 = vsel %vm7934, %v9195, 0
        %v9382 = vsel %vm7934, %v9207, 0
        %v9385 = vsel %vm7934, %v9219, 0
        %v9388 = vsel %vm7934, %v9231, 0
        %v9391 = vsel %vm7934, %v9243, 0
        %v9394 = vsel %vm7934, %v9255, 0
        %v9397 = vsel %vm7934, %v9267, 0
        %v9400 = vsel %vm7934, %v9279, 0
        %v9403 = vsel %vm7934, %v9291, 0
        %v9406 = vsel %vm7934, %v9303, 0
        %v9409 = vsel %vm7934, %v9315, 0
        %9411 = vmatprep.subr.bf16.mxu0 0
        %9412 = vmatpush1.bf16.msra.mxu0 %v9347
        %9413 = vmatprep.subr.bf16.mxu0 0
        %9414 = vmatpush1.bf16.msra.mxu0 %v9348
        %9415 = vmatprep.subr.bf16.mxu0 0
        %9416 = vmatpush1.bf16.msra.mxu0 %v9349
        %9417 = vmatprep.subr.bf16.mxu0 0
        %9418 = vmatpush1.bf16.msra.mxu0 %v9350
        %9419 = vmatprep.subr.bf16.mxu0 0
        %9420 = vmatpush1.bf16.msra.mxu0 %v9351
        %9421 = vmatprep.subr.bf16.mxu0 0
        %9422 = vmatpush1.bf16.msra.mxu0 0
        %9423 = vmatprep.subr.bf16.mxu0 0
        %9424 = vmatpush1.bf16.msra.mxu0 0
        %9425 = vmatprep.subr.bf16.mxu0 0
        %9426 = vmatpush1.bf16.msra.mxu0 0
        %9427 = vmatprep.subr.bf16.mxu0 0
        %9428 = vmatpush1.bf16.msra.mxu0 0
        %9429 = vmatprep.subr.bf16.mxu0 0
        %9430 = vmatpush1.bf16.msra.mxu0 0
        %9431 = vmatprep.subr.bf16.mxu0 0
        %9432 = vmatpush1.bf16.msra.mxu0 0
        %9433 = vmatprep.subr.bf16.mxu0 0
        %9434 = vmatpush1.bf16.msra.mxu0 0
        %9435 = vmatprep.subr.bf16.mxu0 0
        %9436 = vmatpush1.bf16.msra.mxu0 0
        %9437 = vmatprep.subr.bf16.mxu0 0
        %9438 = vmatpush1.bf16.msra.mxu0 0
        %9439 = vmatprep.subr.bf16.mxu0 0
        %9440 = vmatpush1.bf16.msra.mxu0 0
        %9441 = vmatprep.subr.bf16.mxu0 0
        %9442 = vmatpush1.bf16.msra.mxu0 0
        %9443 = vmatprep.mubr.bf16.mxu0 0
        %9444 = vmatmul.mubr.bf16.gmra.mrb[0].mxu0 %v9358
        %v9445 = vpop.f32.mrb[0].mxu0
        %v9446 = vadd.f32 0.0, %v9445
        %v9447 = vpop.f32.mrb[0].mxu0
        %v9448 = vpop.f32.mrb[0].mxu0
        %v9449 = vadd.f32 0.0, %v9448
        %v9450 = vpop.f32.mrb[0].mxu0
        %9451 = vmatprep.mubr.bf16.mxu0 0
        %9452 = vmatmul.mubr.bf16.gmra.mrb[0].mxu0 %v9361
        %v9453 = vpop.f32.mrb[0].mxu0
        %v9454 = vadd.f32 0.0, %v9453
        %v9455 = vpop.f32.mrb[0].mxu0
        %v9456 = vpop.f32.mrb[0].mxu0
        %v9457 = vadd.f32 0.0, %v9456
        %v9458 = vpop.f32.mrb[0].mxu0
        %9459 = vmatprep.mubr.bf16.mxu0 0
        %9460 = vmatmul.mubr.bf16.gmra.mrb[0].mxu0 %v9364
        %v9461 = vpop.f32.mrb[0].mxu0
        %v9462 = vadd.f32 0.0, %v9461
        %v9463 = vpop.f32.mrb[0].mxu0
        %v9464 = vpop.f32.mrb[0].mxu0
        %v9465 = vadd.f32 0.0, %v9464
        %v9466 = vpop.f32.mrb[0].mxu0
        %9467 = vmatprep.mubr.bf16.mxu0 0
        %9468 = vmatmul.mubr.bf16.gmra.mrb[0].mxu0 %v9367
        %v9469 = vpop.f32.mrb[0].mxu0
        %v9470 = vadd.f32 0.0, %v9469
        %v9471 = vpop.f32.mrb[0].mxu0
        %v9472 = vpop.f32.mrb[0].mxu0
        %v9473 = vadd.f32 0.0, %v9472
        %v9474 = vpop.f32.mrb[0].mxu0
        %9475 = vmatprep.mubr.bf16.mxu0 0
        %9476 = vmatmul.mubr.bf16.gmra.mrb[0].mxu0 %v9370
        %v9477 = vpop.f32.mrb[0].mxu0
        %v9478 = vadd.f32 0.0, %v9477
        %v9479 = vpop.f32.mrb[0].mxu0
        %v9480 = vpop.f32.mrb[0].mxu0
        %v9481 = vadd.f32 0.0, %v9480
        %v9482 = vpop.f32.mrb[0].mxu0
        %9483 = vmatprep.mubr.bf16.mxu0 0
        %9484 = vmatmul.mubr.bf16.gmra.mrb[0].mxu0 %v9373
        %v9485 = vpop.f32.mrb[0].mxu0
        %v9486 = vadd.f32 0.0, %v9485
        %v9487 = vpop.f32.mrb[0].mxu0
        %v9488 = vpop.f32.mrb[0].mxu0
        %v9489 = vadd.f32 0.0, %v9488
        %v9490 = vpop.f32.mrb[0].mxu0
        %9491 = vmatprep.mubr.bf16.mxu0 0
        %9492 = vmatmul.mubr.bf16.gmra.mrb[0].mxu0 %v9376
        %v9493 = vpop.f32.mrb[0].mxu0
        %v9494 = vadd.f32 0.0, %v9493
        %v9495 = vpop.f32.mrb[0].mxu0
        %v9496 = vpop.f32.mrb[0].mxu0
        %v9497 = vadd.f32 0.0, %v9496
        %v9498 = vpop.f32.mrb[0].mxu0
        %9499 = vmatprep.mubr.bf16.mxu0 0
        %9500 = vmatmul.mubr.bf16.gmra.mrb[0].mxu0 %v9379
        %v9501 = vpop.f32.mrb[0].mxu0
        %v9502 = vadd.f32 0.0, %v9501
        %v9503 = vpop.f32.mrb[0].mxu0
        %v9504 = vpop.f32.mrb[0].mxu0
        %v9505 = vadd.f32 0.0, %v9504
        %v9506 = vpop.f32.mrb[0].mxu0
        %9507 = vmatprep.mubr.bf16.mxu0 0
        %9508 = vmatmul.mubr.bf16.gmra.mrb[0].mxu0 %v9382
        %v9509 = vpop.f32.mrb[0].mxu0
        %v9510 = vadd.f32 0.0, %v9509
        %v9511 = vpop.f32.mrb[0].mxu0
        %v9512 = vpop.f32.mrb[0].mxu0
        %v9513 = vadd.f32 0.0, %v9512
        %v9514 = vpop.f32.mrb[0].mxu0
        %9515 = vmatprep.mubr.bf16.mxu0 0
        %9516 = vmatmul.mubr.bf16.gmra.mrb[0].mxu0 %v9385
        %v9517 = vpop.f32.mrb[0].mxu0
        %v9518 = vadd.f32 0.0, %v9517
        %v9519 = vpop.f32.mrb[0].mxu0
        %v9520 = vpop.f32.mrb[0].mxu0
        %v9521 = vadd.f32 0.0, %v9520
        %v9522 = vpop.f32.mrb[0].mxu0
        %9523 = vmatprep.mubr.bf16.mxu0 0
        %9524 = vmatmul.mubr.bf16.gmra.mrb[0].mxu0 %v9388
        %v9525 = vpop.f32.mrb[0].mxu0
        %v9526 = vadd.f32 0.0, %v9525
        %v9527 = vpop.f32.mrb[0].mxu0
        %v9528 = vpop.f32.mrb[0].mxu0
        %v9529 = vadd.f32 0.0, %v9528
        %v9530 = vpop.f32.mrb[0].mxu0
        %9531 = vmatprep.mubr.bf16.mxu0 0
        %9532 = vmatmul.mubr.bf16.gmra.mrb[0].mxu0 %v9391
        %v9533 = vpop.f32.mrb[0].mxu0
        %v9534 = vadd.f32 0.0, %v9533
        %v9535 = vpop.f32.mrb[0].mxu0
        %v9536 = vpop.f32.mrb[0].mxu0
        %v9537 = vadd.f32 0.0, %v9536
        %v9538 = vpop.f32.mrb[0].mxu0
        %9539 = vmatprep.mubr.bf16.mxu0 0
        %9540 = vmatmul.mubr.bf16.gmra.mrb[0].mxu0 %v9394
        %v9541 = vpop.f32.mrb[0].mxu0
        %v9542 = vadd.f32 0.0, %v9541
        %v9543 = vpop.f32.mrb[0].mxu0
        %v9544 = vpop.f32.mrb[0].mxu0
        %v9545 = vadd.f32 0.0, %v9544
        %v9546 = vpop.f32.mrb[0].mxu0
        %9547 = vmatprep.mubr.bf16.mxu0 0
        %9548 = vmatmul.mubr.bf16.gmra.mrb[0].mxu0 %v9397
        %v9549 = vpop.f32.mrb[0].mxu0
        %v9550 = vadd.f32 0.0, %v9549
        %v9551 = vpop.f32.mrb[0].mxu0
        %v9552 = vpop.f32.mrb[0].mxu0
        %v9553 = vadd.f32 0.0, %v9552
        %v9554 = vpop.f32.mrb[0].mxu0
        %9555 = vmatprep.mubr.bf16.mxu0 0
        %9556 = vmatmul.mubr.bf16.gmra.mrb[0].mxu0 %v9400
        %v9557 = vpop.f32.mrb[0].mxu0
        %v9558 = vadd.f32 0.0, %v9557
        %v9559 = vpop.f32.mrb[0].mxu0
        %v9560 = vpop.f32.mrb[0].mxu0
        %v9561 = vadd.f32 0.0, %v9560
        %v9562 = vpop.f32.mrb[0].mxu0
        %9563 = vmatprep.mubr.bf16.mxu0 0
        %9564 = vmatmul.mubr.bf16.gmra.mrb[0].mxu0 %v9403
        %v9565 = vpop.f32.mrb[0].mxu0
        %v9566 = vadd.f32 0.0, %v9565
        %v9567 = vpop.f32.mrb[0].mxu0
        %v9568 = vpop.f32.mrb[0].mxu0
        %v9569 = vadd.f32 0.0, %v9568
        %v9570 = vpop.f32.mrb[0].mxu0
        %9571 = vmatprep.mubr.bf16.mxu0 0
        %9572 = vmatmul.mubr.bf16.gmra.mrb[0].mxu0 %v9406
        %v9573 = vpop.f32.mrb[0].mxu0
        %v9574 = vadd.f32 0.0, %v9573
        %v9575 = vpop.f32.mrb[0].mxu0
        %v9576 = vpop.f32.mrb[0].mxu0
        %v9577 = vadd.f32 0.0, %v9576
        %v9578 = vpop.f32.mrb[0].mxu0
        %9579 = vmatprep.mubr.bf16.mxu0 0
        %9580 = vmatmul.mubr.bf16.gmra.mrb[0].mxu0 %v9409
        %v9581 = vpop.f32.mrb[0].mxu0
        %v9582 = vadd.f32 0.0, %v9581
        %v9583 = vpop.f32.mrb[0].mxu0
        %v9584 = vpop.f32.mrb[0].mxu0
        %v9585 = vadd.f32 0.0, %v9584
        %v9586 = vpop.f32.mrb[0].mxu0
        %9587 = vdwg.mxu0
        %v9588 = vadd.f32 %v9032, %v9446
        %v9589 = vadd.f32 %v9033, %v9449
        %v9590 = vadd.f32 %v9034, %v9454
        %v9591 = vadd.f32 %v9035, %v9457
        %v9592 = vadd.f32 %v9036, %v9462
        %v9593 = vadd.f32 %v9037, %v9465
        %v9594 = vadd.f32 %v9038, %v9470
        %v9595 = vadd.f32 %v9039, %v9473
        %v9596 = vadd.f32 %v9040, %v9478
        %v9597 = vadd.f32 %v9041, %v9481
        %v9598 = vadd.f32 %v9042, %v9486
        %v9599 = vadd.f32 %v9043, %v9489
        %v9600 = vadd.f32 %v9044, %v9494
        %v9601 = vadd.f32 %v9045, %v9497
        %v9602 = vadd.f32 %v9046, %v9502
        %v9603 = vadd.f32 %v9047, %v9505
        %v9604 = vadd.f32 %v9048, %v9510
        %v9605 = vadd.f32 %v9049, %v9513
        %v9606 = vadd.f32 %v9050, %v9518
        %v9607 = vadd.f32 %v9051, %v9521
        %v9608 = vadd.f32 %v9052, %v9526
        %v9609 = vadd.f32 %v9053, %v9529
        %v9610 = vadd.f32 %v9054, %v9534
        %v9611 = vadd.f32 %v9055, %v9537
        %v9612 = vadd.f32 %v9056, %v9542
        %v9613 = vadd.f32 %v9057, %v9545
        %v9614 = vadd.f32 %v9058, %v9550
        %v9615 = vadd.f32 %v9059, %v9553
        %v9616 = vadd.f32 %v9060, %v9558
        %v9617 = vadd.f32 %v9061, %v9561
        %v9618 = vadd.f32 %v9062, %v9566
        %v9619 = vadd.f32 %v9063, %v9569
        %9652 = vrot.lane.b32.xlu0 %v9454, 112
        %v9653 = vpop.permute.xlu0 %9652
        %9654 = vrot.lane.b32.xlu0 %v9457, 112
        %v9655 = vpop.permute.xlu0 %9654
        %9656 = vrot.lane.b32.xlu0 %v9462, 112
        %v9657 = vpop.permute.xlu0 %9656
        %9658 = vrot.lane.b32.xlu0 %v9465, 112
        %v9659 = vpop.permute.xlu0 %9658
        %9660 = vrot.lane.b32.xlu0 %v9470, 112
        %v9661 = vpop.permute.xlu0 %9660
        %9662 = vrot.lane.b32.xlu0 %v9473, 112
        %v9663 = vpop.permute.xlu0 %9662
        %9664 = vrot.lane.b32.xlu0 %v9478, 112
        %v9665 = vpop.permute.xlu0 %9664
        %9666 = vrot.lane.b32.xlu0 %v9481, 112
        %v9667 = vpop.permute.xlu0 %9666
        %9668 = vrot.lane.b32.xlu0 %v9486, 112
        %v9669 = vpop.permute.xlu0 %9668
        %9670 = vrot.lane.b32.xlu0 %v9489, 112
        %v9671 = vpop.permute.xlu0 %9670
        %9672 = vrot.lane.b32.xlu0 %v9494, 112
        %v9673 = vpop.permute.xlu0 %9672
        %9674 = vrot.lane.b32.xlu0 %v9497, 112
        %v9675 = vpop.permute.xlu0 %9674
        %9676 = vrot.lane.b32.xlu0 %v9502, 112
        %v9677 = vpop.permute.xlu0 %9676
        %9678 = vrot.lane.b32.xlu0 %v9505, 112
        %v9679 = vpop.permute.xlu0 %9678
        %9680 = vrot.lane.b32.xlu0 %v9510, 112
        %v9681 = vpop.permute.xlu0 %9680
        %9682 = vrot.lane.b32.xlu0 %v9513, 112
        %v9683 = vpop.permute.xlu0 %9682
        %9684 = vrot.lane.b32.xlu0 %v9518, 112
        %v9685 = vpop.permute.xlu0 %9684
        %9686 = vrot.lane.b32.xlu0 %v9521, 112
        %v9687 = vpop.permute.xlu0 %9686
        %9688 = vrot.lane.b32.xlu0 %v9526, 112
        %v9689 = vpop.permute.xlu0 %9688
        %9690 = vrot.lane.b32.xlu0 %v9529, 112
        %v9691 = vpop.permute.xlu0 %9690
        %9692 = vrot.lane.b32.xlu0 %v9534, 112
        %v9693 = vpop.permute.xlu0 %9692
        %9694 = vrot.lane.b32.xlu0 %v9537, 112
        %v9695 = vpop.permute.xlu0 %9694
        %9696 = vrot.lane.b32.xlu0 %v9542, 112
        %v9697 = vpop.permute.xlu0 %9696
        %9698 = vrot.lane.b32.xlu0 %v9545, 112
        %v9699 = vpop.permute.xlu0 %9698
        %9700 = vrot.lane.b32.xlu0 %v9550, 112
        %v9701 = vpop.permute.xlu0 %9700
        %9702 = vrot.lane.b32.xlu0 %v9553, 112
        %v9703 = vpop.permute.xlu0 %9702
        %9704 = vrot.lane.b32.xlu0 %v9558, 112
        %v9705 = vpop.permute.xlu0 %9704
        %9706 = vrot.lane.b32.xlu0 %v9561, 112
        %v9707 = vpop.permute.xlu0 %9706
        %9708 = vrot.lane.b32.xlu0 %v9566, 112
        %v9709 = vpop.permute.xlu0 %9708
        %9710 = vrot.lane.b32.xlu0 %v9569, 112
        %v9711 = vpop.permute.xlu0 %9710
        %9712 = vrot.lane.b32.xlu0 %v9574, 112
        %v9713 = vpop.permute.xlu0 %9712
        %9714 = vrot.lane.b32.xlu0 %v9577, 112
        %v9715 = vpop.permute.xlu0 %9714
        %v9748 = vadd.f32 %v9588, %v9653
        %v9749 = vadd.f32 %v9589, %v9655
        %v9750 = vadd.f32 %v9590, %v9657
        %v9751 = vadd.f32 %v9591, %v9659
        %v9752 = vadd.f32 %v9592, %v9661
        %v9753 = vadd.f32 %v9593, %v9663
        %v9754 = vadd.f32 %v9594, %v9665
        %v9755 = vadd.f32 %v9595, %v9667
        %v9756 = vadd.f32 %v9596, %v9669
        %v9757 = vadd.f32 %v9597, %v9671
        %v9758 = vadd.f32 %v9598, %v9673
        %v9759 = vadd.f32 %v9599, %v9675
        %v9760 = vadd.f32 %v9600, %v9677
        %v9761 = vadd.f32 %v9601, %v9679
        %v9762 = vadd.f32 %v9602, %v9681
        %v9763 = vadd.f32 %v9603, %v9683
        %v9764 = vadd.f32 %v9604, %v9685
        %v9765 = vadd.f32 %v9605, %v9687
        %v9766 = vadd.f32 %v9606, %v9689
        %v9767 = vadd.f32 %v9607, %v9691
        %v9768 = vadd.f32 %v9608, %v9693
        %v9769 = vadd.f32 %v9609, %v9695
        %v9770 = vadd.f32 %v9610, %v9697
        %v9771 = vadd.f32 %v9611, %v9699
        %v9772 = vadd.f32 %v9612, %v9701
        %v9773 = vadd.f32 %v9613, %v9703
        %v9774 = vadd.f32 %v9614, %v9705
        %v9775 = vadd.f32 %v9615, %v9707
        %v9776 = vadd.f32 %v9616, %v9709
        %v9777 = vadd.f32 %v9617, %v9711
        %v9778 = vadd.f32 %v9618, %v9713
        %v9779 = vadd.f32 %v9619, %v9715
        %9782 = vrot.lane.b32.xlu0 %v9462, 96
        %v9783 = vpop.permute.xlu0 %9782
        %9784 = vrot.lane.b32.xlu0 %v9465, 96
        %v9785 = vpop.permute.xlu0 %9784
        %9786 = vrot.lane.b32.xlu0 %v9470, 96
        %v9787 = vpop.permute.xlu0 %9786
        %9788 = vrot.lane.b32.xlu0 %v9473, 96
        %v9789 = vpop.permute.xlu0 %9788
        %9790 = vrot.lane.b32.xlu0 %v9478, 96
        %v9791 = vpop.permute.xlu0 %9790
        %9792 = vrot.lane.b32.xlu0 %v9481, 96
        %v9793 = vpop.permute.xlu0 %9792
        %9794 = vrot.lane.b32.xlu0 %v9486, 96
        %v9795 = vpop.permute.xlu0 %9794
        %9796 = vrot.lane.b32.xlu0 %v9489, 96
        %v9797 = vpop.permute.xlu0 %9796
        %9798 = vrot.lane.b32.xlu0 %v9494, 96
        %v9799 = vpop.permute.xlu0 %9798
        %9800 = vrot.lane.b32.xlu0 %v9497, 96
        %v9801 = vpop.permute.xlu0 %9800
        %9802 = vrot.lane.b32.xlu0 %v9502, 96
        %v9803 = vpop.permute.xlu0 %9802
        %9804 = vrot.lane.b32.xlu0 %v9505, 96
        %v9805 = vpop.permute.xlu0 %9804
        %9806 = vrot.lane.b32.xlu0 %v9510, 96
        %v9807 = vpop.permute.xlu0 %9806
        %9808 = vrot.lane.b32.xlu0 %v9513, 96
        %v9809 = vpop.permute.xlu0 %9808
        %9810 = vrot.lane.b32.xlu0 %v9518, 96
        %v9811 = vpop.permute.xlu0 %9810
        %9812 = vrot.lane.b32.xlu0 %v9521, 96
        %v9813 = vpop.permute.xlu0 %9812
        %9814 = vrot.lane.b32.xlu0 %v9526, 96
        %v9815 = vpop.permute.xlu0 %9814
        %9816 = vrot.lane.b32.xlu0 %v9529, 96
        %v9817 = vpop.permute.xlu0 %9816
        %9818 = vrot.lane.b32.xlu0 %v9534, 96
        %v9819 = vpop.permute.xlu0 %9818
        %9820 = vrot.lane.b32.xlu0 %v9537, 96
        %v9821 = vpop.permute.xlu0 %9820
        %9822 = vrot.lane.b32.xlu0 %v9542, 96
        %v9823 = vpop.permute.xlu0 %9822
        %9824 = vrot.lane.b32.xlu0 %v9545, 96
        %v9825 = vpop.permute.xlu0 %9824
        %9826 = vrot.lane.b32.xlu0 %v9550, 96
        %v9827 = vpop.permute.xlu0 %9826
        %9828 = vrot.lane.b32.xlu0 %v9553, 96
        %v9829 = vpop.permute.xlu0 %9828
        %9830 = vrot.lane.b32.xlu0 %v9558, 96
        %v9831 = vpop.permute.xlu0 %9830
        %9832 = vrot.lane.b32.xlu0 %v9561, 96
        %v9833 = vpop.permute.xlu0 %9832
        %9834 = vrot.lane.b32.xlu0 %v9566, 96
        %v9835 = vpop.permute.xlu0 %9834
        %9836 = vrot.lane.b32.xlu0 %v9569, 96
        %v9837 = vpop.permute.xlu0 %9836
        %9838 = vrot.lane.b32.xlu0 %v9574, 96
        %v9839 = vpop.permute.xlu0 %9838
        %9840 = vrot.lane.b32.xlu0 %v9577, 96
        %v9841 = vpop.permute.xlu0 %9840
        %9842 = vrot.lane.b32.xlu0 %v9582, 96
        %v9843 = vpop.permute.xlu0 %9842
        %9844 = vrot.lane.b32.xlu0 %v9585, 96
        %v9845 = vpop.permute.xlu0 %9844
        %v9878 = vadd.f32 %v9748, %v9783
        %v9879 = vadd.f32 %v9749, %v9785
        %v9880 = vadd.f32 %v9750, %v9787
        %v9881 = vadd.f32 %v9751, %v9789
        %v9882 = vadd.f32 %v9752, %v9791
        %v9883 = vadd.f32 %v9753, %v9793
        %v9884 = vadd.f32 %v9754, %v9795
        %v9885 = vadd.f32 %v9755, %v9797
        %v9886 = vadd.f32 %v9756, %v9799
        %v9887 = vadd.f32 %v9757, %v9801
        %v9888 = vadd.f32 %v9758, %v9803
        %v9889 = vadd.f32 %v9759, %v9805
        %v9890 = vadd.f32 %v9760, %v9807
        %v9891 = vadd.f32 %v9761, %v9809
        %v9892 = vadd.f32 %v9762, %v9811
        %v9893 = vadd.f32 %v9763, %v9813
        %v9894 = vadd.f32 %v9764, %v9815
        %v9895 = vadd.f32 %v9765, %v9817
        %v9896 = vadd.f32 %v9766, %v9819
        %v9897 = vadd.f32 %v9767, %v9821
        %v9898 = vadd.f32 %v9768, %v9823
        %v9899 = vadd.f32 %v9769, %v9825
        %v9900 = vadd.f32 %v9770, %v9827
        %v9901 = vadd.f32 %v9771, %v9829
        %v9902 = vadd.f32 %v9772, %v9831
        %v9903 = vadd.f32 %v9773, %v9833
        %v9904 = vadd.f32 %v9774, %v9835
        %v9905 = vadd.f32 %v9775, %v9837
        %v9906 = vadd.f32 %v9776, %v9839
        %v9907 = vadd.f32 %v9777, %v9841
        %v9908 = vadd.f32 %v9778, %v9843
        %v9909 = vadd.f32 %v9779, %v9845
        %s9910 = scalar_lea.vmem %s2, 3
        %v9911 = vld [vmem:[%s9910] sm:$0x1]
        %v9913 = vlaneseq
        %v9914 = vshrl.u32 %v9913, 7
        %v9915 = vsub.s32 0, %v9914
        %v9916 = vrot.slane %v9911, %v9915
        %v9918 = vadd.f32 %v9878, %v9916
        %v9919 = vadd.f32 %v9879, %v9916
        %v9920 = vadd.f32 %v9880, %v9916
        %v9921 = vadd.f32 %v9881, %v9916
        %v9922 = vadd.f32 %v9882, %v9916
        %v9923 = vadd.f32 %v9883, %v9916
        %v9924 = vadd.f32 %v9884, %v9916
        %v9925 = vadd.f32 %v9885, %v9916
        %v9926 = vadd.f32 %v9886, %v9916
        %v9927 = vadd.f32 %v9887, %v9916
        %v9928 = vadd.f32 %v9888, %v9916
        %v9929 = vadd.f32 %v9889, %v9916
        %v9930 = vadd.f32 %v9890, %v9916
        %v9931 = vadd.f32 %v9891, %v9916
        %v9932 = vadd.f32 %v9892, %v9916
        %v9933 = vadd.f32 %v9893, %v9916
        %v9934 = vadd.f32 %v9894, %v9916
        %v9935 = vadd.f32 %v9895, %v9916
        %v9936 = vadd.f32 %v9896, %v9916
        %v9937 = vadd.f32 %v9897, %v9916
        %v9938 = vadd.f32 %v9898, %v9916
        %v9939 = vadd.f32 %v9899, %v9916
        %v9940 = vadd.f32 %v9900, %v9916
        %v9941 = vadd.f32 %v9901, %v9916
        %v9942 = vadd.f32 %v9902, %v9916
        %v9943 = vadd.f32 %v9903, %v9916
        %v9944 = vadd.f32 %v9904, %v9916
        %v9945 = vadd.f32 %v9905, %v9916
        %v9946 = vadd.f32 %v9906, %v9916
        %v9947 = vadd.f32 %v9907, %v9916
        %v9948 = vadd.f32 %v9908, %v9916
        %v9949 = vadd.f32 %v9909, %v9916
        %vm9950 = vcmp.ge.f32.partialorder %v9918, 0.0
        %vm9951 = vcmp.ge.f32.partialorder %v9919, 0.0
        %vm9952 = vcmp.ge.f32.partialorder %v9920, 0.0
        %vm9953 = vcmp.ge.f32.partialorder %v9921, 0.0
        %vm9954 = vcmp.ge.f32.partialorder %v9922, 0.0
        %vm9955 = vcmp.ge.f32.partialorder %v9923, 0.0
        %vm9956 = vcmp.ge.f32.partialorder %v9924, 0.0
        %vm9957 = vcmp.ge.f32.partialorder %v9925, 0.0
        %vm9958 = vcmp.ge.f32.partialorder %v9926, 0.0
        %vm9959 = vcmp.ge.f32.partialorder %v9927, 0.0
        %vm9960 = vcmp.ge.f32.partialorder %v9928, 0.0
        %vm9961 = vcmp.ge.f32.partialorder %v9929, 0.0
        %vm9962 = vcmp.ge.f32.partialorder %v9930, 0.0
        %vm9963 = vcmp.ge.f32.partialorder %v9931, 0.0
        %vm9964 = vcmp.ge.f32.partialorder %v9932, 0.0
        %vm9965 = vcmp.ge.f32.partialorder %v9933, 0.0
        %vm9966 = vcmp.ge.f32.partialorder %v9934, 0.0
        %vm9967 = vcmp.ge.f32.partialorder %v9935, 0.0
        %vm9968 = vcmp.ge.f32.partialorder %v9936, 0.0
        %vm9969 = vcmp.ge.f32.partialorder %v9937, 0.0
        %vm9970 = vcmp.ge.f32.partialorder %v9938, 0.0
        %vm9971 = vcmp.ge.f32.partialorder %v9939, 0.0
        %vm9972 = vcmp.ge.f32.partialorder %v9940, 0.0
        %vm9973 = vcmp.ge.f32.partialorder %v9941, 0.0
        %vm9974 = vcmp.ge.f32.partialorder %v9942, 0.0
        %vm9975 = vcmp.ge.f32.partialorder %v9943, 0.0
        %vm9976 = vcmp.ge.f32.partialorder %v9944, 0.0
        %vm9977 = vcmp.ge.f32.partialorder %v9945, 0.0
        %vm9978 = vcmp.ge.f32.partialorder %v9946, 0.0
        %vm9979 = vcmp.ge.f32.partialorder %v9947, 0.0
        %vm9980 = vcmp.ge.f32.partialorder %v9948, 0.0
        %vm9981 = vcmp.ge.f32.partialorder %v9949, 0.0
        %v9982 = vmul.f32 %v9918, 0.2
        %v9983 = vmul.f32 %v9919, 0.2
        %v9984 = vmul.f32 %v9920, 0.2
        %v9985 = vmul.f32 %v9921, 0.2
        %v9986 = vmul.f32 %v9922, 0.2
        %v9987 = vmul.f32 %v9923, 0.2
        %v9988 = vmul.f32 %v9924, 0.2
        %v9989 = vmul.f32 %v9925, 0.2
        %v9990 = vmul.f32 %v9926, 0.2
        %v9991 = vmul.f32 %v9927, 0.2
        %v9992 = vmul.f32 %v9928, 0.2
        %v9993 = vmul.f32 %v9929, 0.2
        %v9994 = vmul.f32 %v9930, 0.2
        %v9995 = vmul.f32 %v9931, 0.2
        %v9996 = vmul.f32 %v9932, 0.2
        %v9997 = vmul.f32 %v9933, 0.2
        %v9998 = vmul.f32 %v9934, 0.2
        %v9999 = vmul.f32 %v9935, 0.2
        %v10000 = vmul.f32 %v9936, 0.2
        %v10001 = vmul.f32 %v9937, 0.2
        %v10002 = vmul.f32 %v9938, 0.2
        %v10003 = vmul.f32 %v9939, 0.2
        %v10004 = vmul.f32 %v9940, 0.2
        %v10005 = vmul.f32 %v9941, 0.2
        %v10006 = vmul.f32 %v9942, 0.2
        %v10007 = vmul.f32 %v9943, 0.2
        %v10008 = vmul.f32 %v9944, 0.2
        %v10009 = vmul.f32 %v9945, 0.2
        %v10010 = vmul.f32 %v9946, 0.2
        %v10011 = vmul.f32 %v9947, 0.2
        %v10012 = vmul.f32 %v9948, 0.2
        %v10013 = vmul.f32 %v9949, 0.2
        %v10014 = vsel %vm9950, %v9918, %v9982
        %v10015 = vsel %vm9951, %v9919, %v9983
        %v10016 = vsel %vm9952, %v9920, %v9984
        %v10017 = vsel %vm9953, %v9921, %v9985
        %v10018 = vsel %vm9954, %v9922, %v9986
        %v10019 = vsel %vm9955, %v9923, %v9987
        %v10020 = vsel %vm9956, %v9924, %v9988
        %v10021 = vsel %vm9957, %v9925, %v9989
        %v10022 = vsel %vm9958, %v9926, %v9990
        %v10023 = vsel %vm9959, %v9927, %v9991
        %v10024 = vsel %vm9960, %v9928, %v9992
        %v10025 = vsel %vm9961, %v9929, %v9993
        %v10026 = vsel %vm9962, %v9930, %v9994
        %v10027 = vsel %vm9963, %v9931, %v9995
        %v10028 = vsel %vm9964, %v9932, %v9996
        %v10029 = vsel %vm9965, %v9933, %v9997
        %v10030 = vsel %vm9966, %v9934, %v9998
        %v10031 = vsel %vm9967, %v9935, %v9999
        %v10032 = vsel %vm9968, %v9936, %v10000
        %v10033 = vsel %vm9969, %v9937, %v10001
        %v10034 = vsel %vm9970, %v9938, %v10002
        %v10035 = vsel %vm9971, %v9939, %v10003
        %v10036 = vsel %vm9972, %v9940, %v10004
        %v10037 = vsel %vm9973, %v9941, %v10005
        %v10038 = vsel %vm9974, %v9942, %v10006
        %v10039 = vsel %vm9975, %v9943, %v10007
        %v10040 = vsel %vm9976, %v9944, %v10008
        %v10041 = vsel %vm9977, %v9945, %v10009
        %v10042 = vsel %vm9978, %v9946, %v10010
        %v10043 = vsel %vm9979, %v9947, %v10011
        %v10044 = vsel %vm9980, %v9948, %v10012
        %v10045 = vsel %vm9981, %v9949, %v10013
        %v10046 = vpack.c.bf16 %v10015, %v10014
        %v10047 = vpack.c.bf16 %v10017, %v10016
        %v10048 = vpack.c.bf16 %v10019, %v10018
        %v10049 = vpack.c.bf16 %v10021, %v10020
        %v10050 = vpack.c.bf16 %v10023, %v10022
        %v10051 = vpack.c.bf16 %v10025, %v10024
        %v10052 = vpack.c.bf16 %v10027, %v10026
        %v10053 = vpack.c.bf16 %v10029, %v10028
        %v10054 = vpack.c.bf16 %v10031, %v10030
        %v10055 = vpack.c.bf16 %v10033, %v10032
        %v10056 = vpack.c.bf16 %v10035, %v10034
        %v10057 = vpack.c.bf16 %v10037, %v10036
        %v10058 = vpack.c.bf16 %v10039, %v10038
        %v10059 = vpack.c.bf16 %v10041, %v10040
        %v10060 = vpack.c.bf16 %v10043, %v10042
        %v10061 = vpack.c.bf16 %v10045, %v10044
        %10078 = vrot.lane.b32.xlu0 %v10046, 80
        %v10079 = vpop.permute.xlu0 %10078
        %10080 = vrot.lane.b32.xlu0 %v10047, 80
        %v10081 = vpop.permute.xlu0 %10080
        %10082 = vrot.lane.b32.xlu0 %v10048, 80
        %v10083 = vpop.permute.xlu0 %10082
        %10084 = vrot.lane.b32.xlu0 %v10049, 80
        %v10085 = vpop.permute.xlu0 %10084
        %10086 = vrot.lane.b32.xlu0 %v10050, 80
        %v10087 = vpop.permute.xlu0 %10086
        %10088 = vrot.lane.b32.xlu0 %v10051, 80
        %v10089 = vpop.permute.xlu0 %10088
        %10090 = vrot.lane.b32.xlu0 %v10052, 80
        %v10091 = vpop.permute.xlu0 %10090
        %10092 = vrot.lane.b32.xlu0 %v10053, 80
        %v10093 = vpop.permute.xlu0 %10092
        %10094 = vrot.lane.b32.xlu0 %v10054, 80
        %v10095 = vpop.permute.xlu0 %10094
        %10096 = vrot.lane.b32.xlu0 %v10055, 80
        %v10097 = vpop.permute.xlu0 %10096
        %10098 = vrot.lane.b32.xlu0 %v10056, 80
        %v10099 = vpop.permute.xlu0 %10098
        %10100 = vrot.lane.b32.xlu0 %v10057, 80
        %v10101 = vpop.permute.xlu0 %10100
        %10102 = vrot.lane.b32.xlu0 %v10058, 80
        %v10103 = vpop.permute.xlu0 %10102
        %10104 = vrot.lane.b32.xlu0 %v10059, 80
        %v10105 = vpop.permute.xlu0 %10104
        %10106 = vrot.lane.b32.xlu0 %v10060, 80
        %v10107 = vpop.permute.xlu0 %10106
        %10108 = vrot.lane.b32.xlu0 %v10061, 80
        %v10109 = vpop.permute.xlu0 %10108
        %vm10126 = vcmask 786048
        %10127 = vst.msk [vmem:[%s262 + $0x8] sm:$0xff] %vm10126, %v10079
        %10128 = vst.msk [vmem:[%s262 + $0x20] sm:$0xff] %vm10126, %v10081
        %10129 = vst.msk [vmem:[%s262 + $0x38] sm:$0xff] %vm10126, %v10083
        %10130 = vst.msk [vmem:[%s262 + $0x50] sm:$0xff] %vm10126, %v10085
        %10131 = vst.msk [vmem:[%s262 + $0x68] sm:$0xff] %vm10126, %v10087
        %10132 = vst.msk [vmem:[%s262 + $0x80] sm:$0xff] %vm10126, %v10089
        %10133 = vst.msk [vmem:[%s262 + $0x98] sm:$0xff] %vm10126, %v10091
        %10134 = vst.msk [vmem:[%s262 + $0xb0] sm:$0xff] %vm10126, %v10093
        %10135 = vst.msk [vmem:[%s262 + $0xc8] sm:$0xff] %vm10126, %v10095
        %10136 = vst.msk [vmem:[%s262 + $0xe0] sm:$0xff] %vm10126, %v10097
        %10137 = vst.msk [vmem:[%s262 + $0xf8] sm:$0xff] %vm10126, %v10099
        %10138 = vst.msk [vmem:[%s262 + $0x110] sm:$0xff] %vm10126, %v10101
        %10139 = vst.msk [vmem:[%s262 + $0x128] sm:$0xff] %vm10126, %v10103
        %10140 = vst.msk [vmem:[%s262 + $0x140] sm:$0xff] %vm10126, %v10105
        %10141 = vst.msk [vmem:[%s262 + $0x158] sm:$0xff] %vm10126, %v10107
        %10142 = vst.msk [vmem:[%s262 + $0x170] sm:$0xff] %vm10126, %v10109
        %v10143 = vld [vmem:[#allocation2] sm:$0x80]
        %v10144 = vld [vmem:[#allocation2 + $0x8] sm:$0xff]
        %v10145 = vld [vmem:[#allocation2 + $0x18] sm:$0x80]
        %v10146 = vld [vmem:[#allocation2 + $0x20] sm:$0xff]
        %v10147 = vld [vmem:[#allocation2 + $0x30] sm:$0x80]
        %v10148 = vld [vmem:[#allocation2 + $0x38] sm:$0xff]
        %v10149 = vld [vmem:[#allocation2 + $0x48] sm:$0x80]
        %v10150 = vld [vmem:[#allocation2 + $0x50] sm:$0xff]
        %v10151 = vld [vmem:[#allocation2 + $0x60] sm:$0x80]
        %v10152 = vld [vmem:[#allocation2 + $0x68] sm:$0xff]
        %v10153 = vld [vmem:[#allocation2 + $0x78] sm:$0x80]
        %v10154 = vld [vmem:[#allocation2 + $0x80] sm:$0xff]
        %v10155 = vld [vmem:[#allocation2 + $0x90] sm:$0x80]
        %v10156 = vld [vmem:[#allocation2 + $0x98] sm:$0xff]
        %v10157 = vld [vmem:[#allocation2 + $0xa8] sm:$0x80]
        %v10158 = vld [vmem:[#allocation2 + $0xb0] sm:$0xff]
        %v10159 = vld [vmem:[#allocation2 + $0xc0] sm:$0x80]
        %v10160 = vld [vmem:[#allocation2 + $0xc8] sm:$0xff]
        %v10161 = vld [vmem:[#allocation2 + $0xd8] sm:$0x80]
        %v10162 = vld [vmem:[#allocation2 + $0xe0] sm:$0xff]
        %v10163 = vld [vmem:[#allocation2 + $0xf0] sm:$0x80]
        %v10164 = vld [vmem:[#allocation2 + $0xf8] sm:$0xff]
        %v10165 = vld [vmem:[#allocation2 + $0x108] sm:$0x80]
        %v10166 = vld [vmem:[#allocation2 + $0x110] sm:$0xff]
        %v10167 = vld [vmem:[#allocation2 + $0x120] sm:$0x80]
        %v10168 = vld [vmem:[#allocation2 + $0x128] sm:$0xff]
        %v10169 = vld [vmem:[#allocation2 + $0x138] sm:$0x80]
        %v10170 = vld [vmem:[#allocation2 + $0x140] sm:$0xff]
        %v10171 = vld [vmem:[#allocation2 + $0x150] sm:$0x80]
        %v10172 = vld [vmem:[#allocation2 + $0x158] sm:$0xff]
        %v10173 = vld [vmem:[#allocation2 + $0x168] sm:$0x80]
        %v10174 = vld [vmem:[#allocation2 + $0x170] sm:$0xff]
        %v10175 = vld [vmem:[#allocation2 + $0x180] sm:$0x80]
        %v10176 = vld [vmem:[#allocation2 + $0x188] sm:$0xff]
        %v10177 = vld [vmem:[#allocation2 + $0x198] sm:$0x80]
        %v10178 = vld [vmem:[#allocation2 + $0x1a0] sm:$0xff]
        %v10180 = vshrl.u32 %v10143, 16
        %v10182 = vrot.slane %v10180, 7
        %v10184 = vshrl.u32 %v10144, 16
        %v10186 = vrot.slane %v10184, 7
        %v10187 = vshll.u32 %v10144, 16
        %v10189 = vor.u32 %v10186, %v10187
        %v10190 = vsel %vm316, %v10182, %v10189
        %v10192 = vshrl.u32 %v10145, 16
        %v10194 = vrot.slane %v10192, 7
        %v10196 = vshrl.u32 %v10146, 16
        %v10198 = vrot.slane %v10196, 7
        %v10199 = vshll.u32 %v10146, 16
        %v10201 = vor.u32 %v10198, %v10199
        %v10202 = vsel %vm316, %v10194, %v10201
        %v10204 = vshrl.u32 %v10147, 16
        %v10206 = vrot.slane %v10204, 7
        %v10208 = vshrl.u32 %v10148, 16
        %v10210 = vrot.slane %v10208, 7
        %v10211 = vshll.u32 %v10148, 16
        %v10213 = vor.u32 %v10210, %v10211
        %v10214 = vsel %vm316, %v10206, %v10213
        %v10216 = vshrl.u32 %v10149, 16
        %v10218 = vrot.slane %v10216, 7
        %v10220 = vshrl.u32 %v10150, 16
        %v10222 = vrot.slane %v10220, 7
        %v10223 = vshll.u32 %v10150, 16
        %v10225 = vor.u32 %v10222, %v10223
        %v10226 = vsel %vm316, %v10218, %v10225
        %v10228 = vshrl.u32 %v10151, 16
        %v10230 = vrot.slane %v10228, 7
        %v10232 = vshrl.u32 %v10152, 16
        %v10234 = vrot.slane %v10232, 7
        %v10235 = vshll.u32 %v10152, 16
        %v10237 = vor.u32 %v10234, %v10235
        %v10238 = vsel %vm316, %v10230, %v10237
        %v10240 = vshrl.u32 %v10153, 16
        %v10242 = vrot.slane %v10240, 7
        %v10244 = vshrl.u32 %v10154, 16
        %v10246 = vrot.slane %v10244, 7
        %v10247 = vshll.u32 %v10154, 16
        %v10249 = vor.u32 %v10246, %v10247
        %v10250 = vsel %vm316, %v10242, %v10249
        %v10252 = vshrl.u32 %v10155, 16
        %v10254 = vrot.slane %v10252, 7
        %v10256 = vshrl.u32 %v10156, 16
        %v10258 = vrot.slane %v10256, 7
        %v10259 = vshll.u32 %v10156, 16
        %v10261 = vor.u32 %v10258, %v10259
        %v10262 = vsel %vm316, %v10254, %v10261
        %v10264 = vshrl.u32 %v10157, 16
        %v10266 = vrot.slane %v10264, 7
        %v10268 = vshrl.u32 %v10158, 16
        %v10270 = vrot.slane %v10268, 7
        %v10271 = vshll.u32 %v10158, 16
        %v10273 = vor.u32 %v10270, %v10271
        %v10274 = vsel %vm316, %v10266, %v10273
        %v10276 = vshrl.u32 %v10159, 16
        %v10278 = vrot.slane %v10276, 7
        %v10280 = vshrl.u32 %v10160, 16
        %v10282 = vrot.slane %v10280, 7
        %v10283 = vshll.u32 %v10160, 16
        %v10285 = vor.u32 %v10282, %v10283
        %v10286 = vsel %vm316, %v10278, %v10285
        %v10288 = vshrl.u32 %v10161, 16
        %v10290 = vrot.slane %v10288, 7
        %v10292 = vshrl.u32 %v10162, 16
        %v10294 = vrot.slane %v10292, 7
        %v10295 = vshll.u32 %v10162, 16
        %v10297 = vor.u32 %v10294, %v10295
        %v10298 = vsel %vm316, %v10290, %v10297
        %v10300 = vshrl.u32 %v10163, 16
        %v10302 = vrot.slane %v10300, 7
        %v10304 = vshrl.u32 %v10164, 16
        %v10306 = vrot.slane %v10304, 7
        %v10307 = vshll.u32 %v10164, 16
        %v10309 = vor.u32 %v10306, %v10307
        %v10310 = vsel %vm316, %v10302, %v10309
        %v10312 = vshrl.u32 %v10165, 16
        %v10314 = vrot.slane %v10312, 7
        %v10316 = vshrl.u32 %v10166, 16
        %v10318 = vrot.slane %v10316, 7
        %v10319 = vshll.u32 %v10166, 16
        %v10321 = vor.u32 %v10318, %v10319
        %v10322 = vsel %vm316, %v10314, %v10321
        %v10324 = vshrl.u32 %v10167, 16
        %v10326 = vrot.slane %v10324, 7
        %v10328 = vshrl.u32 %v10168, 16
        %v10330 = vrot.slane %v10328, 7
        %v10331 = vshll.u32 %v10168, 16
        %v10333 = vor.u32 %v10330, %v10331
        %v10334 = vsel %vm316, %v10326, %v10333
        %v10336 = vshrl.u32 %v10169, 16
        %v10338 = vrot.slane %v10336, 7
        %v10340 = vshrl.u32 %v10170, 16
        %v10342 = vrot.slane %v10340, 7
        %v10343 = vshll.u32 %v10170, 16
        %v10345 = vor.u32 %v10342, %v10343
        %v10346 = vsel %vm316, %v10338, %v10345
        %v10348 = vshrl.u32 %v10171, 16
        %v10350 = vrot.slane %v10348, 7
        %v10352 = vshrl.u32 %v10172, 16
        %v10354 = vrot.slane %v10352, 7
        %v10355 = vshll.u32 %v10172, 16
        %v10357 = vor.u32 %v10354, %v10355
        %v10358 = vsel %vm316, %v10350, %v10357
        %v10360 = vshrl.u32 %v10173, 16
        %v10362 = vrot.slane %v10360, 7
        %v10364 = vshrl.u32 %v10174, 16
        %v10366 = vrot.slane %v10364, 7
        %v10367 = vshll.u32 %v10174, 16
        %v10369 = vor.u32 %v10366, %v10367
        %v10370 = vsel %vm316, %v10362, %v10369
        %v10372 = vshrl.u32 %v10175, 16
        %v10374 = vrot.slane %v10372, 7
        %v10376 = vshrl.u32 %v10176, 16
        %v10378 = vrot.slane %v10376, 7
        %v10379 = vshll.u32 %v10176, 16
        %v10381 = vor.u32 %v10378, %v10379
        %v10382 = vsel %vm316, %v10374, %v10381
        %v10384 = vshrl.u32 %v10177, 16
        %v10386 = vrot.slane %v10384, 7
        %v10388 = vshrl.u32 %v10178, 16
        %v10390 = vrot.slane %v10388, 7
        %v10391 = vshll.u32 %v10178, 16
        %v10393 = vor.u32 %v10390, %v10391
        %v10394 = vsel %vm316, %v10386, %v10393
        %s10395 = scalar_lea.vmem %s1, 576
        %v10396 = vld [vmem:[%s10395] sm:$0xf]
        %v10397 = vld [vmem:[%s10395 + $0x4] sm:$0xf]
        %v10398 = vld [vmem:[%s10395 + $0x8] sm:$0xf]
        %v10399 = vld [vmem:[%s10395 + $0xc] sm:$0xf]
        %v10400 = vld [vmem:[%s10395 + $0x10] sm:$0xf]
        %v10401 = vld [vmem:[%s10395 + $0x14] sm:$0xf]
        %v10402 = vld [vmem:[%s10395 + $0x18] sm:$0xf]
        %v10403 = vld [vmem:[%s10395 + $0x1c] sm:$0xf]
        %v10404 = vld [vmem:[%s10395 + $0x20] sm:$0xf]
        %v10405 = vld [vmem:[%s10395 + $0x24] sm:$0xf]
        %v10406 = vld [vmem:[%s10395 + $0x28] sm:$0xf]
        %v10407 = vld [vmem:[%s10395 + $0x2c] sm:$0xf]
        %v10420 = vunpack.c.l.b16 %v10396
        %v10421 = vunpack.c.l.b16 %v10397
        %v10422 = vunpack.c.l.b16 %v10398
        %v10423 = vunpack.c.l.b16 %v10399
        %v10424 = vunpack.c.l.b16 %v10400
        %v10425 = vunpack.c.l.b16 %v10401
        %v10426 = vunpack.c.l.b16 %v10402
        %v10427 = vunpack.c.l.b16 %v10403
        %v10428 = vunpack.c.l.b16 %v10404
        %v10429 = vunpack.c.l.b16 %v10405
        %v10430 = vunpack.c.l.b16 %v10406
        %v10431 = vunpack.c.l.b16 %v10407
        %v10432 = vpack.c.b16 %v10421, %v10420
        %v10433 = vpack.c.b16 %v10423, %v10422
        %v10434 = vpack.c.b16 %v10425, %v10424
        %v10435 = vpack.c.b16 %v10427, %v10426
        %v10436 = vpack.c.b16 %v10429, %v10428
        %v10437 = vpack.c.b16 %v10431, %v10430
        %v10445 = vsel %vm170, %v10190, 0
        %v10448 = vsel %vm170, %v10202, 0
        %v10451 = vsel %vm170, %v10214, 0
        %v10454 = vsel %vm170, %v10226, 0
        %v10457 = vsel %vm170, %v10238, 0
        %v10460 = vsel %vm170, %v10250, 0
        %v10463 = vsel %vm170, %v10262, 0
        %v10466 = vsel %vm170, %v10274, 0
        %v10469 = vsel %vm170, %v10286, 0
        %v10472 = vsel %vm170, %v10298, 0
        %v10475 = vsel %vm170, %v10310, 0
        %v10478 = vsel %vm170, %v10322, 0
        %v10481 = vsel %vm170, %v10334, 0
        %v10484 = vsel %vm170, %v10346, 0
        %v10487 = vsel %vm170, %v10358, 0
        %v10490 = vsel %vm170, %v10370, 0
        %v10493 = vsel %vm170, %v10382, 0
        %v10496 = vsel %vm170, %v10394, 0
        %10498 = vmatprep.subr.bf16.mxu0 0
        %10499 = vmatpush1.bf16.msra.mxu0 %v10432
        %10500 = vmatprep.subr.bf16.mxu0 0
        %10501 = vmatpush1.bf16.msra.mxu0 %v10433
        %10502 = vmatprep.subr.bf16.mxu0 0
        %10503 = vmatpush1.bf16.msra.mxu0 %v10434
        %10504 = vmatprep.subr.bf16.mxu0 0
        %10505 = vmatpush1.bf16.msra.mxu0 %v10435
        %10506 = vmatprep.subr.bf16.mxu0 0
        %10507 = vmatpush1.bf16.msra.mxu0 %v10436
        %10508 = vmatprep.subr.bf16.mxu0 0
        %10509 = vmatpush1.bf16.msra.mxu0 %v10437
        %10510 = vmatprep.subr.bf16.mxu0 0
        %10511 = vmatpush1.bf16.msra.mxu0 0
        %10512 = vmatprep.subr.bf16.mxu0 0
        %10513 = vmatpush1.bf16.msra.mxu0 0
        %10514 = vmatprep.subr.bf16.mxu0 0
        %10515 = vmatpush1.bf16.msra.mxu0 0
        %10516 = vmatprep.subr.bf16.mxu0 0
        %10517 = vmatpush1.bf16.msra.mxu0 0
        %10518 = vmatprep.subr.bf16.mxu0 0
        %10519 = vmatpush1.bf16.msra.mxu0 0
        %10520 = vmatprep.subr.bf16.mxu0 0
        %10521 = vmatpush1.bf16.msra.mxu0 0
        %10522 = vmatprep.subr.bf16.mxu0 0
        %10523 = vmatpush1.bf16.msra.mxu0 0
        %10524 = vmatprep.subr.bf16.mxu0 0
        %10525 = vmatpush1.bf16.msra.mxu0 0
        %10526 = vmatprep.subr.bf16.mxu0 0
        %10527 = vmatpush1.bf16.msra.mxu0 0
        %10528 = vmatprep.subr.bf16.mxu0 0
        %10529 = vmatpush1.bf16.msra.mxu0 0
        %10530 = vmatprep.mubr.bf16.mxu0 0
        %10531 = vmatmul.mubr.bf16.gmra.mrb[0].mxu0 %v10445
        %v10532 = vpop.f32.mrb[0].mxu0
        %v10533 = vadd.f32 0.0, %v10532
        %v10534 = vpop.f32.mrb[0].mxu0
        %v10535 = vpop.f32.mrb[0].mxu0
        %v10536 = vadd.f32 0.0, %v10535
        %v10537 = vpop.f32.mrb[0].mxu0
        %10538 = vmatprep.mubr.bf16.mxu0 0
        %10539 = vmatmul.mubr.bf16.gmra.mrb[0].mxu0 %v10448
        %v10540 = vpop.f32.mrb[0].mxu0
        %v10541 = vadd.f32 0.0, %v10540
        %v10542 = vpop.f32.mrb[0].mxu0
        %v10543 = vpop.f32.mrb[0].mxu0
        %v10544 = vadd.f32 0.0, %v10543
        %v10545 = vpop.f32.mrb[0].mxu0
        %10546 = vmatprep.mubr.bf16.mxu0 0
        %10547 = vmatmul.mubr.bf16.gmra.mrb[0].mxu0 %v10451
        %v10548 = vpop.f32.mrb[0].mxu0
        %v10549 = vadd.f32 0.0, %v10548
        %v10550 = vpop.f32.mrb[0].mxu0
        %v10551 = vpop.f32.mrb[0].mxu0
        %v10552 = vadd.f32 0.0, %v10551
        %v10553 = vpop.f32.mrb[0].mxu0
        %10554 = vmatprep.mubr.bf16.mxu0 0
        %10555 = vmatmul.mubr.bf16.gmra.mrb[0].mxu0 %v10454
        %v10556 = vpop.f32.mrb[0].mxu0
        %v10557 = vadd.f32 0.0, %v10556
        %v10558 = vpop.f32.mrb[0].mxu0
        %v10559 = vpop.f32.mrb[0].mxu0
        %v10560 = vadd.f32 0.0, %v10559
        %v10561 = vpop.f32.mrb[0].mxu0
        %10562 = vmatprep.mubr.bf16.mxu0 0
        %10563 = vmatmul.mubr.bf16.gmra.mrb[0].mxu0 %v10457
        %v10564 = vpop.f32.mrb[0].mxu0
        %v10565 = vadd.f32 0.0, %v10564
        %v10566 = vpop.f32.mrb[0].mxu0
        %v10567 = vpop.f32.mrb[0].mxu0
        %v10568 = vadd.f32 0.0, %v10567
        %v10569 = vpop.f32.mrb[0].mxu0
        %10570 = vmatprep.mubr.bf16.mxu0 0
        %10571 = vmatmul.mubr.bf16.gmra.mrb[0].mxu0 %v10460
        %v10572 = vpop.f32.mrb[0].mxu0
        %v10573 = vadd.f32 0.0, %v10572
        %v10574 = vpop.f32.mrb[0].mxu0
        %v10575 = vpop.f32.mrb[0].mxu0
        %v10576 = vadd.f32 0.0, %v10575
        %v10577 = vpop.f32.mrb[0].mxu0
        %10578 = vmatprep.mubr.bf16.mxu0 0
        %10579 = vmatmul.mubr.bf16.gmra.mrb[0].mxu0 %v10463
        %v10580 = vpop.f32.mrb[0].mxu0
        %v10581 = vadd.f32 0.0, %v10580
        %v10582 = vpop.f32.mrb[0].mxu0
        %v10583 = vpop.f32.mrb[0].mxu0
        %v10584 = vadd.f32 0.0, %v10583
        %v10585 = vpop.f32.mrb[0].mxu0
        %10586 = vmatprep.mubr.bf16.mxu0 0
        %10587 = vmatmul.mubr.bf16.gmra.mrb[0].mxu0 %v10466
        %v10588 = vpop.f32.mrb[0].mxu0
        %v10589 = vadd.f32 0.0, %v10588
        %v10590 = vpop.f32.mrb[0].mxu0
        %v10591 = vpop.f32.mrb[0].mxu0
        %v10592 = vadd.f32 0.0, %v10591
        %v10593 = vpop.f32.mrb[0].mxu0
        %10594 = vmatprep.mubr.bf16.mxu0 0
        %10595 = vmatmul.mubr.bf16.gmra.mrb[0].mxu0 %v10469
        %v10596 = vpop.f32.mrb[0].mxu0
        %v10597 = vadd.f32 0.0, %v10596
        %v10598 = vpop.f32.mrb[0].mxu0
        %v10599 = vpop.f32.mrb[0].mxu0
        %v10600 = vadd.f32 0.0, %v10599
        %v10601 = vpop.f32.mrb[0].mxu0
        %10602 = vmatprep.mubr.bf16.mxu0 0
        %10603 = vmatmul.mubr.bf16.gmra.mrb[0].mxu0 %v10472
        %v10604 = vpop.f32.mrb[0].mxu0
        %v10605 = vadd.f32 0.0, %v10604
        %v10606 = vpop.f32.mrb[0].mxu0
        %v10607 = vpop.f32.mrb[0].mxu0
        %v10608 = vadd.f32 0.0, %v10607
        %v10609 = vpop.f32.mrb[0].mxu0
        %10610 = vmatprep.mubr.bf16.mxu0 0
        %10611 = vmatmul.mubr.bf16.gmra.mrb[0].mxu0 %v10475
        %v10612 = vpop.f32.mrb[0].mxu0
        %v10613 = vadd.f32 0.0, %v10612
        %v10614 = vpop.f32.mrb[0].mxu0
        %v10615 = vpop.f32.mrb[0].mxu0
        %v10616 = vadd.f32 0.0, %v10615
        %v10617 = vpop.f32.mrb[0].mxu0
        %10618 = vmatprep.mubr.bf16.mxu0 0
        %10619 = vmatmul.mubr.bf16.gmra.mrb[0].mxu0 %v10478
        %v10620 = vpop.f32.mrb[0].mxu0
        %v10621 = vadd.f32 0.0, %v10620
        %v10622 = vpop.f32.mrb[0].mxu0
        %v10623 = vpop.f32.mrb[0].mxu0
        %v10624 = vadd.f32 0.0, %v10623
        %v10625 = vpop.f32.mrb[0].mxu0
        %10626 = vmatprep.mubr.bf16.mxu0 0
        %10627 = vmatmul.mubr.bf16.gmra.mrb[0].mxu0 %v10481
        %v10628 = vpop.f32.mrb[0].mxu0
        %v10629 = vadd.f32 0.0, %v10628
        %v10630 = vpop.f32.mrb[0].mxu0
        %v10631 = vpop.f32.mrb[0].mxu0
        %v10632 = vadd.f32 0.0, %v10631
        %v10633 = vpop.f32.mrb[0].mxu0
        %10634 = vmatprep.mubr.bf16.mxu0 0
        %10635 = vmatmul.mubr.bf16.gmra.mrb[0].mxu0 %v10484
        %v10636 = vpop.f32.mrb[0].mxu0
        %v10637 = vadd.f32 0.0, %v10636
        %v10638 = vpop.f32.mrb[0].mxu0
        %v10639 = vpop.f32.mrb[0].mxu0
        %v10640 = vadd.f32 0.0, %v10639
        %v10641 = vpop.f32.mrb[0].mxu0
        %10642 = vmatprep.mubr.bf16.mxu0 0
        %10643 = vmatmul.mubr.bf16.gmra.mrb[0].mxu0 %v10487
        %v10644 = vpop.f32.mrb[0].mxu0
        %v10645 = vadd.f32 0.0, %v10644
        %v10646 = vpop.f32.mrb[0].mxu0
        %v10647 = vpop.f32.mrb[0].mxu0
        %v10648 = vadd.f32 0.0, %v10647
        %v10649 = vpop.f32.mrb[0].mxu0
        %10650 = vmatprep.mubr.bf16.mxu0 0
        %10651 = vmatmul.mubr.bf16.gmra.mrb[0].mxu0 %v10490
        %v10652 = vpop.f32.mrb[0].mxu0
        %v10653 = vadd.f32 0.0, %v10652
        %v10654 = vpop.f32.mrb[0].mxu0
        %v10655 = vpop.f32.mrb[0].mxu0
        %v10656 = vadd.f32 0.0, %v10655
        %v10657 = vpop.f32.mrb[0].mxu0
        %10658 = vmatprep.mubr.bf16.mxu0 0
        %10659 = vmatmul.mubr.bf16.gmra.mrb[0].mxu0 %v10493
        %v10660 = vpop.f32.mrb[0].mxu0
        %v10661 = vadd.f32 0.0, %v10660
        %v10662 = vpop.f32.mrb[0].mxu0
        %v10663 = vpop.f32.mrb[0].mxu0
        %v10664 = vadd.f32 0.0, %v10663
        %v10665 = vpop.f32.mrb[0].mxu0
        %10666 = vmatprep.mubr.bf16.mxu0 0
        %10667 = vmatmul.mubr.bf16.gmra.mrb[0].mxu0 %v10496
        %v10668 = vpop.f32.mrb[0].mxu0
        %v10669 = vadd.f32 0.0, %v10668
        %v10670 = vpop.f32.mrb[0].mxu0
        %v10671 = vpop.f32.mrb[0].mxu0
        %v10672 = vadd.f32 0.0, %v10671
        %v10673 = vpop.f32.mrb[0].mxu0
        %10674 = vdwg.mxu0
        %v10675 = vadd.f32 %v10533, 0.0
        %v10676 = vadd.f32 %v10536, 0.0
        %v10677 = vadd.f32 %v10541, 0.0
        %v10678 = vadd.f32 %v10544, 0.0
        %v10679 = vadd.f32 %v10549, 0.0
        %v10680 = vadd.f32 %v10552, 0.0
        %v10681 = vadd.f32 %v10557, 0.0
        %v10682 = vadd.f32 %v10560, 0.0
        %v10683 = vadd.f32 %v10565, 0.0
        %v10684 = vadd.f32 %v10568, 0.0
        %v10685 = vadd.f32 %v10573, 0.0
        %v10686 = vadd.f32 %v10576, 0.0
        %v10687 = vadd.f32 %v10581, 0.0
        %v10688 = vadd.f32 %v10584, 0.0
        %v10689 = vadd.f32 %v10589, 0.0
        %v10690 = vadd.f32 %v10592, 0.0
        %v10691 = vadd.f32 %v10597, 0.0
        %v10692 = vadd.f32 %v10600, 0.0
        %v10693 = vadd.f32 %v10605, 0.0
        %v10694 = vadd.f32 %v10608, 0.0
        %v10695 = vadd.f32 %v10613, 0.0
        %v10696 = vadd.f32 %v10616, 0.0
        %v10697 = vadd.f32 %v10621, 0.0
        %v10698 = vadd.f32 %v10624, 0.0
        %v10699 = vadd.f32 %v10629, 0.0
        %v10700 = vadd.f32 %v10632, 0.0
        %v10701 = vadd.f32 %v10637, 0.0
        %v10702 = vadd.f32 %v10640, 0.0
        %v10703 = vadd.f32 %v10645, 0.0
        %v10704 = vadd.f32 %v10648, 0.0
        %v10705 = vadd.f32 %v10653, 0.0
        %v10706 = vadd.f32 %v10656, 0.0
        %10739 = vrot.lane.b32.xlu0 %v10541, 96
        %v10740 = vpop.permute.xlu0 %10739
        %10741 = vrot.lane.b32.xlu0 %v10544, 96
        %v10742 = vpop.permute.xlu0 %10741
        %10743 = vrot.lane.b32.xlu0 %v10549, 96
        %v10744 = vpop.permute.xlu0 %10743
        %10745 = vrot.lane.b32.xlu0 %v10552, 96
        %v10746 = vpop.permute.xlu0 %10745
        %10747 = vrot.lane.b32.xlu0 %v10557, 96
        %v10748 = vpop.permute.xlu0 %10747
        %10749 = vrot.lane.b32.xlu0 %v10560, 96
        %v10750 = vpop.permute.xlu0 %10749
        %10751 = vrot.lane.b32.xlu0 %v10565, 96
        %v10752 = vpop.permute.xlu0 %10751
        %10753 = vrot.lane.b32.xlu0 %v10568, 96
        %v10754 = vpop.permute.xlu0 %10753
        %10755 = vrot.lane.b32.xlu0 %v10573, 96
        %v10756 = vpop.permute.xlu0 %10755
        %10757 = vrot.lane.b32.xlu0 %v10576, 96
        %v10758 = vpop.permute.xlu0 %10757
        %10759 = vrot.lane.b32.xlu0 %v10581, 96
        %v10760 = vpop.permute.xlu0 %10759
        %10761 = vrot.lane.b32.xlu0 %v10584, 96
        %v10762 = vpop.permute.xlu0 %10761
        %10763 = vrot.lane.b32.xlu0 %v10589, 96
        %v10764 = vpop.permute.xlu0 %10763
        %10765 = vrot.lane.b32.xlu0 %v10592, 96
        %v10766 = vpop.permute.xlu0 %10765
        %10767 = vrot.lane.b32.xlu0 %v10597, 96
        %v10768 = vpop.permute.xlu0 %10767
        %10769 = vrot.lane.b32.xlu0 %v10600, 96
        %v10770 = vpop.permute.xlu0 %10769
        %10771 = vrot.lane.b32.xlu0 %v10605, 96
        %v10772 = vpop.permute.xlu0 %10771
        %10773 = vrot.lane.b32.xlu0 %v10608, 96
        %v10774 = vpop.permute.xlu0 %10773
        %10775 = vrot.lane.b32.xlu0 %v10613, 96
        %v10776 = vpop.permute.xlu0 %10775
        %10777 = vrot.lane.b32.xlu0 %v10616, 96
        %v10778 = vpop.permute.xlu0 %10777
        %10779 = vrot.lane.b32.xlu0 %v10621, 96
        %v10780 = vpop.permute.xlu0 %10779
        %10781 = vrot.lane.b32.xlu0 %v10624, 96
        %v10782 = vpop.permute.xlu0 %10781
        %10783 = vrot.lane.b32.xlu0 %v10629, 96
        %v10784 = vpop.permute.xlu0 %10783
        %10785 = vrot.lane.b32.xlu0 %v10632, 96
        %v10786 = vpop.permute.xlu0 %10785
        %10787 = vrot.lane.b32.xlu0 %v10637, 96
        %v10788 = vpop.permute.xlu0 %10787
        %10789 = vrot.lane.b32.xlu0 %v10640, 96
        %v10790 = vpop.permute.xlu0 %10789
        %10791 = vrot.lane.b32.xlu0 %v10645, 96
        %v10792 = vpop.permute.xlu0 %10791
        %10793 = vrot.lane.b32.xlu0 %v10648, 96
        %v10794 = vpop.permute.xlu0 %10793
        %10795 = vrot.lane.b32.xlu0 %v10653, 96
        %v10796 = vpop.permute.xlu0 %10795
        %10797 = vrot.lane.b32.xlu0 %v10656, 96
        %v10798 = vpop.permute.xlu0 %10797
        %10799 = vrot.lane.b32.xlu0 %v10661, 96
        %v10800 = vpop.permute.xlu0 %10799
        %10801 = vrot.lane.b32.xlu0 %v10664, 96
        %v10802 = vpop.permute.xlu0 %10801
        %v10835 = vadd.f32 %v10675, %v10740
        %v10836 = vadd.f32 %v10676, %v10742
        %v10837 = vadd.f32 %v10677, %v10744
        %v10838 = vadd.f32 %v10678, %v10746
        %v10839 = vadd.f32 %v10679, %v10748
        %v10840 = vadd.f32 %v10680, %v10750
        %v10841 = vadd.f32 %v10681, %v10752
        %v10842 = vadd.f32 %v10682, %v10754
        %v10843 = vadd.f32 %v10683, %v10756
        %v10844 = vadd.f32 %v10684, %v10758
        %v10845 = vadd.f32 %v10685, %v10760
        %v10846 = vadd.f32 %v10686, %v10762
        %v10847 = vadd.f32 %v10687, %v10764
        %v10848 = vadd.f32 %v10688, %v10766
        %v10849 = vadd.f32 %v10689, %v10768
        %v10850 = vadd.f32 %v10690, %v10770
        %v10851 = vadd.f32 %v10691, %v10772
        %v10852 = vadd.f32 %v10692, %v10774
        %v10853 = vadd.f32 %v10693, %v10776
        %v10854 = vadd.f32 %v10694, %v10778
        %v10855 = vadd.f32 %v10695, %v10780
        %v10856 = vadd.f32 %v10696, %v10782
        %v10857 = vadd.f32 %v10697, %v10784
        %v10858 = vadd.f32 %v10698, %v10786
        %v10859 = vadd.f32 %v10699, %v10788
        %v10860 = vadd.f32 %v10700, %v10790
        %v10861 = vadd.f32 %v10701, %v10792
        %v10862 = vadd.f32 %v10702, %v10794
        %v10863 = vadd.f32 %v10703, %v10796
        %v10864 = vadd.f32 %v10704, %v10798
        %v10865 = vadd.f32 %v10705, %v10800
        %v10866 = vadd.f32 %v10706, %v10802
        %10869 = vrot.lane.b32.xlu0 %v10549, 64
        %v10870 = vpop.permute.xlu0 %10869
        %10871 = vrot.lane.b32.xlu0 %v10552, 64
        %v10872 = vpop.permute.xlu0 %10871
        %10873 = vrot.lane.b32.xlu0 %v10557, 64
        %v10874 = vpop.permute.xlu0 %10873
        %10875 = vrot.lane.b32.xlu0 %v10560, 64
        %v10876 = vpop.permute.xlu0 %10875
        %10877 = vrot.lane.b32.xlu0 %v10565, 64
        %v10878 = vpop.permute.xlu0 %10877
        %10879 = vrot.lane.b32.xlu0 %v10568, 64
        %v10880 = vpop.permute.xlu0 %10879
        %10881 = vrot.lane.b32.xlu0 %v10573, 64
        %v10882 = vpop.permute.xlu0 %10881
        %10883 = vrot.lane.b32.xlu0 %v10576, 64
        %v10884 = vpop.permute.xlu0 %10883
        %10885 = vrot.lane.b32.xlu0 %v10581, 64
        %v10886 = vpop.permute.xlu0 %10885
        %10887 = vrot.lane.b32.xlu0 %v10584, 64
        %v10888 = vpop.permute.xlu0 %10887
        %10889 = vrot.lane.b32.xlu0 %v10589, 64
        %v10890 = vpop.permute.xlu0 %10889
        %10891 = vrot.lane.b32.xlu0 %v10592, 64
        %v10892 = vpop.permute.xlu0 %10891
        %10893 = vrot.lane.b32.xlu0 %v10597, 64
        %v10894 = vpop.permute.xlu0 %10893
        %10895 = vrot.lane.b32.xlu0 %v10600, 64
        %v10896 = vpop.permute.xlu0 %10895
        %10897 = vrot.lane.b32.xlu0 %v10605, 64
        %v10898 = vpop.permute.xlu0 %10897
        %10899 = vrot.lane.b32.xlu0 %v10608, 64
        %v10900 = vpop.permute.xlu0 %10899
        %10901 = vrot.lane.b32.xlu0 %v10613, 64
        %v10902 = vpop.permute.xlu0 %10901
        %10903 = vrot.lane.b32.xlu0 %v10616, 64
        %v10904 = vpop.permute.xlu0 %10903
        %10905 = vrot.lane.b32.xlu0 %v10621, 64
        %v10906 = vpop.permute.xlu0 %10905
        %10907 = vrot.lane.b32.xlu0 %v10624, 64
        %v10908 = vpop.permute.xlu0 %10907
        %10909 = vrot.lane.b32.xlu0 %v10629, 64
        %v10910 = vpop.permute.xlu0 %10909
        %10911 = vrot.lane.b32.xlu0 %v10632, 64
        %v10912 = vpop.permute.xlu0 %10911
        %10913 = vrot.lane.b32.xlu0 %v10637, 64
        %v10914 = vpop.permute.xlu0 %10913
        %10915 = vrot.lane.b32.xlu0 %v10640, 64
        %v10916 = vpop.permute.xlu0 %10915
        %10917 = vrot.lane.b32.xlu0 %v10645, 64
        %v10918 = vpop.permute.xlu0 %10917
        %10919 = vrot.lane.b32.xlu0 %v10648, 64
        %v10920 = vpop.permute.xlu0 %10919
        %10921 = vrot.lane.b32.xlu0 %v10653, 64
        %v10922 = vpop.permute.xlu0 %10921
        %10923 = vrot.lane.b32.xlu0 %v10656, 64
        %v10924 = vpop.permute.xlu0 %10923
        %10925 = vrot.lane.b32.xlu0 %v10661, 64
        %v10926 = vpop.permute.xlu0 %10925
        %10927 = vrot.lane.b32.xlu0 %v10664, 64
        %v10928 = vpop.permute.xlu0 %10927
        %10929 = vrot.lane.b32.xlu0 %v10669, 64
        %v10930 = vpop.permute.xlu0 %10929
        %10931 = vrot.lane.b32.xlu0 %v10672, 64
        %v10932 = vpop.permute.xlu0 %10931
        %v10965 = vadd.f32 %v10835, %v10870
        %v10966 = vadd.f32 %v10836, %v10872
        %v10967 = vadd.f32 %v10837, %v10874
        %v10968 = vadd.f32 %v10838, %v10876
        %v10969 = vadd.f32 %v10839, %v10878
        %v10970 = vadd.f32 %v10840, %v10880
        %v10971 = vadd.f32 %v10841, %v10882
        %v10972 = vadd.f32 %v10842, %v10884
        %v10973 = vadd.f32 %v10843, %v10886
        %v10974 = vadd.f32 %v10844, %v10888
        %v10975 = vadd.f32 %v10845, %v10890
        %v10976 = vadd.f32 %v10846, %v10892
        %v10977 = vadd.f32 %v10847, %v10894
        %v10978 = vadd.f32 %v10848, %v10896
        %v10979 = vadd.f32 %v10849, %v10898
        %v10980 = vadd.f32 %v10850, %v10900
        %v10981 = vadd.f32 %v10851, %v10902
        %v10982 = vadd.f32 %v10852, %v10904
        %v10983 = vadd.f32 %v10853, %v10906
        %v10984 = vadd.f32 %v10854, %v10908
        %v10985 = vadd.f32 %v10855, %v10910
        %v10986 = vadd.f32 %v10856, %v10912
        %v10987 = vadd.f32 %v10857, %v10914
        %v10988 = vadd.f32 %v10858, %v10916
        %v10989 = vadd.f32 %v10859, %v10918
        %v10990 = vadd.f32 %v10860, %v10920
        %v10991 = vadd.f32 %v10861, %v10922
        %v10992 = vadd.f32 %v10862, %v10924
        %v10993 = vadd.f32 %v10863, %v10926
        %v10994 = vadd.f32 %v10864, %v10928
        %v10995 = vadd.f32 %v10865, %v10930
        %v10996 = vadd.f32 %v10866, %v10932
        %s10997 = scalar_lea.vmem %s1, 624
        %v10998 = vld [vmem:[%s10997] sm:$0xf]
        %v10999 = vld [vmem:[%s10997 + $0x4] sm:$0xf]
        %v11000 = vld [vmem:[%s10997 + $0x8] sm:$0xf]
        %v11001 = vld [vmem:[%s10997 + $0xc] sm:$0xf]
        %v11002 = vld [vmem:[%s10997 + $0x10] sm:$0xf]
        %v11003 = vld [vmem:[%s10997 + $0x14] sm:$0xf]
        %v11004 = vld [vmem:[%s10997 + $0x18] sm:$0xf]
        %v11005 = vld [vmem:[%s10997 + $0x1c] sm:$0xf]
        %v11006 = vld [vmem:[%s10997 + $0x20] sm:$0xf]
        %v11007 = vld [vmem:[%s10997 + $0x24] sm:$0xf]
        %v11008 = vld [vmem:[%s10997 + $0x28] sm:$0xf]
        %v11009 = vld [vmem:[%s10997 + $0x2c] sm:$0xf]
        %v11022 = vunpack.c.l.b16 %v10998
        %v11023 = vunpack.c.l.b16 %v10999
        %v11024 = vunpack.c.l.b16 %v11000
        %v11025 = vunpack.c.l.b16 %v11001
        %v11026 = vunpack.c.l.b16 %v11002
        %v11027 = vunpack.c.l.b16 %v11003
        %v11028 = vunpack.c.l.b16 %v11004
        %v11029 = vunpack.c.l.b16 %v11005
        %v11030 = vunpack.c.l.b16 %v11006
        %v11031 = vunpack.c.l.b16 %v11007
        %v11032 = vunpack.c.l.b16 %v11008
        %v11033 = vunpack.c.l.b16 %v11009
        %v11034 = vpack.c.b16 %v11023, %v11022
        %v11035 = vpack.c.b16 %v11025, %v11024
        %v11036 = vpack.c.b16 %v11027, %v11026
        %v11037 = vpack.c.b16 %v11029, %v11028
        %v11038 = vpack.c.b16 %v11031, %v11030
        %v11039 = vpack.c.b16 %v11033, %v11032
        %v11046 = vsel %vm170, %v10144, 0
        %v11048 = vsel %vm170, %v10146, 0
        %v11050 = vsel %vm170, %v10148, 0
        %v11052 = vsel %vm170, %v10150, 0
        %v11054 = vsel %vm170, %v10152, 0
        %v11056 = vsel %vm170, %v10154, 0
        %v11058 = vsel %vm170, %v10156, 0
        %v11060 = vsel %vm170, %v10158, 0
        %v11062 = vsel %vm170, %v10160, 0
        %v11064 = vsel %vm170, %v10162, 0
        %v11066 = vsel %vm170, %v10164, 0
        %v11068 = vsel %vm170, %v10166, 0
        %v11070 = vsel %vm170, %v10168, 0
        %v11072 = vsel %vm170, %v10170, 0
        %v11074 = vsel %vm170, %v10172, 0
        %v11076 = vsel %vm170, %v10174, 0
        %v11078 = vsel %vm170, %v10176, 0
        %v11080 = vsel %vm170, %v10178, 0
        %11082 = vmatprep.subr.bf16.mxu0 0
        %11083 = vmatpush1.bf16.msra.mxu0 %v11034
        %11084 = vmatprep.subr.bf16.mxu0 0
        %11085 = vmatpush1.bf16.msra.mxu0 %v11035
        %11086 = vmatprep.subr.bf16.mxu0 0
        %11087 = vmatpush1.bf16.msra.mxu0 %v11036
        %11088 = vmatprep.subr.bf16.mxu0 0
        %11089 = vmatpush1.bf16.msra.mxu0 %v11037
        %11090 = vmatprep.subr.bf16.mxu0 0
        %11091 = vmatpush1.bf16.msra.mxu0 %v11038
        %11092 = vmatprep.subr.bf16.mxu0 0
        %11093 = vmatpush1.bf16.msra.mxu0 %v11039
        %11094 = vmatprep.subr.bf16.mxu0 0
        %11095 = vmatpush1.bf16.msra.mxu0 0
        %11096 = vmatprep.subr.bf16.mxu0 0
        %11097 = vmatpush1.bf16.msra.mxu0 0
        %11098 = vmatprep.subr.bf16.mxu0 0
        %11099 = vmatpush1.bf16.msra.mxu0 0
        %11100 = vmatprep.subr.bf16.mxu0 0
        %11101 = vmatpush1.bf16.msra.mxu0 0
        %11102 = vmatprep.subr.bf16.mxu0 0
        %11103 = vmatpush1.bf16.msra.mxu0 0
        %11104 = vmatprep.subr.bf16.mxu0 0
        %11105 = vmatpush1.bf16.msra.mxu0 0
        %11106 = vmatprep.subr.bf16.mxu0 0
        %11107 = vmatpush1.bf16.msra.mxu0 0
        %11108 = vmatprep.subr.bf16.mxu0 0
        %11109 = vmatpush1.bf16.msra.mxu0 0
        %11110 = vmatprep.subr.bf16.mxu0 0
        %11111 = vmatpush1.bf16.msra.mxu0 0
        %11112 = vmatprep.subr.bf16.mxu0 0
        %11113 = vmatpush1.bf16.msra.mxu0 0
        %11114 = vmatprep.mubr.bf16.mxu0 0
        %11115 = vmatmul.mubr.bf16.gmra.mrb[0].mxu0 %v11046
        %v11116 = vpop.f32.mrb[0].mxu0
        %v11117 = vadd.f32 0.0, %v11116
        %v11118 = vpop.f32.mrb[0].mxu0
        %v11119 = vpop.f32.mrb[0].mxu0
        %v11120 = vadd.f32 0.0, %v11119
        %v11121 = vpop.f32.mrb[0].mxu0
        %11122 = vmatprep.mubr.bf16.mxu0 0
        %11123 = vmatmul.mubr.bf16.gmra.mrb[0].mxu0 %v11048
        %v11124 = vpop.f32.mrb[0].mxu0
        %v11125 = vadd.f32 0.0, %v11124
        %v11126 = vpop.f32.mrb[0].mxu0
        %v11127 = vpop.f32.mrb[0].mxu0
        %v11128 = vadd.f32 0.0, %v11127
        %v11129 = vpop.f32.mrb[0].mxu0
        %11130 = vmatprep.mubr.bf16.mxu0 0
        %11131 = vmatmul.mubr.bf16.gmra.mrb[0].mxu0 %v11050
        %v11132 = vpop.f32.mrb[0].mxu0
        %v11133 = vadd.f32 0.0, %v11132
        %v11134 = vpop.f32.mrb[0].mxu0
        %v11135 = vpop.f32.mrb[0].mxu0
        %v11136 = vadd.f32 0.0, %v11135
        %v11137 = vpop.f32.mrb[0].mxu0
        %11138 = vmatprep.mubr.bf16.mxu0 0
        %11139 = vmatmul.mubr.bf16.gmra.mrb[0].mxu0 %v11052
        %v11140 = vpop.f32.mrb[0].mxu0
        %v11141 = vadd.f32 0.0, %v11140
        %v11142 = vpop.f32.mrb[0].mxu0
        %v11143 = vpop.f32.mrb[0].mxu0
        %v11144 = vadd.f32 0.0, %v11143
        %v11145 = vpop.f32.mrb[0].mxu0
        %11146 = vmatprep.mubr.bf16.mxu0 0
        %11147 = vmatmul.mubr.bf16.gmra.mrb[0].mxu0 %v11054
        %v11148 = vpop.f32.mrb[0].mxu0
        %v11149 = vadd.f32 0.0, %v11148
        %v11150 = vpop.f32.mrb[0].mxu0
        %v11151 = vpop.f32.mrb[0].mxu0
        %v11152 = vadd.f32 0.0, %v11151
        %v11153 = vpop.f32.mrb[0].mxu0
        %11154 = vmatprep.mubr.bf16.mxu0 0
        %11155 = vmatmul.mubr.bf16.gmra.mrb[0].mxu0 %v11056
        %v11156 = vpop.f32.mrb[0].mxu0
        %v11157 = vadd.f32 0.0, %v11156
        %v11158 = vpop.f32.mrb[0].mxu0
        %v11159 = vpop.f32.mrb[0].mxu0
        %v11160 = vadd.f32 0.0, %v11159
        %v11161 = vpop.f32.mrb[0].mxu0
        %11162 = vmatprep.mubr.bf16.mxu0 0
        %11163 = vmatmul.mubr.bf16.gmra.mrb[0].mxu0 %v11058
        %v11164 = vpop.f32.mrb[0].mxu0
        %v11165 = vadd.f32 0.0, %v11164
        %v11166 = vpop.f32.mrb[0].mxu0
        %v11167 = vpop.f32.mrb[0].mxu0
        %v11168 = vadd.f32 0.0, %v11167
        %v11169 = vpop.f32.mrb[0].mxu0
        %11170 = vmatprep.mubr.bf16.mxu0 0
        %11171 = vmatmul.mubr.bf16.gmra.mrb[0].mxu0 %v11060
        %v11172 = vpop.f32.mrb[0].mxu0
        %v11173 = vadd.f32 0.0, %v11172
        %v11174 = vpop.f32.mrb[0].mxu0
        %v11175 = vpop.f32.mrb[0].mxu0
        %v11176 = vadd.f32 0.0, %v11175
        %v11177 = vpop.f32.mrb[0].mxu0
        %11178 = vmatprep.mubr.bf16.mxu0 0
        %11179 = vmatmul.mubr.bf16.gmra.mrb[0].mxu0 %v11062
        %v11180 = vpop.f32.mrb[0].mxu0
        %v11181 = vadd.f32 0.0, %v11180
        %v11182 = vpop.f32.mrb[0].mxu0
        %v11183 = vpop.f32.mrb[0].mxu0
        %v11184 = vadd.f32 0.0, %v11183
        %v11185 = vpop.f32.mrb[0].mxu0
        %11186 = vmatprep.mubr.bf16.mxu0 0
        %11187 = vmatmul.mubr.bf16.gmra.mrb[0].mxu0 %v11064
        %v11188 = vpop.f32.mrb[0].mxu0
        %v11189 = vadd.f32 0.0, %v11188
        %v11190 = vpop.f32.mrb[0].mxu0
        %v11191 = vpop.f32.mrb[0].mxu0
        %v11192 = vadd.f32 0.0, %v11191
        %v11193 = vpop.f32.mrb[0].mxu0
        %11194 = vmatprep.mubr.bf16.mxu0 0
        %11195 = vmatmul.mubr.bf16.gmra.mrb[0].mxu0 %v11066
        %v11196 = vpop.f32.mrb[0].mxu0
        %v11197 = vadd.f32 0.0, %v11196
        %v11198 = vpop.f32.mrb[0].mxu0
        %v11199 = vpop.f32.mrb[0].mxu0
        %v11200 = vadd.f32 0.0, %v11199
        %v11201 = vpop.f32.mrb[0].mxu0
        %11202 = vmatprep.mubr.bf16.mxu0 0
        %11203 = vmatmul.mubr.bf16.gmra.mrb[0].mxu0 %v11068
        %v11204 = vpop.f32.mrb[0].mxu0
        %v11205 = vadd.f32 0.0, %v11204
        %v11206 = vpop.f32.mrb[0].mxu0
        %v11207 = vpop.f32.mrb[0].mxu0
        %v11208 = vadd.f32 0.0, %v11207
        %v11209 = vpop.f32.mrb[0].mxu0
        %11210 = vmatprep.mubr.bf16.mxu0 0
        %11211 = vmatmul.mubr.bf16.gmra.mrb[0].mxu0 %v11070
        %v11212 = vpop.f32.mrb[0].mxu0
        %v11213 = vadd.f32 0.0, %v11212
        %v11214 = vpop.f32.mrb[0].mxu0
        %v11215 = vpop.f32.mrb[0].mxu0
        %v11216 = vadd.f32 0.0, %v11215
        %v11217 = vpop.f32.mrb[0].mxu0
        %11218 = vmatprep.mubr.bf16.mxu0 0
        %11219 = vmatmul.mubr.bf16.gmra.mrb[0].mxu0 %v11072
        %v11220 = vpop.f32.mrb[0].mxu0
        %v11221 = vadd.f32 0.0, %v11220
        %v11222 = vpop.f32.mrb[0].mxu0
        %v11223 = vpop.f32.mrb[0].mxu0
        %v11224 = vadd.f32 0.0, %v11223
        %v11225 = vpop.f32.mrb[0].mxu0
        %11226 = vmatprep.mubr.bf16.mxu0 0
        %11227 = vmatmul.mubr.bf16.gmra.mrb[0].mxu0 %v11074
        %v11228 = vpop.f32.mrb[0].mxu0
        %v11229 = vadd.f32 0.0, %v11228
        %v11230 = vpop.f32.mrb[0].mxu0
        %v11231 = vpop.f32.mrb[0].mxu0
        %v11232 = vadd.f32 0.0, %v11231
        %v11233 = vpop.f32.mrb[0].mxu0
        %11234 = vmatprep.mubr.bf16.mxu0 0
        %11235 = vmatmul.mubr.bf16.gmra.mrb[0].mxu0 %v11076
        %v11236 = vpop.f32.mrb[0].mxu0
        %v11237 = vadd.f32 0.0, %v11236
        %v11238 = vpop.f32.mrb[0].mxu0
        %v11239 = vpop.f32.mrb[0].mxu0
        %v11240 = vadd.f32 0.0, %v11239
        %v11241 = vpop.f32.mrb[0].mxu0
        %11242 = vmatprep.mubr.bf16.mxu0 0
        %11243 = vmatmul.mubr.bf16.gmra.mrb[0].mxu0 %v11078
        %v11244 = vpop.f32.mrb[0].mxu0
        %v11245 = vadd.f32 0.0, %v11244
        %v11246 = vpop.f32.mrb[0].mxu0
        %v11247 = vpop.f32.mrb[0].mxu0
        %v11248 = vadd.f32 0.0, %v11247
        %v11249 = vpop.f32.mrb[0].mxu0
        %11250 = vmatprep.mubr.bf16.mxu0 0
        %11251 = vmatmul.mubr.bf16.gmra.mrb[0].mxu0 %v11080
        %v11252 = vpop.f32.mrb[0].mxu0
        %v11253 = vadd.f32 0.0, %v11252
        %v11254 = vpop.f32.mrb[0].mxu0
        %v11255 = vpop.f32.mrb[0].mxu0
        %v11256 = vadd.f32 0.0, %v11255
        %v11257 = vpop.f32.mrb[0].mxu0
        %11258 = vdwg.mxu0
        %v11259 = vadd.f32 %v10965, %v11117
        %v11260 = vadd.f32 %v10966, %v11120
        %v11261 = vadd.f32 %v10967, %v11125
        %v11262 = vadd.f32 %v10968, %v11128
        %v11263 = vadd.f32 %v10969, %v11133
        %v11264 = vadd.f32 %v10970, %v11136
        %v11265 = vadd.f32 %v10971, %v11141
        %v11266 = vadd.f32 %v10972, %v11144
        %v11267 = vadd.f32 %v10973, %v11149
        %v11268 = vadd.f32 %v10974, %v11152
        %v11269 = vadd.f32 %v10975, %v11157
        %v11270 = vadd.f32 %v10976, %v11160
        %v11271 = vadd.f32 %v10977, %v11165
        %v11272 = vadd.f32 %v10978, %v11168
        %v11273 = vadd.f32 %v10979, %v11173
        %v11274 = vadd.f32 %v10980, %v11176
        %v11275 = vadd.f32 %v10981, %v11181
        %v11276 = vadd.f32 %v10982, %v11184
        %v11277 = vadd.f32 %v10983, %v11189
        %v11278 = vadd.f32 %v10984, %v11192
        %v11279 = vadd.f32 %v10985, %v11197
        %v11280 = vadd.f32 %v10986, %v11200
        %v11281 = vadd.f32 %v10987, %v11205
        %v11282 = vadd.f32 %v10988, %v11208
        %v11283 = vadd.f32 %v10989, %v11213
        %v11284 = vadd.f32 %v10990, %v11216
        %v11285 = vadd.f32 %v10991, %v11221
        %v11286 = vadd.f32 %v10992, %v11224
        %v11287 = vadd.f32 %v10993, %v11229
        %v11288 = vadd.f32 %v10994, %v11232
        %v11289 = vadd.f32 %v10995, %v11237
        %v11290 = vadd.f32 %v10996, %v11240
        %11323 = vrot.lane.b32.xlu0 %v11125, 96
        %v11324 = vpop.permute.xlu0 %11323
        %11325 = vrot.lane.b32.xlu0 %v11128, 96
        %v11326 = vpop.permute.xlu0 %11325
        %11327 = vrot.lane.b32.xlu0 %v11133, 96
        %v11328 = vpop.permute.xlu0 %11327
        %11329 = vrot.lane.b32.xlu0 %v11136, 96
        %v11330 = vpop.permute.xlu0 %11329
        %11331 = vrot.lane.b32.xlu0 %v11141, 96
        %v11332 = vpop.permute.xlu0 %11331
        %11333 = vrot.lane.b32.xlu0 %v11144, 96
        %v11334 = vpop.permute.xlu0 %11333
        %11335 = vrot.lane.b32.xlu0 %v11149, 96
        %v11336 = vpop.permute.xlu0 %11335
        %11337 = vrot.lane.b32.xlu0 %v11152, 96
        %v11338 = vpop.permute.xlu0 %11337
        %11339 = vrot.lane.b32.xlu0 %v11157, 96
        %v11340 = vpop.permute.xlu0 %11339
        %11341 = vrot.lane.b32.xlu0 %v11160, 96
        %v11342 = vpop.permute.xlu0 %11341
        %11343 = vrot.lane.b32.xlu0 %v11165, 96
        %v11344 = vpop.permute.xlu0 %11343
        %11345 = vrot.lane.b32.xlu0 %v11168, 96
        %v11346 = vpop.permute.xlu0 %11345
        %11347 = vrot.lane.b32.xlu0 %v11173, 96
        %v11348 = vpop.permute.xlu0 %11347
        %11349 = vrot.lane.b32.xlu0 %v11176, 96
        %v11350 = vpop.permute.xlu0 %11349
        %11351 = vrot.lane.b32.xlu0 %v11181, 96
        %v11352 = vpop.permute.xlu0 %11351
        %11353 = vrot.lane.b32.xlu0 %v11184, 96
        %v11354 = vpop.permute.xlu0 %11353
        %11355 = vrot.lane.b32.xlu0 %v11189, 96
        %v11356 = vpop.permute.xlu0 %11355
        %11357 = vrot.lane.b32.xlu0 %v11192, 96
        %v11358 = vpop.permute.xlu0 %11357
        %11359 = vrot.lane.b32.xlu0 %v11197, 96
        %v11360 = vpop.permute.xlu0 %11359
        %11361 = vrot.lane.b32.xlu0 %v11200, 96
        %v11362 = vpop.permute.xlu0 %11361
        %11363 = vrot.lane.b32.xlu0 %v11205, 96
        %v11364 = vpop.permute.xlu0 %11363
        %11365 = vrot.lane.b32.xlu0 %v11208, 96
        %v11366 = vpop.permute.xlu0 %11365
        %11367 = vrot.lane.b32.xlu0 %v11213, 96
        %v11368 = vpop.permute.xlu0 %11367
        %11369 = vrot.lane.b32.xlu0 %v11216, 96
        %v11370 = vpop.permute.xlu0 %11369
        %11371 = vrot.lane.b32.xlu0 %v11221, 96
        %v11372 = vpop.permute.xlu0 %11371
        %11373 = vrot.lane.b32.xlu0 %v11224, 96
        %v11374 = vpop.permute.xlu0 %11373
        %11375 = vrot.lane.b32.xlu0 %v11229, 96
        %v11376 = vpop.permute.xlu0 %11375
        %11377 = vrot.lane.b32.xlu0 %v11232, 96
        %v11378 = vpop.permute.xlu0 %11377
        %11379 = vrot.lane.b32.xlu0 %v11237, 96
        %v11380 = vpop.permute.xlu0 %11379
        %11381 = vrot.lane.b32.xlu0 %v11240, 96
        %v11382 = vpop.permute.xlu0 %11381
        %11383 = vrot.lane.b32.xlu0 %v11245, 96
        %v11384 = vpop.permute.xlu0 %11383
        %11385 = vrot.lane.b32.xlu0 %v11248, 96
        %v11386 = vpop.permute.xlu0 %11385
        %v11419 = vadd.f32 %v11259, %v11324
        %v11420 = vadd.f32 %v11260, %v11326
        %v11421 = vadd.f32 %v11261, %v11328
        %v11422 = vadd.f32 %v11262, %v11330
        %v11423 = vadd.f32 %v11263, %v11332
        %v11424 = vadd.f32 %v11264, %v11334
        %v11425 = vadd.f32 %v11265, %v11336
        %v11426 = vadd.f32 %v11266, %v11338
        %v11427 = vadd.f32 %v11267, %v11340
        %v11428 = vadd.f32 %v11268, %v11342
        %v11429 = vadd.f32 %v11269, %v11344
        %v11430 = vadd.f32 %v11270, %v11346
        %v11431 = vadd.f32 %v11271, %v11348
        %v11432 = vadd.f32 %v11272, %v11350
        %v11433 = vadd.f32 %v11273, %v11352
        %v11434 = vadd.f32 %v11274, %v11354
        %v11435 = vadd.f32 %v11275, %v11356
        %v11436 = vadd.f32 %v11276, %v11358
        %v11437 = vadd.f32 %v11277, %v11360
        %v11438 = vadd.f32 %v11278, %v11362
        %v11439 = vadd.f32 %v11279, %v11364
        %v11440 = vadd.f32 %v11280, %v11366
        %v11441 = vadd.f32 %v11281, %v11368
        %v11442 = vadd.f32 %v11282, %v11370
        %v11443 = vadd.f32 %v11283, %v11372
        %v11444 = vadd.f32 %v11284, %v11374
        %v11445 = vadd.f32 %v11285, %v11376
        %v11446 = vadd.f32 %v11286, %v11378
        %v11447 = vadd.f32 %v11287, %v11380
        %v11448 = vadd.f32 %v11288, %v11382
        %v11449 = vadd.f32 %v11289, %v11384
        %v11450 = vadd.f32 %v11290, %v11386
        %11453 = vrot.lane.b32.xlu0 %v11133, 64
        %v11454 = vpop.permute.xlu0 %11453
        %11455 = vrot.lane.b32.xlu0 %v11136, 64
        %v11456 = vpop.permute.xlu0 %11455
        %11457 = vrot.lane.b32.xlu0 %v11141, 64
        %v11458 = vpop.permute.xlu0 %11457
        %11459 = vrot.lane.b32.xlu0 %v11144, 64
        %v11460 = vpop.permute.xlu0 %11459
        %11461 = vrot.lane.b32.xlu0 %v11149, 64
        %v11462 = vpop.permute.xlu0 %11461
        %11463 = vrot.lane.b32.xlu0 %v11152, 64
        %v11464 = vpop.permute.xlu0 %11463
        %11465 = vrot.lane.b32.xlu0 %v11157, 64
        %v11466 = vpop.permute.xlu0 %11465
        %11467 = vrot.lane.b32.xlu0 %v11160, 64
        %v11468 = vpop.permute.xlu0 %11467
        %11469 = vrot.lane.b32.xlu0 %v11165, 64
        %v11470 = vpop.permute.xlu0 %11469
        %11471 = vrot.lane.b32.xlu0 %v11168, 64
        %v11472 = vpop.permute.xlu0 %11471
        %11473 = vrot.lane.b32.xlu0 %v11173, 64
        %v11474 = vpop.permute.xlu0 %11473
        %11475 = vrot.lane.b32.xlu0 %v11176, 64
        %v11476 = vpop.permute.xlu0 %11475
        %11477 = vrot.lane.b32.xlu0 %v11181, 64
        %v11478 = vpop.permute.xlu0 %11477
        %11479 = vrot.lane.b32.xlu0 %v11184, 64
        %v11480 = vpop.permute.xlu0 %11479
        %11481 = vrot.lane.b32.xlu0 %v11189, 64
        %v11482 = vpop.permute.xlu0 %11481
        %11483 = vrot.lane.b32.xlu0 %v11192, 64
        %v11484 = vpop.permute.xlu0 %11483
        %11485 = vrot.lane.b32.xlu0 %v11197, 64
        %v11486 = vpop.permute.xlu0 %11485
        %11487 = vrot.lane.b32.xlu0 %v11200, 64
        %v11488 = vpop.permute.xlu0 %11487
        %11489 = vrot.lane.b32.xlu0 %v11205, 64
        %v11490 = vpop.permute.xlu0 %11489
        %11491 = vrot.lane.b32.xlu0 %v11208, 64
        %v11492 = vpop.permute.xlu0 %11491
        %11493 = vrot.lane.b32.xlu0 %v11213, 64
        %v11494 = vpop.permute.xlu0 %11493
        %11495 = vrot.lane.b32.xlu0 %v11216, 64
        %v11496 = vpop.permute.xlu0 %11495
        %11497 = vrot.lane.b32.xlu0 %v11221, 64
        %v11498 = vpop.permute.xlu0 %11497
        %11499 = vrot.lane.b32.xlu0 %v11224, 64
        %v11500 = vpop.permute.xlu0 %11499
        %11501 = vrot.lane.b32.xlu0 %v11229, 64
        %v11502 = vpop.permute.xlu0 %11501
        %11503 = vrot.lane.b32.xlu0 %v11232, 64
        %v11504 = vpop.permute.xlu0 %11503
        %11505 = vrot.lane.b32.xlu0 %v11237, 64
        %v11506 = vpop.permute.xlu0 %11505
        %11507 = vrot.lane.b32.xlu0 %v11240, 64
        %v11508 = vpop.permute.xlu0 %11507
        %11509 = vrot.lane.b32.xlu0 %v11245, 64
        %v11510 = vpop.permute.xlu0 %11509
        %11511 = vrot.lane.b32.xlu0 %v11248, 64
        %v11512 = vpop.permute.xlu0 %11511
        %11513 = vrot.lane.b32.xlu0 %v11253, 64
        %v11514 = vpop.permute.xlu0 %11513
        %11515 = vrot.lane.b32.xlu0 %v11256, 64
        %v11516 = vpop.permute.xlu0 %11515
        %v11549 = vadd.f32 %v11419, %v11454
        %v11550 = vadd.f32 %v11420, %v11456
        %v11551 = vadd.f32 %v11421, %v11458
        %v11552 = vadd.f32 %v11422, %v11460
        %v11553 = vadd.f32 %v11423, %v11462
        %v11554 = vadd.f32 %v11424, %v11464
        %v11555 = vadd.f32 %v11425, %v11466
        %v11556 = vadd.f32 %v11426, %v11468
        %v11557 = vadd.f32 %v11427, %v11470
        %v11558 = vadd.f32 %v11428, %v11472
        %v11559 = vadd.f32 %v11429, %v11474
        %v11560 = vadd.f32 %v11430, %v11476
        %v11561 = vadd.f32 %v11431, %v11478
        %v11562 = vadd.f32 %v11432, %v11480
        %v11563 = vadd.f32 %v11433, %v11482
        %v11564 = vadd.f32 %v11434, %v11484
        %v11565 = vadd.f32 %v11435, %v11486
        %v11566 = vadd.f32 %v11436, %v11488
        %v11567 = vadd.f32 %v11437, %v11490
        %v11568 = vadd.f32 %v11438, %v11492
        %v11569 = vadd.f32 %v11439, %v11494
        %v11570 = vadd.f32 %v11440, %v11496
        %v11571 = vadd.f32 %v11441, %v11498
        %v11572 = vadd.f32 %v11442, %v11500
        %v11573 = vadd.f32 %v11443, %v11502
        %v11574 = vadd.f32 %v11444, %v11504
        %v11575 = vadd.f32 %v11445, %v11506
        %v11576 = vadd.f32 %v11446, %v11508
        %v11577 = vadd.f32 %v11447, %v11510
        %v11578 = vadd.f32 %v11448, %v11512
        %v11579 = vadd.f32 %v11449, %v11514
        %v11580 = vadd.f32 %v11450, %v11516
        %v11581 = vld [vmem:[#allocation2 + $0x8] sm:$0xff]
        %v11582 = vld [vmem:[#allocation2 + $0x10] sm:$0x1]
        %v11583 = vld [vmem:[#allocation2 + $0x20] sm:$0xff]
        %v11584 = vld [vmem:[#allocation2 + $0x28] sm:$0x1]
        %v11585 = vld [vmem:[#allocation2 + $0x38] sm:$0xff]
        %v11586 = vld [vmem:[#allocation2 + $0x40] sm:$0x1]
        %v11587 = vld [vmem:[#allocation2 + $0x50] sm:$0xff]
        %v11588 = vld [vmem:[#allocation2 + $0x58] sm:$0x1]
        %v11589 = vld [vmem:[#allocation2 + $0x68] sm:$0xff]
        %v11590 = vld [vmem:[#allocation2 + $0x70] sm:$0x1]
        %v11591 = vld [vmem:[#allocation2 + $0x80] sm:$0xff]
        %v11592 = vld [vmem:[#allocation2 + $0x88] sm:$0x1]
        %v11593 = vld [vmem:[#allocation2 + $0x98] sm:$0xff]
        %v11594 = vld [vmem:[#allocation2 + $0xa0] sm:$0x1]
        %v11595 = vld [vmem:[#allocation2 + $0xb0] sm:$0xff]
        %v11596 = vld [vmem:[#allocation2 + $0xb8] sm:$0x1]
        %v11597 = vld [vmem:[#allocation2 + $0xc8] sm:$0xff]
        %v11598 = vld [vmem:[#allocation2 + $0xd0] sm:$0x1]
        %v11599 = vld [vmem:[#allocation2 + $0xe0] sm:$0xff]
        %v11600 = vld [vmem:[#allocation2 + $0xe8] sm:$0x1]
        %v11601 = vld [vmem:[#allocation2 + $0xf8] sm:$0xff]
        %v11602 = vld [vmem:[#allocation2 + $0x100] sm:$0x1]
        %v11603 = vld [vmem:[#allocation2 + $0x110] sm:$0xff]
        %v11604 = vld [vmem:[#allocation2 + $0x118] sm:$0x1]
        %v11605 = vld [vmem:[#allocation2 + $0x128] sm:$0xff]
        %v11606 = vld [vmem:[#allocation2 + $0x130] sm:$0x1]
        %v11607 = vld [vmem:[#allocation2 + $0x140] sm:$0xff]
        %v11608 = vld [vmem:[#allocation2 + $0x148] sm:$0x1]
        %v11609 = vld [vmem:[#allocation2 + $0x158] sm:$0xff]
        %v11610 = vld [vmem:[#allocation2 + $0x160] sm:$0x1]
        %v11611 = vld [vmem:[#allocation2 + $0x170] sm:$0xff]
        %v11612 = vld [vmem:[#allocation2 + $0x178] sm:$0x1]
        %v11613 = vld [vmem:[#allocation2 + $0x188] sm:$0xff]
        %v11614 = vld [vmem:[#allocation2 + $0x190] sm:$0x1]
        %v11615 = vld [vmem:[#allocation2 + $0x1a0] sm:$0xff]
        %v11616 = vld [vmem:[#allocation2 + $0x1a8] sm:$0x1]
        %v11618 = vshrl.u32 %v11581, 16
        %v11620 = vshll.u32 %v11581, 16
        %v11622 = vrot.slane %v11620, 1
        %v11623 = vor.u32 %v11618, %v11622
        %v11625 = vshll.u32 %v11582, 16
        %v11627 = vrot.slane %v11625, 1
        %v11628 = vsel %vm1690, %v11623, %v11627
        %v11630 = vshrl.u32 %v11583, 16
        %v11632 = vshll.u32 %v11583, 16
        %v11634 = vrot.slane %v11632, 1
        %v11635 = vor.u32 %v11630, %v11634
        %v11637 = vshll.u32 %v11584, 16
        %v11639 = vrot.slane %v11637, 1
        %v11640 = vsel %vm1690, %v11635, %v11639
        %v11642 = vshrl.u32 %v11585, 16
        %v11644 = vshll.u32 %v11585, 16
        %v11646 = vrot.slane %v11644, 1
        %v11647 = vor.u32 %v11642, %v11646
        %v11649 = vshll.u32 %v11586, 16
        %v11651 = vrot.slane %v11649, 1
        %v11652 = vsel %vm1690, %v11647, %v11651
        %v11654 = vshrl.u32 %v11587, 16
        %v11656 = vshll.u32 %v11587, 16
        %v11658 = vrot.slane %v11656, 1
        %v11659 = vor.u32 %v11654, %v11658
        %v11661 = vshll.u32 %v11588, 16
        %v11663 = vrot.slane %v11661, 1
        %v11664 = vsel %vm1690, %v11659, %v11663
        %v11666 = vshrl.u32 %v11589, 16
        %v11668 = vshll.u32 %v11589, 16
        %v11670 = vrot.slane %v11668, 1
        %v11671 = vor.u32 %v11666, %v11670
        %v11673 = vshll.u32 %v11590, 16
        %v11675 = vrot.slane %v11673, 1
        %v11676 = vsel %vm1690, %v11671, %v11675
        %v11678 = vshrl.u32 %v11591, 16
        %v11680 = vshll.u32 %v11591, 16
        %v11682 = vrot.slane %v11680, 1
        %v11683 = vor.u32 %v11678, %v11682
        %v11685 = vshll.u32 %v11592, 16
        %v11687 = vrot.slane %v11685, 1
        %v11688 = vsel %vm1690, %v11683, %v11687
        %v11690 = vshrl.u32 %v11593, 16
        %v11692 = vshll.u32 %v11593, 16
        %v11694 = vrot.slane %v11692, 1
        %v11695 = vor.u32 %v11690, %v11694
        %v11697 = vshll.u32 %v11594, 16
        %v11699 = vrot.slane %v11697, 1
        %v11700 = vsel %vm1690, %v11695, %v11699
        %v11702 = vshrl.u32 %v11595, 16
        %v11704 = vshll.u32 %v11595, 16
        %v11706 = vrot.slane %v11704, 1
        %v11707 = vor.u32 %v11702, %v11706
        %v11709 = vshll.u32 %v11596, 16
        %v11711 = vrot.slane %v11709, 1
        %v11712 = vsel %vm1690, %v11707, %v11711
        %v11714 = vshrl.u32 %v11597, 16
        %v11716 = vshll.u32 %v11597, 16
        %v11718 = vrot.slane %v11716, 1
        %v11719 = vor.u32 %v11714, %v11718
        %v11721 = vshll.u32 %v11598, 16
        %v11723 = vrot.slane %v11721, 1
        %v11724 = vsel %vm1690, %v11719, %v11723
        %v11726 = vshrl.u32 %v11599, 16
        %v11728 = vshll.u32 %v11599, 16
        %v11730 = vrot.slane %v11728, 1
        %v11731 = vor.u32 %v11726, %v11730
        %v11733 = vshll.u32 %v11600, 16
        %v11735 = vrot.slane %v11733, 1
        %v11736 = vsel %vm1690, %v11731, %v11735
        %v11738 = vshrl.u32 %v11601, 16
        %v11740 = vshll.u32 %v11601, 16
        %v11742 = vrot.slane %v11740, 1
        %v11743 = vor.u32 %v11738, %v11742
        %v11745 = vshll.u32 %v11602, 16
        %v11747 = vrot.slane %v11745, 1
        %v11748 = vsel %vm1690, %v11743, %v11747
        %v11750 = vshrl.u32 %v11603, 16
        %v11752 = vshll.u32 %v11603, 16
        %v11754 = vrot.slane %v11752, 1
        %v11755 = vor.u32 %v11750, %v11754
        %v11757 = vshll.u32 %v11604, 16
        %v11759 = vrot.slane %v11757, 1
        %v11760 = vsel %vm1690, %v11755, %v11759
        %v11762 = vshrl.u32 %v11605, 16
        %v11764 = vshll.u32 %v11605, 16
        %v11766 = vrot.slane %v11764, 1
        %v11767 = vor.u32 %v11762, %v11766
        %v11769 = vshll.u32 %v11606, 16
        %v11771 = vrot.slane %v11769, 1
        %v11772 = vsel %vm1690, %v11767, %v11771
        %v11774 = vshrl.u32 %v11607, 16
        %v11776 = vshll.u32 %v11607, 16
        %v11778 = vrot.slane %v11776, 1
        %v11779 = vor.u32 %v11774, %v11778
        %v11781 = vshll.u32 %v11608, 16
        %v11783 = vrot.slane %v11781, 1
        %v11784 = vsel %vm1690, %v11779, %v11783
        %v11786 = vshrl.u32 %v11609, 16
        %v11788 = vshll.u32 %v11609, 16
        %v11790 = vrot.slane %v11788, 1
        %v11791 = vor.u32 %v11786, %v11790
        %v11793 = vshll.u32 %v11610, 16
        %v11795 = vrot.slane %v11793, 1
        %v11796 = vsel %vm1690, %v11791, %v11795
        %v11798 = vshrl.u32 %v11611, 16
        %v11800 = vshll.u32 %v11611, 16
        %v11802 = vrot.slane %v11800, 1
        %v11803 = vor.u32 %v11798, %v11802
        %v11805 = vshll.u32 %v11612, 16
        %v11807 = vrot.slane %v11805, 1
        %v11808 = vsel %vm1690, %v11803, %v11807
        %v11810 = vshrl.u32 %v11613, 16
        %v11812 = vshll.u32 %v11613, 16
        %v11814 = vrot.slane %v11812, 1
        %v11815 = vor.u32 %v11810, %v11814
        %v11817 = vshll.u32 %v11614, 16
        %v11819 = vrot.slane %v11817, 1
        %v11820 = vsel %vm1690, %v11815, %v11819
        %v11822 = vshrl.u32 %v11615, 16
        %v11824 = vshll.u32 %v11615, 16
        %v11826 = vrot.slane %v11824, 1
        %v11827 = vor.u32 %v11822, %v11826
        %v11829 = vshll.u32 %v11616, 16
        %v11831 = vrot.slane %v11829, 1
        %v11832 = vsel %vm1690, %v11827, %v11831
        %s11833 = scalar_lea.vmem %s1, 672
        %v11834 = vld [vmem:[%s11833] sm:$0xf]
        %v11835 = vld [vmem:[%s11833 + $0x4] sm:$0xf]
        %v11836 = vld [vmem:[%s11833 + $0x8] sm:$0xf]
        %v11837 = vld [vmem:[%s11833 + $0xc] sm:$0xf]
        %v11838 = vld [vmem:[%s11833 + $0x10] sm:$0xf]
        %v11839 = vld [vmem:[%s11833 + $0x14] sm:$0xf]
        %v11840 = vld [vmem:[%s11833 + $0x18] sm:$0xf]
        %v11841 = vld [vmem:[%s11833 + $0x1c] sm:$0xf]
        %v11842 = vld [vmem:[%s11833 + $0x20] sm:$0xf]
        %v11843 = vld [vmem:[%s11833 + $0x24] sm:$0xf]
        %v11844 = vld [vmem:[%s11833 + $0x28] sm:$0xf]
        %v11845 = vld [vmem:[%s11833 + $0x2c] sm:$0xf]
        %v11858 = vunpack.c.l.b16 %v11834
        %v11859 = vunpack.c.l.b16 %v11835
        %v11860 = vunpack.c.l.b16 %v11836
        %v11861 = vunpack.c.l.b16 %v11837
        %v11862 = vunpack.c.l.b16 %v11838
        %v11863 = vunpack.c.l.b16 %v11839
        %v11864 = vunpack.c.l.b16 %v11840
        %v11865 = vunpack.c.l.b16 %v11841
        %v11866 = vunpack.c.l.b16 %v11842
        %v11867 = vunpack.c.l.b16 %v11843
        %v11868 = vunpack.c.l.b16 %v11844
        %v11869 = vunpack.c.l.b16 %v11845
        %v11870 = vpack.c.b16 %v11859, %v11858
        %v11871 = vpack.c.b16 %v11861, %v11860
        %v11872 = vpack.c.b16 %v11863, %v11862
        %v11873 = vpack.c.b16 %v11865, %v11864
        %v11874 = vpack.c.b16 %v11867, %v11866
        %v11875 = vpack.c.b16 %v11869, %v11868
        %v11883 = vsel %vm170, %v11628, 0
        %v11886 = vsel %vm170, %v11640, 0
        %v11889 = vsel %vm170, %v11652, 0
        %v11892 = vsel %vm170, %v11664, 0
        %v11895 = vsel %vm170, %v11676, 0
        %v11898 = vsel %vm170, %v11688, 0
        %v11901 = vsel %vm170, %v11700, 0
        %v11904 = vsel %vm170, %v11712, 0
        %v11907 = vsel %vm170, %v11724, 0
        %v11910 = vsel %vm170, %v11736, 0
        %v11913 = vsel %vm170, %v11748, 0
        %v11916 = vsel %vm170, %v11760, 0
        %v11919 = vsel %vm170, %v11772, 0
        %v11922 = vsel %vm170, %v11784, 0
        %v11925 = vsel %vm170, %v11796, 0
        %v11928 = vsel %vm170, %v11808, 0
        %v11931 = vsel %vm170, %v11820, 0
        %v11934 = vsel %vm170, %v11832, 0
        %11936 = vmatprep.subr.bf16.mxu0 0
        %11937 = vmatpush1.bf16.msra.mxu0 %v11870
        %11938 = vmatprep.subr.bf16.mxu0 0
        %11939 = vmatpush1.bf16.msra.mxu0 %v11871
        %11940 = vmatprep.subr.bf16.mxu0 0
        %11941 = vmatpush1.bf16.msra.mxu0 %v11872
        %11942 = vmatprep.subr.bf16.mxu0 0
        %11943 = vmatpush1.bf16.msra.mxu0 %v11873
        %11944 = vmatprep.subr.bf16.mxu0 0
        %11945 = vmatpush1.bf16.msra.mxu0 %v11874
        %11946 = vmatprep.subr.bf16.mxu0 0
        %11947 = vmatpush1.bf16.msra.mxu0 %v11875
        %11948 = vmatprep.subr.bf16.mxu0 0
        %11949 = vmatpush1.bf16.msra.mxu0 0
        %11950 = vmatprep.subr.bf16.mxu0 0
        %11951 = vmatpush1.bf16.msra.mxu0 0
        %11952 = vmatprep.subr.bf16.mxu0 0
        %11953 = vmatpush1.bf16.msra.mxu0 0
        %11954 = vmatprep.subr.bf16.mxu0 0
        %11955 = vmatpush1.bf16.msra.mxu0 0
        %11956 = vmatprep.subr.bf16.mxu0 0
        %11957 = vmatpush1.bf16.msra.mxu0 0
        %11958 = vmatprep.subr.bf16.mxu0 0
        %11959 = vmatpush1.bf16.msra.mxu0 0
        %11960 = vmatprep.subr.bf16.mxu0 0
        %11961 = vmatpush1.bf16.msra.mxu0 0
        %11962 = vmatprep.subr.bf16.mxu0 0
        %11963 = vmatpush1.bf16.msra.mxu0 0
        %11964 = vmatprep.subr.bf16.mxu0 0
        %11965 = vmatpush1.bf16.msra.mxu0 0
        %11966 = vmatprep.subr.bf16.mxu0 0
        %11967 = vmatpush1.bf16.msra.mxu0 0
        %11968 = vmatprep.mubr.bf16.mxu0 0
        %11969 = vmatmul.mubr.bf16.gmra.mrb[0].mxu0 %v11883
        %v11970 = vpop.f32.mrb[0].mxu0
        %v11971 = vadd.f32 0.0, %v11970
        %v11972 = vpop.f32.mrb[0].mxu0
        %v11973 = vpop.f32.mrb[0].mxu0
        %v11974 = vadd.f32 0.0, %v11973
        %v11975 = vpop.f32.mrb[0].mxu0
        %11976 = vmatprep.mubr.bf16.mxu0 0
        %11977 = vmatmul.mubr.bf16.gmra.mrb[0].mxu0 %v11886
        %v11978 = vpop.f32.mrb[0].mxu0
        %v11979 = vadd.f32 0.0, %v11978
        %v11980 = vpop.f32.mrb[0].mxu0
        %v11981 = vpop.f32.mrb[0].mxu0
        %v11982 = vadd.f32 0.0, %v11981
        %v11983 = vpop.f32.mrb[0].mxu0
        %11984 = vmatprep.mubr.bf16.mxu0 0
        %11985 = vmatmul.mubr.bf16.gmra.mrb[0].mxu0 %v11889
        %v11986 = vpop.f32.mrb[0].mxu0
        %v11987 = vadd.f32 0.0, %v11986
        %v11988 = vpop.f32.mrb[0].mxu0
        %v11989 = vpop.f32.mrb[0].mxu0
        %v11990 = vadd.f32 0.0, %v11989
        %v11991 = vpop.f32.mrb[0].mxu0
        %11992 = vmatprep.mubr.bf16.mxu0 0
        %11993 = vmatmul.mubr.bf16.gmra.mrb[0].mxu0 %v11892
        %v11994 = vpop.f32.mrb[0].mxu0
        %v11995 = vadd.f32 0.0, %v11994
        %v11996 = vpop.f32.mrb[0].mxu0
        %v11997 = vpop.f32.mrb[0].mxu0
        %v11998 = vadd.f32 0.0, %v11997
        %v11999 = vpop.f32.mrb[0].mxu0
        %12000 = vmatprep.mubr.bf16.mxu0 0
        %12001 = vmatmul.mubr.bf16.gmra.mrb[0].mxu0 %v11895
        %v12002 = vpop.f32.mrb[0].mxu0
        %v12003 = vadd.f32 0.0, %v12002
        %v12004 = vpop.f32.mrb[0].mxu0
        %v12005 = vpop.f32.mrb[0].mxu0
        %v12006 = vadd.f32 0.0, %v12005
        %v12007 = vpop.f32.mrb[0].mxu0
        %12008 = vmatprep.mubr.bf16.mxu0 0
        %12009 = vmatmul.mubr.bf16.gmra.mrb[0].mxu0 %v11898
        %v12010 = vpop.f32.mrb[0].mxu0
        %v12011 = vadd.f32 0.0, %v12010
        %v12012 = vpop.f32.mrb[0].mxu0
        %v12013 = vpop.f32.mrb[0].mxu0
        %v12014 = vadd.f32 0.0, %v12013
        %v12015 = vpop.f32.mrb[0].mxu0
        %12016 = vmatprep.mubr.bf16.mxu0 0
        %12017 = vmatmul.mubr.bf16.gmra.mrb[0].mxu0 %v11901
        %v12018 = vpop.f32.mrb[0].mxu0
        %v12019 = vadd.f32 0.0, %v12018
        %v12020 = vpop.f32.mrb[0].mxu0
        %v12021 = vpop.f32.mrb[0].mxu0
        %v12022 = vadd.f32 0.0, %v12021
        %v12023 = vpop.f32.mrb[0].mxu0
        %12024 = vmatprep.mubr.bf16.mxu0 0
        %12025 = vmatmul.mubr.bf16.gmra.mrb[0].mxu0 %v11904
        %v12026 = vpop.f32.mrb[0].mxu0
        %v12027 = vadd.f32 0.0, %v12026
        %v12028 = vpop.f32.mrb[0].mxu0
        %v12029 = vpop.f32.mrb[0].mxu0
        %v12030 = vadd.f32 0.0, %v12029
        %v12031 = vpop.f32.mrb[0].mxu0
        %12032 = vmatprep.mubr.bf16.mxu0 0
        %12033 = vmatmul.mubr.bf16.gmra.mrb[0].mxu0 %v11907
        %v12034 = vpop.f32.mrb[0].mxu0
        %v12035 = vadd.f32 0.0, %v12034
        %v12036 = vpop.f32.mrb[0].mxu0
        %v12037 = vpop.f32.mrb[0].mxu0
        %v12038 = vadd.f32 0.0, %v12037
        %v12039 = vpop.f32.mrb[0].mxu0
        %12040 = vmatprep.mubr.bf16.mxu0 0
        %12041 = vmatmul.mubr.bf16.gmra.mrb[0].mxu0 %v11910
        %v12042 = vpop.f32.mrb[0].mxu0
        %v12043 = vadd.f32 0.0, %v12042
        %v12044 = vpop.f32.mrb[0].mxu0
        %v12045 = vpop.f32.mrb[0].mxu0
        %v12046 = vadd.f32 0.0, %v12045
        %v12047 = vpop.f32.mrb[0].mxu0
        %12048 = vmatprep.mubr.bf16.mxu0 0
        %12049 = vmatmul.mubr.bf16.gmra.mrb[0].mxu0 %v11913
        %v12050 = vpop.f32.mrb[0].mxu0
        %v12051 = vadd.f32 0.0, %v12050
        %v12052 = vpop.f32.mrb[0].mxu0
        %v12053 = vpop.f32.mrb[0].mxu0
        %v12054 = vadd.f32 0.0, %v12053
        %v12055 = vpop.f32.mrb[0].mxu0
        %12056 = vmatprep.mubr.bf16.mxu0 0
        %12057 = vmatmul.mubr.bf16.gmra.mrb[0].mxu0 %v11916
        %v12058 = vpop.f32.mrb[0].mxu0
        %v12059 = vadd.f32 0.0, %v12058
        %v12060 = vpop.f32.mrb[0].mxu0
        %v12061 = vpop.f32.mrb[0].mxu0
        %v12062 = vadd.f32 0.0, %v12061
        %v12063 = vpop.f32.mrb[0].mxu0
        %12064 = vmatprep.mubr.bf16.mxu0 0
        %12065 = vmatmul.mubr.bf16.gmra.mrb[0].mxu0 %v11919
        %v12066 = vpop.f32.mrb[0].mxu0
        %v12067 = vadd.f32 0.0, %v12066
        %v12068 = vpop.f32.mrb[0].mxu0
        %v12069 = vpop.f32.mrb[0].mxu0
        %v12070 = vadd.f32 0.0, %v12069
        %v12071 = vpop.f32.mrb[0].mxu0
        %12072 = vmatprep.mubr.bf16.mxu0 0
        %12073 = vmatmul.mubr.bf16.gmra.mrb[0].mxu0 %v11922
        %v12074 = vpop.f32.mrb[0].mxu0
        %v12075 = vadd.f32 0.0, %v12074
        %v12076 = vpop.f32.mrb[0].mxu0
        %v12077 = vpop.f32.mrb[0].mxu0
        %v12078 = vadd.f32 0.0, %v12077
        %v12079 = vpop.f32.mrb[0].mxu0
        %12080 = vmatprep.mubr.bf16.mxu0 0
        %12081 = vmatmul.mubr.bf16.gmra.mrb[0].mxu0 %v11925
        %v12082 = vpop.f32.mrb[0].mxu0
        %v12083 = vadd.f32 0.0, %v12082
        %v12084 = vpop.f32.mrb[0].mxu0
        %v12085 = vpop.f32.mrb[0].mxu0
        %v12086 = vadd.f32 0.0, %v12085
        %v12087 = vpop.f32.mrb[0].mxu0
        %12088 = vmatprep.mubr.bf16.mxu0 0
        %12089 = vmatmul.mubr.bf16.gmra.mrb[0].mxu0 %v11928
        %v12090 = vpop.f32.mrb[0].mxu0
        %v12091 = vadd.f32 0.0, %v12090
        %v12092 = vpop.f32.mrb[0].mxu0
        %v12093 = vpop.f32.mrb[0].mxu0
        %v12094 = vadd.f32 0.0, %v12093
        %v12095 = vpop.f32.mrb[0].mxu0
        %12096 = vmatprep.mubr.bf16.mxu0 0
        %12097 = vmatmul.mubr.bf16.gmra.mrb[0].mxu0 %v11931
        %v12098 = vpop.f32.mrb[0].mxu0
        %v12099 = vadd.f32 0.0, %v12098
        %v12100 = vpop.f32.mrb[0].mxu0
        %v12101 = vpop.f32.mrb[0].mxu0
        %v12102 = vadd.f32 0.0, %v12101
        %v12103 = vpop.f32.mrb[0].mxu0
        %12104 = vmatprep.mubr.bf16.mxu0 0
        %12105 = vmatmul.mubr.bf16.gmra.mrb[0].mxu0 %v11934
        %v12106 = vpop.f32.mrb[0].mxu0
        %v12107 = vadd.f32 0.0, %v12106
        %v12108 = vpop.f32.mrb[0].mxu0
        %v12109 = vpop.f32.mrb[0].mxu0
        %v12110 = vadd.f32 0.0, %v12109
        %v12111 = vpop.f32.mrb[0].mxu0
        %12112 = vdwg.mxu0
        %v12113 = vadd.f32 %v11549, %v11971
        %v12114 = vadd.f32 %v11550, %v11974
        %v12115 = vadd.f32 %v11551, %v11979
        %v12116 = vadd.f32 %v11552, %v11982
        %v12117 = vadd.f32 %v11553, %v11987
        %v12118 = vadd.f32 %v11554, %v11990
        %v12119 = vadd.f32 %v11555, %v11995
        %v12120 = vadd.f32 %v11556, %v11998
        %v12121 = vadd.f32 %v11557, %v12003
        %v12122 = vadd.f32 %v11558, %v12006
        %v12123 = vadd.f32 %v11559, %v12011
        %v12124 = vadd.f32 %v11560, %v12014
        %v12125 = vadd.f32 %v11561, %v12019
        %v12126 = vadd.f32 %v11562, %v12022
        %v12127 = vadd.f32 %v11563, %v12027
        %v12128 = vadd.f32 %v11564, %v12030
        %v12129 = vadd.f32 %v11565, %v12035
        %v12130 = vadd.f32 %v11566, %v12038
        %v12131 = vadd.f32 %v11567, %v12043
        %v12132 = vadd.f32 %v11568, %v12046
        %v12133 = vadd.f32 %v11569, %v12051
        %v12134 = vadd.f32 %v11570, %v12054
        %v12135 = vadd.f32 %v11571, %v12059
        %v12136 = vadd.f32 %v11572, %v12062
        %v12137 = vadd.f32 %v11573, %v12067
        %v12138 = vadd.f32 %v11574, %v12070
        %v12139 = vadd.f32 %v11575, %v12075
        %v12140 = vadd.f32 %v11576, %v12078
        %v12141 = vadd.f32 %v11577, %v12083
        %v12142 = vadd.f32 %v11578, %v12086
        %v12143 = vadd.f32 %v11579, %v12091
        %v12144 = vadd.f32 %v11580, %v12094
        %12177 = vrot.lane.b32.xlu0 %v11979, 96
        %v12178 = vpop.permute.xlu0 %12177
        %12179 = vrot.lane.b32.xlu0 %v11982, 96
        %v12180 = vpop.permute.xlu0 %12179
        %12181 = vrot.lane.b32.xlu0 %v11987, 96
        %v12182 = vpop.permute.xlu0 %12181
        %12183 = vrot.lane.b32.xlu0 %v11990, 96
        %v12184 = vpop.permute.xlu0 %12183
        %12185 = vrot.lane.b32.xlu0 %v11995, 96
        %v12186 = vpop.permute.xlu0 %12185
        %12187 = vrot.lane.b32.xlu0 %v11998, 96
        %v12188 = vpop.permute.xlu0 %12187
        %12189 = vrot.lane.b32.xlu0 %v12003, 96
        %v12190 = vpop.permute.xlu0 %12189
        %12191 = vrot.lane.b32.xlu0 %v12006, 96
        %v12192 = vpop.permute.xlu0 %12191
        %12193 = vrot.lane.b32.xlu0 %v12011, 96
        %v12194 = vpop.permute.xlu0 %12193
        %12195 = vrot.lane.b32.xlu0 %v12014, 96
        %v12196 = vpop.permute.xlu0 %12195
        %12197 = vrot.lane.b32.xlu0 %v12019, 96
        %v12198 = vpop.permute.xlu0 %12197
        %12199 = vrot.lane.b32.xlu0 %v12022, 96
        %v12200 = vpop.permute.xlu0 %12199
        %12201 = vrot.lane.b32.xlu0 %v12027, 96
        %v12202 = vpop.permute.xlu0 %12201
        %12203 = vrot.lane.b32.xlu0 %v12030, 96
        %v12204 = vpop.permute.xlu0 %12203
        %12205 = vrot.lane.b32.xlu0 %v12035, 96
        %v12206 = vpop.permute.xlu0 %12205
        %12207 = vrot.lane.b32.xlu0 %v12038, 96
        %v12208 = vpop.permute.xlu0 %12207
        %12209 = vrot.lane.b32.xlu0 %v12043, 96
        %v12210 = vpop.permute.xlu0 %12209
        %12211 = vrot.lane.b32.xlu0 %v12046, 96
        %v12212 = vpop.permute.xlu0 %12211
        %12213 = vrot.lane.b32.xlu0 %v12051, 96
        %v12214 = vpop.permute.xlu0 %12213
        %12215 = vrot.lane.b32.xlu0 %v12054, 96
        %v12216 = vpop.permute.xlu0 %12215
        %12217 = vrot.lane.b32.xlu0 %v12059, 96
        %v12218 = vpop.permute.xlu0 %12217
        %12219 = vrot.lane.b32.xlu0 %v12062, 96
        %v12220 = vpop.permute.xlu0 %12219
        %12221 = vrot.lane.b32.xlu0 %v12067, 96
        %v12222 = vpop.permute.xlu0 %12221
        %12223 = vrot.lane.b32.xlu0 %v12070, 96
        %v12224 = vpop.permute.xlu0 %12223
        %12225 = vrot.lane.b32.xlu0 %v12075, 96
        %v12226 = vpop.permute.xlu0 %12225
        %12227 = vrot.lane.b32.xlu0 %v12078, 96
        %v12228 = vpop.permute.xlu0 %12227
        %12229 = vrot.lane.b32.xlu0 %v12083, 96
        %v12230 = vpop.permute.xlu0 %12229
        %12231 = vrot.lane.b32.xlu0 %v12086, 96
        %v12232 = vpop.permute.xlu0 %12231
        %12233 = vrot.lane.b32.xlu0 %v12091, 96
        %v12234 = vpop.permute.xlu0 %12233
        %12235 = vrot.lane.b32.xlu0 %v12094, 96
        %v12236 = vpop.permute.xlu0 %12235
        %12237 = vrot.lane.b32.xlu0 %v12099, 96
        %v12238 = vpop.permute.xlu0 %12237
        %12239 = vrot.lane.b32.xlu0 %v12102, 96
        %v12240 = vpop.permute.xlu0 %12239
        %v12273 = vadd.f32 %v12113, %v12178
        %v12274 = vadd.f32 %v12114, %v12180
        %v12275 = vadd.f32 %v12115, %v12182
        %v12276 = vadd.f32 %v12116, %v12184
        %v12277 = vadd.f32 %v12117, %v12186
        %v12278 = vadd.f32 %v12118, %v12188
        %v12279 = vadd.f32 %v12119, %v12190
        %v12280 = vadd.f32 %v12120, %v12192
        %v12281 = vadd.f32 %v12121, %v12194
        %v12282 = vadd.f32 %v12122, %v12196
        %v12283 = vadd.f32 %v12123, %v12198
        %v12284 = vadd.f32 %v12124, %v12200
        %v12285 = vadd.f32 %v12125, %v12202
        %v12286 = vadd.f32 %v12126, %v12204
        %v12287 = vadd.f32 %v12127, %v12206
        %v12288 = vadd.f32 %v12128, %v12208
        %v12289 = vadd.f32 %v12129, %v12210
        %v12290 = vadd.f32 %v12130, %v12212
        %v12291 = vadd.f32 %v12131, %v12214
        %v12292 = vadd.f32 %v12132, %v12216
        %v12293 = vadd.f32 %v12133, %v12218
        %v12294 = vadd.f32 %v12134, %v12220
        %v12295 = vadd.f32 %v12135, %v12222
        %v12296 = vadd.f32 %v12136, %v12224
        %v12297 = vadd.f32 %v12137, %v12226
        %v12298 = vadd.f32 %v12138, %v12228
        %v12299 = vadd.f32 %v12139, %v12230
        %v12300 = vadd.f32 %v12140, %v12232
        %v12301 = vadd.f32 %v12141, %v12234
        %v12302 = vadd.f32 %v12142, %v12236
        %v12303 = vadd.f32 %v12143, %v12238
        %v12304 = vadd.f32 %v12144, %v12240
        %12307 = vrot.lane.b32.xlu0 %v11987, 64
        %v12308 = vpop.permute.xlu0 %12307
        %12309 = vrot.lane.b32.xlu0 %v11990, 64
        %v12310 = vpop.permute.xlu0 %12309
        %12311 = vrot.lane.b32.xlu0 %v11995, 64
        %v12312 = vpop.permute.xlu0 %12311
        %12313 = vrot.lane.b32.xlu0 %v11998, 64
        %v12314 = vpop.permute.xlu0 %12313
        %12315 = vrot.lane.b32.xlu0 %v12003, 64
        %v12316 = vpop.permute.xlu0 %12315
        %12317 = vrot.lane.b32.xlu0 %v12006, 64
        %v12318 = vpop.permute.xlu0 %12317
        %12319 = vrot.lane.b32.xlu0 %v12011, 64
        %v12320 = vpop.permute.xlu0 %12319
        %12321 = vrot.lane.b32.xlu0 %v12014, 64
        %v12322 = vpop.permute.xlu0 %12321
        %12323 = vrot.lane.b32.xlu0 %v12019, 64
        %v12324 = vpop.permute.xlu0 %12323
        %12325 = vrot.lane.b32.xlu0 %v12022, 64
        %v12326 = vpop.permute.xlu0 %12325
        %12327 = vrot.lane.b32.xlu0 %v12027, 64
        %v12328 = vpop.permute.xlu0 %12327
        %12329 = vrot.lane.b32.xlu0 %v12030, 64
        %v12330 = vpop.permute.xlu0 %12329
        %12331 = vrot.lane.b32.xlu0 %v12035, 64
        %v12332 = vpop.permute.xlu0 %12331
        %12333 = vrot.lane.b32.xlu0 %v12038, 64
        %v12334 = vpop.permute.xlu0 %12333
        %12335 = vrot.lane.b32.xlu0 %v12043, 64
        %v12336 = vpop.permute.xlu0 %12335
        %12337 = vrot.lane.b32.xlu0 %v12046, 64
        %v12338 = vpop.permute.xlu0 %12337
        %12339 = vrot.lane.b32.xlu0 %v12051, 64
        %v12340 = vpop.permute.xlu0 %12339
        %12341 = vrot.lane.b32.xlu0 %v12054, 64
        %v12342 = vpop.permute.xlu0 %12341
        %12343 = vrot.lane.b32.xlu0 %v12059, 64
        %v12344 = vpop.permute.xlu0 %12343
        %12345 = vrot.lane.b32.xlu0 %v12062, 64
        %v12346 = vpop.permute.xlu0 %12345
        %12347 = vrot.lane.b32.xlu0 %v12067, 64
        %v12348 = vpop.permute.xlu0 %12347
        %12349 = vrot.lane.b32.xlu0 %v12070, 64
        %v12350 = vpop.permute.xlu0 %12349
        %12351 = vrot.lane.b32.xlu0 %v12075, 64
        %v12352 = vpop.permute.xlu0 %12351
        %12353 = vrot.lane.b32.xlu0 %v12078, 64
        %v12354 = vpop.permute.xlu0 %12353
        %12355 = vrot.lane.b32.xlu0 %v12083, 64
        %v12356 = vpop.permute.xlu0 %12355
        %12357 = vrot.lane.b32.xlu0 %v12086, 64
        %v12358 = vpop.permute.xlu0 %12357
        %12359 = vrot.lane.b32.xlu0 %v12091, 64
        %v12360 = vpop.permute.xlu0 %12359
        %12361 = vrot.lane.b32.xlu0 %v12094, 64
        %v12362 = vpop.permute.xlu0 %12361
        %12363 = vrot.lane.b32.xlu0 %v12099, 64
        %v12364 = vpop.permute.xlu0 %12363
        %12365 = vrot.lane.b32.xlu0 %v12102, 64
        %v12366 = vpop.permute.xlu0 %12365
        %12367 = vrot.lane.b32.xlu0 %v12107, 64
        %v12368 = vpop.permute.xlu0 %12367
        %12369 = vrot.lane.b32.xlu0 %v12110, 64
        %v12370 = vpop.permute.xlu0 %12369
        %v12403 = vadd.f32 %v12273, %v12308
        %v12404 = vadd.f32 %v12274, %v12310
        %v12405 = vadd.f32 %v12275, %v12312
        %v12406 = vadd.f32 %v12276, %v12314
        %v12407 = vadd.f32 %v12277, %v12316
        %v12408 = vadd.f32 %v12278, %v12318
        %v12409 = vadd.f32 %v12279, %v12320
        %v12410 = vadd.f32 %v12280, %v12322
        %v12411 = vadd.f32 %v12281, %v12324
        %v12412 = vadd.f32 %v12282, %v12326
        %v12413 = vadd.f32 %v12283, %v12328
        %v12414 = vadd.f32 %v12284, %v12330
        %v12415 = vadd.f32 %v12285, %v12332
        %v12416 = vadd.f32 %v12286, %v12334
        %v12417 = vadd.f32 %v12287, %v12336
        %v12418 = vadd.f32 %v12288, %v12338
        %v12419 = vadd.f32 %v12289, %v12340
        %v12420 = vadd.f32 %v12290, %v12342
        %v12421 = vadd.f32 %v12291, %v12344
        %v12422 = vadd.f32 %v12292, %v12346
        %v12423 = vadd.f32 %v12293, %v12348
        %v12424 = vadd.f32 %v12294, %v12350
        %v12425 = vadd.f32 %v12295, %v12352
        %v12426 = vadd.f32 %v12296, %v12354
        %v12427 = vadd.f32 %v12297, %v12356
        %v12428 = vadd.f32 %v12298, %v12358
        %v12429 = vadd.f32 %v12299, %v12360
        %v12430 = vadd.f32 %v12300, %v12362
        %v12431 = vadd.f32 %v12301, %v12364
        %v12432 = vadd.f32 %v12302, %v12366
        %v12433 = vadd.f32 %v12303, %v12368
        %v12434 = vadd.f32 %v12304, %v12370
        %s12435 = scalar_lea.vmem %s2, 4
        %v12436 = vld [vmem:[%s12435] sm:$0x1]
        %v12438 = vlaneseq
        %v12439 = vshrl.u32 %v12438, 7
        %v12440 = vsub.s32 0, %v12439
        %v12441 = vrot.slane %v12436, %v12440
        %v12443 = vadd.f32 %v12403, %v12441
        %v12444 = vadd.f32 %v12404, %v12441
        %v12445 = vadd.f32 %v12405, %v12441
        %v12446 = vadd.f32 %v12406, %v12441
        %v12447 = vadd.f32 %v12407, %v12441
        %v12448 = vadd.f32 %v12408, %v12441
        %v12449 = vadd.f32 %v12409, %v12441
        %v12450 = vadd.f32 %v12410, %v12441
        %v12451 = vadd.f32 %v12411, %v12441
        %v12452 = vadd.f32 %v12412, %v12441
        %v12453 = vadd.f32 %v12413, %v12441
        %v12454 = vadd.f32 %v12414, %v12441
        %v12455 = vadd.f32 %v12415, %v12441
        %v12456 = vadd.f32 %v12416, %v12441
        %v12457 = vadd.f32 %v12417, %v12441
        %v12458 = vadd.f32 %v12418, %v12441
        %v12459 = vadd.f32 %v12419, %v12441
        %v12460 = vadd.f32 %v12420, %v12441
        %v12461 = vadd.f32 %v12421, %v12441
        %v12462 = vadd.f32 %v12422, %v12441
        %v12463 = vadd.f32 %v12423, %v12441
        %v12464 = vadd.f32 %v12424, %v12441
        %v12465 = vadd.f32 %v12425, %v12441
        %v12466 = vadd.f32 %v12426, %v12441
        %v12467 = vadd.f32 %v12427, %v12441
        %v12468 = vadd.f32 %v12428, %v12441
        %v12469 = vadd.f32 %v12429, %v12441
        %v12470 = vadd.f32 %v12430, %v12441
        %v12471 = vadd.f32 %v12431, %v12441
        %v12472 = vadd.f32 %v12432, %v12441
        %v12473 = vadd.f32 %v12433, %v12441
        %v12474 = vadd.f32 %v12434, %v12441
        %v12475 = vmul.f32 %v12443, 0.2
        %v12476 = vmul.f32 %v12444, 0.2
        %v12477 = vmul.f32 %v12445, 0.2
        %v12478 = vmul.f32 %v12446, 0.2
        %v12479 = vmul.f32 %v12447, 0.2
        %v12480 = vmul.f32 %v12448, 0.2
        %v12481 = vmul.f32 %v12449, 0.2
        %v12482 = vmul.f32 %v12450, 0.2
        %v12483 = vmul.f32 %v12451, 0.2
        %v12484 = vmul.f32 %v12452, 0.2
        %v12485 = vmul.f32 %v12453, 0.2
        %v12486 = vmul.f32 %v12454, 0.2
        %v12487 = vmul.f32 %v12455, 0.2
        %v12488 = vmul.f32 %v12456, 0.2
        %v12489 = vmul.f32 %v12457, 0.2
        %v12490 = vmul.f32 %v12458, 0.2
        %v12491 = vmul.f32 %v12459, 0.2
        %v12492 = vmul.f32 %v12460, 0.2
        %v12493 = vmul.f32 %v12461, 0.2
        %v12494 = vmul.f32 %v12462, 0.2
        %v12495 = vmul.f32 %v12463, 0.2
        %v12496 = vmul.f32 %v12464, 0.2
        %v12497 = vmul.f32 %v12465, 0.2
        %v12498 = vmul.f32 %v12466, 0.2
        %v12499 = vmul.f32 %v12467, 0.2
        %v12500 = vmul.f32 %v12468, 0.2
        %v12501 = vmul.f32 %v12469, 0.2
        %v12502 = vmul.f32 %v12470, 0.2
        %v12503 = vmul.f32 %v12471, 0.2
        %v12504 = vmul.f32 %v12472, 0.2
        %v12505 = vmul.f32 %v12473, 0.2
        %v12506 = vmul.f32 %v12474, 0.2
        %v12507 = vadd.f32 %v12475, %v214
        %v12508 = vadd.f32 %v12476, %v215
        %v12509 = vadd.f32 %v12477, %v216
        %v12510 = vadd.f32 %v12478, %v217
        %v12511 = vadd.f32 %v12479, %v218
        %v12512 = vadd.f32 %v12480, %v219
        %v12513 = vadd.f32 %v12481, %v220
        %v12514 = vadd.f32 %v12482, %v221
        %v12515 = vadd.f32 %v12483, %v222
        %v12516 = vadd.f32 %v12484, %v223
        %v12517 = vadd.f32 %v12485, %v224
        %v12518 = vadd.f32 %v12486, %v225
        %v12519 = vadd.f32 %v12487, %v226
        %v12520 = vadd.f32 %v12488, %v227
        %v12521 = vadd.f32 %v12489, %v228
        %v12522 = vadd.f32 %v12490, %v229
        %v12523 = vadd.f32 %v12491, %v230
        %v12524 = vadd.f32 %v12492, %v231
        %v12525 = vadd.f32 %v12493, %v232
        %v12526 = vadd.f32 %v12494, %v233
        %v12527 = vadd.f32 %v12495, %v234
        %v12528 = vadd.f32 %v12496, %v235
        %v12529 = vadd.f32 %v12497, %v236
        %v12530 = vadd.f32 %v12498, %v237
        %v12531 = vadd.f32 %v12499, %v238
        %v12532 = vadd.f32 %v12500, %v239
        %v12533 = vadd.f32 %v12501, %v240
        %v12534 = vadd.f32 %v12502, %v241
        %v12535 = vadd.f32 %v12503, %v242
        %v12536 = vadd.f32 %v12504, %v243
        %v12537 = vadd.f32 %v12505, %v244
        %v12538 = vadd.f32 %v12506, %v245
        %12539 = vst.msk [vmem:[%s163] sm:$0xff] %vm263, %v12507
        %12540 = vst.msk [vmem:[%s163 + $0x8] sm:$0xff] %vm263, %v12508
        %12541 = vst.msk [vmem:[%s163 + $0x10] sm:$0xff] %vm263, %v12509
        %12542 = vst.msk [vmem:[%s163 + $0x18] sm:$0xff] %vm263, %v12510
        %12543 = vst.msk [vmem:[%s163 + $0x20] sm:$0xff] %vm263, %v12511
        %12544 = vst.msk [vmem:[%s163 + $0x28] sm:$0xff] %vm263, %v12512
        %12545 = vst.msk [vmem:[%s163 + $0x30] sm:$0xff] %vm263, %v12513
        %12546 = vst.msk [vmem:[%s163 + $0x38] sm:$0xff] %vm263, %v12514
        %12547 = vst.msk [vmem:[%s163 + $0x40] sm:$0xff] %vm263, %v12515
        %12548 = vst.msk [vmem:[%s163 + $0x48] sm:$0xff] %vm263, %v12516
        %12549 = vst.msk [vmem:[%s163 + $0x50] sm:$0xff] %vm263, %v12517
        %12550 = vst.msk [vmem:[%s163 + $0x58] sm:$0xff] %vm263, %v12518
        %12551 = vst.msk [vmem:[%s163 + $0x60] sm:$0xff] %vm263, %v12519
        %12552 = vst.msk [vmem:[%s163 + $0x68] sm:$0xff] %vm263, %v12520
        %12553 = vst.msk [vmem:[%s163 + $0x70] sm:$0xff] %vm263, %v12521
        %12554 = vst.msk [vmem:[%s163 + $0x78] sm:$0xff] %vm263, %v12522
        %12555 = vst.msk [vmem:[%s163 + $0x80] sm:$0xff] %vm263, %v12523
        %12556 = vst.msk [vmem:[%s163 + $0x88] sm:$0xff] %vm263, %v12524
        %12557 = vst.msk [vmem:[%s163 + $0x90] sm:$0xff] %vm263, %v12525
        %12558 = vst.msk [vmem:[%s163 + $0x98] sm:$0xff] %vm263, %v12526
        %12559 = vst.msk [vmem:[%s163 + $0xa0] sm:$0xff] %vm263, %v12527
        %12560 = vst.msk [vmem:[%s163 + $0xa8] sm:$0xff] %vm263, %v12528
        %12561 = vst.msk [vmem:[%s163 + $0xb0] sm:$0xff] %vm263, %v12529
        %12562 = vst.msk [vmem:[%s163 + $0xb8] sm:$0xff] %vm263, %v12530
        %12563 = vst.msk [vmem:[%s163 + $0xc0] sm:$0xff] %vm263, %v12531
        %12564 = vst.msk [vmem:[%s163 + $0xc8] sm:$0xff] %vm263, %v12532
        %12565 = vst.msk [vmem:[%s163 + $0xd0] sm:$0xff] %vm263, %v12533
        %12566 = vst.msk [vmem:[%s163 + $0xd8] sm:$0xff] %vm263, %v12534
        %12567 = vst.msk [vmem:[%s163 + $0xe0] sm:$0xff] %vm263, %v12535
        %12568 = vst.msk [vmem:[%s163 + $0xe8] sm:$0xff] %vm263, %v12536
        %12569 = vst.msk [vmem:[%s163 + $0xf0] sm:$0xff] %vm263, %v12537
        %12570 = vst.msk [vmem:[%s163 + $0xf8] sm:$0xff] %vm263, %v12538
        %s12571 = sand.u32 %s93, 1
        %s12572 = scalar_lea.sflag [#allocation4], %s12571
        %s12573 = sand.u32 %s93, 1
        %s12574 = smul.addr %s12573, 256
        %s12575 = scalar_lea.vmem [#allocation3], %s12574
        // Predicated region
        $region33: #{rdb5c_forward.1} parent=31 // pred_check
          %p12576 = pneg %p103
        $region34: #{rdb5c_forward.1} parent=31 // pred_check_branch
          %12578 = sbr.rel (%p12576) target = $region36
        $region35: #{rdb5c_forward.1} parent=31 // pred_region
          %s12580 = ssub.s32 4096, 4096
          %12581 = vsyncadd %s12572, %s12580
          %s12582 = smul.addr %s17, 32
          %s12583 = smul.addr %s12582, 128
          %s12584 = scalar_lea.hbm %s3, %s12583
          %s12585 = sshll.u32 %s12575, 4
          %s12586 = int_to_ptr.vmem [resolvable:$true] %s12585
          %12591 = dma.vmem_to_hbm [thread:$0]  %s12586, 4096, %s12584, %s12572, 128, 128, 8
        $region36: #{rdb5c_forward.1} parent=31 // pred_fallthru
          _
      $region32: #{rdb5c_forward.1} parent=5 // pred_fallthru
        _
      %p12592 = scmp.le.s32.totalorder 2, %s12
      // Predicated region
      $region37: #{rdb5c_forward.1} parent=5 // pred_check
        %p12593 = pneg %p12592
      $region38: #{rdb5c_forward.1} parent=5 // pred_check_branch
        %12595 = sbr.rel (%p12593) target = $region40
      $region39: #{rdb5c_forward.1} parent=5 // pred_region
        %s12596 = ssub.s32 %s12, 2
        // Predicated region
        $region41: #{rdb5c_forward.1} parent=39 // pred_check
          %p12597 = pneg %p109
        $region42: #{rdb5c_forward.1} parent=39 // pred_check_branch
          %12599 = sbr.rel (%p12597) target = $region44
        $region43: #{rdb5c_forward.1} parent=39 // pred_region
          %s12600 = sand.u32 %s94, 1
          %s12601 = scalar_lea.sflag [#allocation4], %s12600
          %s12602 = sand.u32 %s94, 1
          %s12603 = smul.addr %s12602, 256
          %s12604 = scalar_lea.vmem [#allocation3], %s12603
          %12605 = dma.done %s12601, 4096
        $region44: #{rdb5c_forward.1} parent=39 // pred_fallthru
          _
      $region40: #{rdb5c_forward.1} parent=5 // pred_fallthru
        _
    $region6: #{rdb5c_forward.1} parent=1 // loop_footer
      %s16 = sadd.s32 1, %s12
    $region7: #{rdb5c_forward.1} parent=1 // loop_footer_branch
      %11 = sbr.rel target = $region3
    $region8: #{rdb5c_forward.1} parent=1 // loop_exit
      _
    %12606 = vsyncpa [#allocation4], 1
    %s12607 = scalar_lea.sflag [#allocation4], 1
    %12608 = vsyncpa %s12607, 1

</llo_original>
